<compile_context>
chip_gen: v6e
topology: v6e:2x2x1
jax: 0.10.0
libtpu: 0.0.40
codegen_flags: <defaults>
</compile_context>

<pallas_src>
import functools
import math

import jax
import jax.numpy as jnp
from jax.experimental import pallas as pl
from jax.experimental.pallas import tpu as pltpu

NEG_INF = -1e30  # additive mask value (behaves like float('-inf') after softmax)


def _layernorm(h, g, b, eps=1e-5):
    m = jnp.mean(h, axis=-1, keepdims=True)
    v = jnp.mean((h - m) ** 2, axis=-1, keepdims=True)
    return (h - m) * jax.lax.rsqrt(v + eps) * g + b


# ---------------------------------------------------------------------------
# Fused kernel: one TransformerEncoderLayer per grid step + head on last step.
# ---------------------------------------------------------------------------
def fused_encoder_kernel(
        x0_ref, causal_ref, pad_ref, pool_ref,
        wqkv_ref, bqkv_ref, wo_ref, bo_ref, ln1g_ref, ln1b_ref,
        w1_ref, b1_ref, w2_ref, b2_ref, ln2g_ref, ln2b_ref,
        fcw_ref, fcb_ref, label_ref,
        probs_ref, loss_ref,
        x_scratch, attn_scratch,
        *, N, S, E, H):
    l = pl.program_id(0)
    Hd = E // H
    scale = 1.0 / math.sqrt(Hd)

    @pl.when(l == 0)
    def _():
        x_scratch[...] = x0_ref[...]

    x = x_scratch[...]                                        # (N*S, E) f32
    causal = causal_ref[...]                                  # (S, S) additive

    # ---- self-attention (bf16 weight matmuls, f32 accumulation) ----
    qkv = jnp.dot(x.astype(jnp.bfloat16), wqkv_ref[0],
                  preferred_element_type=jnp.float32) + bqkv_ref[0]      # (N*S, 3E)
    wo = wo_ref[0]                                            # (E, E) bf16

    for n in range(N):
        mask = causal + pad_ref[n:n + 1, :]                   # (S, S)
        attn_n = jnp.zeros((S, E), jnp.float32)
        for h in range(H):
            q = qkv[n * S:(n + 1) * S, h * Hd:(h + 1) * Hd] * scale          # (S, Hd)
            k = qkv[n * S:(n + 1) * S, E + h * Hd:E + (h + 1) * Hd]
            v = qkv[n * S:(n + 1) * S, 2 * E + h * Hd:2 * E + (h + 1) * Hd]
            s = jax.lax.dot_general(q, k, (((1,), (1,)), ((), ())),
                                    preferred_element_type=jnp.float32) + mask
            m = jnp.max(s, axis=-1, keepdims=True)
            p = jnp.exp(s - m)
            p = p * pl.reciprocal(jnp.sum(p, axis=-1, keepdims=True), approx=True)
            o = jnp.dot(p, v, preferred_element_type=jnp.float32)            # (S, Hd)
            # fold per-head output directly into the output projection:
            # lane-dense (S, E) accumulation, no narrow column stores.
            attn_n = attn_n + jnp.dot(o.astype(jnp.bfloat16),
                                      wo[h * Hd:(h + 1) * Hd, :],
                                      preferred_element_type=jnp.float32)
        attn_scratch[n * S:(n + 1) * S, :] = attn_n           # full-width row-block store

    attn = attn_scratch[...] + bo_ref[0]
    h1 = _layernorm(x + attn, ln1g_ref[0], ln1b_ref[0])

    # ---- feed-forward ----
    ff = jnp.maximum(
        jnp.dot(h1.astype(jnp.bfloat16), w1_ref[0],
                preferred_element_type=jnp.float32) + b1_ref[0], 0.0)
    ff = jnp.dot(ff.astype(jnp.bfloat16), w2_ref[0],
                 preferred_element_type=jnp.float32) + b2_ref[0]

    out = _layernorm(h1 + ff, ln2g_ref[0], ln2b_ref[0])
    x_scratch[...] = out

    # ---- head on the final layer: mean-pool -> fc -> sigmoid / -logsigmoid loss ----
    @pl.when(l == pl.num_programs(0) - 1)
    def _():
        pooled = jnp.dot(pool_ref[...], out,
                         preferred_element_type=jnp.float32)              # (N, E)
        scores = jax.lax.dot_general(fcw_ref[...], pooled,
                                     (((1,), (1,)), ((), ())),
                                     preferred_element_type=jnp.float32) + fcb_ref[...]
        probs_ref[...] = 1.0 / (1.0 + jnp.exp(-scores))                   # (1, N)
        z = scores * label_ref[...]
        nls = jnp.maximum(-z, 0.0) + jnp.log(1.0 + jnp.exp(-jnp.abs(z)))  # -logsigmoid(z)
        loss_ref[...] = jnp.sum(nls, axis=1, keepdims=True)               # (1, 1)


# ---------------------------------------------------------------------------
# pallas_call plumbing
# ---------------------------------------------------------------------------
def _const_spec(shape):
    zeros = (0,) * len(shape)
    return pl.BlockSpec(shape, lambda l, z=zeros: z)


def _layer_spec(shape):
    # shape = (L, d1, d2): stream one layer's slab per grid step
    return pl.BlockSpec((1,) + tuple(shape[1:]), lambda l: (l, 0, 0))


def score_function_model_forward(prep, path_idx, pad_idx, label, *, nhead=8):
    """path_idx: (S, N) int32; label: (N,) float32. Returns (sigmoid(scores), loss)."""
    S, N = path_idx.shape
    E = prep["embedding"].shape[1]
    L = prep["wqkv"].shape[0]

    # glue: embedding gather + layout (S, N, E) -> (N*S, E), batch-major rows
    path_embs = jnp.take(prep["embedding"], path_idx, axis=0)             # (S, N, E)
    x2d = jnp.transpose(path_embs, (1, 0, 2)).reshape(N * S, E).astype(jnp.float32)

    # additive masks
    pad_mask = (path_idx == pad_idx).T                                    # (N, S) bool
    pad_add = jnp.where(pad_mask, NEG_INF, 0.0).astype(jnp.float32)
    tri = jnp.tril(jnp.ones((S, S), jnp.float32))                         # gen_src_mask
    causal = jnp.where(tri > 0, 0.0, NEG_INF).astype(jnp.float32)

    # mean-pool matrix: pooled = pool @ x2d   (pool[n, c] = 1/S iff c//S == n)
    pool = jnp.repeat(jnp.eye(N, dtype=jnp.float32), S, axis=1) / S       # (N, N*S)
    label_row = label.reshape(1, N).astype(jnp.float32)

    const_ins = [x2d, causal, pad_add, pool]
    layer_ins = [prep["wqkv"], prep["bqkv"], prep["wo"], prep["bo"],
                 prep["ln1g"], prep["ln1b"],
                 prep["w1"], prep["b1"], prep["w2"], prep["b2"],
                 prep["ln2g"], prep["ln2b"]]
    head_ins = [prep["fc_w"], prep["fc_b"], label_row]

    in_specs = ([_const_spec(a.shape) for a in const_ins]
                + [_layer_spec(a.shape) for a in layer_ins]
                + [_const_spec(a.shape) for a in head_ins])

    kernel = functools.partial(fused_encoder_kernel, N=N, S=S, E=E, H=nhead)
    probs, loss = pl.pallas_call(
        kernel,
        grid=(L,),
        in_specs=in_specs,
        out_specs=(pl.BlockSpec((1, N), lambda l: (0, 0)),
                   pl.BlockSpec((1, 1), lambda l: (0, 0))),
        out_shape=(jax.ShapeDtypeStruct((1, N), jnp.float32),
                   jax.ShapeDtypeStruct((1, 1), jnp.float32)),
        scratch_shapes=[pltpu.VMEM((N * S, E), jnp.float32),   # activation carry
                        pltpu.VMEM((N * S, E), jnp.float32)],  # attention output
        compiler_params=pltpu.CompilerParams(
            dimension_semantics=("arbitrary",),
            vmem_limit_bytes=32 * 1024 * 1024),
    )(*const_ins, *layer_ins, *head_ins)
    return probs[0], loss[0, 0]


# ---------------------------------------------------------------------------
# Deterministic parameter construction
# ---------------------------------------------------------------------------
def init_layer(key, E, F):
    ks = jax.random.split(key, 4)
    return dict(
        wqkv=jax.random.normal(ks[0], (E, 3 * E), jnp.float32) / math.sqrt(E),
        bqkv=jnp.zeros((1, 3 * E), jnp.float32),
        wo=jax.random.normal(ks[1], (E, E), jnp.float32) / math.sqrt(E),
        bo=jnp.zeros((1, E), jnp.float32),
        ln1g=jnp.ones((1, E), jnp.float32),
        ln1b=jnp.zeros((1, E), jnp.float32),
        w1=jax.random.normal(ks[2], (E, F), jnp.float32) / math.sqrt(E),
        b1=jnp.zeros((1, F), jnp.float32),
        w2=jax.random.normal(ks[3], (F, E), jnp.float32) / math.sqrt(F),
        b2=jnp.zeros((1, E), jnp.float32),
        ln2g=jnp.ones((1, E), jnp.float32),
        ln2b=jnp.zeros((1, E), jnp.float32),
    )


def prepare_params(raw):
    """Stack per-layer weights along a leading L axis; cast matmul weights to bf16."""
    def stack(key, dtype=None):
        a = jnp.stack([lp[key] for lp in raw["layers"]], axis=0)
        return a.astype(dtype) if dtype is not None else a
    return dict(
        embedding=raw["embedding"],
        fc_w=raw["fc_w"], fc_b=raw["fc_b"],
        wqkv=stack("wqkv", jnp.bfloat16), bqkv=stack("bqkv"),
        wo=stack("wo", jnp.bfloat16), bo=stack("bo"),
        ln1g=stack("ln1g"), ln1b=stack("ln1b"),
        w1=stack("w1", jnp.bfloat16), b1=stack("b1"),
        w2=stack("w2", jnp.bfloat16), b2=stack("b2"),
        ln2g=stack("ln2g"), ln2b=stack("ln2b"),
    )


if __name__ == "__main__":
    S, N = 8, 2                 # sequence length, batch
    E, H, F = 128, 8, 2048      # embed_dim, nhead (default 8), dim_feedforward (default 2048)
    V = 32                      # path_vocab_size
    NLAYER = 6                  # default nlayer

    key = jax.random.PRNGKey(0)
    k_emb, k_fc, k_layers, k_idx = jax.random.split(key, 4)

    raw_params = {
        # nn.Embedding weight ~ U(-0.5, 0.5)
        "embedding": jax.random.uniform(k_emb, (V, E), jnp.float32, -0.5, 0.5),
        # fc weight ~ U(-0.5, 0.5), bias = 0
        "fc_w": jax.random.uniform(k_fc, (1, E), jnp.float32, -0.5, 0.5),
        "fc_b": jnp.zeros((1, 1), jnp.float32),
        "layers": [init_layer(k, E, F) for k in jax.random.split(k_layers, NLAYER)],
    }
    prep = prepare_params(raw_params)

    pad_idx = 0
    path_idx = jax.random.randint(k_idx, (S, N), 1, V, dtype=jnp.int32)
    # pad the tail of batch element 1 (never pad position 0 to keep softmax rows valid)
    path_idx = path_idx.at[-2:, 1].set(pad_idx)
    label = jnp.array([1.0, -1.0], jnp.float32)

    fwd = jax.jit(score_function_model_forward, static_argnums=(2,))
    probs, loss = fwd(prep, path_idx, pad_idx, label)
    jax.block_until_ready((probs, loss))
    print("KERNEL_OK")
</pallas_src>

<mosaic_0001>
module attributes {stable_mosaic.version = 11 : i64} {
  func.func @fused_encoder_kernel(%arg0: i32, %arg1: memref<16x128xf32, #tpu.memory_space<vmem>>, %arg2: memref<8x8xf32, #tpu.memory_space<vmem>>, %arg3: memref<2x8xf32, #tpu.memory_space<vmem>>, %arg4: memref<2x16xf32, #tpu.memory_space<vmem>>, %arg5: memref<1x128x384xbf16, #tpu.memory_space<vmem>>, %arg6: memref<1x1x384xf32, #tpu.memory_space<vmem>>, %arg7: memref<1x128x128xbf16, #tpu.memory_space<vmem>>, %arg8: memref<1x1x128xf32, #tpu.memory_space<vmem>>, %arg9: memref<1x1x128xf32, #tpu.memory_space<vmem>>, %arg10: memref<1x1x128xf32, #tpu.memory_space<vmem>>, %arg11: memref<1x128x2048xbf16, #tpu.memory_space<vmem>>, %arg12: memref<1x1x2048xf32, #tpu.memory_space<vmem>>, %arg13: memref<1x2048x128xbf16, #tpu.memory_space<vmem>>, %arg14: memref<1x1x128xf32, #tpu.memory_space<vmem>>, %arg15: memref<1x1x128xf32, #tpu.memory_space<vmem>>, %arg16: memref<1x1x128xf32, #tpu.memory_space<vmem>>, %arg17: memref<1x128xf32, #tpu.memory_space<vmem>>, %arg18: memref<1x1xf32, #tpu.memory_space<vmem>>, %arg19: memref<1x2xf32, #tpu.memory_space<vmem>>, %arg20: memref<1x2xf32, #tpu.memory_space<vmem>>, %arg21: memref<1x1xf32, #tpu.memory_space<vmem>>, %arg22: memref<16x128xf32, #tpu.memory_space<vmem>>, %arg23: memref<16x128xf32, #tpu.memory_space<vmem>>) attributes {dimension_semantics = [#tpu.dimension_semantics<arbitrary>], iteration_bounds = array<i64: 6>, scalar_prefetch = 0 : i64, scratch_operands = 2 : i64, tpu.core_type = #tpu.core_type<tc>, window_params = [{pipeline_mode = #tpu.pipeline_mode<synchronous>, transform_indices = @transform_0, window_bounds = array<i64: 16, 128>}, {pipeline_mode = #tpu.pipeline_mode<synchronous>, transform_indices = @transform_1, window_bounds = array<i64: 8, 8>}, {pipeline_mode = #tpu.pipeline_mode<synchronous>, transform_indices = @transform_2, window_bounds = array<i64: 2, 8>}, {pipeline_mode = #tpu.pipeline_mode<synchronous>, transform_indices = @transform_3, window_bounds = array<i64: 2, 16>}, {transform_indices = @transform_4, window_bounds = array<i64: 1, 128, 384>}, {transform_indices = @transform_5, window_bounds = array<i64: 1, 1, 384>}, {transform_indices = @transform_6, window_bounds = array<i64: 1, 128, 128>}, {transform_indices = @transform_7, window_bounds = array<i64: 1, 1, 128>}, {transform_indices = @transform_8, window_bounds = array<i64: 1, 1, 128>}, {transform_indices = @transform_9, window_bounds = array<i64: 1, 1, 128>}, {transform_indices = @transform_10, window_bounds = array<i64: 1, 128, 2048>}, {transform_indices = @transform_11, window_bounds = array<i64: 1, 1, 2048>}, {transform_indices = @transform_12, window_bounds = array<i64: 1, 2048, 128>}, {transform_indices = @transform_13, window_bounds = array<i64: 1, 1, 128>}, {transform_indices = @transform_14, window_bounds = array<i64: 1, 1, 128>}, {transform_indices = @transform_15, window_bounds = array<i64: 1, 1, 128>}, {pipeline_mode = #tpu.pipeline_mode<synchronous>, transform_indices = @transform_16, window_bounds = array<i64: 1, 128>}, {pipeline_mode = #tpu.pipeline_mode<synchronous>, transform_indices = @transform_17, window_bounds = array<i64: 1, 1>}, {pipeline_mode = #tpu.pipeline_mode<synchronous>, transform_indices = @transform_18, window_bounds = array<i64: 1, 2>}, {pipeline_mode = #tpu.pipeline_mode<synchronous>, transform_indices = @transform_19, window_bounds = array<i64: 1, 2>}, {pipeline_mode = #tpu.pipeline_mode<synchronous>, transform_indices = @transform_20, window_bounds = array<i64: 1, 1>}]} {
    %c0_i32 = arith.constant 0 : i32
    %0 = arith.cmpi eq, %arg0, %c0_i32 : i32
    %1 = arith.extui %0 : i1 to i32
    %c0_i32_0 = arith.constant 0 : i32
    %2 = arith.cmpi ne, %1, %c0_i32_0 : i32
    scf.if %2 {
      %c0_162 = arith.constant 0 : index
      %c0_163 = arith.constant 0 : index
      %458 = vector.load %arg1[%c0_162, %c0_163] : memref<16x128xf32, #tpu.memory_space<vmem>>, vector<16x128xf32>
      %c0_164 = arith.constant 0 : index
      %c0_165 = arith.constant 0 : index
      %459 = vector.load %arg22[%c0_164, %c0_165] : memref<16x128xf32, #tpu.memory_space<vmem>>, vector<16x128xf32>
      tpu.vector_store %arg22[%c0_164, %c0_165], %458 {strides = array<i32>} : memref<16x128xf32, #tpu.memory_space<vmem>>, vector<16x128xf32>,
    } else {
    }
    %c0 = arith.constant 0 : index
    %c0_1 = arith.constant 0 : index
    %3 = vector.load %arg22[%c0, %c0_1] : memref<16x128xf32, #tpu.memory_space<vmem>>, vector<16x128xf32>
    %c0_2 = arith.constant 0 : index
    %c0_3 = arith.constant 0 : index
    %4 = vector.load %arg2[%c0_2, %c0_3] : memref<8x8xf32, #tpu.memory_space<vmem>>, vector<8x8xf32>
    %5 = arith.truncf %3 : vector<16x128xf32> to vector<16x128xbf16>
    %c0_4 = arith.constant 0 : index
    %c0_5 = arith.constant 0 : index
    %c0_6 = arith.constant 0 : index
    %6 = vector.load %arg5[%c0_4, %c0_5, %c0_6] : memref<1x128x384xbf16, #tpu.memory_space<vmem>>, vector<1x128x384xbf16>
    %7 = vector.shape_cast %6 : vector<1x128x384xbf16> to vector<128x384xbf16>
    %cst = arith.constant dense<0.000000e+00> : vector<16x384xf32>
    %8 = tpu.matmul %5, %7, %cst {dimension_numbers = #tpu.dot_dimension_numbers<[1], [0], [0], [1], [0, 0, 1, 1], [], []>} : vector<16x128xbf16>, vector<128x384xbf16>, vector<16x384xf32> -> vector<16x384xf32>
    %c0_7 = arith.constant 0 : index
    %c0_8 = arith.constant 0 : index
    %c0_9 = arith.constant 0 : index
    %9 = vector.load %arg6[%c0_7, %c0_8, %c0_9] : memref<1x1x384xf32, #tpu.memory_space<vmem>>, vector<1x1x384xf32>
    %10 = vector.shape_cast %9 : vector<1x1x384xf32> to vector<1x384xf32>
    %11 = vector.broadcast %10 : vector<1x384xf32> to vector<16x384xf32>
    %12 = arith.addf %8, %11 : vector<16x384xf32>
    %c0_10 = arith.constant 0 : index
    %c0_11 = arith.constant 0 : index
    %c0_12 = arith.constant 0 : index
    %13 = vector.load %arg7[%c0_10, %c0_11, %c0_12] : memref<1x128x128xbf16, #tpu.memory_space<vmem>>, vector<1x128x128xbf16>
    %14 = vector.shape_cast %13 : vector<1x128x128xbf16> to vector<128x128xbf16>
    %c0_13 = arith.constant 0 : index
    %c0_14 = arith.constant 0 : index
    %15 = vector.load %arg3[%c0_13, %c0_14] : memref<2x8xf32, #tpu.memory_space<vmem>>, vector<1x8xf32>
    %16 = vector.broadcast %15 : vector<1x8xf32> to vector<8x8xf32>
    %17 = arith.addf %4, %16 : vector<8x8xf32>
    %cst_15 = arith.constant 0.000000e+00 : f32
    %18 = vector.broadcast %cst_15 : f32 to vector<8x128xf32>
    %19 = vector.extract_strided_slice %12 {offsets = [0, 0], sizes = [8, 16], strides = [1, 1]} : vector<16x384xf32> to vector<8x16xf32>
    %cst_16 = arith.constant 2.500000e-01 : f32
    %20 = vector.broadcast %cst_16 : f32 to vector<8x16xf32>
    %21 = arith.mulf %19, %20 : vector<8x16xf32>
    %22 = vector.extract_strided_slice %12 {offsets = [0, 128], sizes = [8, 16], strides = [1, 1]} : vector<16x384xf32> to vector<8x16xf32>
    %23 = vector.extract_strided_slice %12 {offsets = [0, 256], sizes = [8, 16], strides = [1, 1]} : vector<16x384xf32> to vector<8x16xf32>
    %cst_17 = arith.constant dense<0.000000e+00> : vector<8x8xf32>
    %24 = tpu.matmul %21, %22, %cst_17 {dimension_numbers = #tpu.dot_dimension_numbers<[1], [1], [0], [0], [0, 0, 1, 0], [], []>} : vector<8x16xf32>, vector<8x16xf32>, vector<8x8xf32> -> vector<8x8xf32>
    %25 = arith.addf %24, %17 : vector<8x8xf32>
    %cst_18 = arith.constant dense<0xFF800000> : vector<8xf32>
    %26 = vector.multi_reduction <maximumf>, %25, %cst_18 [1] : vector<8x8xf32> to vector<8xf32>
    %27 = vector.shape_cast %26 : vector<8xf32> to vector<8x1xf32>
    %28 = vector.broadcast %27 : vector<8x1xf32> to vector<8x8xf32>
    %29 = arith.subf %25, %28 : vector<8x8xf32>
    %30 = math.exp %29 : vector<8x8xf32>
    %cst_19 = arith.constant dense<0.000000e+00> : vector<8xf32>
    %31 = vector.multi_reduction <add>, %30, %cst_19 [1] : vector<8x8xf32> to vector<8xf32>
    %32 = vector.shape_cast %31 : vector<8xf32> to vector<8x1xf32>
    %33 = tpu.reciprocal %32 {approx = true} : vector<8x1xf32> -> vector<8x1xf32>
    %34 = vector.broadcast %33 : vector<8x1xf32> to vector<8x8xf32>
    %35 = arith.mulf %30, %34 : vector<8x8xf32>
    %cst_20 = arith.constant dense<0.000000e+00> : vector<8x16xf32>
    %36 = tpu.matmul %35, %23, %cst_20 {dimension_numbers = #tpu.dot_dimension_numbers<[1], [0], [0], [1], [0, 0, 1, 1], [], []>} : vector<8x8xf32>, vector<8x16xf32>, vector<8x16xf32> -> vector<8x16xf32>
    %37 = arith.truncf %36 : vector<8x16xf32> to vector<8x16xbf16>
    %38 = vector.extract_strided_slice %14 {offsets = [0, 0], sizes = [16, 128], strides = [1, 1]} : vector<128x128xbf16> to vector<16x128xbf16>
    %cst_21 = arith.constant dense<0.000000e+00> : vector<8x128xf32>
    %39 = tpu.matmul %37, %38, %cst_21 {dimension_numbers = #tpu.dot_dimension_numbers<[1], [0], [0], [1], [0, 0, 1, 1], [], []>} : vector<8x16xbf16>, vector<16x128xbf16>, vector<8x128xf32> -> vector<8x128xf32>
    %40 = arith.addf %18, %39 : vector<8x128xf32>
    %41 = vector.extract_strided_slice %12 {offsets = [0, 16], sizes = [8, 16], strides = [1, 1]} : vector<16x384xf32> to vector<8x16xf32>
    %cst_22 = arith.constant 2.500000e-01 : f32
    %42 = vector.broadcast %cst_22 : f32 to vector<8x16xf32>
    %43 = arith.mulf %41, %42 : vector<8x16xf32>
    %44 = vector.extract_strided_slice %12 {offsets = [0, 144], sizes = [8, 16], strides = [1, 1]} : vector<16x384xf32> to vector<8x16xf32>
    %45 = vector.extract_strided_slice %12 {offsets = [0, 272], sizes = [8, 16], strides = [1, 1]} : vector<16x384xf32> to vector<8x16xf32>
    %cst_23 = arith.constant dense<0.000000e+00> : vector<8x8xf32>
    %46 = tpu.matmul %43, %44, %cst_23 {dimension_numbers = #tpu.dot_dimension_numbers<[1], [1], [0], [0], [0, 0, 1, 0], [], []>} : vector<8x16xf32>, vector<8x16xf32>, vector<8x8xf32> -> vector<8x8xf32>
    %47 = arith.addf %46, %17 : vector<8x8xf32>
    %cst_24 = arith.constant dense<0xFF800000> : vector<8xf32>
    %48 = vector.multi_reduction <maximumf>, %47, %cst_24 [1] : vector<8x8xf32> to vector<8xf32>
    %49 = vector.shape_cast %48 : vector<8xf32> to vector<8x1xf32>
    %50 = vector.broadcast %49 : vector<8x1xf32> to vector<8x8xf32>
    %51 = arith.subf %47, %50 : vector<8x8xf32>
    %52 = math.exp %51 : vector<8x8xf32>
    %cst_25 = arith.constant dense<0.000000e+00> : vector<8xf32>
    %53 = vector.multi_reduction <add>, %52, %cst_25 [1] : vector<8x8xf32> to vector<8xf32>
    %54 = vector.shape_cast %53 : vector<8xf32> to vector<8x1xf32>
    %55 = tpu.reciprocal %54 {approx = true} : vector<8x1xf32> -> vector<8x1xf32>
    %56 = vector.broadcast %55 : vector<8x1xf32> to vector<8x8xf32>
    %57 = arith.mulf %52, %56 : vector<8x8xf32>
    %cst_26 = arith.constant dense<0.000000e+00> : vector<8x16xf32>
    %58 = tpu.matmul %57, %45, %cst_26 {dimension_numbers = #tpu.dot_dimension_numbers<[1], [0], [0], [1], [0, 0, 1, 1], [], []>} : vector<8x8xf32>, vector<8x16xf32>, vector<8x16xf32> -> vector<8x16xf32>
    %59 = arith.truncf %58 : vector<8x16xf32> to vector<8x16xbf16>
    %60 = vector.extract_strided_slice %14 {offsets = [16, 0], sizes = [16, 128], strides = [1, 1]} : vector<128x128xbf16> to vector<16x128xbf16>
    %cst_27 = arith.constant dense<0.000000e+00> : vector<8x128xf32>
    %61 = tpu.matmul %59, %60, %cst_27 {dimension_numbers = #tpu.dot_dimension_numbers<[1], [0], [0], [1], [0, 0, 1, 1], [], []>} : vector<8x16xbf16>, vector<16x128xbf16>, vector<8x128xf32> -> vector<8x128xf32>
    %62 = arith.addf %40, %61 : vector<8x128xf32>
    %63 = vector.extract_strided_slice %12 {offsets = [0, 32], sizes = [8, 16], strides = [1, 1]} : vector<16x384xf32> to vector<8x16xf32>
    %cst_28 = arith.constant 2.500000e-01 : f32
    %64 = vector.broadcast %cst_28 : f32 to vector<8x16xf32>
    %65 = arith.mulf %63, %64 : vector<8x16xf32>
    %66 = vector.extract_strided_slice %12 {offsets = [0, 160], sizes = [8, 16], strides = [1, 1]} : vector<16x384xf32> to vector<8x16xf32>
    %67 = vector.extract_strided_slice %12 {offsets = [0, 288], sizes = [8, 16], strides = [1, 1]} : vector<16x384xf32> to vector<8x16xf32>
    %cst_29 = arith.constant dense<0.000000e+00> : vector<8x8xf32>
    %68 = tpu.matmul %65, %66, %cst_29 {dimension_numbers = #tpu.dot_dimension_numbers<[1], [1], [0], [0], [0, 0, 1, 0], [], []>} : vector<8x16xf32>, vector<8x16xf32>, vector<8x8xf32> -> vector<8x8xf32>
    %69 = arith.addf %68, %17 : vector<8x8xf32>
    %cst_30 = arith.constant dense<0xFF800000> : vector<8xf32>
    %70 = vector.multi_reduction <maximumf>, %69, %cst_30 [1] : vector<8x8xf32> to vector<8xf32>
    %71 = vector.shape_cast %70 : vector<8xf32> to vector<8x1xf32>
    %72 = vector.broadcast %71 : vector<8x1xf32> to vector<8x8xf32>
    %73 = arith.subf %69, %72 : vector<8x8xf32>
    %74 = math.exp %73 : vector<8x8xf32>
    %cst_31 = arith.constant dense<0.000000e+00> : vector<8xf32>
    %75 = vector.multi_reduction <add>, %74, %cst_31 [1] : vector<8x8xf32> to vector<8xf32>
    %76 = vector.shape_cast %75 : vector<8xf32> to vector<8x1xf32>
    %77 = tpu.reciprocal %76 {approx = true} : vector<8x1xf32> -> vector<8x1xf32>
    %78 = vector.broadcast %77 : vector<8x1xf32> to vector<8x8xf32>
    %79 = arith.mulf %74, %78 : vector<8x8xf32>
    %cst_32 = arith.constant dense<0.000000e+00> : vector<8x16xf32>
    %80 = tpu.matmul %79, %67, %cst_32 {dimension_numbers = #tpu.dot_dimension_numbers<[1], [0], [0], [1], [0, 0, 1, 1], [], []>} : vector<8x8xf32>, vector<8x16xf32>, vector<8x16xf32> -> vector<8x16xf32>
    %81 = arith.truncf %80 : vector<8x16xf32> to vector<8x16xbf16>
    %82 = vector.extract_strided_slice %14 {offsets = [32, 0], sizes = [16, 128], strides = [1, 1]} : vector<128x128xbf16> to vector<16x128xbf16>
    %cst_33 = arith.constant dense<0.000000e+00> : vector<8x128xf32>
    %83 = tpu.matmul %81, %82, %cst_33 {dimension_numbers = #tpu.dot_dimension_numbers<[1], [0], [0], [1], [0, 0, 1, 1], [], []>} : vector<8x16xbf16>, vector<16x128xbf16>, vector<8x128xf32> -> vector<8x128xf32>
    %84 = arith.addf %62, %83 : vector<8x128xf32>
    %85 = vector.extract_strided_slice %12 {offsets = [0, 48], sizes = [8, 16], strides = [1, 1]} : vector<16x384xf32> to vector<8x16xf32>
    %cst_34 = arith.constant 2.500000e-01 : f32
    %86 = vector.broadcast %cst_34 : f32 to vector<8x16xf32>
    %87 = arith.mulf %85, %86 : vector<8x16xf32>
    %88 = vector.extract_strided_slice %12 {offsets = [0, 176], sizes = [8, 16], strides = [1, 1]} : vector<16x384xf32> to vector<8x16xf32>
    %89 = vector.extract_strided_slice %12 {offsets = [0, 304], sizes = [8, 16], strides = [1, 1]} : vector<16x384xf32> to vector<8x16xf32>
    %cst_35 = arith.constant dense<0.000000e+00> : vector<8x8xf32>
    %90 = tpu.matmul %87, %88, %cst_35 {dimension_numbers = #tpu.dot_dimension_numbers<[1], [1], [0], [0], [0, 0, 1, 0], [], []>} : vector<8x16xf32>, vector<8x16xf32>, vector<8x8xf32> -> vector<8x8xf32>
    %91 = arith.addf %90, %17 : vector<8x8xf32>
    %cst_36 = arith.constant dense<0xFF800000> : vector<8xf32>
    %92 = vector.multi_reduction <maximumf>, %91, %cst_36 [1] : vector<8x8xf32> to vector<8xf32>
    %93 = vector.shape_cast %92 : vector<8xf32> to vector<8x1xf32>
    %94 = vector.broadcast %93 : vector<8x1xf32> to vector<8x8xf32>
    %95 = arith.subf %91, %94 : vector<8x8xf32>
    %96 = math.exp %95 : vector<8x8xf32>
    %cst_37 = arith.constant dense<0.000000e+00> : vector<8xf32>
    %97 = vector.multi_reduction <add>, %96, %cst_37 [1] : vector<8x8xf32> to vector<8xf32>
    %98 = vector.shape_cast %97 : vector<8xf32> to vector<8x1xf32>
    %99 = tpu.reciprocal %98 {approx = true} : vector<8x1xf32> -> vector<8x1xf32>
    %100 = vector.broadcast %99 : vector<8x1xf32> to vector<8x8xf32>
    %101 = arith.mulf %96, %100 : vector<8x8xf32>
    %cst_38 = arith.constant dense<0.000000e+00> : vector<8x16xf32>
    %102 = tpu.matmul %101, %89, %cst_38 {dimension_numbers = #tpu.dot_dimension_numbers<[1], [0], [0], [1], [0, 0, 1, 1], [], []>} : vector<8x8xf32>, vector<8x16xf32>, vector<8x16xf32> -> vector<8x16xf32>
    %103 = arith.truncf %102 : vector<8x16xf32> to vector<8x16xbf16>
    %104 = vector.extract_strided_slice %14 {offsets = [48, 0], sizes = [16, 128], strides = [1, 1]} : vector<128x128xbf16> to vector<16x128xbf16>
    %cst_39 = arith.constant dense<0.000000e+00> : vector<8x128xf32>
    %105 = tpu.matmul %103, %104, %cst_39 {dimension_numbers = #tpu.dot_dimension_numbers<[1], [0], [0], [1], [0, 0, 1, 1], [], []>} : vector<8x16xbf16>, vector<16x128xbf16>, vector<8x128xf32> -> vector<8x128xf32>
    %106 = arith.addf %84, %105 : vector<8x128xf32>
    %107 = vector.extract_strided_slice %12 {offsets = [0, 64], sizes = [8, 16], strides = [1, 1]} : vector<16x384xf32> to vector<8x16xf32>
    %cst_40 = arith.constant 2.500000e-01 : f32
    %108 = vector.broadcast %cst_40 : f32 to vector<8x16xf32>
    %109 = arith.mulf %107, %108 : vector<8x16xf32>
    %110 = vector.extract_strided_slice %12 {offsets = [0, 192], sizes = [8, 16], strides = [1, 1]} : vector<16x384xf32> to vector<8x16xf32>
    %111 = vector.extract_strided_slice %12 {offsets = [0, 320], sizes = [8, 16], strides = [1, 1]} : vector<16x384xf32> to vector<8x16xf32>
    %cst_41 = arith.constant dense<0.000000e+00> : vector<8x8xf32>
    %112 = tpu.matmul %109, %110, %cst_41 {dimension_numbers = #tpu.dot_dimension_numbers<[1], [1], [0], [0], [0, 0, 1, 0], [], []>} : vector<8x16xf32>, vector<8x16xf32>, vector<8x8xf32> -> vector<8x8xf32>
    %113 = arith.addf %112, %17 : vector<8x8xf32>
    %cst_42 = arith.constant dense<0xFF800000> : vector<8xf32>
    %114 = vector.multi_reduction <maximumf>, %113, %cst_42 [1] : vector<8x8xf32> to vector<8xf32>
    %115 = vector.shape_cast %114 : vector<8xf32> to vector<8x1xf32>
    %116 = vector.broadcast %115 : vector<8x1xf32> to vector<8x8xf32>
    %117 = arith.subf %113, %116 : vector<8x8xf32>
    %118 = math.exp %117 : vector<8x8xf32>
    %cst_43 = arith.constant dense<0.000000e+00> : vector<8xf32>
    %119 = vector.multi_reduction <add>, %118, %cst_43 [1] : vector<8x8xf32> to vector<8xf32>
    %120 = vector.shape_cast %119 : vector<8xf32> to vector<8x1xf32>
    %121 = tpu.reciprocal %120 {approx = true} : vector<8x1xf32> -> vector<8x1xf32>
    %122 = vector.broadcast %121 : vector<8x1xf32> to vector<8x8xf32>
    %123 = arith.mulf %118, %122 : vector<8x8xf32>
    %cst_44 = arith.constant dense<0.000000e+00> : vector<8x16xf32>
    %124 = tpu.matmul %123, %111, %cst_44 {dimension_numbers = #tpu.dot_dimension_numbers<[1], [0], [0], [1], [0, 0, 1, 1], [], []>} : vector<8x8xf32>, vector<8x16xf32>, vector<8x16xf32> -> vector<8x16xf32>
    %125 = arith.truncf %124 : vector<8x16xf32> to vector<8x16xbf16>
    %126 = vector.extract_strided_slice %14 {offsets = [64, 0], sizes = [16, 128], strides = [1, 1]} : vector<128x128xbf16> to vector<16x128xbf16>
    %cst_45 = arith.constant dense<0.000000e+00> : vector<8x128xf32>
    %127 = tpu.matmul %125, %126, %cst_45 {dimension_numbers = #tpu.dot_dimension_numbers<[1], [0], [0], [1], [0, 0, 1, 1], [], []>} : vector<8x16xbf16>, vector<16x128xbf16>, vector<8x128xf32> -> vector<8x128xf32>
    %128 = arith.addf %106, %127 : vector<8x128xf32>
    %129 = vector.extract_strided_slice %12 {offsets = [0, 80], sizes = [8, 16], strides = [1, 1]} : vector<16x384xf32> to vector<8x16xf32>
    %cst_46 = arith.constant 2.500000e-01 : f32
    %130 = vector.broadcast %cst_46 : f32 to vector<8x16xf32>
    %131 = arith.mulf %129, %130 : vector<8x16xf32>
    %132 = vector.extract_strided_slice %12 {offsets = [0, 208], sizes = [8, 16], strides = [1, 1]} : vector<16x384xf32> to vector<8x16xf32>
    %133 = vector.extract_strided_slice %12 {offsets = [0, 336], sizes = [8, 16], strides = [1, 1]} : vector<16x384xf32> to vector<8x16xf32>
    %cst_47 = arith.constant dense<0.000000e+00> : vector<8x8xf32>
    %134 = tpu.matmul %131, %132, %cst_47 {dimension_numbers = #tpu.dot_dimension_numbers<[1], [1], [0], [0], [0, 0, 1, 0], [], []>} : vector<8x16xf32>, vector<8x16xf32>, vector<8x8xf32> -> vector<8x8xf32>
    %135 = arith.addf %134, %17 : vector<8x8xf32>
    %cst_48 = arith.constant dense<0xFF800000> : vector<8xf32>
    %136 = vector.multi_reduction <maximumf>, %135, %cst_48 [1] : vector<8x8xf32> to vector<8xf32>
    %137 = vector.shape_cast %136 : vector<8xf32> to vector<8x1xf32>
    %138 = vector.broadcast %137 : vector<8x1xf32> to vector<8x8xf32>
    %139 = arith.subf %135, %138 : vector<8x8xf32>
    %140 = math.exp %139 : vector<8x8xf32>
    %cst_49 = arith.constant dense<0.000000e+00> : vector<8xf32>
    %141 = vector.multi_reduction <add>, %140, %cst_49 [1] : vector<8x8xf32> to vector<8xf32>
    %142 = vector.shape_cast %141 : vector<8xf32> to vector<8x1xf32>
    %143 = tpu.reciprocal %142 {approx = true} : vector<8x1xf32> -> vector<8x1xf32>
    %144 = vector.broadcast %143 : vector<8x1xf32> to vector<8x8xf32>
    %145 = arith.mulf %140, %144 : vector<8x8xf32>
    %cst_50 = arith.constant dense<0.000000e+00> : vector<8x16xf32>
    %146 = tpu.matmul %145, %133, %cst_50 {dimension_numbers = #tpu.dot_dimension_numbers<[1], [0], [0], [1], [0, 0, 1, 1], [], []>} : vector<8x8xf32>, vector<8x16xf32>, vector<8x16xf32> -> vector<8x16xf32>
    %147 = arith.truncf %146 : vector<8x16xf32> to vector<8x16xbf16>
    %148 = vector.extract_strided_slice %14 {offsets = [80, 0], sizes = [16, 128], strides = [1, 1]} : vector<128x128xbf16> to vector<16x128xbf16>
    %cst_51 = arith.constant dense<0.000000e+00> : vector<8x128xf32>
    %149 = tpu.matmul %147, %148, %cst_51 {dimension_numbers = #tpu.dot_dimension_numbers<[1], [0], [0], [1], [0, 0, 1, 1], [], []>} : vector<8x16xbf16>, vector<16x128xbf16>, vector<8x128xf32> -> vector<8x128xf32>
    %150 = arith.addf %128, %149 : vector<8x128xf32>
    %151 = vector.extract_strided_slice %12 {offsets = [0, 96], sizes = [8, 16], strides = [1, 1]} : vector<16x384xf32> to vector<8x16xf32>
    %cst_52 = arith.constant 2.500000e-01 : f32
    %152 = vector.broadcast %cst_52 : f32 to vector<8x16xf32>
    %153 = arith.mulf %151, %152 : vector<8x16xf32>
    %154 = vector.extract_strided_slice %12 {offsets = [0, 224], sizes = [8, 16], strides = [1, 1]} : vector<16x384xf32> to vector<8x16xf32>
    %155 = vector.extract_strided_slice %12 {offsets = [0, 352], sizes = [8, 16], strides = [1, 1]} : vector<16x384xf32> to vector<8x16xf32>
    %cst_53 = arith.constant dense<0.000000e+00> : vector<8x8xf32>
    %156 = tpu.matmul %153, %154, %cst_53 {dimension_numbers = #tpu.dot_dimension_numbers<[1], [1], [0], [0], [0, 0, 1, 0], [], []>} : vector<8x16xf32>, vector<8x16xf32>, vector<8x8xf32> -> vector<8x8xf32>
    %157 = arith.addf %156, %17 : vector<8x8xf32>
    %cst_54 = arith.constant dense<0xFF800000> : vector<8xf32>
    %158 = vector.multi_reduction <maximumf>, %157, %cst_54 [1] : vector<8x8xf32> to vector<8xf32>
    %159 = vector.shape_cast %158 : vector<8xf32> to vector<8x1xf32>
    %160 = vector.broadcast %159 : vector<8x1xf32> to vector<8x8xf32>
    %161 = arith.subf %157, %160 : vector<8x8xf32>
    %162 = math.exp %161 : vector<8x8xf32>
    %cst_55 = arith.constant dense<0.000000e+00> : vector<8xf32>
    %163 = vector.multi_reduction <add>, %162, %cst_55 [1] : vector<8x8xf32> to vector<8xf32>
    %164 = vector.shape_cast %163 : vector<8xf32> to vector<8x1xf32>
    %165 = tpu.reciprocal %164 {approx = true} : vector<8x1xf32> -> vector<8x1xf32>
    %166 = vector.broadcast %165 : vector<8x1xf32> to vector<8x8xf32>
    %167 = arith.mulf %162, %166 : vector<8x8xf32>
    %cst_56 = arith.constant dense<0.000000e+00> : vector<8x16xf32>
    %168 = tpu.matmul %167, %155, %cst_56 {dimension_numbers = #tpu.dot_dimension_numbers<[1], [0], [0], [1], [0, 0, 1, 1], [], []>} : vector<8x8xf32>, vector<8x16xf32>, vector<8x16xf32> -> vector<8x16xf32>
    %169 = arith.truncf %168 : vector<8x16xf32> to vector<8x16xbf16>
    %170 = vector.extract_strided_slice %14 {offsets = [96, 0], sizes = [16, 128], strides = [1, 1]} : vector<128x128xbf16> to vector<16x128xbf16>
    %cst_57 = arith.constant dense<0.000000e+00> : vector<8x128xf32>
    %171 = tpu.matmul %169, %170, %cst_57 {dimension_numbers = #tpu.dot_dimension_numbers<[1], [0], [0], [1], [0, 0, 1, 1], [], []>} : vector<8x16xbf16>, vector<16x128xbf16>, vector<8x128xf32> -> vector<8x128xf32>
    %172 = arith.addf %150, %171 : vector<8x128xf32>
    %173 = vector.extract_strided_slice %12 {offsets = [0, 112], sizes = [8, 16], strides = [1, 1]} : vector<16x384xf32> to vector<8x16xf32>
    %cst_58 = arith.constant 2.500000e-01 : f32
    %174 = vector.broadcast %cst_58 : f32 to vector<8x16xf32>
    %175 = arith.mulf %173, %174 : vector<8x16xf32>
    %176 = vector.extract_strided_slice %12 {offsets = [0, 240], sizes = [8, 16], strides = [1, 1]} : vector<16x384xf32> to vector<8x16xf32>
    %177 = vector.extract_strided_slice %12 {offsets = [0, 368], sizes = [8, 16], strides = [1, 1]} : vector<16x384xf32> to vector<8x16xf32>
    %cst_59 = arith.constant dense<0.000000e+00> : vector<8x8xf32>
    %178 = tpu.matmul %175, %176, %cst_59 {dimension_numbers = #tpu.dot_dimension_numbers<[1], [1], [0], [0], [0, 0, 1, 0], [], []>} : vector<8x16xf32>, vector<8x16xf32>, vector<8x8xf32> -> vector<8x8xf32>
    %179 = arith.addf %178, %17 : vector<8x8xf32>
    %cst_60 = arith.constant dense<0xFF800000> : vector<8xf32>
    %180 = vector.multi_reduction <maximumf>, %179, %cst_60 [1] : vector<8x8xf32> to vector<8xf32>
    %181 = vector.shape_cast %180 : vector<8xf32> to vector<8x1xf32>
    %182 = vector.broadcast %181 : vector<8x1xf32> to vector<8x8xf32>
    %183 = arith.subf %179, %182 : vector<8x8xf32>
    %184 = math.exp %183 : vector<8x8xf32>
    %cst_61 = arith.constant dense<0.000000e+00> : vector<8xf32>
    %185 = vector.multi_reduction <add>, %184, %cst_61 [1] : vector<8x8xf32> to vector<8xf32>
    %186 = vector.shape_cast %185 : vector<8xf32> to vector<8x1xf32>
    %187 = tpu.reciprocal %186 {approx = true} : vector<8x1xf32> -> vector<8x1xf32>
    %188 = vector.broadcast %187 : vector<8x1xf32> to vector<8x8xf32>
    %189 = arith.mulf %184, %188 : vector<8x8xf32>
    %cst_62 = arith.constant dense<0.000000e+00> : vector<8x16xf32>
    %190 = tpu.matmul %189, %177, %cst_62 {dimension_numbers = #tpu.dot_dimension_numbers<[1], [0], [0], [1], [0, 0, 1, 1], [], []>} : vector<8x8xf32>, vector<8x16xf32>, vector<8x16xf32> -> vector<8x16xf32>
    %191 = arith.truncf %190 : vector<8x16xf32> to vector<8x16xbf16>
    %192 = vector.extract_strided_slice %14 {offsets = [112, 0], sizes = [16, 128], strides = [1, 1]} : vector<128x128xbf16> to vector<16x128xbf16>
    %cst_63 = arith.constant dense<0.000000e+00> : vector<8x128xf32>
    %193 = tpu.matmul %191, %192, %cst_63 {dimension_numbers = #tpu.dot_dimension_numbers<[1], [0], [0], [1], [0, 0, 1, 1], [], []>} : vector<8x16xbf16>, vector<16x128xbf16>, vector<8x128xf32> -> vector<8x128xf32>
    %194 = arith.addf %172, %193 : vector<8x128xf32>
    %c0_64 = arith.constant 0 : index
    %c0_65 = arith.constant 0 : index
    %195 = vector.load %arg23[%c0_64, %c0_65] : memref<16x128xf32, #tpu.memory_space<vmem>>, vector<8x128xf32>
    tpu.vector_store %arg23[%c0_64, %c0_65], %194 {strides = array<i32>} : memref<16x128xf32, #tpu.memory_space<vmem>>, vector<8x128xf32>,
    %c1 = arith.constant 1 : index
    %c0_66 = arith.constant 0 : index
    %196 = vector.load %arg3[%c1, %c0_66] : memref<2x8xf32, #tpu.memory_space<vmem>>, vector<1x8xf32>
    %197 = vector.broadcast %196 : vector<1x8xf32> to vector<8x8xf32>
    %198 = arith.addf %4, %197 : vector<8x8xf32>
    %cst_67 = arith.constant 0.000000e+00 : f32
    %199 = vector.broadcast %cst_67 : f32 to vector<8x128xf32>
    %200 = vector.extract_strided_slice %12 {offsets = [8, 0], sizes = [8, 16], strides = [1, 1]} : vector<16x384xf32> to vector<8x16xf32>
    %cst_68 = arith.constant 2.500000e-01 : f32
    %201 = vector.broadcast %cst_68 : f32 to vector<8x16xf32>
    %202 = arith.mulf %200, %201 : vector<8x16xf32>
    %203 = vector.extract_strided_slice %12 {offsets = [8, 128], sizes = [8, 16], strides = [1, 1]} : vector<16x384xf32> to vector<8x16xf32>
    %204 = vector.extract_strided_slice %12 {offsets = [8, 256], sizes = [8, 16], strides = [1, 1]} : vector<16x384xf32> to vector<8x16xf32>
    %cst_69 = arith.constant dense<0.000000e+00> : vector<8x8xf32>
    %205 = tpu.matmul %202, %203, %cst_69 {dimension_numbers = #tpu.dot_dimension_numbers<[1], [1], [0], [0], [0, 0, 1, 0], [], []>} : vector<8x16xf32>, vector<8x16xf32>, vector<8x8xf32> -> vector<8x8xf32>
    %206 = arith.addf %205, %198 : vector<8x8xf32>
    %cst_70 = arith.constant dense<0xFF800000> : vector<8xf32>
    %207 = vector.multi_reduction <maximumf>, %206, %cst_70 [1] : vector<8x8xf32> to vector<8xf32>
    %208 = vector.shape_cast %207 : vector<8xf32> to vector<8x1xf32>
    %209 = vector.broadcast %208 : vector<8x1xf32> to vector<8x8xf32>
    %210 = arith.subf %206, %209 : vector<8x8xf32>
    %211 = math.exp %210 : vector<8x8xf32>
    %cst_71 = arith.constant dense<0.000000e+00> : vector<8xf32>
    %212 = vector.multi_reduction <add>, %211, %cst_71 [1] : vector<8x8xf32> to vector<8xf32>
    %213 = vector.shape_cast %212 : vector<8xf32> to vector<8x1xf32>
    %214 = tpu.reciprocal %213 {approx = true} : vector<8x1xf32> -> vector<8x1xf32>
    %215 = vector.broadcast %214 : vector<8x1xf32> to vector<8x8xf32>
    %216 = arith.mulf %211, %215 : vector<8x8xf32>
    %cst_72 = arith.constant dense<0.000000e+00> : vector<8x16xf32>
    %217 = tpu.matmul %216, %204, %cst_72 {dimension_numbers = #tpu.dot_dimension_numbers<[1], [0], [0], [1], [0, 0, 1, 1], [], []>} : vector<8x8xf32>, vector<8x16xf32>, vector<8x16xf32> -> vector<8x16xf32>
    %218 = arith.truncf %217 : vector<8x16xf32> to vector<8x16xbf16>
    %219 = vector.extract_strided_slice %14 {offsets = [0, 0], sizes = [16, 128], strides = [1, 1]} : vector<128x128xbf16> to vector<16x128xbf16>
    %cst_73 = arith.constant dense<0.000000e+00> : vector<8x128xf32>
    %220 = tpu.matmul %218, %219, %cst_73 {dimension_numbers = #tpu.dot_dimension_numbers<[1], [0], [0], [1], [0, 0, 1, 1], [], []>} : vector<8x16xbf16>, vector<16x128xbf16>, vector<8x128xf32> -> vector<8x128xf32>
    %221 = arith.addf %199, %220 : vector<8x128xf32>
    %222 = vector.extract_strided_slice %12 {offsets = [8, 16], sizes = [8, 16], strides = [1, 1]} : vector<16x384xf32> to vector<8x16xf32>
    %cst_74 = arith.constant 2.500000e-01 : f32
    %223 = vector.broadcast %cst_74 : f32 to vector<8x16xf32>
    %224 = arith.mulf %222, %223 : vector<8x16xf32>
    %225 = vector.extract_strided_slice %12 {offsets = [8, 144], sizes = [8, 16], strides = [1, 1]} : vector<16x384xf32> to vector<8x16xf32>
    %226 = vector.extract_strided_slice %12 {offsets = [8, 272], sizes = [8, 16], strides = [1, 1]} : vector<16x384xf32> to vector<8x16xf32>
    %cst_75 = arith.constant dense<0.000000e+00> : vector<8x8xf32>
    %227 = tpu.matmul %224, %225, %cst_75 {dimension_numbers = #tpu.dot_dimension_numbers<[1], [1], [0], [0], [0, 0, 1, 0], [], []>} : vector<8x16xf32>, vector<8x16xf32>, vector<8x8xf32> -> vector<8x8xf32>
    %228 = arith.addf %227, %198 : vector<8x8xf32>
    %cst_76 = arith.constant dense<0xFF800000> : vector<8xf32>
    %229 = vector.multi_reduction <maximumf>, %228, %cst_76 [1] : vector<8x8xf32> to vector<8xf32>
    %230 = vector.shape_cast %229 : vector<8xf32> to vector<8x1xf32>
    %231 = vector.broadcast %230 : vector<8x1xf32> to vector<8x8xf32>
    %232 = arith.subf %228, %231 : vector<8x8xf32>
    %233 = math.exp %232 : vector<8x8xf32>
    %cst_77 = arith.constant dense<0.000000e+00> : vector<8xf32>
    %234 = vector.multi_reduction <add>, %233, %cst_77 [1] : vector<8x8xf32> to vector<8xf32>
    %235 = vector.shape_cast %234 : vector<8xf32> to vector<8x1xf32>
    %236 = tpu.reciprocal %235 {approx = true} : vector<8x1xf32> -> vector<8x1xf32>
    %237 = vector.broadcast %236 : vector<8x1xf32> to vector<8x8xf32>
    %238 = arith.mulf %233, %237 : vector<8x8xf32>
    %cst_78 = arith.constant dense<0.000000e+00> : vector<8x16xf32>
    %239 = tpu.matmul %238, %226, %cst_78 {dimension_numbers = #tpu.dot_dimension_numbers<[1], [0], [0], [1], [0, 0, 1, 1], [], []>} : vector<8x8xf32>, vector<8x16xf32>, vector<8x16xf32> -> vector<8x16xf32>
    %240 = arith.truncf %239 : vector<8x16xf32> to vector<8x16xbf16>
    %241 = vector.extract_strided_slice %14 {offsets = [16, 0], sizes = [16, 128], strides = [1, 1]} : vector<128x128xbf16> to vector<16x128xbf16>
    %cst_79 = arith.constant dense<0.000000e+00> : vector<8x128xf32>
    %242 = tpu.matmul %240, %241, %cst_79 {dimension_numbers = #tpu.dot_dimension_numbers<[1], [0], [0], [1], [0, 0, 1, 1], [], []>} : vector<8x16xbf16>, vector<16x128xbf16>, vector<8x128xf32> -> vector<8x128xf32>
    %243 = arith.addf %221, %242 : vector<8x128xf32>
    %244 = vector.extract_strided_slice %12 {offsets = [8, 32], sizes = [8, 16], strides = [1, 1]} : vector<16x384xf32> to vector<8x16xf32>
    %cst_80 = arith.constant 2.500000e-01 : f32
    %245 = vector.broadcast %cst_80 : f32 to vector<8x16xf32>
    %246 = arith.mulf %244, %245 : vector<8x16xf32>
    %247 = vector.extract_strided_slice %12 {offsets = [8, 160], sizes = [8, 16], strides = [1, 1]} : vector<16x384xf32> to vector<8x16xf32>
    %248 = vector.extract_strided_slice %12 {offsets = [8, 288], sizes = [8, 16], strides = [1, 1]} : vector<16x384xf32> to vector<8x16xf32>
    %cst_81 = arith.constant dense<0.000000e+00> : vector<8x8xf32>
    %249 = tpu.matmul %246, %247, %cst_81 {dimension_numbers = #tpu.dot_dimension_numbers<[1], [1], [0], [0], [0, 0, 1, 0], [], []>} : vector<8x16xf32>, vector<8x16xf32>, vector<8x8xf32> -> vector<8x8xf32>
    %250 = arith.addf %249, %198 : vector<8x8xf32>
    %cst_82 = arith.constant dense<0xFF800000> : vector<8xf32>
    %251 = vector.multi_reduction <maximumf>, %250, %cst_82 [1] : vector<8x8xf32> to vector<8xf32>
    %252 = vector.shape_cast %251 : vector<8xf32> to vector<8x1xf32>
    %253 = vector.broadcast %252 : vector<8x1xf32> to vector<8x8xf32>
    %254 = arith.subf %250, %253 : vector<8x8xf32>
    %255 = math.exp %254 : vector<8x8xf32>
    %cst_83 = arith.constant dense<0.000000e+00> : vector<8xf32>
    %256 = vector.multi_reduction <add>, %255, %cst_83 [1] : vector<8x8xf32> to vector<8xf32>
    %257 = vector.shape_cast %256 : vector<8xf32> to vector<8x1xf32>
    %258 = tpu.reciprocal %257 {approx = true} : vector<8x1xf32> -> vector<8x1xf32>
    %259 = vector.broadcast %258 : vector<8x1xf32> to vector<8x8xf32>
    %260 = arith.mulf %255, %259 : vector<8x8xf32>
    %cst_84 = arith.constant dense<0.000000e+00> : vector<8x16xf32>
    %261 = tpu.matmul %260, %248, %cst_84 {dimension_numbers = #tpu.dot_dimension_numbers<[1], [0], [0], [1], [0, 0, 1, 1], [], []>} : vector<8x8xf32>, vector<8x16xf32>, vector<8x16xf32> -> vector<8x16xf32>
    %262 = arith.truncf %261 : vector<8x16xf32> to vector<8x16xbf16>
    %263 = vector.extract_strided_slice %14 {offsets = [32, 0], sizes = [16, 128], strides = [1, 1]} : vector<128x128xbf16> to vector<16x128xbf16>
    %cst_85 = arith.constant dense<0.000000e+00> : vector<8x128xf32>
    %264 = tpu.matmul %262, %263, %cst_85 {dimension_numbers = #tpu.dot_dimension_numbers<[1], [0], [0], [1], [0, 0, 1, 1], [], []>} : vector<8x16xbf16>, vector<16x128xbf16>, vector<8x128xf32> -> vector<8x128xf32>
    %265 = arith.addf %243, %264 : vector<8x128xf32>
    %266 = vector.extract_strided_slice %12 {offsets = [8, 48], sizes = [8, 16], strides = [1, 1]} : vector<16x384xf32> to vector<8x16xf32>
    %cst_86 = arith.constant 2.500000e-01 : f32
    %267 = vector.broadcast %cst_86 : f32 to vector<8x16xf32>
    %268 = arith.mulf %266, %267 : vector<8x16xf32>
    %269 = vector.extract_strided_slice %12 {offsets = [8, 176], sizes = [8, 16], strides = [1, 1]} : vector<16x384xf32> to vector<8x16xf32>
    %270 = vector.extract_strided_slice %12 {offsets = [8, 304], sizes = [8, 16], strides = [1, 1]} : vector<16x384xf32> to vector<8x16xf32>
    %cst_87 = arith.constant dense<0.000000e+00> : vector<8x8xf32>
    %271 = tpu.matmul %268, %269, %cst_87 {dimension_numbers = #tpu.dot_dimension_numbers<[1], [1], [0], [0], [0, 0, 1, 0], [], []>} : vector<8x16xf32>, vector<8x16xf32>, vector<8x8xf32> -> vector<8x8xf32>
    %272 = arith.addf %271, %198 : vector<8x8xf32>
    %cst_88 = arith.constant dense<0xFF800000> : vector<8xf32>
    %273 = vector.multi_reduction <maximumf>, %272, %cst_88 [1] : vector<8x8xf32> to vector<8xf32>
    %274 = vector.shape_cast %273 : vector<8xf32> to vector<8x1xf32>
    %275 = vector.broadcast %274 : vector<8x1xf32> to vector<8x8xf32>
    %276 = arith.subf %272, %275 : vector<8x8xf32>
    %277 = math.exp %276 : vector<8x8xf32>
    %cst_89 = arith.constant dense<0.000000e+00> : vector<8xf32>
    %278 = vector.multi_reduction <add>, %277, %cst_89 [1] : vector<8x8xf32> to vector<8xf32>
    %279 = vector.shape_cast %278 : vector<8xf32> to vector<8x1xf32>
    %280 = tpu.reciprocal %279 {approx = true} : vector<8x1xf32> -> vector<8x1xf32>
    %281 = vector.broadcast %280 : vector<8x1xf32> to vector<8x8xf32>
    %282 = arith.mulf %277, %281 : vector<8x8xf32>
    %cst_90 = arith.constant dense<0.000000e+00> : vector<8x16xf32>
    %283 = tpu.matmul %282, %270, %cst_90 {dimension_numbers = #tpu.dot_dimension_numbers<[1], [0], [0], [1], [0, 0, 1, 1], [], []>} : vector<8x8xf32>, vector<8x16xf32>, vector<8x16xf32> -> vector<8x16xf32>
    %284 = arith.truncf %283 : vector<8x16xf32> to vector<8x16xbf16>
    %285 = vector.extract_strided_slice %14 {offsets = [48, 0], sizes = [16, 128], strides = [1, 1]} : vector<128x128xbf16> to vector<16x128xbf16>
    %cst_91 = arith.constant dense<0.000000e+00> : vector<8x128xf32>
    %286 = tpu.matmul %284, %285, %cst_91 {dimension_numbers = #tpu.dot_dimension_numbers<[1], [0], [0], [1], [0, 0, 1, 1], [], []>} : vector<8x16xbf16>, vector<16x128xbf16>, vector<8x128xf32> -> vector<8x128xf32>
    %287 = arith.addf %265, %286 : vector<8x128xf32>
    %288 = vector.extract_strided_slice %12 {offsets = [8, 64], sizes = [8, 16], strides = [1, 1]} : vector<16x384xf32> to vector<8x16xf32>
    %cst_92 = arith.constant 2.500000e-01 : f32
    %289 = vector.broadcast %cst_92 : f32 to vector<8x16xf32>
    %290 = arith.mulf %288, %289 : vector<8x16xf32>
    %291 = vector.extract_strided_slice %12 {offsets = [8, 192], sizes = [8, 16], strides = [1, 1]} : vector<16x384xf32> to vector<8x16xf32>
    %292 = vector.extract_strided_slice %12 {offsets = [8, 320], sizes = [8, 16], strides = [1, 1]} : vector<16x384xf32> to vector<8x16xf32>
    %cst_93 = arith.constant dense<0.000000e+00> : vector<8x8xf32>
    %293 = tpu.matmul %290, %291, %cst_93 {dimension_numbers = #tpu.dot_dimension_numbers<[1], [1], [0], [0], [0, 0, 1, 0], [], []>} : vector<8x16xf32>, vector<8x16xf32>, vector<8x8xf32> -> vector<8x8xf32>
    %294 = arith.addf %293, %198 : vector<8x8xf32>
    %cst_94 = arith.constant dense<0xFF800000> : vector<8xf32>
    %295 = vector.multi_reduction <maximumf>, %294, %cst_94 [1] : vector<8x8xf32> to vector<8xf32>
    %296 = vector.shape_cast %295 : vector<8xf32> to vector<8x1xf32>
    %297 = vector.broadcast %296 : vector<8x1xf32> to vector<8x8xf32>
    %298 = arith.subf %294, %297 : vector<8x8xf32>
    %299 = math.exp %298 : vector<8x8xf32>
    %cst_95 = arith.constant dense<0.000000e+00> : vector<8xf32>
    %300 = vector.multi_reduction <add>, %299, %cst_95 [1] : vector<8x8xf32> to vector<8xf32>
    %301 = vector.shape_cast %300 : vector<8xf32> to vector<8x1xf32>
    %302 = tpu.reciprocal %301 {approx = true} : vector<8x1xf32> -> vector<8x1xf32>
    %303 = vector.broadcast %302 : vector<8x1xf32> to vector<8x8xf32>
    %304 = arith.mulf %299, %303 : vector<8x8xf32>
    %cst_96 = arith.constant dense<0.000000e+00> : vector<8x16xf32>
    %305 = tpu.matmul %304, %292, %cst_96 {dimension_numbers = #tpu.dot_dimension_numbers<[1], [0], [0], [1], [0, 0, 1, 1], [], []>} : vector<8x8xf32>, vector<8x16xf32>, vector<8x16xf32> -> vector<8x16xf32>
    %306 = arith.truncf %305 : vector<8x16xf32> to vector<8x16xbf16>
    %307 = vector.extract_strided_slice %14 {offsets = [64, 0], sizes = [16, 128], strides = [1, 1]} : vector<128x128xbf16> to vector<16x128xbf16>
    %cst_97 = arith.constant dense<0.000000e+00> : vector<8x128xf32>
    %308 = tpu.matmul %306, %307, %cst_97 {dimension_numbers = #tpu.dot_dimension_numbers<[1], [0], [0], [1], [0, 0, 1, 1], [], []>} : vector<8x16xbf16>, vector<16x128xbf16>, vector<8x128xf32> -> vector<8x128xf32>
    %309 = arith.addf %287, %308 : vector<8x128xf32>
    %310 = vector.extract_strided_slice %12 {offsets = [8, 80], sizes = [8, 16], strides = [1, 1]} : vector<16x384xf32> to vector<8x16xf32>
    %cst_98 = arith.constant 2.500000e-01 : f32
    %311 = vector.broadcast %cst_98 : f32 to vector<8x16xf32>
    %312 = arith.mulf %310, %311 : vector<8x16xf32>
    %313 = vector.extract_strided_slice %12 {offsets = [8, 208], sizes = [8, 16], strides = [1, 1]} : vector<16x384xf32> to vector<8x16xf32>
    %314 = vector.extract_strided_slice %12 {offsets = [8, 336], sizes = [8, 16], strides = [1, 1]} : vector<16x384xf32> to vector<8x16xf32>
    %cst_99 = arith.constant dense<0.000000e+00> : vector<8x8xf32>
    %315 = tpu.matmul %312, %313, %cst_99 {dimension_numbers = #tpu.dot_dimension_numbers<[1], [1], [0], [0], [0, 0, 1, 0], [], []>} : vector<8x16xf32>, vector<8x16xf32>, vector<8x8xf32> -> vector<8x8xf32>
    %316 = arith.addf %315, %198 : vector<8x8xf32>
    %cst_100 = arith.constant dense<0xFF800000> : vector<8xf32>
    %317 = vector.multi_reduction <maximumf>, %316, %cst_100 [1] : vector<8x8xf32> to vector<8xf32>
    %318 = vector.shape_cast %317 : vector<8xf32> to vector<8x1xf32>
    %319 = vector.broadcast %318 : vector<8x1xf32> to vector<8x8xf32>
    %320 = arith.subf %316, %319 : vector<8x8xf32>
    %321 = math.exp %320 : vector<8x8xf32>
    %cst_101 = arith.constant dense<0.000000e+00> : vector<8xf32>
    %322 = vector.multi_reduction <add>, %321, %cst_101 [1] : vector<8x8xf32> to vector<8xf32>
    %323 = vector.shape_cast %322 : vector<8xf32> to vector<8x1xf32>
    %324 = tpu.reciprocal %323 {approx = true} : vector<8x1xf32> -> vector<8x1xf32>
    %325 = vector.broadcast %324 : vector<8x1xf32> to vector<8x8xf32>
    %326 = arith.mulf %321, %325 : vector<8x8xf32>
    %cst_102 = arith.constant dense<0.000000e+00> : vector<8x16xf32>
    %327 = tpu.matmul %326, %314, %cst_102 {dimension_numbers = #tpu.dot_dimension_numbers<[1], [0], [0], [1], [0, 0, 1, 1], [], []>} : vector<8x8xf32>, vector<8x16xf32>, vector<8x16xf32> -> vector<8x16xf32>
    %328 = arith.truncf %327 : vector<8x16xf32> to vector<8x16xbf16>
    %329 = vector.extract_strided_slice %14 {offsets = [80, 0], sizes = [16, 128], strides = [1, 1]} : vector<128x128xbf16> to vector<16x128xbf16>
    %cst_103 = arith.constant dense<0.000000e+00> : vector<8x128xf32>
    %330 = tpu.matmul %328, %329, %cst_103 {dimension_numbers = #tpu.dot_dimension_numbers<[1], [0], [0], [1], [0, 0, 1, 1], [], []>} : vector<8x16xbf16>, vector<16x128xbf16>, vector<8x128xf32> -> vector<8x128xf32>
    %331 = arith.addf %309, %330 : vector<8x128xf32>
    %332 = vector.extract_strided_slice %12 {offsets = [8, 96], sizes = [8, 16], strides = [1, 1]} : vector<16x384xf32> to vector<8x16xf32>
    %cst_104 = arith.constant 2.500000e-01 : f32
    %333 = vector.broadcast %cst_104 : f32 to vector<8x16xf32>
    %334 = arith.mulf %332, %333 : vector<8x16xf32>
    %335 = vector.extract_strided_slice %12 {offsets = [8, 224], sizes = [8, 16], strides = [1, 1]} : vector<16x384xf32> to vector<8x16xf32>
    %336 = vector.extract_strided_slice %12 {offsets = [8, 352], sizes = [8, 16], strides = [1, 1]} : vector<16x384xf32> to vector<8x16xf32>
    %cst_105 = arith.constant dense<0.000000e+00> : vector<8x8xf32>
    %337 = tpu.matmul %334, %335, %cst_105 {dimension_numbers = #tpu.dot_dimension_numbers<[1], [1], [0], [0], [0, 0, 1, 0], [], []>} : vector<8x16xf32>, vector<8x16xf32>, vector<8x8xf32> -> vector<8x8xf32>
    %338 = arith.addf %337, %198 : vector<8x8xf32>
    %cst_106 = arith.constant dense<0xFF800000> : vector<8xf32>
    %339 = vector.multi_reduction <maximumf>, %338, %cst_106 [1] : vector<8x8xf32> to vector<8xf32>
    %340 = vector.shape_cast %339 : vector<8xf32> to vector<8x1xf32>
    %341 = vector.broadcast %340 : vector<8x1xf32> to vector<8x8xf32>
    %342 = arith.subf %338, %341 : vector<8x8xf32>
    %343 = math.exp %342 : vector<8x8xf32>
    %cst_107 = arith.constant dense<0.000000e+00> : vector<8xf32>
    %344 = vector.multi_reduction <add>, %343, %cst_107 [1] : vector<8x8xf32> to vector<8xf32>
    %345 = vector.shape_cast %344 : vector<8xf32> to vector<8x1xf32>
    %346 = tpu.reciprocal %345 {approx = true} : vector<8x1xf32> -> vector<8x1xf32>
    %347 = vector.broadcast %346 : vector<8x1xf32> to vector<8x8xf32>
    %348 = arith.mulf %343, %347 : vector<8x8xf32>
    %cst_108 = arith.constant dense<0.000000e+00> : vector<8x16xf32>
    %349 = tpu.matmul %348, %336, %cst_108 {dimension_numbers = #tpu.dot_dimension_numbers<[1], [0], [0], [1], [0, 0, 1, 1], [], []>} : vector<8x8xf32>, vector<8x16xf32>, vector<8x16xf32> -> vector<8x16xf32>
    %350 = arith.truncf %349 : vector<8x16xf32> to vector<8x16xbf16>
    %351 = vector.extract_strided_slice %14 {offsets = [96, 0], sizes = [16, 128], strides = [1, 1]} : vector<128x128xbf16> to vector<16x128xbf16>
    %cst_109 = arith.constant dense<0.000000e+00> : vector<8x128xf32>
    %352 = tpu.matmul %350, %351, %cst_109 {dimension_numbers = #tpu.dot_dimension_numbers<[1], [0], [0], [1], [0, 0, 1, 1], [], []>} : vector<8x16xbf16>, vector<16x128xbf16>, vector<8x128xf32> -> vector<8x128xf32>
    %353 = arith.addf %331, %352 : vector<8x128xf32>
    %354 = vector.extract_strided_slice %12 {offsets = [8, 112], sizes = [8, 16], strides = [1, 1]} : vector<16x384xf32> to vector<8x16xf32>
    %cst_110 = arith.constant 2.500000e-01 : f32
    %355 = vector.broadcast %cst_110 : f32 to vector<8x16xf32>
    %356 = arith.mulf %354, %355 : vector<8x16xf32>
    %357 = vector.extract_strided_slice %12 {offsets = [8, 240], sizes = [8, 16], strides = [1, 1]} : vector<16x384xf32> to vector<8x16xf32>
    %358 = vector.extract_strided_slice %12 {offsets = [8, 368], sizes = [8, 16], strides = [1, 1]} : vector<16x384xf32> to vector<8x16xf32>
    %cst_111 = arith.constant dense<0.000000e+00> : vector<8x8xf32>
    %359 = tpu.matmul %356, %357, %cst_111 {dimension_numbers = #tpu.dot_dimension_numbers<[1], [1], [0], [0], [0, 0, 1, 0], [], []>} : vector<8x16xf32>, vector<8x16xf32>, vector<8x8xf32> -> vector<8x8xf32>
    %360 = arith.addf %359, %198 : vector<8x8xf32>
    %cst_112 = arith.constant dense<0xFF800000> : vector<8xf32>
    %361 = vector.multi_reduction <maximumf>, %360, %cst_112 [1] : vector<8x8xf32> to vector<8xf32>
    %362 = vector.shape_cast %361 : vector<8xf32> to vector<8x1xf32>
    %363 = vector.broadcast %362 : vector<8x1xf32> to vector<8x8xf32>
    %364 = arith.subf %360, %363 : vector<8x8xf32>
    %365 = math.exp %364 : vector<8x8xf32>
    %cst_113 = arith.constant dense<0.000000e+00> : vector<8xf32>
    %366 = vector.multi_reduction <add>, %365, %cst_113 [1] : vector<8x8xf32> to vector<8xf32>
    %367 = vector.shape_cast %366 : vector<8xf32> to vector<8x1xf32>
    %368 = tpu.reciprocal %367 {approx = true} : vector<8x1xf32> -> vector<8x1xf32>
    %369 = vector.broadcast %368 : vector<8x1xf32> to vector<8x8xf32>
    %370 = arith.mulf %365, %369 : vector<8x8xf32>
    %cst_114 = arith.constant dense<0.000000e+00> : vector<8x16xf32>
    %371 = tpu.matmul %370, %358, %cst_114 {dimension_numbers = #tpu.dot_dimension_numbers<[1], [0], [0], [1], [0, 0, 1, 1], [], []>} : vector<8x8xf32>, vector<8x16xf32>, vector<8x16xf32> -> vector<8x16xf32>
    %372 = arith.truncf %371 : vector<8x16xf32> to vector<8x16xbf16>
    %373 = vector.extract_strided_slice %14 {offsets = [112, 0], sizes = [16, 128], strides = [1, 1]} : vector<128x128xbf16> to vector<16x128xbf16>
    %cst_115 = arith.constant dense<0.000000e+00> : vector<8x128xf32>
    %374 = tpu.matmul %372, %373, %cst_115 {dimension_numbers = #tpu.dot_dimension_numbers<[1], [0], [0], [1], [0, 0, 1, 1], [], []>} : vector<8x16xbf16>, vector<16x128xbf16>, vector<8x128xf32> -> vector<8x128xf32>
    %375 = arith.addf %353, %374 : vector<8x128xf32>
    %c8 = arith.constant 8 : index
    %c0_116 = arith.constant 0 : index
    %376 = vector.load %arg23[%c8, %c0_116] : memref<16x128xf32, #tpu.memory_space<vmem>>, vector<8x128xf32>
    tpu.vector_store %arg23[%c8, %c0_116], %375 {strides = array<i32>} : memref<16x128xf32, #tpu.memory_space<vmem>>, vector<8x128xf32>,
    %c0_117 = arith.constant 0 : index
    %c0_118 = arith.constant 0 : index
    %377 = vector.load %arg23[%c0_117, %c0_118] : memref<16x128xf32, #tpu.memory_space<vmem>>, vector<16x128xf32>
    %c0_119 = arith.constant 0 : index
    %c0_120 = arith.constant 0 : index
    %c0_121 = arith.constant 0 : index
    %378 = vector.load %arg8[%c0_119, %c0_120, %c0_121] : memref<1x1x128xf32, #tpu.memory_space<vmem>>, vector<1x1x128xf32>
    %379 = vector.shape_cast %378 : vector<1x1x128xf32> to vector<1x128xf32>
    %380 = vector.broadcast %379 : vector<1x128xf32> to vector<16x128xf32>
    %381 = arith.addf %377, %380 : vector<16x128xf32>
    %382 = arith.addf %3, %381 : vector<16x128xf32>
    %c0_122 = arith.constant 0 : index
    %c0_123 = arith.constant 0 : index
    %c0_124 = arith.constant 0 : index
    %383 = vector.load %arg9[%c0_122, %c0_123, %c0_124] : memref<1x1x128xf32, #tpu.memory_space<vmem>>, vector<1x1x128xf32>
    %384 = vector.shape_cast %383 : vector<1x1x128xf32> to vector<1x128xf32>
    %c0_125 = arith.constant 0 : index
    %c0_126 = arith.constant 0 : index
    %c0_127 = arith.constant 0 : index
    %385 = vector.load %arg10[%c0_125, %c0_126, %c0_127] : memref<1x1x128xf32, #tpu.memory_space<vmem>>, vector<1x1x128xf32>
    %386 = vector.shape_cast %385 : vector<1x1x128xf32> to vector<1x128xf32>
    %cst_128 = arith.constant dense<0.000000e+00> : vector<16xf32>
    %387 = vector.multi_reduction <add>, %382, %cst_128 [1] : vector<16x128xf32> to vector<16xf32>
    %388 = vector.shape_cast %387 : vector<16xf32> to vector<16x1xf32>
    %cst_129 = arith.constant 1.280000e+02 : f32
    %389 = vector.broadcast %cst_129 : f32 to vector<16x1xf32>
    %390 = arith.divf %388, %389 : vector<16x1xf32>
    %391 = vector.broadcast %390 : vector<16x1xf32> to vector<16x128xf32>
    %392 = arith.subf %382, %391 : vector<16x128xf32>
    %393 = arith.mulf %392, %392 : vector<16x128xf32>
    %cst_130 = arith.constant dense<0.000000e+00> : vector<16xf32>
    %394 = vector.multi_reduction <add>, %393, %cst_130 [1] : vector<16x128xf32> to vector<16xf32>
    %395 = vector.shape_cast %394 : vector<16xf32> to vector<16x1xf32>
    %cst_131 = arith.constant 1.280000e+02 : f32
    %396 = vector.broadcast %cst_131 : f32 to vector<16x1xf32>
    %397 = arith.divf %395, %396 : vector<16x1xf32>
    %398 = vector.broadcast %390 : vector<16x1xf32> to vector<16x128xf32>
    %399 = arith.subf %382, %398 : vector<16x128xf32>
    %cst_132 = arith.constant 9.99999974E-6 : f32
    %400 = vector.broadcast %cst_132 : f32 to vector<16x1xf32>
    %401 = arith.addf %397, %400 : vector<16x1xf32>
    %402 = math.rsqrt %401 : vector<16x1xf32>
    %403 = vector.broadcast %402 : vector<16x1xf32> to vector<16x128xf32>
    %404 = arith.mulf %399, %403 : vector<16x128xf32>
    %405 = vector.broadcast %384 : vector<1x128xf32> to vector<16x128xf32>
    %406 = arith.mulf %404, %405 : vector<16x128xf32>
    %407 = vector.broadcast %386 : vector<1x128xf32> to vector<16x128xf32>
    %408 = arith.addf %406, %407 : vector<16x128xf32>
    %409 = arith.truncf %408 : vector<16x128xf32> to vector<16x128xbf16>
    %c0_133 = arith.constant 0 : index
    %c0_134 = arith.constant 0 : index
    %c0_135 = arith.constant 0 : index
    %410 = vector.load %arg11[%c0_133, %c0_134, %c0_135] : memref<1x128x2048xbf16, #tpu.memory_space<vmem>>, vector<1x128x2048xbf16>
    %411 = vector.shape_cast %410 : vector<1x128x2048xbf16> to vector<128x2048xbf16>
    %cst_136 = arith.constant dense<0.000000e+00> : vector<16x2048xf32>
    %412 = tpu.matmul %409, %411, %cst_136 {dimension_numbers = #tpu.dot_dimension_numbers<[1], [0], [0], [1], [0, 0, 1, 1], [], []>} : vector<16x128xbf16>, vector<128x2048xbf16>, vector<16x2048xf32> -> vector<16x2048xf32>
    %c0_137 = arith.constant 0 : index
    %c0_138 = arith.constant 0 : index
    %c0_139 = arith.constant 0 : index
    %413 = vector.load %arg12[%c0_137, %c0_138, %c0_139] : memref<1x1x2048xf32, #tpu.memory_space<vmem>>, vector<1x1x2048xf32>
    %414 = vector.shape_cast %413 : vector<1x1x2048xf32> to vector<1x2048xf32>
    %415 = vector.broadcast %414 : vector<1x2048xf32> to vector<16x2048xf32>
    %416 = arith.addf %412, %415 : vector<16x2048xf32>
    %cst_140 = arith.constant 0.000000e+00 : f32
    %417 = vector.broadcast %cst_140 : f32 to vector<16x2048xf32>
    %418 = arith.maximumf %416, %417 : vector<16x2048xf32>
    %419 = arith.truncf %418 : vector<16x2048xf32> to vector<16x2048xbf16>
    %c0_141 = arith.constant 0 : index
    %c0_142 = arith.constant 0 : index
    %c0_143 = arith.constant 0 : index
    %420 = vector.load %arg13[%c0_141, %c0_142, %c0_143] : memref<1x2048x128xbf16, #tpu.memory_space<vmem>>, vector<1x2048x128xbf16>
    %421 = vector.shape_cast %420 : vector<1x2048x128xbf16> to vector<2048x128xbf16>
    %cst_144 = arith.constant dense<0.000000e+00> : vector<16x128xf32>
    %422 = tpu.matmul %419, %421, %cst_144 {dimension_numbers = #tpu.dot_dimension_numbers<[1], [0], [0], [1], [0, 0, 1, 1], [], []>} : vector<16x2048xbf16>, vector<2048x128xbf16>, vector<16x128xf32> -> vector<16x128xf32>
    %c0_145 = arith.constant 0 : index
    %c0_146 = arith.constant 0 : index
    %c0_147 = arith.constant 0 : index
    %423 = vector.load %arg14[%c0_145, %c0_146, %c0_147] : memref<1x1x128xf32, #tpu.memory_space<vmem>>, vector<1x1x128xf32>
    %424 = vector.shape_cast %423 : vector<1x1x128xf32> to vector<1x128xf32>
    %425 = vector.broadcast %424 : vector<1x128xf32> to vector<16x128xf32>
    %426 = arith.addf %422, %425 : vector<16x128xf32>
    %427 = arith.addf %408, %426 : vector<16x128xf32>
    %c0_148 = arith.constant 0 : index
    %c0_149 = arith.constant 0 : index
    %c0_150 = arith.constant 0 : index
    %428 = vector.load %arg15[%c0_148, %c0_149, %c0_150] : memref<1x1x128xf32, #tpu.memory_space<vmem>>, vector<1x1x128xf32>
    %429 = vector.shape_cast %428 : vector<1x1x128xf32> to vector<1x128xf32>
    %c0_151 = arith.constant 0 : index
    %c0_152 = arith.constant 0 : index
    %c0_153 = arith.constant 0 : index
    %430 = vector.load %arg16[%c0_151, %c0_152, %c0_153] : memref<1x1x128xf32, #tpu.memory_space<vmem>>, vector<1x1x128xf32>
    %431 = vector.shape_cast %430 : vector<1x1x128xf32> to vector<1x128xf32>
    %cst_154 = arith.constant dense<0.000000e+00> : vector<16xf32>
    %432 = vector.multi_reduction <add>, %427, %cst_154 [1] : vector<16x128xf32> to vector<16xf32>
    %433 = vector.shape_cast %432 : vector<16xf32> to vector<16x1xf32>
    %cst_155 = arith.constant 1.280000e+02 : f32
    %434 = vector.broadcast %cst_155 : f32 to vector<16x1xf32>
    %435 = arith.divf %433, %434 : vector<16x1xf32>
    %436 = vector.broadcast %435 : vector<16x1xf32> to vector<16x128xf32>
    %437 = arith.subf %427, %436 : vector<16x128xf32>
    %438 = arith.mulf %437, %437 : vector<16x128xf32>
    %cst_156 = arith.constant dense<0.000000e+00> : vector<16xf32>
    %439 = vector.multi_reduction <add>, %438, %cst_156 [1] : vector<16x128xf32> to vector<16xf32>
    %440 = vector.shape_cast %439 : vector<16xf32> to vector<16x1xf32>
    %cst_157 = arith.constant 1.280000e+02 : f32
    %441 = vector.broadcast %cst_157 : f32 to vector<16x1xf32>
    %442 = arith.divf %440, %441 : vector<16x1xf32>
    %443 = vector.broadcast %435 : vector<16x1xf32> to vector<16x128xf32>
    %444 = arith.subf %427, %443 : vector<16x128xf32>
    %cst_158 = arith.constant 9.99999974E-6 : f32
    %445 = vector.broadcast %cst_158 : f32 to vector<16x1xf32>
    %446 = arith.addf %442, %445 : vector<16x1xf32>
    %447 = math.rsqrt %446 : vector<16x1xf32>
    %448 = vector.broadcast %447 : vector<16x1xf32> to vector<16x128xf32>
    %449 = arith.mulf %444, %448 : vector<16x128xf32>
    %450 = vector.broadcast %429 : vector<1x128xf32> to vector<16x128xf32>
    %451 = arith.mulf %449, %450 : vector<16x128xf32>
    %452 = vector.broadcast %431 : vector<1x128xf32> to vector<16x128xf32>
    %453 = arith.addf %451, %452 : vector<16x128xf32>
    %c0_159 = arith.constant 0 : index
    %c0_160 = arith.constant 0 : index
    %454 = vector.load %arg22[%c0_159, %c0_160] : memref<16x128xf32, #tpu.memory_space<vmem>>, vector<16x128xf32>
    tpu.vector_store %arg22[%c0_159, %c0_160], %453 {strides = array<i32>} : memref<16x128xf32, #tpu.memory_space<vmem>>, vector<16x128xf32>,
    %c5_i32 = arith.constant 5 : i32
    %455 = arith.cmpi eq, %arg0, %c5_i32 : i32
    %456 = arith.extui %455 : i1 to i32
    %c0_i32_161 = arith.constant 0 : i32
    %457 = arith.cmpi ne, %456, %c0_i32_161 : i32
    scf.if %457 {
      %c0_162 = arith.constant 0 : index
      %c0_163 = arith.constant 0 : index
      %458 = vector.load %arg4[%c0_162, %c0_163] : memref<2x16xf32, #tpu.memory_space<vmem>>, vector<2x16xf32>
      %cst_164 = arith.constant dense<0.000000e+00> : vector<2x128xf32>
      %459 = tpu.matmul %458, %453, %cst_164 {dimension_numbers = #tpu.dot_dimension_numbers<[1], [0], [0], [1], [0, 0, 1, 1], [], []>} : vector<2x16xf32>, vector<16x128xf32>, vector<2x128xf32> -> vector<2x128xf32>
      %c0_165 = arith.constant 0 : index
      %c0_166 = arith.constant 0 : index
      %460 = vector.load %arg17[%c0_165, %c0_166] : memref<1x128xf32, #tpu.memory_space<vmem>>, vector<1x128xf32>
      %cst_167 = arith.constant dense<0.000000e+00> : vector<1x2xf32>
      %461 = tpu.matmul %460, %459, %cst_167 {dimension_numbers = #tpu.dot_dimension_numbers<[1], [1], [0], [0], [0, 0, 1, 0], [], []>} : vector<1x128xf32>, vector<2x128xf32>, vector<1x2xf32> -> vector<1x2xf32>
      %c0_168 = arith.constant 0 : index
      %c0_169 = arith.constant 0 : index
      %462 = vector.load %arg18[%c0_168, %c0_169] : memref<1x1xf32, #tpu.memory_space<vmem>>, vector<1x1xf32>
      %463 = vector.broadcast %462 : vector<1x1xf32> to vector<1x2xf32>
      %464 = arith.addf %461, %463 : vector<1x2xf32>
      %cst_170 = arith.constant 0.000000e+00 : f32
      %465 = vector.broadcast %cst_170 : f32 to vector<1x2xf32>
      %466 = arith.subf %465, %464 : vector<1x2xf32>
      %467 = math.exp %466 : vector<1x2xf32>
      %cst_171 = arith.constant 1.000000e+00 : f32
      %468 = vector.broadcast %cst_171 : f32 to vector<1x2xf32>
      %469 = arith.addf %468, %467 : vector<1x2xf32>
      %cst_172 = arith.constant 1.000000e+00 : f32
      %470 = vector.broadcast %cst_172 : f32 to vector<1x2xf32>
      %471 = arith.divf %470, %469 : vector<1x2xf32>
      %c0_173 = arith.constant 0 : index
      %c0_174 = arith.constant 0 : index
      %472 = vector.load %arg20[%c0_173, %c0_174] : memref<1x2xf32, #tpu.memory_space<vmem>>, vector<1x2xf32>
      tpu.vector_store %arg20[%c0_173, %c0_174], %471 {strides = array<i32>} : memref<1x2xf32, #tpu.memory_space<vmem>>, vector<1x2xf32>,
      %c0_175 = arith.constant 0 : index
      %c0_176 = arith.constant 0 : index
      %473 = vector.load %arg19[%c0_175, %c0_176] : memref<1x2xf32, #tpu.memory_space<vmem>>, vector<1x2xf32>
      %474 = arith.mulf %464, %473 : vector<1x2xf32>
      %cst_177 = arith.constant 0.000000e+00 : f32
      %475 = vector.broadcast %cst_177 : f32 to vector<1x2xf32>
      %476 = arith.subf %475, %474 : vector<1x2xf32>
      %cst_178 = arith.constant 0.000000e+00 : f32
      %477 = vector.broadcast %cst_178 : f32 to vector<1x2xf32>
      %478 = arith.maximumf %476, %477 : vector<1x2xf32>
      %479 = math.absf %474 : vector<1x2xf32>
      %cst_179 = arith.constant 0.000000e+00 : f32
      %480 = vector.broadcast %cst_179 : f32 to vector<1x2xf32>
      %481 = arith.subf %480, %479 : vector<1x2xf32>
      %482 = math.exp %481 : vector<1x2xf32>
      %cst_180 = arith.constant 1.000000e+00 : f32
      %483 = vector.broadcast %cst_180 : f32 to vector<1x2xf32>
      %484 = arith.addf %483, %482 : vector<1x2xf32>
      %485 = math.log %484 : vector<1x2xf32>
      %486 = arith.addf %478, %485 : vector<1x2xf32>
      %cst_181 = arith.constant dense<0.000000e+00> : vector<1xf32>
      %487 = vector.multi_reduction <add>, %486, %cst_181 [1] : vector<1x2xf32> to vector<1xf32>
      %488 = vector.shape_cast %487 : vector<1xf32> to vector<1x1xf32>
      %c0_182 = arith.constant 0 : index
      %c0_183 = arith.constant 0 : index
      %489 = vector.load %arg21[%c0_182, %c0_183] : memref<1x1xf32, #tpu.memory_space<vmem>>, vector<1x1xf32>
      tpu.vector_store %arg21[%c0_182, %c0_183], %488 {strides = array<i32>} : memref<1x1xf32, #tpu.memory_space<vmem>>, vector<1x1xf32>,
    } else {
    }
    return
  }
  func.func @transform_0(%arg0: i32) -> (i32, i32) {
    %c0_i32 = arith.constant 0 : i32
    %c0_i32_0 = arith.constant 0 : i32
    %c0_i32_1 = arith.constant 0 : i32
    return %c0_i32, %c0_i32_0 : i32, i32
  }
  func.func @transform_1(%arg0: i32) -> (i32, i32) {
    %c0_i32 = arith.constant 0 : i32
    %c0_i32_0 = arith.constant 0 : i32
    %c0_i32_1 = arith.constant 0 : i32
    return %c0_i32, %c0_i32_0 : i32, i32
  }
  func.func @transform_2(%arg0: i32) -> (i32, i32) {
    %c0_i32 = arith.constant 0 : i32
    %c0_i32_0 = arith.constant 0 : i32
    %c0_i32_1 = arith.constant 0 : i32
    return %c0_i32, %c0_i32_0 : i32, i32
  }
  func.func @transform_3(%arg0: i32) -> (i32, i32) {
    %c0_i32 = arith.constant 0 : i32
    %c0_i32_0 = arith.constant 0 : i32
    %c0_i32_1 = arith.constant 0 : i32
    return %c0_i32, %c0_i32_0 : i32, i32
  }
  func.func @transform_4(%arg0: i32) -> (i32, i32, i32) {
    %c0_i32 = arith.constant 0 : i32
    %c0_i32_0 = arith.constant 0 : i32
    %c0_i32_1 = arith.constant 0 : i32
    return %arg0, %c0_i32, %c0_i32_0 : i32, i32, i32
  }
  func.func @transform_5(%arg0: i32) -> (i32, i32, i32) {
    %c0_i32 = arith.constant 0 : i32
    %c0_i32_0 = arith.constant 0 : i32
    %c0_i32_1 = arith.constant 0 : i32
    return %arg0, %c0_i32, %c0_i32_0 : i32, i32, i32
  }
  func.func @transform_6(%arg0: i32) -> (i32, i32, i32) {
    %c0_i32 = arith.constant 0 : i32
    %c0_i32_0 = arith.constant 0 : i32
    %c0_i32_1 = arith.constant 0 : i32
    return %arg0, %c0_i32, %c0_i32_0 : i32, i32, i32
  }
  func.func @transform_7(%arg0: i32) -> (i32, i32, i32) {
    %c0_i32 = arith.constant 0 : i32
    %c0_i32_0 = arith.constant 0 : i32
    %c0_i32_1 = arith.constant 0 : i32
    return %arg0, %c0_i32, %c0_i32_0 : i32, i32, i32
  }
  func.func @transform_8(%arg0: i32) -> (i32, i32, i32) {
    %c0_i32 = arith.constant 0 : i32
    %c0_i32_0 = arith.constant 0 : i32
    %c0_i32_1 = arith.constant 0 : i32
    return %arg0, %c0_i32, %c0_i32_0 : i32, i32, i32
  }
  func.func @transform_9(%arg0: i32) -> (i32, i32, i32) {
    %c0_i32 = arith.constant 0 : i32
    %c0_i32_0 = arith.constant 0 : i32
    %c0_i32_1 = arith.constant 0 : i32
    return %arg0, %c0_i32, %c0_i32_0 : i32, i32, i32
  }
  func.func @transform_10(%arg0: i32) -> (i32, i32, i32) {
    %c0_i32 = arith.constant 0 : i32
    %c0_i32_0 = arith.constant 0 : i32
    %c0_i32_1 = arith.constant 0 : i32
    return %arg0, %c0_i32, %c0_i32_0 : i32, i32, i32
  }
  func.func @transform_11(%arg0: i32) -> (i32, i32, i32) {
    %c0_i32 = arith.constant 0 : i32
    %c0_i32_0 = arith.constant 0 : i32
    %c0_i32_1 = arith.constant 0 : i32
    return %arg0, %c0_i32, %c0_i32_0 : i32, i32, i32
  }
  func.func @transform_12(%arg0: i32) -> (i32, i32, i32) {
    %c0_i32 = arith.constant 0 : i32
    %c0_i32_0 = arith.constant 0 : i32
    %c0_i32_1 = arith.constant 0 : i32
    return %arg0, %c0_i32, %c0_i32_0 : i32, i32, i32
  }
  func.func @transform_13(%arg0: i32) -> (i32, i32, i32) {
    %c0_i32 = arith.constant 0 : i32
    %c0_i32_0 = arith.constant 0 : i32
    %c0_i32_1 = arith.constant 0 : i32
    return %arg0, %c0_i32, %c0_i32_0 : i32, i32, i32
  }
  func.func @transform_14(%arg0: i32) -> (i32, i32, i32) {
    %c0_i32 = arith.constant 0 : i32
    %c0_i32_0 = arith.constant 0 : i32
    %c0_i32_1 = arith.constant 0 : i32
    return %arg0, %c0_i32, %c0_i32_0 : i32, i32, i32
  }
  func.func @transform_15(%arg0: i32) -> (i32, i32, i32) {
    %c0_i32 = arith.constant 0 : i32
    %c0_i32_0 = arith.constant 0 : i32
    %c0_i32_1 = arith.constant 0 : i32
    return %arg0, %c0_i32, %c0_i32_0 : i32, i32, i32
  }
  func.func @transform_16(%arg0: i32) -> (i32, i32) {
    %c0_i32 = arith.constant 0 : i32
    %c0_i32_0 = arith.constant 0 : i32
    %c0_i32_1 = arith.constant 0 : i32
    return %c0_i32, %c0_i32_0 : i32, i32
  }
  func.func @transform_17(%arg0: i32) -> (i32, i32) {
    %c0_i32 = arith.constant 0 : i32
    %c0_i32_0 = arith.constant 0 : i32
    %c0_i32_1 = arith.constant 0 : i32
    return %c0_i32, %c0_i32_0 : i32, i32
  }
  func.func @transform_18(%arg0: i32) -> (i32, i32) {
    %c0_i32 = arith.constant 0 : i32
    %c0_i32_0 = arith.constant 0 : i32
    %c0_i32_1 = arith.constant 0 : i32
    return %c0_i32, %c0_i32_0 : i32, i32
  }
  func.func @transform_19(%arg0: i32) -> (i32, i32) {
    %c0_i32 = arith.constant 0 : i32
    %c0_i32_0 = arith.constant 0 : i32
    %c0_i32_1 = arith.constant 0 : i32
    return %c0_i32, %c0_i32_0 : i32, i32
  }
  func.func @transform_20(%arg0: i32) -> (i32, i32) {
    %c0_i32 = arith.constant 0 : i32
    %c0_i32_0 = arith.constant 0 : i32
    %c0_i32_1 = arith.constant 0 : i32
    return %c0_i32, %c0_i32_0 : i32, i32
  }
}

</mosaic_0001>

<llo_original>
// kernel: score_function_model_forward.1
$region0: #{score_function_model_forward.1}
  #allocation0 [shape = 'u32[]', space=smem, size = 0x4, offset = 0x4, fixed_abs, tag = 'smem constant byte address 0x4 - core index']
  #allocation1 [shape = 'u32[144,128]{1,0:T(1,128)}', space=vmem, size = 0x12000, scoped, tag = 'internal scratch']
  #allocation2 [shape = 'f32[16,128]{1,0:T(8,128)}', space=vmem, size = 0x2000, scoped, tag = 'scratch operand']
  #allocation3 [shape = 'f32[16,128]{1,0:T(8,128)}', space=vmem, size = 0x2000, scoped, tag = 'scratch operand']
  #allocation4 [shape = 'f32[1,1]{1,0:T(1,128)S(1)}', space=vmem, size = 0x200, scoped, tag = 'scoped memory for score_function_model_forward.1']
  %s0 = inlined_call_operand.vmem [shape: f32[16,128], index: 0, kind: input, shape index: {}]
  %s1 = inlined_call_operand.vmem [shape: f32[8,8], index: 1, kind: input, shape index: {}]
  %s2 = inlined_call_operand.vmem [shape: f32[2,8], index: 2, kind: input, shape index: {}]
  %s3 = inlined_call_operand.vmem [shape: f32[2,16], index: 3, kind: input, shape index: {}]
  %s4 = inlined_call_operand.hbm [shape: bf16[6,128,384], index: 4, kind: input, shape index: {}]
  %s5 = inlined_call_operand.hbm [shape: f32[6,1,384], index: 5, kind: input, shape index: {}]
  %s6 = inlined_call_operand.hbm [shape: bf16[6,128,128], index: 6, kind: input, shape index: {}]
  %s7 = inlined_call_operand.hbm [shape: f32[6,1,128], index: 7, kind: input, shape index: {}]
  %s8 = inlined_call_operand.hbm [shape: f32[6,1,128], index: 8, kind: input, shape index: {}]
  %s9 = inlined_call_operand.hbm [shape: f32[6,1,128], index: 9, kind: input, shape index: {}]
  %s10 = inlined_call_operand.hbm [shape: bf16[6,128,2048], index: 10, kind: input, shape index: {}]
  %s11 = inlined_call_operand.hbm [shape: f32[6,1,2048], index: 11, kind: input, shape index: {}]
  %s12 = inlined_call_operand.hbm [shape: bf16[6,2048,128], index: 12, kind: input, shape index: {}]
  %s13 = inlined_call_operand.hbm [shape: f32[6,1,128], index: 13, kind: input, shape index: {}]
  %s14 = inlined_call_operand.hbm [shape: f32[6,1,128], index: 14, kind: input, shape index: {}]
  %s15 = inlined_call_operand.hbm [shape: f32[6,1,128], index: 15, kind: input, shape index: {}]
  %s16 = inlined_call_operand.hbm [shape: f32[1,128], index: 16, kind: input, shape index: {}]
  %s17 = inlined_call_operand.<no memory space> [shape: f32[1,1], index: 17, kind: input, shape index: {}]
  %s18 = inlined_call_operand.hbm [shape: f32[1,2], index: 18, kind: input, shape index: {}]
  %s19 = inlined_call_operand.hbm [shape: f32[1,2], index: 19, kind: output, shape index: {0}]
  %s20 = inlined_call_operand.hbm [shape: f32[1,1], index: 20, kind: output, shape index: {1}]
  %21 = xla_tuple %s19, %s20
  %s22 = sld [smem:[#allocation0]]
  $region181: #{score_function_model_forward.1} parent=0
    _
  %s24 = ssub.s32 1, %s22
  %s25 = scalar_select 0, %s24, %s22
  %v26 = vstv %s17
  %27 = vst [vmem:[#allocation4] sm:$0x1] %v26
  $region1: #{score_function_model_forward.1} parent=0
    #allocation5 [shape = 'u8[196608]{0}', space=vmem, size = 0x30000, scoped, tag = 'input window, operand 4']
    #allocation6 [shape = 's32[2]{0}', space=sflag, size = 0x8, scoped, tag = 'scoped memory for score_function_model_forward.1']
    #allocation7 [shape = 's32[2]{0}', space=sflag, size = 0x8, scoped, tag = 'scoped memory for score_function_model_forward.1']
    #allocation8 [shape = 'u8[3072]{0}', space=vmem, size = 0xc00, scoped, tag = 'input window, operand 5']
    #allocation9 [shape = 's32[2]{0}', space=sflag, size = 0x8, scoped, tag = 'scoped memory for score_function_model_forward.1']
    #allocation10 [shape = 'u8[65536]{0}', space=vmem, size = 0x10000, scoped, tag = 'input window, operand 6']
    #allocation11 [shape = 'u8[1024]{0}', space=vmem, size = 0x400, scoped, tag = 'input window, operand 7']
    #allocation12 [shape = 's32[2]{0}', space=sflag, size = 0x8, scoped, tag = 'scoped memory for score_function_model_forward.1']
    #allocation13 [shape = 'u8[1024]{0}', space=vmem, size = 0x400, scoped, tag = 'input window, operand 8']
    #allocation14 [shape = 'u8[1024]{0}', space=vmem, size = 0x400, scoped, tag = 'input window, operand 9']
    #allocation15 [shape = 's32[2]{0}', space=sflag, size = 0x8, scoped, tag = 'scoped memory for score_function_model_forward.1']
    #allocation16 [shape = 'u8[1048576]{0}', space=vmem, size = 0x100000, scoped, tag = 'input window, operand 10']
    #allocation17 [shape = 'u8[16384]{0}', space=vmem, size = 0x4000, scoped, tag = 'input window, operand 11']
    #allocation18 [shape = 's32[2]{0}', space=sflag, size = 0x8, scoped, tag = 'scoped memory for score_function_model_forward.1']
    #allocation19 [shape = 'u8[1048576]{0}', space=vmem, size = 0x100000, scoped, tag = 'input window, operand 12']
    #allocation20 [shape = 'u8[1024]{0}', space=vmem, size = 0x400, scoped, tag = 'input window, operand 13']
    #allocation21 [shape = 's32[2]{0}', space=sflag, size = 0x8, scoped, tag = 'scoped memory for score_function_model_forward.1']
    #allocation22 [shape = 'u8[1024]{0}', space=vmem, size = 0x400, scoped, tag = 'input window, operand 14']
    #allocation23 [shape = 'u8[1024]{0}', space=vmem, size = 0x400, scoped, tag = 'input window, operand 15']
    #allocation24 [shape = 's32[2]{0}', space=sflag, size = 0x8, scoped, tag = 'scoped memory for score_function_model_forward.1']
    #allocation25 [shape = 'u8[512]{0}', space=vmem, size = 0x400, scoped, tag = 'input window, operand 16, single buffered']
    #allocation26 [shape = 'u8[512]{0}', space=vmem, size = 0x400, scoped, tag = 'input window, operand 18, single buffered']
    #allocation27 [shape = 's32[1]{0}', space=sflag, size = 0x4, scoped, tag = 'scoped memory for score_function_model_forward.1']
    #allocation28 [shape = 'u8[512]{0}', space=vmem, size = 0x400, scoped, tag = 'output window, operand 0, single buffered']
    #allocation29 [shape = 'u8[512]{0}', space=vmem, size = 0x400, scoped, tag = 'output window, operand 1, single buffered']
    #allocation30 [shape = 's32[1]{0}', space=sflag, size = 0x4, scoped, tag = 'scoped memory for score_function_model_forward.1']
    %28 = vsyncpa [#allocation6], 0
    %s29 = scalar_lea.sflag [#allocation6], 1
    %30 = vsyncpa %s29, 0
    %31 = vsyncpa [#allocation9], 0
    %s32 = scalar_lea.sflag [#allocation9], 1
    %33 = vsyncpa %s32, 0
    %34 = vsyncpa [#allocation12], 0
    %s35 = scalar_lea.sflag [#allocation12], 1
    %36 = vsyncpa %s35, 0
    %37 = vsyncpa [#allocation15], 0
    %s38 = scalar_lea.sflag [#allocation15], 1
    %39 = vsyncpa %s38, 0
    %40 = vsyncpa [#allocation18], 0
    %s41 = scalar_lea.sflag [#allocation18], 1
    %42 = vsyncpa %s41, 0
    %43 = vsyncpa [#allocation21], 0
    %s44 = scalar_lea.sflag [#allocation21], 1
    %45 = vsyncpa %s44, 0
    %46 = vsyncpa [#allocation24], 0
    %s47 = scalar_lea.sflag [#allocation24], 1
    %48 = vsyncpa %s47, 0
    %49 = vsyncpa [#allocation27], 0
    %50 = vsyncpa [#allocation7], 0
    %51 = vsyncpa [#allocation30], 0
    loop: start=0, step=1, limit=8
    $region2: #{score_function_model_forward.1} parent=1 // loop_pre_header
      _
    $region3: #{score_function_model_forward.1} parent=1 // loop_header
      %s53 = sphi 0, %s57
      %p54 = scmp.ge.s32.totalorder %s53, 8
      %s61 = sphi 0, %s61
      %s63 = sphi 0, %s61
      %s64 = sphi 0, %s63
      %s78 = sphi 0, %s64
      %s82 = sphi 0, %s82
      %s84 = sphi 0, %s82
      %s85 = sphi 0, %s84
      %s99 = sphi 0, %s85
      %s103 = sphi 0, %s103
      %s105 = sphi 0, %s103
      %s106 = sphi 0, %s105
      %s120 = sphi 0, %s106
      %s124 = sphi 0, %s124
      %s126 = sphi 0, %s124
      %s127 = sphi 0, %s126
      %s141 = sphi 0, %s127
      %s147 = sphi 0, %s149
      %s150 = sphi 0, %s147
      %s151 = sphi 0, %s150
      %s167 = sphi 0, %s151
      %s173 = sphi 0, %s175
      %s176 = sphi 0, %s173
      %s177 = sphi 0, %s176
      %s193 = sphi 0, %s177
      %s199 = sphi 0, %s201
      %s202 = sphi 0, %s199
      %s203 = sphi 0, %s202
      %s219 = sphi 0, %s203
      %s225 = sphi 0, %s227
      %s228 = sphi 0, %s225
      %s229 = sphi 0, %s228
      %s245 = sphi 0, %s229
      %s251 = sphi 0, %s253
      %s254 = sphi 0, %s251
      %s255 = sphi 0, %s254
      %s271 = sphi 0, %s255
      %s277 = sphi 0, %s279
      %s280 = sphi 0, %s277
      %s281 = sphi 0, %s280
      %s297 = sphi 0, %s281
      %s303 = sphi 0, %s305
      %s306 = sphi 0, %s303
      %s307 = sphi 0, %s306
      %s323 = sphi 0, %s307
      %s329 = sphi 0, %s331
      %s332 = sphi 0, %s329
      %s333 = sphi 0, %s332
      %s349 = sphi 0, %s333
      %s355 = sphi 0, %s357
      %s358 = sphi 0, %s355
      %s359 = sphi 0, %s358
      %s375 = sphi 0, %s359
      %s381 = sphi 0, %s383
      %s384 = sphi 0, %s381
      %s385 = sphi 0, %s384
      %s401 = sphi 0, %s385
      %s407 = sphi 0, %s409
      %s410 = sphi 0, %s407
      %s411 = sphi 0, %s410
      %s427 = sphi 0, %s411
      %s433 = sphi 0, %s435
      %s436 = sphi 0, %s433
      %s437 = sphi 0, %s436
      %s453 = sphi 0, %s437
      %s457 = sphi 0, %s457
      %s459 = sphi 0, %s457
      %s460 = sphi 0, %s459
      %s474 = sphi 0, %s460
      %s478 = sphi 0, %s478
      %s480 = sphi 0, %s478
      %s481 = sphi 0, %s480
      %s495 = sphi 0, %s481
      %s499 = sphi 0, %s499
      %s501 = sphi 0, %s499
      %s502 = sphi 0, %s501
      %s516 = sphi 0, %s502
      %s520 = sphi 0, %s520
      %s522 = sphi 0, %s520
      %s523 = sphi 0, %s522
      %s537 = sphi 0, %s523
      %s541 = sphi 0, %s541
      %s543 = sphi 0, %s541
      %s544 = sphi 0, %s543
      %s558 = sphi 0, %s544
    $region4: #{score_function_model_forward.1} parent=1 // loop_header_branch
      %56 = sbr.rel (%p54) target = $region8
    $region5: #{score_function_model_forward.1} parent=1 // loop_body
      %s58 = ssub.s32 %s53, 1
      %s59 = ssub.s32 %s53, 2
      %s60 = sadd.s32 %s53, 1
      %s62 = sadd.s32 %s61, 1
      %p65 = scmp.eq.s32.totalorder %s53, 5
      %p66 = scmp.ne.s32.totalorder %s61, %s63
      %p67 = scmp.eq.s32.totalorder %s53, 0
      %p68 = por %p66, %p67
      %p69 = scmp.ne.s32.totalorder %s61, %s63
      %p70 = scmp.eq.s32.totalorder %s58, 5
      %p71 = por %p69, %p70
      %p72 = scmp.ne.s32.totalorder %s63, %s64
      %p73 = scmp.eq.s32.totalorder %s58, 0
      %p74 = por %p72, %p73
      %p75 = scmp.ne.s32.totalorder %s63, %s64
      %p76 = scmp.eq.s32.totalorder %s59, 5
      %p77 = por %p75, %p76
      %p79 = scmp.ne.s32.totalorder %s64, %s78
      %p80 = scmp.eq.s32.totalorder %s59, 0
      %p81 = por %p79, %p80
      %s83 = sadd.s32 %s82, 1
      %p86 = scmp.eq.s32.totalorder %s53, 5
      %p87 = scmp.ne.s32.totalorder %s82, %s84
      %p88 = scmp.eq.s32.totalorder %s53, 0
      %p89 = por %p87, %p88
      %p90 = scmp.ne.s32.totalorder %s82, %s84
      %p91 = scmp.eq.s32.totalorder %s58, 5
      %p92 = por %p90, %p91
      %p93 = scmp.ne.s32.totalorder %s84, %s85
      %p94 = scmp.eq.s32.totalorder %s58, 0
      %p95 = por %p93, %p94
      %p96 = scmp.ne.s32.totalorder %s84, %s85
      %p97 = scmp.eq.s32.totalorder %s59, 5
      %p98 = por %p96, %p97
      %p100 = scmp.ne.s32.totalorder %s85, %s99
      %p101 = scmp.eq.s32.totalorder %s59, 0
      %p102 = por %p100, %p101
      %s104 = sadd.s32 %s103, 1
      %p107 = scmp.eq.s32.totalorder %s53, 5
      %p108 = scmp.ne.s32.totalorder %s103, %s105
      %p109 = scmp.eq.s32.totalorder %s53, 0
      %p110 = por %p108, %p109
      %p111 = scmp.ne.s32.totalorder %s103, %s105
      %p112 = scmp.eq.s32.totalorder %s58, 5
      %p113 = por %p111, %p112
      %p114 = scmp.ne.s32.totalorder %s105, %s106
      %p115 = scmp.eq.s32.totalorder %s58, 0
      %p116 = por %p114, %p115
      %p117 = scmp.ne.s32.totalorder %s105, %s106
      %p118 = scmp.eq.s32.totalorder %s59, 5
      %p119 = por %p117, %p118
      %p121 = scmp.ne.s32.totalorder %s106, %s120
      %p122 = scmp.eq.s32.totalorder %s59, 0
      %p123 = por %p121, %p122
      %s125 = sadd.s32 %s124, 1
      %p128 = scmp.eq.s32.totalorder %s53, 5
      %p129 = scmp.ne.s32.totalorder %s124, %s126
      %p130 = scmp.eq.s32.totalorder %s53, 0
      %p131 = por %p129, %p130
      %p132 = scmp.ne.s32.totalorder %s124, %s126
      %p133 = scmp.eq.s32.totalorder %s58, 5
      %p134 = por %p132, %p133
      %p135 = scmp.ne.s32.totalorder %s126, %s127
      %p136 = scmp.eq.s32.totalorder %s58, 0
      %p137 = por %p135, %p136
      %p138 = scmp.ne.s32.totalorder %s126, %s127
      %p139 = scmp.eq.s32.totalorder %s59, 5
      %p140 = por %p138, %p139
      %p142 = scmp.ne.s32.totalorder %s127, %s141
      %p143 = scmp.eq.s32.totalorder %s59, 0
      %p144 = por %p142, %p143
      %s145 = ssub.s32 %s53, %s60
      %p146 = scmp.eq.s32.totalorder %s145, 0
      %s148 = sadd.s32 %s147, 1
      %s149 = scalar_select %p146, %s147, %s148
      %p152 = pneg %p146
      %p153 = scmp.eq.s32.totalorder %s53, 5
      %p154 = por %p152, %p153
      %p155 = scmp.ne.s32.totalorder %s147, %s150
      %p156 = scmp.eq.s32.totalorder %s53, 0
      %p157 = por %p155, %p156
      %p158 = scmp.ne.s32.totalorder %s147, %s150
      %p159 = scmp.eq.s32.totalorder %s58, 5
      %p160 = por %p158, %p159
      %p161 = scmp.ne.s32.totalorder %s150, %s151
      %p162 = scmp.eq.s32.totalorder %s58, 0
      %p163 = por %p161, %p162
      %p164 = scmp.ne.s32.totalorder %s150, %s151
      %p165 = scmp.eq.s32.totalorder %s59, 5
      %p166 = por %p164, %p165
      %p168 = scmp.ne.s32.totalorder %s151, %s167
      %p169 = scmp.eq.s32.totalorder %s59, 0
      %p170 = por %p168, %p169
      %s171 = ssub.s32 %s53, %s60
      %p172 = scmp.eq.s32.totalorder %s171, 0
      %s174 = sadd.s32 %s173, 1
      %s175 = scalar_select %p172, %s173, %s174
      %p178 = pneg %p172
      %p179 = scmp.eq.s32.totalorder %s53, 5
      %p180 = por %p178, %p179
      %p181 = scmp.ne.s32.totalorder %s173, %s176
      %p182 = scmp.eq.s32.totalorder %s53, 0
      %p183 = por %p181, %p182
      %p184 = scmp.ne.s32.totalorder %s173, %s176
      %p185 = scmp.eq.s32.totalorder %s58, 5
      %p186 = por %p184, %p185
      %p187 = scmp.ne.s32.totalorder %s176, %s177
      %p188 = scmp.eq.s32.totalorder %s58, 0
      %p189 = por %p187, %p188
      %p190 = scmp.ne.s32.totalorder %s176, %s177
      %p191 = scmp.eq.s32.totalorder %s59, 5
      %p192 = por %p190, %p191
      %p194 = scmp.ne.s32.totalorder %s177, %s193
      %p195 = scmp.eq.s32.totalorder %s59, 0
      %p196 = por %p194, %p195
      %s197 = ssub.s32 %s53, %s60
      %p198 = scmp.eq.s32.totalorder %s197, 0
      %s200 = sadd.s32 %s199, 1
      %s201 = scalar_select %p198, %s199, %s200
      %p204 = pneg %p198
      %p205 = scmp.eq.s32.totalorder %s53, 5
      %p206 = por %p204, %p205
      %p207 = scmp.ne.s32.totalorder %s199, %s202
      %p208 = scmp.eq.s32.totalorder %s53, 0
      %p209 = por %p207, %p208
      %p210 = scmp.ne.s32.totalorder %s199, %s202
      %p211 = scmp.eq.s32.totalorder %s58, 5
      %p212 = por %p210, %p211
      %p213 = scmp.ne.s32.totalorder %s202, %s203
      %p214 = scmp.eq.s32.totalorder %s58, 0
      %p215 = por %p213, %p214
      %p216 = scmp.ne.s32.totalorder %s202, %s203
      %p217 = scmp.eq.s32.totalorder %s59, 5
      %p218 = por %p216, %p217
      %p220 = scmp.ne.s32.totalorder %s203, %s219
      %p221 = scmp.eq.s32.totalorder %s59, 0
      %p222 = por %p220, %p221
      %s223 = ssub.s32 %s53, %s60
      %p224 = scmp.eq.s32.totalorder %s223, 0
      %s226 = sadd.s32 %s225, 1
      %s227 = scalar_select %p224, %s225, %s226
      %p230 = pneg %p224
      %p231 = scmp.eq.s32.totalorder %s53, 5
      %p232 = por %p230, %p231
      %p233 = scmp.ne.s32.totalorder %s225, %s228
      %p234 = scmp.eq.s32.totalorder %s53, 0
      %p235 = por %p233, %p234
      %p236 = scmp.ne.s32.totalorder %s225, %s228
      %p237 = scmp.eq.s32.totalorder %s58, 5
      %p238 = por %p236, %p237
      %p239 = scmp.ne.s32.totalorder %s228, %s229
      %p240 = scmp.eq.s32.totalorder %s58, 0
      %p241 = por %p239, %p240
      %p242 = scmp.ne.s32.totalorder %s228, %s229
      %p243 = scmp.eq.s32.totalorder %s59, 5
      %p244 = por %p242, %p243
      %p246 = scmp.ne.s32.totalorder %s229, %s245
      %p247 = scmp.eq.s32.totalorder %s59, 0
      %p248 = por %p246, %p247
      %s249 = ssub.s32 %s53, %s60
      %p250 = scmp.eq.s32.totalorder %s249, 0
      %s252 = sadd.s32 %s251, 1
      %s253 = scalar_select %p250, %s251, %s252
      %p256 = pneg %p250
      %p257 = scmp.eq.s32.totalorder %s53, 5
      %p258 = por %p256, %p257
      %p259 = scmp.ne.s32.totalorder %s251, %s254
      %p260 = scmp.eq.s32.totalorder %s53, 0
      %p261 = por %p259, %p260
      %p262 = scmp.ne.s32.totalorder %s251, %s254
      %p263 = scmp.eq.s32.totalorder %s58, 5
      %p264 = por %p262, %p263
      %p265 = scmp.ne.s32.totalorder %s254, %s255
      %p266 = scmp.eq.s32.totalorder %s58, 0
      %p267 = por %p265, %p266
      %p268 = scmp.ne.s32.totalorder %s254, %s255
      %p269 = scmp.eq.s32.totalorder %s59, 5
      %p270 = por %p268, %p269
      %p272 = scmp.ne.s32.totalorder %s255, %s271
      %p273 = scmp.eq.s32.totalorder %s59, 0
      %p274 = por %p272, %p273
      %s275 = ssub.s32 %s53, %s60
      %p276 = scmp.eq.s32.totalorder %s275, 0
      %s278 = sadd.s32 %s277, 1
      %s279 = scalar_select %p276, %s277, %s278
      %p282 = pneg %p276
      %p283 = scmp.eq.s32.totalorder %s53, 5
      %p284 = por %p282, %p283
      %p285 = scmp.ne.s32.totalorder %s277, %s280
      %p286 = scmp.eq.s32.totalorder %s53, 0
      %p287 = por %p285, %p286
      %p288 = scmp.ne.s32.totalorder %s277, %s280
      %p289 = scmp.eq.s32.totalorder %s58, 5
      %p290 = por %p288, %p289
      %p291 = scmp.ne.s32.totalorder %s280, %s281
      %p292 = scmp.eq.s32.totalorder %s58, 0
      %p293 = por %p291, %p292
      %p294 = scmp.ne.s32.totalorder %s280, %s281
      %p295 = scmp.eq.s32.totalorder %s59, 5
      %p296 = por %p294, %p295
      %p298 = scmp.ne.s32.totalorder %s281, %s297
      %p299 = scmp.eq.s32.totalorder %s59, 0
      %p300 = por %p298, %p299
      %s301 = ssub.s32 %s53, %s60
      %p302 = scmp.eq.s32.totalorder %s301, 0
      %s304 = sadd.s32 %s303, 1
      %s305 = scalar_select %p302, %s303, %s304
      %p308 = pneg %p302
      %p309 = scmp.eq.s32.totalorder %s53, 5
      %p310 = por %p308, %p309
      %p311 = scmp.ne.s32.totalorder %s303, %s306
      %p312 = scmp.eq.s32.totalorder %s53, 0
      %p313 = por %p311, %p312
      %p314 = scmp.ne.s32.totalorder %s303, %s306
      %p315 = scmp.eq.s32.totalorder %s58, 5
      %p316 = por %p314, %p315
      %p317 = scmp.ne.s32.totalorder %s306, %s307
      %p318 = scmp.eq.s32.totalorder %s58, 0
      %p319 = por %p317, %p318
      %p320 = scmp.ne.s32.totalorder %s306, %s307
      %p321 = scmp.eq.s32.totalorder %s59, 5
      %p322 = por %p320, %p321
      %p324 = scmp.ne.s32.totalorder %s307, %s323
      %p325 = scmp.eq.s32.totalorder %s59, 0
      %p326 = por %p324, %p325
      %s327 = ssub.s32 %s53, %s60
      %p328 = scmp.eq.s32.totalorder %s327, 0
      %s330 = sadd.s32 %s329, 1
      %s331 = scalar_select %p328, %s329, %s330
      %p334 = pneg %p328
      %p335 = scmp.eq.s32.totalorder %s53, 5
      %p336 = por %p334, %p335
      %p337 = scmp.ne.s32.totalorder %s329, %s332
      %p338 = scmp.eq.s32.totalorder %s53, 0
      %p339 = por %p337, %p338
      %p340 = scmp.ne.s32.totalorder %s329, %s332
      %p341 = scmp.eq.s32.totalorder %s58, 5
      %p342 = por %p340, %p341
      %p343 = scmp.ne.s32.totalorder %s332, %s333
      %p344 = scmp.eq.s32.totalorder %s58, 0
      %p345 = por %p343, %p344
      %p346 = scmp.ne.s32.totalorder %s332, %s333
      %p347 = scmp.eq.s32.totalorder %s59, 5
      %p348 = por %p346, %p347
      %p350 = scmp.ne.s32.totalorder %s333, %s349
      %p351 = scmp.eq.s32.totalorder %s59, 0
      %p352 = por %p350, %p351
      %s353 = ssub.s32 %s53, %s60
      %p354 = scmp.eq.s32.totalorder %s353, 0
      %s356 = sadd.s32 %s355, 1
      %s357 = scalar_select %p354, %s355, %s356
      %p360 = pneg %p354
      %p361 = scmp.eq.s32.totalorder %s53, 5
      %p362 = por %p360, %p361
      %p363 = scmp.ne.s32.totalorder %s355, %s358
      %p364 = scmp.eq.s32.totalorder %s53, 0
      %p365 = por %p363, %p364
      %p366 = scmp.ne.s32.totalorder %s355, %s358
      %p367 = scmp.eq.s32.totalorder %s58, 5
      %p368 = por %p366, %p367
      %p369 = scmp.ne.s32.totalorder %s358, %s359
      %p370 = scmp.eq.s32.totalorder %s58, 0
      %p371 = por %p369, %p370
      %p372 = scmp.ne.s32.totalorder %s358, %s359
      %p373 = scmp.eq.s32.totalorder %s59, 5
      %p374 = por %p372, %p373
      %p376 = scmp.ne.s32.totalorder %s359, %s375
      %p377 = scmp.eq.s32.totalorder %s59, 0
      %p378 = por %p376, %p377
      %s379 = ssub.s32 %s53, %s60
      %p380 = scmp.eq.s32.totalorder %s379, 0
      %s382 = sadd.s32 %s381, 1
      %s383 = scalar_select %p380, %s381, %s382
      %p386 = pneg %p380
      %p387 = scmp.eq.s32.totalorder %s53, 5
      %p388 = por %p386, %p387
      %p389 = scmp.ne.s32.totalorder %s381, %s384
      %p390 = scmp.eq.s32.totalorder %s53, 0
      %p391 = por %p389, %p390
      %p392 = scmp.ne.s32.totalorder %s381, %s384
      %p393 = scmp.eq.s32.totalorder %s58, 5
      %p394 = por %p392, %p393
      %p395 = scmp.ne.s32.totalorder %s384, %s385
      %p396 = scmp.eq.s32.totalorder %s58, 0
      %p397 = por %p395, %p396
      %p398 = scmp.ne.s32.totalorder %s384, %s385
      %p399 = scmp.eq.s32.totalorder %s59, 5
      %p400 = por %p398, %p399
      %p402 = scmp.ne.s32.totalorder %s385, %s401
      %p403 = scmp.eq.s32.totalorder %s59, 0
      %p404 = por %p402, %p403
      %s405 = ssub.s32 %s53, %s60
      %p406 = scmp.eq.s32.totalorder %s405, 0
      %s408 = sadd.s32 %s407, 1
      %s409 = scalar_select %p406, %s407, %s408
      %p412 = pneg %p406
      %p413 = scmp.eq.s32.totalorder %s53, 5
      %p414 = por %p412, %p413
      %p415 = scmp.ne.s32.totalorder %s407, %s410
      %p416 = scmp.eq.s32.totalorder %s53, 0
      %p417 = por %p415, %p416
      %p418 = scmp.ne.s32.totalorder %s407, %s410
      %p419 = scmp.eq.s32.totalorder %s58, 5
      %p420 = por %p418, %p419
      %p421 = scmp.ne.s32.totalorder %s410, %s411
      %p422 = scmp.eq.s32.totalorder %s58, 0
      %p423 = por %p421, %p422
      %p424 = scmp.ne.s32.totalorder %s410, %s411
      %p425 = scmp.eq.s32.totalorder %s59, 5
      %p426 = por %p424, %p425
      %p428 = scmp.ne.s32.totalorder %s411, %s427
      %p429 = scmp.eq.s32.totalorder %s59, 0
      %p430 = por %p428, %p429
      %s431 = ssub.s32 %s53, %s60
      %p432 = scmp.eq.s32.totalorder %s431, 0
      %s434 = sadd.s32 %s433, 1
      %s435 = scalar_select %p432, %s433, %s434
      %p438 = pneg %p432
      %p439 = scmp.eq.s32.totalorder %s53, 5
      %p440 = por %p438, %p439
      %p441 = scmp.ne.s32.totalorder %s433, %s436
      %p442 = scmp.eq.s32.totalorder %s53, 0
      %p443 = por %p441, %p442
      %p444 = scmp.ne.s32.totalorder %s433, %s436
      %p445 = scmp.eq.s32.totalorder %s58, 5
      %p446 = por %p444, %p445
      %p447 = scmp.ne.s32.totalorder %s436, %s437
      %p448 = scmp.eq.s32.totalorder %s58, 0
      %p449 = por %p447, %p448
      %p450 = scmp.ne.s32.totalorder %s436, %s437
      %p451 = scmp.eq.s32.totalorder %s59, 5
      %p452 = por %p450, %p451
      %p454 = scmp.ne.s32.totalorder %s437, %s453
      %p455 = scmp.eq.s32.totalorder %s59, 0
      %p456 = por %p454, %p455
      %s458 = sadd.s32 %s457, 1
      %p461 = scmp.eq.s32.totalorder %s53, 5
      %p462 = scmp.ne.s32.totalorder %s457, %s459
      %p463 = scmp.eq.s32.totalorder %s53, 0
      %p464 = por %p462, %p463
      %p465 = scmp.ne.s32.totalorder %s457, %s459
      %p466 = scmp.eq.s32.totalorder %s58, 5
      %p467 = por %p465, %p466
      %p468 = scmp.ne.s32.totalorder %s459, %s460
      %p469 = scmp.eq.s32.totalorder %s58, 0
      %p470 = por %p468, %p469
      %p471 = scmp.ne.s32.totalorder %s459, %s460
      %p472 = scmp.eq.s32.totalorder %s59, 5
      %p473 = por %p471, %p472
      %p475 = scmp.ne.s32.totalorder %s460, %s474
      %p476 = scmp.eq.s32.totalorder %s59, 0
      %p477 = por %p475, %p476
      %s479 = sadd.s32 %s478, 1
      %p482 = scmp.eq.s32.totalorder %s53, 5
      %p483 = scmp.ne.s32.totalorder %s478, %s480
      %p484 = scmp.eq.s32.totalorder %s53, 0
      %p485 = por %p483, %p484
      %p486 = scmp.ne.s32.totalorder %s478, %s480
      %p487 = scmp.eq.s32.totalorder %s58, 5
      %p488 = por %p486, %p487
      %p489 = scmp.ne.s32.totalorder %s480, %s481
      %p490 = scmp.eq.s32.totalorder %s58, 0
      %p491 = por %p489, %p490
      %p492 = scmp.ne.s32.totalorder %s480, %s481
      %p493 = scmp.eq.s32.totalorder %s59, 5
      %p494 = por %p492, %p493
      %p496 = scmp.ne.s32.totalorder %s481, %s495
      %p497 = scmp.eq.s32.totalorder %s59, 0
      %p498 = por %p496, %p497
      %s500 = sadd.s32 %s499, 1
      %p503 = scmp.eq.s32.totalorder %s53, 5
      %p504 = scmp.ne.s32.totalorder %s499, %s501
      %p505 = scmp.eq.s32.totalorder %s53, 0
      %p506 = por %p504, %p505
      %p507 = scmp.ne.s32.totalorder %s499, %s501
      %p508 = scmp.eq.s32.totalorder %s58, 5
      %p509 = por %p507, %p508
      %p510 = scmp.ne.s32.totalorder %s501, %s502
      %p511 = scmp.eq.s32.totalorder %s58, 0
      %p512 = por %p510, %p511
      %p513 = scmp.ne.s32.totalorder %s501, %s502
      %p514 = scmp.eq.s32.totalorder %s59, 5
      %p515 = por %p513, %p514
      %p517 = scmp.ne.s32.totalorder %s502, %s516
      %p518 = scmp.eq.s32.totalorder %s59, 0
      %p519 = por %p517, %p518
      %s521 = sadd.s32 %s520, 1
      %p524 = scmp.eq.s32.totalorder %s53, 5
      %p525 = scmp.ne.s32.totalorder %s520, %s522
      %p526 = scmp.eq.s32.totalorder %s53, 0
      %p527 = por %p525, %p526
      %p528 = scmp.ne.s32.totalorder %s520, %s522
      %p529 = scmp.eq.s32.totalorder %s58, 5
      %p530 = por %p528, %p529
      %p531 = scmp.ne.s32.totalorder %s522, %s523
      %p532 = scmp.eq.s32.totalorder %s58, 0
      %p533 = por %p531, %p532
      %p534 = scmp.ne.s32.totalorder %s522, %s523
      %p535 = scmp.eq.s32.totalorder %s59, 5
      %p536 = por %p534, %p535
      %p538 = scmp.ne.s32.totalorder %s523, %s537
      %p539 = scmp.eq.s32.totalorder %s59, 0
      %p540 = por %p538, %p539
      %s542 = sadd.s32 %s541, 1
      %p545 = scmp.eq.s32.totalorder %s53, 5
      %p546 = scmp.ne.s32.totalorder %s541, %s543
      %p547 = scmp.eq.s32.totalorder %s53, 0
      %p548 = por %p546, %p547
      %p549 = scmp.ne.s32.totalorder %s541, %s543
      %p550 = scmp.eq.s32.totalorder %s58, 5
      %p551 = por %p549, %p550
      %p552 = scmp.ne.s32.totalorder %s543, %s544
      %p553 = scmp.eq.s32.totalorder %s58, 0
      %p554 = por %p552, %p553
      %p555 = scmp.ne.s32.totalorder %s543, %s544
      %p556 = scmp.eq.s32.totalorder %s59, 5
      %p557 = por %p555, %p556
      %p559 = scmp.ne.s32.totalorder %s544, %s558
      %p560 = scmp.eq.s32.totalorder %s59, 0
      %p561 = por %p559, %p560
      %p562 = scmp.le.s32.totalorder 1, %s53
      %p563 = scmp.lt.s32.totalorder %s53, 7
      %p564 = pnand %p562, %p563
      %p565 = pneg %p564
      // Predicated region
      $region9: #{score_function_model_forward.1} parent=5 // pred_check
        _
      $region10: #{score_function_model_forward.1} parent=5 // pred_check_branch
        %567 = sbr.rel (%p564) target = $region12
      $region11: #{score_function_model_forward.1} parent=5 // pred_region
        %s568 = ssub.s32 %s53, 1
        // Predicated region
        $region13: #{score_function_model_forward.1} parent=11 // pred_check
          %p569 = pneg %p74
        $region14: #{score_function_model_forward.1} parent=11 // pred_check_branch
          %571 = sbr.rel (%p569) target = $region16
        $region15: #{score_function_model_forward.1} parent=11 // pred_region
          _
        $region16: #{score_function_model_forward.1} parent=11 // pred_fallthru
          _
        // Predicated region
        $region17: #{score_function_model_forward.1} parent=11 // pred_check
          %p572 = pneg %p95
        $region18: #{score_function_model_forward.1} parent=11 // pred_check_branch
          %574 = sbr.rel (%p572) target = $region20
        $region19: #{score_function_model_forward.1} parent=11 // pred_region
          _
        $region20: #{score_function_model_forward.1} parent=11 // pred_fallthru
          _
        // Predicated region
        $region21: #{score_function_model_forward.1} parent=11 // pred_check
          %p575 = pneg %p116
        $region22: #{score_function_model_forward.1} parent=11 // pred_check_branch
          %577 = sbr.rel (%p575) target = $region24
        $region23: #{score_function_model_forward.1} parent=11 // pred_region
          _
        $region24: #{score_function_model_forward.1} parent=11 // pred_fallthru
          _
        // Predicated region
        $region25: #{score_function_model_forward.1} parent=11 // pred_check
          %p578 = pneg %p137
        $region26: #{score_function_model_forward.1} parent=11 // pred_check_branch
          %580 = sbr.rel (%p578) target = $region28
        $region27: #{score_function_model_forward.1} parent=11 // pred_region
          _
        $region28: #{score_function_model_forward.1} parent=11 // pred_fallthru
          _
        // Predicated region
        $region29: #{score_function_model_forward.1} parent=11 // pred_check
          %p581 = pneg %p470
        $region30: #{score_function_model_forward.1} parent=11 // pred_check_branch
          %583 = sbr.rel (%p581) target = $region32
        $region31: #{score_function_model_forward.1} parent=11 // pred_region
          %s585 = ssub.s32 16, 16
          %586 = vsyncadd [#allocation24], %s585
          %s588 = sshll.u32 [#allocation25], 4
          %s589 = int_to_ptr.vmem [resolvable:$true] %s588
          %591 = dma.hbm_to_vmem [thread:$0]  %s16, 16, %s589, [#allocation24]
        $region32: #{score_function_model_forward.1} parent=11 // pred_fallthru
          _
        // Predicated region
        $region33: #{score_function_model_forward.1} parent=11 // pred_check
          %p592 = pneg %p491
        $region34: #{score_function_model_forward.1} parent=11 // pred_check_branch
          %594 = sbr.rel (%p592) target = $region36
        $region35: #{score_function_model_forward.1} parent=11 // pred_region
          _
        $region36: #{score_function_model_forward.1} parent=11 // pred_fallthru
          _
        // Predicated region
        $region37: #{score_function_model_forward.1} parent=11 // pred_check
          %p595 = pneg %p512
        $region38: #{score_function_model_forward.1} parent=11 // pred_check_branch
          %597 = sbr.rel (%p595) target = $region40
        $region39: #{score_function_model_forward.1} parent=11 // pred_region
          %s599 = ssub.s32 16, 16
          %600 = vsyncadd [#allocation27], %s599
          %s602 = sshll.u32 [#allocation26], 4
          %s603 = int_to_ptr.vmem [resolvable:$true] %s602
          %605 = dma.hbm_to_vmem [thread:$0]  %s18, 16, %s603, [#allocation27]
        $region40: #{score_function_model_forward.1} parent=11 // pred_fallthru
          _
      $region12: #{score_function_model_forward.1} parent=5 // pred_fallthru
        _
      %p606 = scmp.lt.s32.totalorder %s53, 6
      // Predicated region
      $region41: #{score_function_model_forward.1} parent=5 // pred_check
        %p607 = pneg %p606
      $region42: #{score_function_model_forward.1} parent=5 // pred_check_branch
        %609 = sbr.rel (%p607) target = $region44
      $region43: #{score_function_model_forward.1} parent=5 // pred_region
        // Predicated region
        $region45: #{score_function_model_forward.1} parent=43 // pred_check
          %p610 = pneg %p157
        $region46: #{score_function_model_forward.1} parent=43 // pred_check_branch
          %612 = sbr.rel (%p610) target = $region48
        $region47: #{score_function_model_forward.1} parent=43 // pred_region
          %s613 = sand.u32 %s147, 1
          %s614 = scalar_lea.sflag [#allocation6], %s613
          %s615 = sand.u32 %s147, 1
          %s616 = smul.addr %s615, 192
          %s617 = scalar_lea.vmem [#allocation5], %s616
          %s619 = ssub.s32 3072, 3072
          %620 = vsyncadd %s614, %s619
          %s621 = smul.addr %s53, 48
          %s622 = smul.addr %s621, 64
          %s623 = scalar_lea.hbm %s4, %s622
          %s624 = sshll.u32 %s617, 4
          %s625 = int_to_ptr.vmem [resolvable:$true] %s624
          %630 = dma.hbm_to_vmem [thread:$0]  %s623, 3072, %s625, %s614, 192, 192, 12
        $region48: #{score_function_model_forward.1} parent=43 // pred_fallthru
          _
        // Predicated region
        $region49: #{score_function_model_forward.1} parent=43 // pred_check
          %p631 = pneg %p183
        $region50: #{score_function_model_forward.1} parent=43 // pred_check_branch
          %633 = sbr.rel (%p631) target = $region52
        $region51: #{score_function_model_forward.1} parent=43 // pred_region
          %s634 = sand.u32 %s53, 1
          %s635 = scalar_lea.sflag [#allocation9], %s634
          %s636 = sand.u32 %s173, 1
          %s637 = smul.addr %s636, 3
          %s638 = scalar_lea.vmem [#allocation8], %s637
          %s640 = ssub.s32 48, 48
          %641 = vsyncadd %s635, %s640
          %s642 = smul.addr %s53, 3
          %s643 = smul.addr %s642, 16
          %s644 = scalar_lea.hbm %s5, %s643
          %s646 = sshll.u32 %s638, 4
          %s647 = int_to_ptr.vmem [resolvable:$true] %s646
          %649 = dma.hbm_to_vmem [thread:$0]  %s644, 48, %s647, %s635
        $region52: #{score_function_model_forward.1} parent=43 // pred_fallthru
          _
        // Predicated region
        $region53: #{score_function_model_forward.1} parent=43 // pred_check
          %p650 = pneg %p209
        $region54: #{score_function_model_forward.1} parent=43 // pred_check_branch
          %652 = sbr.rel (%p650) target = $region56
        $region55: #{score_function_model_forward.1} parent=43 // pred_region
          %s653 = sand.u32 %s53, 1
          %s654 = scalar_lea.sflag [#allocation9], %s653
          %s655 = sand.u32 %s199, 1
          %s656 = smul.addr %s655, 64
          %s657 = scalar_lea.vmem [#allocation10], %s656
          %s659 = ssub.s32 1024, 1024
          %660 = vsyncadd %s654, %s659
          %s661 = smul.addr %s53, 16
          %s662 = smul.addr %s661, 64
          %s663 = scalar_lea.hbm %s6, %s662
          %s664 = sshll.u32 %s657, 4
          %s665 = int_to_ptr.vmem [resolvable:$true] %s664
          %670 = dma.hbm_to_vmem [thread:$0]  %s663, 1024, %s665, %s654, 64, 64, 4
        $region56: #{score_function_model_forward.1} parent=43 // pred_fallthru
          _
        // Predicated region
        $region57: #{score_function_model_forward.1} parent=43 // pred_check
          %p671 = pneg %p235
        $region58: #{score_function_model_forward.1} parent=43 // pred_check_branch
          %673 = sbr.rel (%p671) target = $region60
        $region59: #{score_function_model_forward.1} parent=43 // pred_region
          %s674 = sand.u32 %s53, 1
          %s675 = scalar_lea.sflag [#allocation12], %s674
          %s676 = sand.u32 %s225, 1
          %s677 = scalar_lea.vmem [#allocation11], %s676
          %s679 = ssub.s32 16, 16
          %680 = vsyncadd %s675, %s679
          %s681 = smul.addr %s53, 16
          %s682 = scalar_lea.hbm %s7, %s681
          %s684 = sshll.u32 %s677, 4
          %s685 = int_to_ptr.vmem [resolvable:$true] %s684
          %687 = dma.hbm_to_vmem [thread:$0]  %s682, 16, %s685, %s675
        $region60: #{score_function_model_forward.1} parent=43 // pred_fallthru
          _
        // Predicated region
        $region61: #{score_function_model_forward.1} parent=43 // pred_check
          %p688 = pneg %p261
        $region62: #{score_function_model_forward.1} parent=43 // pred_check_branch
          %690 = sbr.rel (%p688) target = $region64
        $region63: #{score_function_model_forward.1} parent=43 // pred_region
          %s691 = sand.u32 %s53, 1
          %s692 = scalar_lea.sflag [#allocation12], %s691
          %s693 = sand.u32 %s251, 1
          %s694 = scalar_lea.vmem [#allocation13], %s693
          %s696 = ssub.s32 16, 16
          %697 = vsyncadd %s692, %s696
          %s698 = smul.addr %s53, 16
          %s699 = scalar_lea.hbm %s8, %s698
          %s701 = sshll.u32 %s694, 4
          %s702 = int_to_ptr.vmem [resolvable:$true] %s701
          %704 = dma.hbm_to_vmem [thread:$0]  %s699, 16, %s702, %s692
        $region64: #{score_function_model_forward.1} parent=43 // pred_fallthru
          _
        // Predicated region
        $region65: #{score_function_model_forward.1} parent=43 // pred_check
          %p705 = pneg %p287
        $region66: #{score_function_model_forward.1} parent=43 // pred_check_branch
          %707 = sbr.rel (%p705) target = $region68
        $region67: #{score_function_model_forward.1} parent=43 // pred_region
          %s708 = sand.u32 %s53, 1
          %s709 = scalar_lea.sflag [#allocation15], %s708
          %s710 = sand.u32 %s277, 1
          %s711 = scalar_lea.vmem [#allocation14], %s710
          %s713 = ssub.s32 16, 16
          %714 = vsyncadd %s709, %s713
          %s715 = smul.addr %s53, 16
          %s716 = scalar_lea.hbm %s9, %s715
          %s718 = sshll.u32 %s711, 4
          %s719 = int_to_ptr.vmem [resolvable:$true] %s718
          %721 = dma.hbm_to_vmem [thread:$0]  %s716, 16, %s719, %s709
        $region68: #{score_function_model_forward.1} parent=43 // pred_fallthru
          _
        // Predicated region
        $region69: #{score_function_model_forward.1} parent=43 // pred_check
          %p722 = pneg %p313
        $region70: #{score_function_model_forward.1} parent=43 // pred_check_branch
          %724 = sbr.rel (%p722) target = $region72
        $region71: #{score_function_model_forward.1} parent=43 // pred_region
          %s725 = sand.u32 %s53, 1
          %s726 = scalar_lea.sflag [#allocation15], %s725
          %s727 = sand.u32 %s303, 1
          %s728 = smul.addr %s727, 1024
          %s729 = scalar_lea.vmem [#allocation16], %s728
          %s731 = ssub.s32 16384, 16384
          %732 = vsyncadd %s726, %s731
          %s733 = smul.addr %s53, 256
          %s734 = smul.addr %s733, 64
          %s735 = scalar_lea.hbm %s10, %s734
          %s736 = sshll.u32 %s729, 4
          %s737 = int_to_ptr.vmem [resolvable:$true] %s736
          %742 = dma.hbm_to_vmem [thread:$0]  %s735, 16384, %s737, %s726, 1024, 1024, 64
        $region72: #{score_function_model_forward.1} parent=43 // pred_fallthru
          _
        // Predicated region
        $region73: #{score_function_model_forward.1} parent=43 // pred_check
          %p743 = pneg %p339
        $region74: #{score_function_model_forward.1} parent=43 // pred_check_branch
          %745 = sbr.rel (%p743) target = $region76
        $region75: #{score_function_model_forward.1} parent=43 // pred_region
          %s746 = sand.u32 %s53, 1
          %s747 = scalar_lea.sflag [#allocation18], %s746
          %s748 = sand.u32 %s329, 1
          %s749 = smul.addr %s748, 16
          %s750 = scalar_lea.vmem [#allocation17], %s749
          %s752 = ssub.s32 256, 256
          %753 = vsyncadd %s747, %s752
          %s754 = smul.addr %s53, 16
          %s755 = smul.addr %s754, 16
          %s756 = scalar_lea.hbm %s11, %s755
          %s758 = sshll.u32 %s750, 4
          %s759 = int_to_ptr.vmem [resolvable:$true] %s758
          %761 = dma.hbm_to_vmem [thread:$0]  %s756, 256, %s759, %s747
        $region76: #{score_function_model_forward.1} parent=43 // pred_fallthru
          _
        // Predicated region
        $region77: #{score_function_model_forward.1} parent=43 // pred_check
          %p762 = pneg %p365
        $region78: #{score_function_model_forward.1} parent=43 // pred_check_branch
          %764 = sbr.rel (%p762) target = $region80
        $region79: #{score_function_model_forward.1} parent=43 // pred_region
          %s765 = sand.u32 %s53, 1
          %s766 = scalar_lea.sflag [#allocation18], %s765
          %s767 = sand.u32 %s355, 1
          %s768 = smul.addr %s767, 1024
          %s769 = scalar_lea.vmem [#allocation19], %s768
          %s771 = ssub.s32 16384, 16384
          %772 = vsyncadd %s766, %s771
          %s773 = smul.addr %s53, 256
          %s774 = smul.addr %s773, 64
          %s775 = scalar_lea.hbm %s12, %s774
          %s776 = sshll.u32 %s769, 4
          %s777 = int_to_ptr.vmem [resolvable:$true] %s776
          %782 = dma.hbm_to_vmem [thread:$0]  %s775, 16384, %s777, %s766, 64, 64, 4
        $region80: #{score_function_model_forward.1} parent=43 // pred_fallthru
          _
        // Predicated region
        $region81: #{score_function_model_forward.1} parent=43 // pred_check
          %p783 = pneg %p391
        $region82: #{score_function_model_forward.1} parent=43 // pred_check_branch
          %785 = sbr.rel (%p783) target = $region84
        $region83: #{score_function_model_forward.1} parent=43 // pred_region
          %s786 = sand.u32 %s53, 1
          %s787 = scalar_lea.sflag [#allocation21], %s786
          %s788 = sand.u32 %s381, 1
          %s789 = scalar_lea.vmem [#allocation20], %s788
          %s791 = ssub.s32 16, 16
          %792 = vsyncadd %s787, %s791
          %s793 = smul.addr %s53, 16
          %s794 = scalar_lea.hbm %s13, %s793
          %s796 = sshll.u32 %s789, 4
          %s797 = int_to_ptr.vmem [resolvable:$true] %s796
          %799 = dma.hbm_to_vmem [thread:$0]  %s794, 16, %s797, %s787
        $region84: #{score_function_model_forward.1} parent=43 // pred_fallthru
          _
        // Predicated region
        $region85: #{score_function_model_forward.1} parent=43 // pred_check
          %p800 = pneg %p417
        $region86: #{score_function_model_forward.1} parent=43 // pred_check_branch
          %802 = sbr.rel (%p800) target = $region88
        $region87: #{score_function_model_forward.1} parent=43 // pred_region
          %s803 = sand.u32 %s53, 1
          %s804 = scalar_lea.sflag [#allocation21], %s803
          %s805 = sand.u32 %s407, 1
          %s806 = scalar_lea.vmem [#allocation22], %s805
          %s808 = ssub.s32 16, 16
          %809 = vsyncadd %s804, %s808
          %s810 = smul.addr %s53, 16
          %s811 = scalar_lea.hbm %s14, %s810
          %s813 = sshll.u32 %s806, 4
          %s814 = int_to_ptr.vmem [resolvable:$true] %s813
          %816 = dma.hbm_to_vmem [thread:$0]  %s811, 16, %s814, %s804
        $region88: #{score_function_model_forward.1} parent=43 // pred_fallthru
          _
        // Predicated region
        $region89: #{score_function_model_forward.1} parent=43 // pred_check
          %p817 = pneg %p443
        $region90: #{score_function_model_forward.1} parent=43 // pred_check_branch
          %819 = sbr.rel (%p817) target = $region92
        $region91: #{score_function_model_forward.1} parent=43 // pred_region
          %s820 = sand.u32 %s53, 1
          %s821 = scalar_lea.sflag [#allocation24], %s820
          %s822 = sand.u32 %s433, 1
          %s823 = scalar_lea.vmem [#allocation23], %s822
          %s825 = ssub.s32 16, 16
          %826 = vsyncadd %s821, %s825
          %s827 = smul.addr %s53, 16
          %s828 = scalar_lea.hbm %s15, %s827
          %s830 = sshll.u32 %s823, 4
          %s831 = int_to_ptr.vmem [resolvable:$true] %s830
          %833 = dma.hbm_to_vmem [thread:$0]  %s828, 16, %s831, %s821
        $region92: #{score_function_model_forward.1} parent=43 // pred_fallthru
          _
      $region44: #{score_function_model_forward.1} parent=5 // pred_fallthru
        _
      %p834 = scmp.le.s32.totalorder 1, %s53
      %p835 = scmp.lt.s32.totalorder %s53, 7
      %p836 = pnand %p834, %p835
      %p837 = pneg %p836
      // Predicated region
      $region93: #{score_function_model_forward.1} parent=5 // pred_check
        _
      $region94: #{score_function_model_forward.1} parent=5 // pred_check_branch
        %839 = sbr.rel (%p836) target = $region96
      $region95: #{score_function_model_forward.1} parent=5 // pred_region
        %s840 = ssub.s32 %s53, 1
        %s841 = sand.u32 %s150, 1
        %s842 = scalar_lea.sflag [#allocation6], %s841
        %s843 = sand.u32 %s150, 1
        %s844 = smul.addr %s843, 192
        %s845 = scalar_lea.vmem [#allocation5], %s844
        // Predicated region
        $region97: #{score_function_model_forward.1} parent=95 // pred_check
          %p846 = pneg %p163
        $region98: #{score_function_model_forward.1} parent=95 // pred_check_branch
          %848 = sbr.rel (%p846) target = $region100
        $region99: #{score_function_model_forward.1} parent=95 // pred_region
          %849 = dma.done %s842, 3072
        $region100: #{score_function_model_forward.1} parent=95 // pred_fallthru
          _
        %s850 = sand.u32 %s58, 1
        %s851 = scalar_lea.sflag [#allocation9], %s850
        %s852 = sand.u32 %s176, 1
        %s853 = smul.addr %s852, 3
        %s854 = scalar_lea.vmem [#allocation8], %s853
        // Predicated region
        $region101: #{score_function_model_forward.1} parent=95 // pred_check
          %p855 = pneg %p189
        $region102: #{score_function_model_forward.1} parent=95 // pred_check_branch
          %857 = sbr.rel (%p855) target = $region104
        $region103: #{score_function_model_forward.1} parent=95 // pred_region
          %858 = dma.done %s851, 48
        $region104: #{score_function_model_forward.1} parent=95 // pred_fallthru
          _
        %s859 = sand.u32 %s58, 1
        %s860 = scalar_lea.sflag [#allocation9], %s859
        %s861 = sand.u32 %s202, 1
        %s862 = smul.addr %s861, 64
        %s863 = scalar_lea.vmem [#allocation10], %s862
        // Predicated region
        $region105: #{score_function_model_forward.1} parent=95 // pred_check
          %p864 = pneg %p215
        $region106: #{score_function_model_forward.1} parent=95 // pred_check_branch
          %866 = sbr.rel (%p864) target = $region108
        $region107: #{score_function_model_forward.1} parent=95 // pred_region
          %867 = dma.done %s860, 1024
        $region108: #{score_function_model_forward.1} parent=95 // pred_fallthru
          _
        %s868 = sand.u32 %s58, 1
        %s869 = scalar_lea.sflag [#allocation12], %s868
        %s870 = sand.u32 %s228, 1
        %s871 = scalar_lea.vmem [#allocation11], %s870
        // Predicated region
        $region109: #{score_function_model_forward.1} parent=95 // pred_check
          %p872 = pneg %p241
        $region110: #{score_function_model_forward.1} parent=95 // pred_check_branch
          %874 = sbr.rel (%p872) target = $region112
        $region111: #{score_function_model_forward.1} parent=95 // pred_region
          %875 = dma.done %s869, 16
        $region112: #{score_function_model_forward.1} parent=95 // pred_fallthru
          _
        %s876 = sand.u32 %s58, 1
        %s877 = scalar_lea.sflag [#allocation12], %s876
        %s878 = sand.u32 %s254, 1
        %s879 = scalar_lea.vmem [#allocation13], %s878
        // Predicated region
        $region113: #{score_function_model_forward.1} parent=95 // pred_check
          %p880 = pneg %p267
        $region114: #{score_function_model_forward.1} parent=95 // pred_check_branch
          %882 = sbr.rel (%p880) target = $region116
        $region115: #{score_function_model_forward.1} parent=95 // pred_region
          %883 = dma.done %s877, 16
        $region116: #{score_function_model_forward.1} parent=95 // pred_fallthru
          _
        %s884 = sand.u32 %s58, 1
        %s885 = scalar_lea.sflag [#allocation15], %s884
        %s886 = sand.u32 %s280, 1
        %s887 = scalar_lea.vmem [#allocation14], %s886
        // Predicated region
        $region117: #{score_function_model_forward.1} parent=95 // pred_check
          %p888 = pneg %p293
        $region118: #{score_function_model_forward.1} parent=95 // pred_check_branch
          %890 = sbr.rel (%p888) target = $region120
        $region119: #{score_function_model_forward.1} parent=95 // pred_region
          %891 = dma.done %s885, 16
        $region120: #{score_function_model_forward.1} parent=95 // pred_fallthru
          _
        %s892 = sand.u32 %s58, 1
        %s893 = scalar_lea.sflag [#allocation15], %s892
        %s894 = sand.u32 %s306, 1
        %s895 = smul.addr %s894, 1024
        %s896 = scalar_lea.vmem [#allocation16], %s895
        // Predicated region
        $region121: #{score_function_model_forward.1} parent=95 // pred_check
          %p897 = pneg %p319
        $region122: #{score_function_model_forward.1} parent=95 // pred_check_branch
          %899 = sbr.rel (%p897) target = $region124
        $region123: #{score_function_model_forward.1} parent=95 // pred_region
          %900 = dma.done %s893, 16384
        $region124: #{score_function_model_forward.1} parent=95 // pred_fallthru
          _
        %s901 = sand.u32 %s58, 1
        %s902 = scalar_lea.sflag [#allocation18], %s901
        %s903 = sand.u32 %s332, 1
        %s904 = smul.addr %s903, 16
        %s905 = scalar_lea.vmem [#allocation17], %s904
        // Predicated region
        $region125: #{score_function_model_forward.1} parent=95 // pred_check
          %p906 = pneg %p345
        $region126: #{score_function_model_forward.1} parent=95 // pred_check_branch
          %908 = sbr.rel (%p906) target = $region128
        $region127: #{score_function_model_forward.1} parent=95 // pred_region
          %909 = dma.done %s902, 256
        $region128: #{score_function_model_forward.1} parent=95 // pred_fallthru
          _
        %s910 = sand.u32 %s58, 1
        %s911 = scalar_lea.sflag [#allocation18], %s910
        %s912 = sand.u32 %s358, 1
        %s913 = smul.addr %s912, 1024
        %s914 = scalar_lea.vmem [#allocation19], %s913
        // Predicated region
        $region129: #{score_function_model_forward.1} parent=95 // pred_check
          %p915 = pneg %p371
        $region130: #{score_function_model_forward.1} parent=95 // pred_check_branch
          %917 = sbr.rel (%p915) target = $region132
        $region131: #{score_function_model_forward.1} parent=95 // pred_region
          %918 = dma.done %s911, 16384
        $region132: #{score_function_model_forward.1} parent=95 // pred_fallthru
          _
        %s919 = sand.u32 %s58, 1
        %s920 = scalar_lea.sflag [#allocation21], %s919
        %s921 = sand.u32 %s384, 1
        %s922 = scalar_lea.vmem [#allocation20], %s921
        // Predicated region
        $region133: #{score_function_model_forward.1} parent=95 // pred_check
          %p923 = pneg %p397
        $region134: #{score_function_model_forward.1} parent=95 // pred_check_branch
          %925 = sbr.rel (%p923) target = $region136
        $region135: #{score_function_model_forward.1} parent=95 // pred_region
          %926 = dma.done %s920, 16
        $region136: #{score_function_model_forward.1} parent=95 // pred_fallthru
          _
        %s927 = sand.u32 %s58, 1
        %s928 = scalar_lea.sflag [#allocation21], %s927
        %s929 = sand.u32 %s410, 1
        %s930 = scalar_lea.vmem [#allocation22], %s929
        // Predicated region
        $region137: #{score_function_model_forward.1} parent=95 // pred_check
          %p931 = pneg %p423
        $region138: #{score_function_model_forward.1} parent=95 // pred_check_branch
          %933 = sbr.rel (%p931) target = $region140
        $region139: #{score_function_model_forward.1} parent=95 // pred_region
          %934 = dma.done %s928, 16
        $region140: #{score_function_model_forward.1} parent=95 // pred_fallthru
          _
        %s935 = sand.u32 %s58, 1
        %s936 = scalar_lea.sflag [#allocation24], %s935
        %s937 = sand.u32 %s436, 1
        %s938 = scalar_lea.vmem [#allocation23], %s937
        // Predicated region
        $region141: #{score_function_model_forward.1} parent=95 // pred_check
          %p939 = pneg %p449
        $region142: #{score_function_model_forward.1} parent=95 // pred_check_branch
          %941 = sbr.rel (%p939) target = $region144
        $region143: #{score_function_model_forward.1} parent=95 // pred_region
          %942 = dma.done %s936, 16
        $region144: #{score_function_model_forward.1} parent=95 // pred_fallthru
          _
        // Predicated region
        $region145: #{score_function_model_forward.1} parent=95 // pred_check
          %p943 = pneg %p470
        $region146: #{score_function_model_forward.1} parent=95 // pred_check_branch
          %945 = sbr.rel (%p943) target = $region148
        $region147: #{score_function_model_forward.1} parent=95 // pred_region
          %946 = dma.done [#allocation24], 16
        $region148: #{score_function_model_forward.1} parent=95 // pred_fallthru
          _
        // Predicated region
        $region149: #{score_function_model_forward.1} parent=95 // pred_check
          %p947 = pneg %p512
        $region150: #{score_function_model_forward.1} parent=95 // pred_check_branch
          %949 = sbr.rel (%p947) target = $region152
        $region151: #{score_function_model_forward.1} parent=95 // pred_region
          %950 = dma.done [#allocation27], 16
        $region152: #{score_function_model_forward.1} parent=95 // pred_fallthru
          _
        %p951 = pneg %p74
        %p952 = pneg %p71
        %p953 = pneg %p95
        %p954 = pneg %p92
        %p955 = pneg %p116
        %p956 = pneg %p113
        %p957 = pneg %p137
        %p958 = pneg %p134
        %s959 = sand.u32 %s150, 1
        %s960 = scalar_lea.sflag [#allocation6], %s959
        %s961 = sand.u32 %s150, 1
        %s962 = smul.addr %s961, 192
        %s963 = scalar_lea.vmem [#allocation5], %s962
        %p964 = pneg %p163
        %p965 = pneg %p160
        %s966 = sand.u32 %s58, 1
        %s967 = scalar_lea.sflag [#allocation9], %s966
        %s968 = sand.u32 %s176, 1
        %s969 = smul.addr %s968, 3
        %s970 = scalar_lea.vmem [#allocation8], %s969
        %p971 = pneg %p189
        %p972 = pneg %p186
        %s973 = sand.u32 %s58, 1
        %s974 = scalar_lea.sflag [#allocation9], %s973
        %s975 = sand.u32 %s202, 1
        %s976 = smul.addr %s975, 64
        %s977 = scalar_lea.vmem [#allocation10], %s976
        %p978 = pneg %p215
        %p979 = pneg %p212
        %s980 = sand.u32 %s58, 1
        %s981 = scalar_lea.sflag [#allocation12], %s980
        %s982 = sand.u32 %s228, 1
        %s983 = scalar_lea.vmem [#allocation11], %s982
        %p984 = pneg %p241
        %p985 = pneg %p238
        %s986 = sand.u32 %s58, 1
        %s987 = scalar_lea.sflag [#allocation12], %s986
        %s988 = sand.u32 %s254, 1
        %s989 = scalar_lea.vmem [#allocation13], %s988
        %p990 = pneg %p267
        %p991 = pneg %p264
        %s992 = sand.u32 %s58, 1
        %s993 = scalar_lea.sflag [#allocation15], %s992
        %s994 = sand.u32 %s280, 1
        %s995 = scalar_lea.vmem [#allocation14], %s994
        %p996 = pneg %p293
        %p997 = pneg %p290
        %s998 = sand.u32 %s58, 1
        %s999 = scalar_lea.sflag [#allocation15], %s998
        %s1000 = sand.u32 %s306, 1
        %s1001 = smul.addr %s1000, 1024
        %s1002 = scalar_lea.vmem [#allocation16], %s1001
        %p1003 = pneg %p319
        %p1004 = pneg %p316
        %s1005 = sand.u32 %s58, 1
        %s1006 = scalar_lea.sflag [#allocation18], %s1005
        %s1007 = sand.u32 %s332, 1
        %s1008 = smul.addr %s1007, 16
        %s1009 = scalar_lea.vmem [#allocation17], %s1008
        %p1010 = pneg %p345
        %p1011 = pneg %p342
        %s1012 = sand.u32 %s58, 1
        %s1013 = scalar_lea.sflag [#allocation18], %s1012
        %s1014 = sand.u32 %s358, 1
        %s1015 = smul.addr %s1014, 1024
        %s1016 = scalar_lea.vmem [#allocation19], %s1015
        %p1017 = pneg %p371
        %p1018 = pneg %p368
        %s1019 = sand.u32 %s58, 1
        %s1020 = scalar_lea.sflag [#allocation21], %s1019
        %s1021 = sand.u32 %s384, 1
        %s1022 = scalar_lea.vmem [#allocation20], %s1021
        %p1023 = pneg %p397
        %p1024 = pneg %p394
        %s1025 = sand.u32 %s58, 1
        %s1026 = scalar_lea.sflag [#allocation21], %s1025
        %s1027 = sand.u32 %s410, 1
        %s1028 = scalar_lea.vmem [#allocation22], %s1027
        %p1029 = pneg %p423
        %p1030 = pneg %p420
        %s1031 = sand.u32 %s58, 1
        %s1032 = scalar_lea.sflag [#allocation24], %s1031
        %s1033 = sand.u32 %s436, 1
        %s1034 = scalar_lea.vmem [#allocation23], %s1033
        %p1035 = pneg %p449
        %p1036 = pneg %p446
        %p1037 = pneg %p470
        %p1038 = pneg %p467
        %p1039 = pneg %p491
        %p1040 = pneg %p488
        %p1041 = pneg %p512
        %p1042 = pneg %p509
        %p1043 = pneg %p533
        %p1044 = pneg %p530
        %p1045 = pneg %p554
        %p1046 = pneg %p551
        %p1048 = scmp.eq.s32.totalorder %s58, 0
        // Predicated region
        $region153: #{score_function_model_forward.1} parent=95 // pred_check
          %p1049 = pneg %p1048
        $region154: #{score_function_model_forward.1} parent=95 // pred_check_branch
          %1051 = sbr.rel (%p1049) target = $region156
        $region155: #{score_function_model_forward.1} parent=95 // pred_region
          %v1052 = vld [vmem:[%s0] sm:$0xff]
          %v1053 = vld [vmem:[%s0 + $0x8] sm:$0xff]
          %1054 = vst [vmem:[#allocation2] sm:$0xff] %v1052
          %1055 = vst [vmem:[#allocation2 + $0x8] sm:$0xff] %v1053
        $region156: #{score_function_model_forward.1} parent=95 // pred_fallthru
          _
        %v1056 = vld [vmem:[#allocation2] sm:$0xff]
        %v1057 = vld [vmem:[#allocation2 + $0x8] sm:$0xff]
        %v1058 = vld [vmem:[%s1] sm:$0xff]
        %v1059 = vpack.c.bf16 %v1057, %v1056
        %v1060 = vld [vmem:[%s845] sm:$0xff]
        %v1061 = vld [vmem:[%s845 + $0x8] sm:$0xf]
        %v1062 = vld [vmem:[%s845 + $0xc] sm:$0xff]
        %v1063 = vld [vmem:[%s845 + $0x14] sm:$0xf]
        %v1064 = vld [vmem:[%s845 + $0x18] sm:$0xff]
        %v1065 = vld [vmem:[%s845 + $0x20] sm:$0xf]
        %v1066 = vld [vmem:[%s845 + $0x24] sm:$0xff]
        %v1067 = vld [vmem:[%s845 + $0x2c] sm:$0xf]
        %v1068 = vld [vmem:[%s845 + $0x30] sm:$0xff]
        %v1069 = vld [vmem:[%s845 + $0x38] sm:$0xf]
        %v1070 = vld [vmem:[%s845 + $0x3c] sm:$0xff]
        %v1071 = vld [vmem:[%s845 + $0x44] sm:$0xf]
        %v1072 = vld [vmem:[%s845 + $0x48] sm:$0xff]
        %v1073 = vld [vmem:[%s845 + $0x50] sm:$0xf]
        %v1074 = vld [vmem:[%s845 + $0x54] sm:$0xff]
        %v1075 = vld [vmem:[%s845 + $0x5c] sm:$0xf]
        %v1076 = vld [vmem:[%s845 + $0x60] sm:$0xff]
        %v1077 = vld [vmem:[%s845 + $0x68] sm:$0xf]
        %v1078 = vld [vmem:[%s845 + $0x6c] sm:$0xff]
        %v1079 = vld [vmem:[%s845 + $0x74] sm:$0xf]
        %v1080 = vld [vmem:[%s845 + $0x78] sm:$0xff]
        %v1081 = vld [vmem:[%s845 + $0x80] sm:$0xf]
        %v1082 = vld [vmem:[%s845 + $0x84] sm:$0xff]
        %v1083 = vld [vmem:[%s845 + $0x8c] sm:$0xf]
        %v1084 = vld [vmem:[%s845 + $0x90] sm:$0xff]
        %v1085 = vld [vmem:[%s845 + $0x98] sm:$0xf]
        %v1086 = vld [vmem:[%s845 + $0x9c] sm:$0xff]
        %v1087 = vld [vmem:[%s845 + $0xa4] sm:$0xf]
        %v1088 = vld [vmem:[%s845 + $0xa8] sm:$0xff]
        %v1089 = vld [vmem:[%s845 + $0xb0] sm:$0xf]
        %v1090 = vld [vmem:[%s845 + $0xb4] sm:$0xff]
        %v1091 = vld [vmem:[%s845 + $0xbc] sm:$0xf]
        %v1092 = vld [vmem:[%s854] sm:$0x7]
        %v1094 = vlaneseq
        %v1095 = vshrl.u32 %v1094, 7
        %v1096 = vsub.s32 0, %v1095
        %v1097 = vrot.slane %v1092, %v1096
        %v1098 = vlaneseq
        %v1099 = vshrl.u32 %v1098, 7
        %v1100 = vsub.s32 1, %v1099
        %v1101 = vrot.slane %v1092, %v1100
        %v1102 = vlaneseq
        %v1103 = vshrl.u32 %v1102, 7
        %v1104 = vsub.s32 2, %v1103
        %v1105 = vrot.slane %v1092, %v1104
        %v1141 = vunpack.c.l.b16 %v1060
        %v1142 = vunpack.c.h.b16 %v1060
        %v1143 = vunpack.c.l.b16 %v1061
        %v1144 = vunpack.c.l.b16 %v1062
        %v1145 = vunpack.c.h.b16 %v1062
        %v1146 = vunpack.c.l.b16 %v1063
        %v1147 = vunpack.c.l.b16 %v1064
        %v1148 = vunpack.c.h.b16 %v1064
        %v1149 = vunpack.c.l.b16 %v1065
        %v1150 = vunpack.c.l.b16 %v1066
        %v1151 = vunpack.c.h.b16 %v1066
        %v1152 = vunpack.c.l.b16 %v1067
        %v1153 = vunpack.c.l.b16 %v1068
        %v1154 = vunpack.c.h.b16 %v1068
        %v1155 = vunpack.c.l.b16 %v1069
        %v1156 = vunpack.c.l.b16 %v1070
        %v1157 = vunpack.c.h.b16 %v1070
        %v1158 = vunpack.c.l.b16 %v1071
        %v1159 = vunpack.c.l.b16 %v1072
        %v1160 = vunpack.c.h.b16 %v1072
        %v1161 = vunpack.c.l.b16 %v1073
        %v1162 = vunpack.c.l.b16 %v1074
        %v1163 = vunpack.c.h.b16 %v1074
        %v1164 = vunpack.c.l.b16 %v1075
        %v1165 = vunpack.c.l.b16 %v1076
        %v1166 = vunpack.c.h.b16 %v1076
        %v1167 = vunpack.c.l.b16 %v1077
        %v1168 = vunpack.c.l.b16 %v1078
        %v1169 = vunpack.c.h.b16 %v1078
        %v1170 = vunpack.c.l.b16 %v1079
        %v1171 = vunpack.c.l.b16 %v1080
        %v1172 = vunpack.c.h.b16 %v1080
        %v1173 = vunpack.c.l.b16 %v1081
        %v1174 = vunpack.c.l.b16 %v1082
        %v1175 = vunpack.c.h.b16 %v1082
        %v1176 = vunpack.c.l.b16 %v1083
        %v1177 = vunpack.c.l.b16 %v1084
        %v1178 = vunpack.c.h.b16 %v1084
        %v1179 = vunpack.c.l.b16 %v1085
        %v1180 = vunpack.c.l.b16 %v1086
        %v1181 = vunpack.c.h.b16 %v1086
        %v1182 = vunpack.c.l.b16 %v1087
        %v1183 = vunpack.c.l.b16 %v1088
        %v1184 = vunpack.c.h.b16 %v1088
        %v1185 = vunpack.c.l.b16 %v1089
        %v1186 = vunpack.c.l.b16 %v1090
        %v1187 = vunpack.c.h.b16 %v1090
        %v1188 = vunpack.c.l.b16 %v1091
        %v1189 = vpack.c.b16 %v1144, %v1141
        %v1190 = vpack.c.b16 %v1145, %v1142
        %v1191 = vpack.c.b16 %v1146, %v1143
        %v1192 = vpack.c.b16 %v1150, %v1147
        %v1193 = vpack.c.b16 %v1151, %v1148
        %v1194 = vpack.c.b16 %v1152, %v1149
        %v1195 = vpack.c.b16 %v1156, %v1153
        %v1196 = vpack.c.b16 %v1157, %v1154
        %v1197 = vpack.c.b16 %v1158, %v1155
        %v1198 = vpack.c.b16 %v1162, %v1159
        %v1199 = vpack.c.b16 %v1163, %v1160
        %v1200 = vpack.c.b16 %v1164, %v1161
        %v1201 = vpack.c.b16 %v1168, %v1165
        %v1202 = vpack.c.b16 %v1169, %v1166
        %v1203 = vpack.c.b16 %v1170, %v1167
        %v1204 = vpack.c.b16 %v1174, %v1171
        %v1205 = vpack.c.b16 %v1175, %v1172
        %v1206 = vpack.c.b16 %v1176, %v1173
        %v1207 = vpack.c.b16 %v1180, %v1177
        %v1208 = vpack.c.b16 %v1181, %v1178
        %v1209 = vpack.c.b16 %v1182, %v1179
        %v1210 = vpack.c.b16 %v1186, %v1183
        %v1211 = vpack.c.b16 %v1187, %v1184
        %v1212 = vpack.c.b16 %v1188, %v1185
        %1237 = vmatprep.subr.bf16.mxu0 %v1211
        %1238 = vmatpush1.bf16.msra.mxu0 %v1210
        %1239 = vmatprep.subr.bf16.mxu0 %v1208
        %1240 = vmatpush1.bf16.msra.mxu0 %v1207
        %1241 = vmatprep.subr.bf16.mxu0 %v1205
        %1242 = vmatpush1.bf16.msra.mxu0 %v1204
        %1243 = vmatprep.subr.bf16.mxu0 %v1202
        %1244 = vmatpush1.bf16.msra.mxu0 %v1201
        %1245 = vmatprep.subr.bf16.mxu0 %v1199
        %1246 = vmatpush1.bf16.msra.mxu0 %v1198
        %1247 = vmatprep.subr.bf16.mxu0 %v1196
        %1248 = vmatpush1.bf16.msra.mxu0 %v1195
        %1249 = vmatprep.subr.bf16.mxu0 %v1193
        %1250 = vmatpush1.bf16.msra.mxu0 %v1192
        %1251 = vmatprep.subr.bf16.mxu0 %v1190
        %1252 = vmatpush1.bf16.msra.mxu0 %v1189
        %1253 = vmatprep.subr.bf16.mxu0 0
        %1254 = vmatpush2.bf16.msra.mxu0 0
        %1255 = vmatprep.subr.bf16.mxu0 0
        %1256 = vmatpush2.bf16.msra.mxu0 0
        %1257 = vmatprep.subr.bf16.mxu0 0
        %1258 = vmatpush2.bf16.msra.mxu0 0
        %1259 = vmatprep.subr.bf16.mxu0 0
        %1260 = vmatpush2.bf16.msra.mxu0 0
        %1261 = vmatprep.subr.bf16.mxu0 0
        %1262 = vmatpush2.bf16.msra.mxu0 0
        %1263 = vmatprep.subr.bf16.mxu0 0
        %1264 = vmatpush2.bf16.msra.mxu0 0
        %1265 = vmatprep.subr.bf16.mxu0 0
        %1266 = vmatpush2.bf16.msra.mxu0 0
        %1267 = vmatprep.subr.bf16.mxu0 0
        %1268 = vmatpush2.bf16.msra.mxu0 0
        %1269 = vmatprep.mubr.bf16.mxu0 0
        %1270 = vmatmul.mubr.bf16.gmra.mxu0 %v1059
        %v1271 = vpop.f32.mrf.mxu0
        %v1272 = vadd.f32 %v1097, %v1271
        %v1273 = vpop.f32.mrf.mxu0
        %v1274 = vadd.f32 %v1101, %v1273
        %v1275 = vpop.f32.mrf.mxu0
        %v1276 = vadd.f32 %v1097, %v1275
        %v1277 = vpop.f32.mrf.mxu0
        %v1278 = vadd.f32 %v1101, %v1277
        %1279 = vdwg.mxu0
        %1280 = vmatprep.subr.bf16.mxu0 0
        %1281 = vmatpush1.bf16.msra.mxu0 %v1212
        %1282 = vmatprep.subr.bf16.mxu0 0
        %1283 = vmatpush1.bf16.msra.mxu0 %v1209
        %1284 = vmatprep.subr.bf16.mxu0 0
        %1285 = vmatpush1.bf16.msra.mxu0 %v1206
        %1286 = vmatprep.subr.bf16.mxu0 0
        %1287 = vmatpush1.bf16.msra.mxu0 %v1203
        %1288 = vmatprep.subr.bf16.mxu0 0
        %1289 = vmatpush1.bf16.msra.mxu0 %v1200
        %1290 = vmatprep.subr.bf16.mxu0 0
        %1291 = vmatpush1.bf16.msra.mxu0 %v1197
        %1292 = vmatprep.subr.bf16.mxu0 0
        %1293 = vmatpush1.bf16.msra.mxu0 %v1194
        %1294 = vmatprep.subr.bf16.mxu0 0
        %1295 = vmatpush1.bf16.msra.mxu0 %v1191
        %1296 = vmatprep.subr.bf16.mxu0 0
        %1297 = vmatpush2.bf16.msra.mxu0 0
        %1298 = vmatprep.subr.bf16.mxu0 0
        %1299 = vmatpush2.bf16.msra.mxu0 0
        %1300 = vmatprep.subr.bf16.mxu0 0
        %1301 = vmatpush2.bf16.msra.mxu0 0
        %1302 = vmatprep.subr.bf16.mxu0 0
        %1303 = vmatpush2.bf16.msra.mxu0 0
        %1304 = vmatprep.subr.bf16.mxu0 0
        %1305 = vmatpush2.bf16.msra.mxu0 0
        %1306 = vmatprep.subr.bf16.mxu0 0
        %1307 = vmatpush2.bf16.msra.mxu0 0
        %1308 = vmatprep.subr.bf16.mxu0 0
        %1309 = vmatpush2.bf16.msra.mxu0 0
        %1310 = vmatprep.subr.bf16.mxu0 0
        %1311 = vmatpush2.bf16.msra.mxu0 0
        %1312 = vmatprep.mubr.bf16.mxu0 0
        %1313 = vmatmul.mubr.bf16.gmra.mxu0 %v1059
        %v1314 = vpop.f32.mrf.mxu0
        %v1315 = vadd.f32 %v1105, %v1314
        %v1316 = vpop.f32.mrf.mxu0
        %v1317 = vpop.f32.mrf.mxu0
        %v1318 = vadd.f32 %v1105, %v1317
        %v1319 = vpop.f32.mrf.mxu0
        %1320 = vdwg.mxu0
        %v1321 = vld [vmem:[%s863] sm:$0xf]
        %v1322 = vld [vmem:[%s863 + $0x4] sm:$0xf]
        %v1323 = vld [vmem:[%s863 + $0x8] sm:$0xf]
        %v1324 = vld [vmem:[%s863 + $0xc] sm:$0xf]
        %v1325 = vld [vmem:[%s863 + $0x10] sm:$0xf]
        %v1326 = vld [vmem:[%s863 + $0x14] sm:$0xf]
        %v1327 = vld [vmem:[%s863 + $0x18] sm:$0xf]
        %v1328 = vld [vmem:[%s863 + $0x1c] sm:$0xf]
        %v1329 = vld [vmem:[%s863 + $0x20] sm:$0xf]
        %v1330 = vld [vmem:[%s863 + $0x24] sm:$0xf]
        %v1331 = vld [vmem:[%s863 + $0x28] sm:$0xf]
        %v1332 = vld [vmem:[%s863 + $0x2c] sm:$0xf]
        %v1333 = vld [vmem:[%s863 + $0x30] sm:$0xf]
        %v1334 = vld [vmem:[%s863 + $0x34] sm:$0xf]
        %v1335 = vld [vmem:[%s863 + $0x38] sm:$0xf]
        %v1336 = vld [vmem:[%s863 + $0x3c] sm:$0xf]
        %v1337 = vld [vmem:[%s2] sm:$0x1]
        %v1338 = vlaneseq
        %v1339 = vshrl.u32 %v1338, 7
        %v1340 = vsub.s32 0, %v1339
        %v1341 = vrot.slane %v1337, %v1340
        %v1342 = vadd.f32 %v1058, %v1341
        %v1343 = vmul.f32 %v1272, 0.25
        %vm1344 = vcmask 130048
        %v1346 = vsel %vm1344, %v1343, 0
        %v1349 = vsel %vm1344, %v1274, 0
        %1351 = vmatprep.subr.mxu0 0.0
        %1352 = vmatpush1.xpose.msra.mxu0 0.0
        %1353 = vmatprep.subr.mxu0 0.0
        %1354 = vmatpush1.xpose.msra.mxu0 0.0
        %1355 = vmatprep.subr.mxu0 0.0
        %1356 = vmatpush1.xpose.msra.mxu0 0.0
        %1357 = vmatprep.subr.mxu0 0.0
        %1358 = vmatpush1.xpose.msra.mxu0 0.0
        %1359 = vmatprep.subr.mxu0 0.0
        %1360 = vmatpush1.xpose.msra.mxu0 0.0
        %1361 = vmatprep.subr.mxu0 0.0
        %1362 = vmatpush1.xpose.msra.mxu0 0.0
        %1363 = vmatprep.subr.mxu0 0.0
        %1364 = vmatpush1.xpose.msra.mxu0 0.0
        %1365 = vmatprep.subr.mxu0 0.0
        %1366 = vmatpush1.xpose.msra.mxu0 0.0
        %1367 = vmatprep.subr.mxu0 0.0
        %1368 = vmatpush1.xpose.msra.mxu0 0.0
        %1369 = vmatprep.subr.mxu0 0.0
        %1370 = vmatpush1.xpose.msra.mxu0 0.0
        %1371 = vmatprep.subr.mxu0 0.0
        %1372 = vmatpush1.xpose.msra.mxu0 0.0
        %1373 = vmatprep.subr.mxu0 0.0
        %1374 = vmatpush1.xpose.msra.mxu0 0.0
        %1375 = vmatprep.subr.mxu0 0.0
        %1376 = vmatpush1.xpose.msra.mxu0 0.0
        %1377 = vmatprep.subr.mxu0 0.0
        %1378 = vmatpush1.xpose.msra.mxu0 0.0
        %1379 = vmatprep.subr.mxu0 0.0
        %1380 = vmatpush1.xpose.msra.mxu0 0.0
        %1381 = vmatprep.subr.mxu0 0.0
        %1382 = vmatpush1.xpose.msra.mxu0 %v1349
        %1383 = vmatprep.subr.mxu0 0.0
        %1384 = vmatpush2.xpose.msra.mxu0 0.0
        %1385 = vmatprep.subr.mxu0 0.0
        %1386 = vmatpush2.xpose.msra.mxu0 0.0
        %1387 = vmatprep.subr.mxu0 0.0
        %1388 = vmatpush2.xpose.msra.mxu0 0.0
        %1389 = vmatprep.subr.mxu0 0.0
        %1390 = vmatpush2.xpose.msra.mxu0 0.0
        %1391 = vmatprep.subr.mxu0 0.0
        %1392 = vmatpush2.xpose.msra.mxu0 0.0
        %1393 = vmatprep.subr.mxu0 0.0
        %1394 = vmatpush2.xpose.msra.mxu0 0.0
        %1395 = vmatprep.subr.mxu0 0.0
        %1396 = vmatpush2.xpose.msra.mxu0 0.0
        %1397 = vmatprep.subr.mxu0 0.0
        %1398 = vmatpush2.xpose.msra.mxu0 0.0
        %1399 = vmatprep.subr.mxu0 0.0
        %1400 = vmatpush2.xpose.msra.mxu0 0.0
        %1401 = vmatprep.subr.mxu0 0.0
        %1402 = vmatpush2.xpose.msra.mxu0 0.0
        %1403 = vmatprep.subr.mxu0 0.0
        %1404 = vmatpush2.xpose.msra.mxu0 0.0
        %1405 = vmatprep.subr.mxu0 0.0
        %1406 = vmatpush2.xpose.msra.mxu0 0.0
        %1407 = vmatprep.subr.mxu0 0.0
        %1408 = vmatpush2.xpose.msra.mxu0 0.0
        %1409 = vmatprep.subr.mxu0 0.0
        %1410 = vmatpush2.xpose.msra.mxu0 0.0
        %1411 = vmatprep.subr.mxu0 0.0
        %1412 = vmatpush2.xpose.msra.mxu0 0.0
        %1413 = vmatprep.subr.mxu0 0.0
        %1414 = vmatpush2.xpose.msra.mxu0 0.0
        %1415 = vmatprep.mubr.f32.mxu0 0.0
        %1416 = vmatmul.mubr.f32.gmra.mxu0 %v1346
        %v1417 = vpop.f32.mrf.mxu0
        %v1418 = vadd.f32 %v1342, %v1417
        %v1419 = vpop.f32.mrf.mxu0
        %1420 = vdwg.mxu0
        %vm1421 = vcmask 64512
        %v1422 = vsel %vm1421, %v1418, -inf
        %1423 = vmax.xlane.f32.xlu0 %v1422
        %v1424 = vpop.xlane.xlu0 %1423
        %v1425 = vsub.f32 %v1418, %v1424
        %v1426 = vmul.f32 %v1425, 1.442695
        %v1427 = vpow.pop %v1426
        %v1428 = vsel %vm1421, %v1427, 0.0
        %1429 = vadd.xlane.f32.xlu0 %v1428
        %v1430 = vpop.xlane.xlu0 %1429
        %v1431 = vrcp.pop %v1430
        %v1432 = vmul.f32 %v1427, %v1431
        %v1434 = vsel %vm1421, %v1432, 0
        %1436 = vmatprep.subr.mxu0 0.0
        %1437 = vmatpush1.msra.mxu0 0.0
        %1438 = vmatprep.subr.mxu0 0.0
        %1439 = vmatpush1.msra.mxu0 0.0
        %1440 = vmatprep.subr.mxu0 0.0
        %1441 = vmatpush1.msra.mxu0 0.0
        %1442 = vmatprep.subr.mxu0 0.0
        %1443 = vmatpush1.msra.mxu0 0.0
        %1444 = vmatprep.subr.mxu0 0.0
        %1445 = vmatpush1.msra.mxu0 0.0
        %1446 = vmatprep.subr.mxu0 0.0
        %1447 = vmatpush1.msra.mxu0 0.0
        %1448 = vmatprep.subr.mxu0 0.0
        %1449 = vmatpush1.msra.mxu0 0.0
        %1450 = vmatprep.subr.mxu0 0.0
        %1451 = vmatpush1.msra.mxu0 0.0
        %1452 = vmatprep.subr.mxu0 0.0
        %1453 = vmatpush1.msra.mxu0 0.0
        %1454 = vmatprep.subr.mxu0 0.0
        %1455 = vmatpush1.msra.mxu0 0.0
        %1456 = vmatprep.subr.mxu0 0.0
        %1457 = vmatpush1.msra.mxu0 0.0
        %1458 = vmatprep.subr.mxu0 0.0
        %1459 = vmatpush1.msra.mxu0 0.0
        %1460 = vmatprep.subr.mxu0 0.0
        %1461 = vmatpush1.msra.mxu0 0.0
        %1462 = vmatprep.subr.mxu0 0.0
        %1463 = vmatpush1.msra.mxu0 0.0
        %1464 = vmatprep.subr.mxu0 0.0
        %1465 = vmatpush1.msra.mxu0 0.0
        %1466 = vmatprep.subr.mxu0 0.0
        %1467 = vmatpush1.msra.mxu0 %v1315
        %1468 = vmatprep.subr.mxu0 0.0
        %1469 = vmatpush2.msra.mxu0 0.0
        %1470 = vmatprep.subr.mxu0 0.0
        %1471 = vmatpush2.msra.mxu0 0.0
        %1472 = vmatprep.subr.mxu0 0.0
        %1473 = vmatpush2.msra.mxu0 0.0
        %1474 = vmatprep.subr.mxu0 0.0
        %1475 = vmatpush2.msra.mxu0 0.0
        %1476 = vmatprep.subr.mxu0 0.0
        %1477 = vmatpush2.msra.mxu0 0.0
        %1478 = vmatprep.subr.mxu0 0.0
        %1479 = vmatpush2.msra.mxu0 0.0
        %1480 = vmatprep.subr.mxu0 0.0
        %1481 = vmatpush2.msra.mxu0 0.0
        %1482 = vmatprep.subr.mxu0 0.0
        %1483 = vmatpush2.msra.mxu0 0.0
        %1484 = vmatprep.subr.mxu0 0.0
        %1485 = vmatpush2.msra.mxu0 0.0
        %1486 = vmatprep.subr.mxu0 0.0
        %1487 = vmatpush2.msra.mxu0 0.0
        %1488 = vmatprep.subr.mxu0 0.0
        %1489 = vmatpush2.msra.mxu0 0.0
        %1490 = vmatprep.subr.mxu0 0.0
        %1491 = vmatpush2.msra.mxu0 0.0
        %1492 = vmatprep.subr.mxu0 0.0
        %1493 = vmatpush2.msra.mxu0 0.0
        %1494 = vmatprep.subr.mxu0 0.0
        %1495 = vmatpush2.msra.mxu0 0.0
        %1496 = vmatprep.subr.mxu0 0.0
        %1497 = vmatpush2.msra.mxu0 0.0
        %1498 = vmatprep.subr.mxu0 0.0
        %1499 = vmatpush2.msra.mxu0 0.0
        %1500 = vmatprep.mubr.f32.mxu0 0.0
        %1501 = vmatmul.mubr.f32.gmra.mxu0 %v1434
        %v1502 = vpop.f32.mrf.mxu0
        %v1503 = vadd.f32 0.0, %v1502
        %v1504 = vpop.f32.mrf.mxu0
        %1505 = vdwg.mxu0
        %v1506 = vpack.c.bf16 %v1503, %v1503
        %1507 = vrot.lane.b32.xlu0 %v1343, 112
        %v1508 = vpop.permute.xlu0 %1507
        %1509 = vrot.lane.b32.xlu0 %v1274, 112
        %v1510 = vpop.permute.xlu0 %1509
        %v1511 = vsel %vm1344, %v1508, 0
        %v1513 = vsel %vm1344, %v1510, 0
        %1515 = vmatprep.subr.mxu0 0.0
        %1516 = vmatpush1.xpose.msra.mxu0 0.0
        %1517 = vmatprep.subr.mxu0 0.0
        %1518 = vmatpush1.xpose.msra.mxu0 0.0
        %1519 = vmatprep.subr.mxu0 0.0
        %1520 = vmatpush1.xpose.msra.mxu0 0.0
        %1521 = vmatprep.subr.mxu0 0.0
        %1522 = vmatpush1.xpose.msra.mxu0 0.0
        %1523 = vmatprep.subr.mxu0 0.0
        %1524 = vmatpush1.xpose.msra.mxu0 0.0
        %1525 = vmatprep.subr.mxu0 0.0
        %1526 = vmatpush1.xpose.msra.mxu0 0.0
        %1527 = vmatprep.subr.mxu0 0.0
        %1528 = vmatpush1.xpose.msra.mxu0 0.0
        %1529 = vmatprep.subr.mxu0 0.0
        %1530 = vmatpush1.xpose.msra.mxu0 0.0
        %1531 = vmatprep.subr.mxu0 0.0
        %1532 = vmatpush1.xpose.msra.mxu0 0.0
        %1533 = vmatprep.subr.mxu0 0.0
        %1534 = vmatpush1.xpose.msra.mxu0 0.0
        %1535 = vmatprep.subr.mxu0 0.0
        %1536 = vmatpush1.xpose.msra.mxu0 0.0
        %1537 = vmatprep.subr.mxu0 0.0
        %1538 = vmatpush1.xpose.msra.mxu0 0.0
        %1539 = vmatprep.subr.mxu0 0.0
        %1540 = vmatpush1.xpose.msra.mxu0 0.0
        %1541 = vmatprep.subr.mxu0 0.0
        %1542 = vmatpush1.xpose.msra.mxu0 0.0
        %1543 = vmatprep.subr.mxu0 0.0
        %1544 = vmatpush1.xpose.msra.mxu0 0.0
        %1545 = vmatprep.subr.mxu0 0.0
        %1546 = vmatpush1.xpose.msra.mxu0 %v1513
        %1547 = vmatprep.subr.mxu0 0.0
        %1548 = vmatpush2.xpose.msra.mxu0 0.0
        %1549 = vmatprep.subr.mxu0 0.0
        %1550 = vmatpush2.xpose.msra.mxu0 0.0
        %1551 = vmatprep.subr.mxu0 0.0
        %1552 = vmatpush2.xpose.msra.mxu0 0.0
        %1553 = vmatprep.subr.mxu0 0.0
        %1554 = vmatpush2.xpose.msra.mxu0 0.0
        %1555 = vmatprep.subr.mxu0 0.0
        %1556 = vmatpush2.xpose.msra.mxu0 0.0
        %1557 = vmatprep.subr.mxu0 0.0
        %1558 = vmatpush2.xpose.msra.mxu0 0.0
        %1559 = vmatprep.subr.mxu0 0.0
        %1560 = vmatpush2.xpose.msra.mxu0 0.0
        %1561 = vmatprep.subr.mxu0 0.0
        %1562 = vmatpush2.xpose.msra.mxu0 0.0
        %1563 = vmatprep.subr.mxu0 0.0
        %1564 = vmatpush2.xpose.msra.mxu0 0.0
        %1565 = vmatprep.subr.mxu0 0.0
        %1566 = vmatpush2.xpose.msra.mxu0 0.0
        %1567 = vmatprep.subr.mxu0 0.0
        %1568 = vmatpush2.xpose.msra.mxu0 0.0
        %1569 = vmatprep.subr.mxu0 0.0
        %1570 = vmatpush2.xpose.msra.mxu0 0.0
        %1571 = vmatprep.subr.mxu0 0.0
        %1572 = vmatpush2.xpose.msra.mxu0 0.0
        %1573 = vmatprep.subr.mxu0 0.0
        %1574 = vmatpush2.xpose.msra.mxu0 0.0
        %1575 = vmatprep.subr.mxu0 0.0
        %1576 = vmatpush2.xpose.msra.mxu0 0.0
        %1577 = vmatprep.subr.mxu0 0.0
        %1578 = vmatpush2.xpose.msra.mxu0 0.0
        %1579 = vmatprep.mubr.f32.mxu0 0.0
        %1580 = vmatmul.mubr.f32.gmra.mxu0 %v1511
        %v1581 = vpop.f32.mrf.mxu0
        %v1582 = vadd.f32 %v1342, %v1581
        %v1583 = vpop.f32.mrf.mxu0
        %1584 = vdwg.mxu0
        %v1585 = vsel %vm1421, %v1582, -inf
        %1586 = vmax.xlane.f32.xlu0 %v1585
        %v1587 = vpop.xlane.xlu0 %1586
        %v1588 = vsub.f32 %v1582, %v1587
        %v1589 = vmul.f32 %v1588, 1.442695
        %v1590 = vpow.pop %v1589
        %v1591 = vsel %vm1421, %v1590, 0.0
        %1592 = vadd.xlane.f32.xlu0 %v1591
        %v1593 = vpop.xlane.xlu0 %1592
        %v1594 = vrcp.pop %v1593
        %v1595 = vmul.f32 %v1590, %v1594
        %1597 = vrot.lane.b32.xlu0 %v1315, 112
        %v1598 = vpop.permute.xlu0 %1597
        %v1601 = vsel %vm1421, %v1595, 0
        %1603 = vmatprep.subr.mxu0 0.0
        %1604 = vmatpush1.msra.mxu0 0.0
        %1605 = vmatprep.subr.mxu0 0.0
        %1606 = vmatpush1.msra.mxu0 0.0
        %1607 = vmatprep.subr.mxu0 0.0
        %1608 = vmatpush1.msra.mxu0 0.0
        %1609 = vmatprep.subr.mxu0 0.0
        %1610 = vmatpush1.msra.mxu0 0.0
        %1611 = vmatprep.subr.mxu0 0.0
        %1612 = vmatpush1.msra.mxu0 0.0
        %1613 = vmatprep.subr.mxu0 0.0
        %1614 = vmatpush1.msra.mxu0 0.0
        %1615 = vmatprep.subr.mxu0 0.0
        %1616 = vmatpush1.msra.mxu0 0.0
        %1617 = vmatprep.subr.mxu0 0.0
        %1618 = vmatpush1.msra.mxu0 0.0
        %1619 = vmatprep.subr.mxu0 0.0
        %1620 = vmatpush1.msra.mxu0 0.0
        %1621 = vmatprep.subr.mxu0 0.0
        %1622 = vmatpush1.msra.mxu0 0.0
        %1623 = vmatprep.subr.mxu0 0.0
        %1624 = vmatpush1.msra.mxu0 0.0
        %1625 = vmatprep.subr.mxu0 0.0
        %1626 = vmatpush1.msra.mxu0 0.0
        %1627 = vmatprep.subr.mxu0 0.0
        %1628 = vmatpush1.msra.mxu0 0.0
        %1629 = vmatprep.subr.mxu0 0.0
        %1630 = vmatpush1.msra.mxu0 0.0
        %1631 = vmatprep.subr.mxu0 0.0
        %1632 = vmatpush1.msra.mxu0 0.0
        %1633 = vmatprep.subr.mxu0 0.0
        %1634 = vmatpush1.msra.mxu0 %v1598
        %1635 = vmatprep.subr.mxu0 0.0
        %1636 = vmatpush2.msra.mxu0 0.0
        %1637 = vmatprep.subr.mxu0 0.0
        %1638 = vmatpush2.msra.mxu0 0.0
        %1639 = vmatprep.subr.mxu0 0.0
        %1640 = vmatpush2.msra.mxu0 0.0
        %1641 = vmatprep.subr.mxu0 0.0
        %1642 = vmatpush2.msra.mxu0 0.0
        %1643 = vmatprep.subr.mxu0 0.0
        %1644 = vmatpush2.msra.mxu0 0.0
        %1645 = vmatprep.subr.mxu0 0.0
        %1646 = vmatpush2.msra.mxu0 0.0
        %1647 = vmatprep.subr.mxu0 0.0
        %1648 = vmatpush2.msra.mxu0 0.0
        %1649 = vmatprep.subr.mxu0 0.0
        %1650 = vmatpush2.msra.mxu0 0.0
        %1651 = vmatprep.subr.mxu0 0.0
        %1652 = vmatpush2.msra.mxu0 0.0
        %1653 = vmatprep.subr.mxu0 0.0
        %1654 = vmatpush2.msra.mxu0 0.0
        %1655 = vmatprep.subr.mxu0 0.0
        %1656 = vmatpush2.msra.mxu0 0.0
        %1657 = vmatprep.subr.mxu0 0.0
        %1658 = vmatpush2.msra.mxu0 0.0
        %1659 = vmatprep.subr.mxu0 0.0
        %1660 = vmatpush2.msra.mxu0 0.0
        %1661 = vmatprep.subr.mxu0 0.0
        %1662 = vmatpush2.msra.mxu0 0.0
        %1663 = vmatprep.subr.mxu0 0.0
        %1664 = vmatpush2.msra.mxu0 0.0
        %1665 = vmatprep.subr.mxu0 0.0
        %1666 = vmatpush2.msra.mxu0 0.0
        %1667 = vmatprep.mubr.f32.mxu0 0.0
        %1668 = vmatmul.mubr.f32.gmra.mxu0 %v1601
        %v1669 = vpop.f32.mrf.mxu0
        %v1670 = vadd.f32 0.0, %v1669
        %v1671 = vpop.f32.mrf.mxu0
        %1672 = vdwg.mxu0
        %v1673 = vpack.c.bf16 %v1670, %v1670
        %v1676 = vunpack.c.l.b16 %v1323
        %v1677 = vunpack.c.l.b16 %v1324
        %v1678 = vpack.c.b16 %v1677, %v1676
        %v1681 = vsel %vm1344, %v1673, 0
        %1683 = vmatprep.subr.bf16.mxu0 0
        %1684 = vmatpush1.bf16.msra.mxu0 0
        %1685 = vmatprep.subr.bf16.mxu0 0
        %1686 = vmatpush1.bf16.msra.mxu0 0
        %1687 = vmatprep.subr.bf16.mxu0 0
        %1688 = vmatpush1.bf16.msra.mxu0 0
        %1689 = vmatprep.subr.bf16.mxu0 0
        %1690 = vmatpush1.bf16.msra.mxu0 0
        %1691 = vmatprep.subr.bf16.mxu0 0
        %1692 = vmatpush1.bf16.msra.mxu0 0
        %1693 = vmatprep.subr.bf16.mxu0 0
        %1694 = vmatpush1.bf16.msra.mxu0 0
        %1695 = vmatprep.subr.bf16.mxu0 0
        %1696 = vmatpush1.bf16.msra.mxu0 0
        %1697 = vmatprep.subr.bf16.mxu0 0
        %1698 = vmatpush1.bf16.msra.mxu0 %v1678
        %1699 = vmatprep.subr.bf16.mxu0 0
        %1700 = vmatpush2.bf16.msra.mxu0 0
        %1701 = vmatprep.subr.bf16.mxu0 0
        %1702 = vmatpush2.bf16.msra.mxu0 0
        %1703 = vmatprep.subr.bf16.mxu0 0
        %1704 = vmatpush2.bf16.msra.mxu0 0
        %1705 = vmatprep.subr.bf16.mxu0 0
        %1706 = vmatpush2.bf16.msra.mxu0 0
        %1707 = vmatprep.subr.bf16.mxu0 0
        %1708 = vmatpush2.bf16.msra.mxu0 0
        %1709 = vmatprep.subr.bf16.mxu0 0
        %1710 = vmatpush2.bf16.msra.mxu0 0
        %1711 = vmatprep.subr.bf16.mxu0 0
        %1712 = vmatpush2.bf16.msra.mxu0 0
        %1713 = vmatprep.subr.bf16.mxu0 0
        %1714 = vmatpush2.bf16.msra.mxu0 0
        %1715 = vmatprep.mubr.bf16.mxu0 0
        %1716 = vmatmul.mubr.bf16.gmra.mxu0 %v1681
        %v1717 = vpop.f32.mrf.mxu0
        %v1718 = vadd.f32 0.0, %v1717
        %v1719 = vpop.f32.mrf.mxu0
        %v1720 = vpop.f32.mrf.mxu0
        %v1721 = vpop.f32.mrf.mxu0
        %1722 = vdwg.mxu0
        %v1725 = vunpack.c.l.b16 %v1321
        %v1726 = vunpack.c.l.b16 %v1322
        %v1727 = vpack.c.b16 %v1726, %v1725
        %v1730 = vsel %vm1344, %v1506, 0
        %1732 = vmatprep.subr.bf16.mxu0 0
        %1733 = vmatpush1.bf16.msra.mxu0 0
        %1734 = vmatprep.subr.bf16.mxu0 0
        %1735 = vmatpush1.bf16.msra.mxu0 0
        %1736 = vmatprep.subr.bf16.mxu0 0
        %1737 = vmatpush1.bf16.msra.mxu0 0
        %1738 = vmatprep.subr.bf16.mxu0 0
        %1739 = vmatpush1.bf16.msra.mxu0 0
        %1740 = vmatprep.subr.bf16.mxu0 0
        %1741 = vmatpush1.bf16.msra.mxu0 0
        %1742 = vmatprep.subr.bf16.mxu0 0
        %1743 = vmatpush1.bf16.msra.mxu0 0
        %1744 = vmatprep.subr.bf16.mxu0 0
        %1745 = vmatpush1.bf16.msra.mxu0 0
        %1746 = vmatprep.subr.bf16.mxu0 0
        %1747 = vmatpush1.bf16.msra.mxu0 %v1727
        %1748 = vmatprep.subr.bf16.mxu0 0
        %1749 = vmatpush2.bf16.msra.mxu0 0
        %1750 = vmatprep.subr.bf16.mxu0 0
        %1751 = vmatpush2.bf16.msra.mxu0 0
        %1752 = vmatprep.subr.bf16.mxu0 0
        %1753 = vmatpush2.bf16.msra.mxu0 0
        %1754 = vmatprep.subr.bf16.mxu0 0
        %1755 = vmatpush2.bf16.msra.mxu0 0
        %1756 = vmatprep.subr.bf16.mxu0 0
        %1757 = vmatpush2.bf16.msra.mxu0 0
        %1758 = vmatprep.subr.bf16.mxu0 0
        %1759 = vmatpush2.bf16.msra.mxu0 0
        %1760 = vmatprep.subr.bf16.mxu0 0
        %1761 = vmatpush2.bf16.msra.mxu0 0
        %1762 = vmatprep.subr.bf16.mxu0 0
        %1763 = vmatpush2.bf16.msra.mxu0 0
        %1764 = vmatprep.mubr.bf16.mxu0 0
        %1765 = vmatmul.mubr.bf16.gmra.mxu0 %v1730
        %v1766 = vpop.f32.mrf.mxu0
        %v1767 = vadd.f32 %v1718, %v1766
        %v1768 = vpop.f32.mrf.mxu0
        %v1769 = vpop.f32.mrf.mxu0
        %v1770 = vpop.f32.mrf.mxu0
        %1771 = vdwg.mxu0
        %1772 = vrot.lane.b32.xlu0 %v1343, 96
        %v1773 = vpop.permute.xlu0 %1772
        %1774 = vrot.lane.b32.xlu0 %v1274, 96
        %v1775 = vpop.permute.xlu0 %1774
        %v1776 = vsel %vm1344, %v1773, 0
        %v1778 = vsel %vm1344, %v1775, 0
        %1780 = vmatprep.subr.mxu0 0.0
        %1781 = vmatpush1.xpose.msra.mxu0 0.0
        %1782 = vmatprep.subr.mxu0 0.0
        %1783 = vmatpush1.xpose.msra.mxu0 0.0
        %1784 = vmatprep.subr.mxu0 0.0
        %1785 = vmatpush1.xpose.msra.mxu0 0.0
        %1786 = vmatprep.subr.mxu0 0.0
        %1787 = vmatpush1.xpose.msra.mxu0 0.0
        %1788 = vmatprep.subr.mxu0 0.0
        %1789 = vmatpush1.xpose.msra.mxu0 0.0
        %1790 = vmatprep.subr.mxu0 0.0
        %1791 = vmatpush1.xpose.msra.mxu0 0.0
        %1792 = vmatprep.subr.mxu0 0.0
        %1793 = vmatpush1.xpose.msra.mxu0 0.0
        %1794 = vmatprep.subr.mxu0 0.0
        %1795 = vmatpush1.xpose.msra.mxu0 0.0
        %1796 = vmatprep.subr.mxu0 0.0
        %1797 = vmatpush1.xpose.msra.mxu0 0.0
        %1798 = vmatprep.subr.mxu0 0.0
        %1799 = vmatpush1.xpose.msra.mxu0 0.0
        %1800 = vmatprep.subr.mxu0 0.0
        %1801 = vmatpush1.xpose.msra.mxu0 0.0
        %1802 = vmatprep.subr.mxu0 0.0
        %1803 = vmatpush1.xpose.msra.mxu0 0.0
        %1804 = vmatprep.subr.mxu0 0.0
        %1805 = vmatpush1.xpose.msra.mxu0 0.0
        %1806 = vmatprep.subr.mxu0 0.0
        %1807 = vmatpush1.xpose.msra.mxu0 0.0
        %1808 = vmatprep.subr.mxu0 0.0
        %1809 = vmatpush1.xpose.msra.mxu0 0.0
        %1810 = vmatprep.subr.mxu0 0.0
        %1811 = vmatpush1.xpose.msra.mxu0 %v1778
        %1812 = vmatprep.subr.mxu0 0.0
        %1813 = vmatpush2.xpose.msra.mxu0 0.0
        %1814 = vmatprep.subr.mxu0 0.0
        %1815 = vmatpush2.xpose.msra.mxu0 0.0
        %1816 = vmatprep.subr.mxu0 0.0
        %1817 = vmatpush2.xpose.msra.mxu0 0.0
        %1818 = vmatprep.subr.mxu0 0.0
        %1819 = vmatpush2.xpose.msra.mxu0 0.0
        %1820 = vmatprep.subr.mxu0 0.0
        %1821 = vmatpush2.xpose.msra.mxu0 0.0
        %1822 = vmatprep.subr.mxu0 0.0
        %1823 = vmatpush2.xpose.msra.mxu0 0.0
        %1824 = vmatprep.subr.mxu0 0.0
        %1825 = vmatpush2.xpose.msra.mxu0 0.0
        %1826 = vmatprep.subr.mxu0 0.0
        %1827 = vmatpush2.xpose.msra.mxu0 0.0
        %1828 = vmatprep.subr.mxu0 0.0
        %1829 = vmatpush2.xpose.msra.mxu0 0.0
        %1830 = vmatprep.subr.mxu0 0.0
        %1831 = vmatpush2.xpose.msra.mxu0 0.0
        %1832 = vmatprep.subr.mxu0 0.0
        %1833 = vmatpush2.xpose.msra.mxu0 0.0
        %1834 = vmatprep.subr.mxu0 0.0
        %1835 = vmatpush2.xpose.msra.mxu0 0.0
        %1836 = vmatprep.subr.mxu0 0.0
        %1837 = vmatpush2.xpose.msra.mxu0 0.0
        %1838 = vmatprep.subr.mxu0 0.0
        %1839 = vmatpush2.xpose.msra.mxu0 0.0
        %1840 = vmatprep.subr.mxu0 0.0
        %1841 = vmatpush2.xpose.msra.mxu0 0.0
        %1842 = vmatprep.subr.mxu0 0.0
        %1843 = vmatpush2.xpose.msra.mxu0 0.0
        %1844 = vmatprep.mubr.f32.mxu0 0.0
        %1845 = vmatmul.mubr.f32.gmra.mxu0 %v1776
        %v1846 = vpop.f32.mrf.mxu0
        %v1847 = vadd.f32 %v1342, %v1846
        %v1848 = vpop.f32.mrf.mxu0
        %1849 = vdwg.mxu0
        %v1850 = vsel %vm1421, %v1847, -inf
        %1851 = vmax.xlane.f32.xlu0 %v1850
        %v1852 = vpop.xlane.xlu0 %1851
        %v1853 = vsub.f32 %v1847, %v1852
        %v1854 = vmul.f32 %v1853, 1.442695
        %v1855 = vpow.pop %v1854
        %v1856 = vsel %vm1421, %v1855, 0.0
        %1857 = vadd.xlane.f32.xlu0 %v1856
        %v1858 = vpop.xlane.xlu0 %1857
        %v1859 = vrcp.pop %v1858
        %v1860 = vmul.f32 %v1855, %v1859
        %1861 = vrot.lane.b32.xlu0 %v1315, 96
        %v1862 = vpop.permute.xlu0 %1861
        %v1865 = vsel %vm1421, %v1860, 0
        %1867 = vmatprep.subr.mxu0 0.0
        %1868 = vmatpush1.msra.mxu0 0.0
        %1869 = vmatprep.subr.mxu0 0.0
        %1870 = vmatpush1.msra.mxu0 0.0
        %1871 = vmatprep.subr.mxu0 0.0
        %1872 = vmatpush1.msra.mxu0 0.0
        %1873 = vmatprep.subr.mxu0 0.0
        %1874 = vmatpush1.msra.mxu0 0.0
        %1875 = vmatprep.subr.mxu0 0.0
        %1876 = vmatpush1.msra.mxu0 0.0
        %1877 = vmatprep.subr.mxu0 0.0
        %1878 = vmatpush1.msra.mxu0 0.0
        %1879 = vmatprep.subr.mxu0 0.0
        %1880 = vmatpush1.msra.mxu0 0.0
        %1881 = vmatprep.subr.mxu0 0.0
        %1882 = vmatpush1.msra.mxu0 0.0
        %1883 = vmatprep.subr.mxu0 0.0
        %1884 = vmatpush1.msra.mxu0 0.0
        %1885 = vmatprep.subr.mxu0 0.0
        %1886 = vmatpush1.msra.mxu0 0.0
        %1887 = vmatprep.subr.mxu0 0.0
        %1888 = vmatpush1.msra.mxu0 0.0
        %1889 = vmatprep.subr.mxu0 0.0
        %1890 = vmatpush1.msra.mxu0 0.0
        %1891 = vmatprep.subr.mxu0 0.0
        %1892 = vmatpush1.msra.mxu0 0.0
        %1893 = vmatprep.subr.mxu0 0.0
        %1894 = vmatpush1.msra.mxu0 0.0
        %1895 = vmatprep.subr.mxu0 0.0
        %1896 = vmatpush1.msra.mxu0 0.0
        %1897 = vmatprep.subr.mxu0 0.0
        %1898 = vmatpush1.msra.mxu0 %v1862
        %1899 = vmatprep.subr.mxu0 0.0
        %1900 = vmatpush2.msra.mxu0 0.0
        %1901 = vmatprep.subr.mxu0 0.0
        %1902 = vmatpush2.msra.mxu0 0.0
        %1903 = vmatprep.subr.mxu0 0.0
        %1904 = vmatpush2.msra.mxu0 0.0
        %1905 = vmatprep.subr.mxu0 0.0
        %1906 = vmatpush2.msra.mxu0 0.0
        %1907 = vmatprep.subr.mxu0 0.0
        %1908 = vmatpush2.msra.mxu0 0.0
        %1909 = vmatprep.subr.mxu0 0.0
        %1910 = vmatpush2.msra.mxu0 0.0
        %1911 = vmatprep.subr.mxu0 0.0
        %1912 = vmatpush2.msra.mxu0 0.0
        %1913 = vmatprep.subr.mxu0 0.0
        %1914 = vmatpush2.msra.mxu0 0.0
        %1915 = vmatprep.subr.mxu0 0.0
        %1916 = vmatpush2.msra.mxu0 0.0
        %1917 = vmatprep.subr.mxu0 0.0
        %1918 = vmatpush2.msra.mxu0 0.0
        %1919 = vmatprep.subr.mxu0 0.0
        %1920 = vmatpush2.msra.mxu0 0.0
        %1921 = vmatprep.subr.mxu0 0.0
        %1922 = vmatpush2.msra.mxu0 0.0
        %1923 = vmatprep.subr.mxu0 0.0
        %1924 = vmatpush2.msra.mxu0 0.0
        %1925 = vmatprep.subr.mxu0 0.0
        %1926 = vmatpush2.msra.mxu0 0.0
        %1927 = vmatprep.subr.mxu0 0.0
        %1928 = vmatpush2.msra.mxu0 0.0
        %1929 = vmatprep.subr.mxu0 0.0
        %1930 = vmatpush2.msra.mxu0 0.0
        %1931 = vmatprep.mubr.f32.mxu0 0.0
        %1932 = vmatmul.mubr.f32.gmra.mxu0 %v1865
        %v1933 = vpop.f32.mrf.mxu0
        %v1934 = vadd.f32 0.0, %v1933
        %v1935 = vpop.f32.mrf.mxu0
        %1936 = vdwg.mxu0
        %v1937 = vpack.c.bf16 %v1934, %v1934
        %v1940 = vunpack.c.l.b16 %v1325
        %v1941 = vunpack.c.l.b16 %v1326
        %v1942 = vpack.c.b16 %v1941, %v1940
        %v1945 = vsel %vm1344, %v1937, 0
        %1947 = vmatprep.subr.bf16.mxu0 0
        %1948 = vmatpush1.bf16.msra.mxu0 0
        %1949 = vmatprep.subr.bf16.mxu0 0
        %1950 = vmatpush1.bf16.msra.mxu0 0
        %1951 = vmatprep.subr.bf16.mxu0 0
        %1952 = vmatpush1.bf16.msra.mxu0 0
        %1953 = vmatprep.subr.bf16.mxu0 0
        %1954 = vmatpush1.bf16.msra.mxu0 0
        %1955 = vmatprep.subr.bf16.mxu0 0
        %1956 = vmatpush1.bf16.msra.mxu0 0
        %1957 = vmatprep.subr.bf16.mxu0 0
        %1958 = vmatpush1.bf16.msra.mxu0 0
        %1959 = vmatprep.subr.bf16.mxu0 0
        %1960 = vmatpush1.bf16.msra.mxu0 0
        %1961 = vmatprep.subr.bf16.mxu0 0
        %1962 = vmatpush1.bf16.msra.mxu0 %v1942
        %1963 = vmatprep.subr.bf16.mxu0 0
        %1964 = vmatpush2.bf16.msra.mxu0 0
        %1965 = vmatprep.subr.bf16.mxu0 0
        %1966 = vmatpush2.bf16.msra.mxu0 0
        %1967 = vmatprep.subr.bf16.mxu0 0
        %1968 = vmatpush2.bf16.msra.mxu0 0
        %1969 = vmatprep.subr.bf16.mxu0 0
        %1970 = vmatpush2.bf16.msra.mxu0 0
        %1971 = vmatprep.subr.bf16.mxu0 0
        %1972 = vmatpush2.bf16.msra.mxu0 0
        %1973 = vmatprep.subr.bf16.mxu0 0
        %1974 = vmatpush2.bf16.msra.mxu0 0
        %1975 = vmatprep.subr.bf16.mxu0 0
        %1976 = vmatpush2.bf16.msra.mxu0 0
        %1977 = vmatprep.subr.bf16.mxu0 0
        %1978 = vmatpush2.bf16.msra.mxu0 0
        %1979 = vmatprep.mubr.bf16.mxu0 0
        %1980 = vmatmul.mubr.bf16.gmra.mxu0 %v1945
        %v1981 = vpop.f32.mrf.mxu0
        %v1982 = vadd.f32 0.0, %v1981
        %v1983 = vpop.f32.mrf.mxu0
        %v1984 = vpop.f32.mrf.mxu0
        %v1985 = vpop.f32.mrf.mxu0
        %1986 = vdwg.mxu0
        %v1987 = vadd.f32 %v1767, %v1982
        %1988 = vrot.lane.b32.xlu0 %v1343, 80
        %v1989 = vpop.permute.xlu0 %1988
        %1990 = vrot.lane.b32.xlu0 %v1274, 80
        %v1991 = vpop.permute.xlu0 %1990
        %v1992 = vsel %vm1344, %v1989, 0
        %v1994 = vsel %vm1344, %v1991, 0
        %1996 = vmatprep.subr.mxu0 0.0
        %1997 = vmatpush1.xpose.msra.mxu0 0.0
        %1998 = vmatprep.subr.mxu0 0.0
        %1999 = vmatpush1.xpose.msra.mxu0 0.0
        %2000 = vmatprep.subr.mxu0 0.0
        %2001 = vmatpush1.xpose.msra.mxu0 0.0
        %2002 = vmatprep.subr.mxu0 0.0
        %2003 = vmatpush1.xpose.msra.mxu0 0.0
        %2004 = vmatprep.subr.mxu0 0.0
        %2005 = vmatpush1.xpose.msra.mxu0 0.0
        %2006 = vmatprep.subr.mxu0 0.0
        %2007 = vmatpush1.xpose.msra.mxu0 0.0
        %2008 = vmatprep.subr.mxu0 0.0
        %2009 = vmatpush1.xpose.msra.mxu0 0.0
        %2010 = vmatprep.subr.mxu0 0.0
        %2011 = vmatpush1.xpose.msra.mxu0 0.0
        %2012 = vmatprep.subr.mxu0 0.0
        %2013 = vmatpush1.xpose.msra.mxu0 0.0
        %2014 = vmatprep.subr.mxu0 0.0
        %2015 = vmatpush1.xpose.msra.mxu0 0.0
        %2016 = vmatprep.subr.mxu0 0.0
        %2017 = vmatpush1.xpose.msra.mxu0 0.0
        %2018 = vmatprep.subr.mxu0 0.0
        %2019 = vmatpush1.xpose.msra.mxu0 0.0
        %2020 = vmatprep.subr.mxu0 0.0
        %2021 = vmatpush1.xpose.msra.mxu0 0.0
        %2022 = vmatprep.subr.mxu0 0.0
        %2023 = vmatpush1.xpose.msra.mxu0 0.0
        %2024 = vmatprep.subr.mxu0 0.0
        %2025 = vmatpush1.xpose.msra.mxu0 0.0
        %2026 = vmatprep.subr.mxu0 0.0
        %2027 = vmatpush1.xpose.msra.mxu0 %v1994
        %2028 = vmatprep.subr.mxu0 0.0
        %2029 = vmatpush2.xpose.msra.mxu0 0.0
        %2030 = vmatprep.subr.mxu0 0.0
        %2031 = vmatpush2.xpose.msra.mxu0 0.0
        %2032 = vmatprep.subr.mxu0 0.0
        %2033 = vmatpush2.xpose.msra.mxu0 0.0
        %2034 = vmatprep.subr.mxu0 0.0
        %2035 = vmatpush2.xpose.msra.mxu0 0.0
        %2036 = vmatprep.subr.mxu0 0.0
        %2037 = vmatpush2.xpose.msra.mxu0 0.0
        %2038 = vmatprep.subr.mxu0 0.0
        %2039 = vmatpush2.xpose.msra.mxu0 0.0
        %2040 = vmatprep.subr.mxu0 0.0
        %2041 = vmatpush2.xpose.msra.mxu0 0.0
        %2042 = vmatprep.subr.mxu0 0.0
        %2043 = vmatpush2.xpose.msra.mxu0 0.0
        %2044 = vmatprep.subr.mxu0 0.0
        %2045 = vmatpush2.xpose.msra.mxu0 0.0
        %2046 = vmatprep.subr.mxu0 0.0
        %2047 = vmatpush2.xpose.msra.mxu0 0.0
        %2048 = vmatprep.subr.mxu0 0.0
        %2049 = vmatpush2.xpose.msra.mxu0 0.0
        %2050 = vmatprep.subr.mxu0 0.0
        %2051 = vmatpush2.xpose.msra.mxu0 0.0
        %2052 = vmatprep.subr.mxu0 0.0
        %2053 = vmatpush2.xpose.msra.mxu0 0.0
        %2054 = vmatprep.subr.mxu0 0.0
        %2055 = vmatpush2.xpose.msra.mxu0 0.0
        %2056 = vmatprep.subr.mxu0 0.0
        %2057 = vmatpush2.xpose.msra.mxu0 0.0
        %2058 = vmatprep.subr.mxu0 0.0
        %2059 = vmatpush2.xpose.msra.mxu0 0.0
        %2060 = vmatprep.mubr.f32.mxu0 0.0
        %2061 = vmatmul.mubr.f32.gmra.mxu0 %v1992
        %v2062 = vpop.f32.mrf.mxu0
        %v2063 = vadd.f32 %v1342, %v2062
        %v2064 = vpop.f32.mrf.mxu0
        %2065 = vdwg.mxu0
        %v2066 = vsel %vm1421, %v2063, -inf
        %2067 = vmax.xlane.f32.xlu0 %v2066
        %v2068 = vpop.xlane.xlu0 %2067
        %v2069 = vsub.f32 %v2063, %v2068
        %v2070 = vmul.f32 %v2069, 1.442695
        %v2071 = vpow.pop %v2070
        %v2072 = vsel %vm1421, %v2071, 0.0
        %2073 = vadd.xlane.f32.xlu0 %v2072
        %v2074 = vpop.xlane.xlu0 %2073
        %v2075 = vrcp.pop %v2074
        %v2076 = vmul.f32 %v2071, %v2075
        %2077 = vrot.lane.b32.xlu0 %v1315, 80
        %v2078 = vpop.permute.xlu0 %2077
        %v2081 = vsel %vm1421, %v2076, 0
        %2083 = vmatprep.subr.mxu0 0.0
        %2084 = vmatpush1.msra.mxu0 0.0
        %2085 = vmatprep.subr.mxu0 0.0
        %2086 = vmatpush1.msra.mxu0 0.0
        %2087 = vmatprep.subr.mxu0 0.0
        %2088 = vmatpush1.msra.mxu0 0.0
        %2089 = vmatprep.subr.mxu0 0.0
        %2090 = vmatpush1.msra.mxu0 0.0
        %2091 = vmatprep.subr.mxu0 0.0
        %2092 = vmatpush1.msra.mxu0 0.0
        %2093 = vmatprep.subr.mxu0 0.0
        %2094 = vmatpush1.msra.mxu0 0.0
        %2095 = vmatprep.subr.mxu0 0.0
        %2096 = vmatpush1.msra.mxu0 0.0
        %2097 = vmatprep.subr.mxu0 0.0
        %2098 = vmatpush1.msra.mxu0 0.0
        %2099 = vmatprep.subr.mxu0 0.0
        %2100 = vmatpush1.msra.mxu0 0.0
        %2101 = vmatprep.subr.mxu0 0.0
        %2102 = vmatpush1.msra.mxu0 0.0
        %2103 = vmatprep.subr.mxu0 0.0
        %2104 = vmatpush1.msra.mxu0 0.0
        %2105 = vmatprep.subr.mxu0 0.0
        %2106 = vmatpush1.msra.mxu0 0.0
        %2107 = vmatprep.subr.mxu0 0.0
        %2108 = vmatpush1.msra.mxu0 0.0
        %2109 = vmatprep.subr.mxu0 0.0
        %2110 = vmatpush1.msra.mxu0 0.0
        %2111 = vmatprep.subr.mxu0 0.0
        %2112 = vmatpush1.msra.mxu0 0.0
        %2113 = vmatprep.subr.mxu0 0.0
        %2114 = vmatpush1.msra.mxu0 %v2078
        %2115 = vmatprep.subr.mxu0 0.0
        %2116 = vmatpush2.msra.mxu0 0.0
        %2117 = vmatprep.subr.mxu0 0.0
        %2118 = vmatpush2.msra.mxu0 0.0
        %2119 = vmatprep.subr.mxu0 0.0
        %2120 = vmatpush2.msra.mxu0 0.0
        %2121 = vmatprep.subr.mxu0 0.0
        %2122 = vmatpush2.msra.mxu0 0.0
        %2123 = vmatprep.subr.mxu0 0.0
        %2124 = vmatpush2.msra.mxu0 0.0
        %2125 = vmatprep.subr.mxu0 0.0
        %2126 = vmatpush2.msra.mxu0 0.0
        %2127 = vmatprep.subr.mxu0 0.0
        %2128 = vmatpush2.msra.mxu0 0.0
        %2129 = vmatprep.subr.mxu0 0.0
        %2130 = vmatpush2.msra.mxu0 0.0
        %2131 = vmatprep.subr.mxu0 0.0
        %2132 = vmatpush2.msra.mxu0 0.0
        %2133 = vmatprep.subr.mxu0 0.0
        %2134 = vmatpush2.msra.mxu0 0.0
        %2135 = vmatprep.subr.mxu0 0.0
        %2136 = vmatpush2.msra.mxu0 0.0
        %2137 = vmatprep.subr.mxu0 0.0
        %2138 = vmatpush2.msra.mxu0 0.0
        %2139 = vmatprep.subr.mxu0 0.0
        %2140 = vmatpush2.msra.mxu0 0.0
        %2141 = vmatprep.subr.mxu0 0.0
        %2142 = vmatpush2.msra.mxu0 0.0
        %2143 = vmatprep.subr.mxu0 0.0
        %2144 = vmatpush2.msra.mxu0 0.0
        %2145 = vmatprep.subr.mxu0 0.0
        %2146 = vmatpush2.msra.mxu0 0.0
        %2147 = vmatprep.mubr.f32.mxu0 0.0
        %2148 = vmatmul.mubr.f32.gmra.mxu0 %v2081
        %v2149 = vpop.f32.mrf.mxu0
        %v2150 = vadd.f32 0.0, %v2149
        %v2151 = vpop.f32.mrf.mxu0
        %2152 = vdwg.mxu0
        %v2153 = vpack.c.bf16 %v2150, %v2150
        %v2156 = vunpack.c.l.b16 %v1327
        %v2157 = vunpack.c.l.b16 %v1328
        %v2158 = vpack.c.b16 %v2157, %v2156
        %v2161 = vsel %vm1344, %v2153, 0
        %2163 = vmatprep.subr.bf16.mxu0 0
        %2164 = vmatpush1.bf16.msra.mxu0 0
        %2165 = vmatprep.subr.bf16.mxu0 0
        %2166 = vmatpush1.bf16.msra.mxu0 0
        %2167 = vmatprep.subr.bf16.mxu0 0
        %2168 = vmatpush1.bf16.msra.mxu0 0
        %2169 = vmatprep.subr.bf16.mxu0 0
        %2170 = vmatpush1.bf16.msra.mxu0 0
        %2171 = vmatprep.subr.bf16.mxu0 0
        %2172 = vmatpush1.bf16.msra.mxu0 0
        %2173 = vmatprep.subr.bf16.mxu0 0
        %2174 = vmatpush1.bf16.msra.mxu0 0
        %2175 = vmatprep.subr.bf16.mxu0 0
        %2176 = vmatpush1.bf16.msra.mxu0 0
        %2177 = vmatprep.subr.bf16.mxu0 0
        %2178 = vmatpush1.bf16.msra.mxu0 %v2158
        %2179 = vmatprep.subr.bf16.mxu0 0
        %2180 = vmatpush2.bf16.msra.mxu0 0
        %2181 = vmatprep.subr.bf16.mxu0 0
        %2182 = vmatpush2.bf16.msra.mxu0 0
        %2183 = vmatprep.subr.bf16.mxu0 0
        %2184 = vmatpush2.bf16.msra.mxu0 0
        %2185 = vmatprep.subr.bf16.mxu0 0
        %2186 = vmatpush2.bf16.msra.mxu0 0
        %2187 = vmatprep.subr.bf16.mxu0 0
        %2188 = vmatpush2.bf16.msra.mxu0 0
        %2189 = vmatprep.subr.bf16.mxu0 0
        %2190 = vmatpush2.bf16.msra.mxu0 0
        %2191 = vmatprep.subr.bf16.mxu0 0
        %2192 = vmatpush2.bf16.msra.mxu0 0
        %2193 = vmatprep.subr.bf16.mxu0 0
        %2194 = vmatpush2.bf16.msra.mxu0 0
        %2195 = vmatprep.mubr.bf16.mxu0 0
        %2196 = vmatmul.mubr.bf16.gmra.mxu0 %v2161
        %v2197 = vpop.f32.mrf.mxu0
        %v2198 = vadd.f32 0.0, %v2197
        %v2199 = vpop.f32.mrf.mxu0
        %v2200 = vpop.f32.mrf.mxu0
        %v2201 = vpop.f32.mrf.mxu0
        %2202 = vdwg.mxu0
        %v2203 = vadd.f32 %v1987, %v2198
        %2204 = vrot.lane.b32.xlu0 %v1343, 64
        %v2205 = vpop.permute.xlu0 %2204
        %2206 = vrot.lane.b32.xlu0 %v1274, 64
        %v2207 = vpop.permute.xlu0 %2206
        %v2208 = vsel %vm1344, %v2205, 0
        %v2210 = vsel %vm1344, %v2207, 0
        %2212 = vmatprep.subr.mxu0 0.0
        %2213 = vmatpush1.xpose.msra.mxu0 0.0
        %2214 = vmatprep.subr.mxu0 0.0
        %2215 = vmatpush1.xpose.msra.mxu0 0.0
        %2216 = vmatprep.subr.mxu0 0.0
        %2217 = vmatpush1.xpose.msra.mxu0 0.0
        %2218 = vmatprep.subr.mxu0 0.0
        %2219 = vmatpush1.xpose.msra.mxu0 0.0
        %2220 = vmatprep.subr.mxu0 0.0
        %2221 = vmatpush1.xpose.msra.mxu0 0.0
        %2222 = vmatprep.subr.mxu0 0.0
        %2223 = vmatpush1.xpose.msra.mxu0 0.0
        %2224 = vmatprep.subr.mxu0 0.0
        %2225 = vmatpush1.xpose.msra.mxu0 0.0
        %2226 = vmatprep.subr.mxu0 0.0
        %2227 = vmatpush1.xpose.msra.mxu0 0.0
        %2228 = vmatprep.subr.mxu0 0.0
        %2229 = vmatpush1.xpose.msra.mxu0 0.0
        %2230 = vmatprep.subr.mxu0 0.0
        %2231 = vmatpush1.xpose.msra.mxu0 0.0
        %2232 = vmatprep.subr.mxu0 0.0
        %2233 = vmatpush1.xpose.msra.mxu0 0.0
        %2234 = vmatprep.subr.mxu0 0.0
        %2235 = vmatpush1.xpose.msra.mxu0 0.0
        %2236 = vmatprep.subr.mxu0 0.0
        %2237 = vmatpush1.xpose.msra.mxu0 0.0
        %2238 = vmatprep.subr.mxu0 0.0
        %2239 = vmatpush1.xpose.msra.mxu0 0.0
        %2240 = vmatprep.subr.mxu0 0.0
        %2241 = vmatpush1.xpose.msra.mxu0 0.0
        %2242 = vmatprep.subr.mxu0 0.0
        %2243 = vmatpush1.xpose.msra.mxu0 %v2210
        %2244 = vmatprep.subr.mxu0 0.0
        %2245 = vmatpush2.xpose.msra.mxu0 0.0
        %2246 = vmatprep.subr.mxu0 0.0
        %2247 = vmatpush2.xpose.msra.mxu0 0.0
        %2248 = vmatprep.subr.mxu0 0.0
        %2249 = vmatpush2.xpose.msra.mxu0 0.0
        %2250 = vmatprep.subr.mxu0 0.0
        %2251 = vmatpush2.xpose.msra.mxu0 0.0
        %2252 = vmatprep.subr.mxu0 0.0
        %2253 = vmatpush2.xpose.msra.mxu0 0.0
        %2254 = vmatprep.subr.mxu0 0.0
        %2255 = vmatpush2.xpose.msra.mxu0 0.0
        %2256 = vmatprep.subr.mxu0 0.0
        %2257 = vmatpush2.xpose.msra.mxu0 0.0
        %2258 = vmatprep.subr.mxu0 0.0
        %2259 = vmatpush2.xpose.msra.mxu0 0.0
        %2260 = vmatprep.subr.mxu0 0.0
        %2261 = vmatpush2.xpose.msra.mxu0 0.0
        %2262 = vmatprep.subr.mxu0 0.0
        %2263 = vmatpush2.xpose.msra.mxu0 0.0
        %2264 = vmatprep.subr.mxu0 0.0
        %2265 = vmatpush2.xpose.msra.mxu0 0.0
        %2266 = vmatprep.subr.mxu0 0.0
        %2267 = vmatpush2.xpose.msra.mxu0 0.0
        %2268 = vmatprep.subr.mxu0 0.0
        %2269 = vmatpush2.xpose.msra.mxu0 0.0
        %2270 = vmatprep.subr.mxu0 0.0
        %2271 = vmatpush2.xpose.msra.mxu0 0.0
        %2272 = vmatprep.subr.mxu0 0.0
        %2273 = vmatpush2.xpose.msra.mxu0 0.0
        %2274 = vmatprep.subr.mxu0 0.0
        %2275 = vmatpush2.xpose.msra.mxu0 0.0
        %2276 = vmatprep.mubr.f32.mxu0 0.0
        %2277 = vmatmul.mubr.f32.gmra.mxu0 %v2208
        %v2278 = vpop.f32.mrf.mxu0
        %v2279 = vadd.f32 %v1342, %v2278
        %v2280 = vpop.f32.mrf.mxu0
        %2281 = vdwg.mxu0
        %v2282 = vsel %vm1421, %v2279, -inf
        %2283 = vmax.xlane.f32.xlu0 %v2282
        %v2284 = vpop.xlane.xlu0 %2283
        %v2285 = vsub.f32 %v2279, %v2284
        %v2286 = vmul.f32 %v2285, 1.442695
        %v2287 = vpow.pop %v2286
        %v2288 = vsel %vm1421, %v2287, 0.0
        %2289 = vadd.xlane.f32.xlu0 %v2288
        %v2290 = vpop.xlane.xlu0 %2289
        %v2291 = vrcp.pop %v2290
        %v2292 = vmul.f32 %v2287, %v2291
        %2293 = vrot.lane.b32.xlu0 %v1315, 64
        %v2294 = vpop.permute.xlu0 %2293
        %v2297 = vsel %vm1421, %v2292, 0
        %2299 = vmatprep.subr.mxu0 0.0
        %2300 = vmatpush1.msra.mxu0 0.0
        %2301 = vmatprep.subr.mxu0 0.0
        %2302 = vmatpush1.msra.mxu0 0.0
        %2303 = vmatprep.subr.mxu0 0.0
        %2304 = vmatpush1.msra.mxu0 0.0
        %2305 = vmatprep.subr.mxu0 0.0
        %2306 = vmatpush1.msra.mxu0 0.0
        %2307 = vmatprep.subr.mxu0 0.0
        %2308 = vmatpush1.msra.mxu0 0.0
        %2309 = vmatprep.subr.mxu0 0.0
        %2310 = vmatpush1.msra.mxu0 0.0
        %2311 = vmatprep.subr.mxu0 0.0
        %2312 = vmatpush1.msra.mxu0 0.0
        %2313 = vmatprep.subr.mxu0 0.0
        %2314 = vmatpush1.msra.mxu0 0.0
        %2315 = vmatprep.subr.mxu0 0.0
        %2316 = vmatpush1.msra.mxu0 0.0
        %2317 = vmatprep.subr.mxu0 0.0
        %2318 = vmatpush1.msra.mxu0 0.0
        %2319 = vmatprep.subr.mxu0 0.0
        %2320 = vmatpush1.msra.mxu0 0.0
        %2321 = vmatprep.subr.mxu0 0.0
        %2322 = vmatpush1.msra.mxu0 0.0
        %2323 = vmatprep.subr.mxu0 0.0
        %2324 = vmatpush1.msra.mxu0 0.0
        %2325 = vmatprep.subr.mxu0 0.0
        %2326 = vmatpush1.msra.mxu0 0.0
        %2327 = vmatprep.subr.mxu0 0.0
        %2328 = vmatpush1.msra.mxu0 0.0
        %2329 = vmatprep.subr.mxu0 0.0
        %2330 = vmatpush1.msra.mxu0 %v2294
        %2331 = vmatprep.subr.mxu0 0.0
        %2332 = vmatpush2.msra.mxu0 0.0
        %2333 = vmatprep.subr.mxu0 0.0
        %2334 = vmatpush2.msra.mxu0 0.0
        %2335 = vmatprep.subr.mxu0 0.0
        %2336 = vmatpush2.msra.mxu0 0.0
        %2337 = vmatprep.subr.mxu0 0.0
        %2338 = vmatpush2.msra.mxu0 0.0
        %2339 = vmatprep.subr.mxu0 0.0
        %2340 = vmatpush2.msra.mxu0 0.0
        %2341 = vmatprep.subr.mxu0 0.0
        %2342 = vmatpush2.msra.mxu0 0.0
        %2343 = vmatprep.subr.mxu0 0.0
        %2344 = vmatpush2.msra.mxu0 0.0
        %2345 = vmatprep.subr.mxu0 0.0
        %2346 = vmatpush2.msra.mxu0 0.0
        %2347 = vmatprep.subr.mxu0 0.0
        %2348 = vmatpush2.msra.mxu0 0.0
        %2349 = vmatprep.subr.mxu0 0.0
        %2350 = vmatpush2.msra.mxu0 0.0
        %2351 = vmatprep.subr.mxu0 0.0
        %2352 = vmatpush2.msra.mxu0 0.0
        %2353 = vmatprep.subr.mxu0 0.0
        %2354 = vmatpush2.msra.mxu0 0.0
        %2355 = vmatprep.subr.mxu0 0.0
        %2356 = vmatpush2.msra.mxu0 0.0
        %2357 = vmatprep.subr.mxu0 0.0
        %2358 = vmatpush2.msra.mxu0 0.0
        %2359 = vmatprep.subr.mxu0 0.0
        %2360 = vmatpush2.msra.mxu0 0.0
        %2361 = vmatprep.subr.mxu0 0.0
        %2362 = vmatpush2.msra.mxu0 0.0
        %2363 = vmatprep.mubr.f32.mxu0 0.0
        %2364 = vmatmul.mubr.f32.gmra.mxu0 %v2297
        %v2365 = vpop.f32.mrf.mxu0
        %v2366 = vadd.f32 0.0, %v2365
        %v2367 = vpop.f32.mrf.mxu0
        %2368 = vdwg.mxu0
        %v2369 = vpack.c.bf16 %v2366, %v2366
        %v2372 = vunpack.c.l.b16 %v1329
        %v2373 = vunpack.c.l.b16 %v1330
        %v2374 = vpack.c.b16 %v2373, %v2372
        %v2377 = vsel %vm1344, %v2369, 0
        %2379 = vmatprep.subr.bf16.mxu0 0
        %2380 = vmatpush1.bf16.msra.mxu0 0
        %2381 = vmatprep.subr.bf16.mxu0 0
        %2382 = vmatpush1.bf16.msra.mxu0 0
        %2383 = vmatprep.subr.bf16.mxu0 0
        %2384 = vmatpush1.bf16.msra.mxu0 0
        %2385 = vmatprep.subr.bf16.mxu0 0
        %2386 = vmatpush1.bf16.msra.mxu0 0
        %2387 = vmatprep.subr.bf16.mxu0 0
        %2388 = vmatpush1.bf16.msra.mxu0 0
        %2389 = vmatprep.subr.bf16.mxu0 0
        %2390 = vmatpush1.bf16.msra.mxu0 0
        %2391 = vmatprep.subr.bf16.mxu0 0
        %2392 = vmatpush1.bf16.msra.mxu0 0
        %2393 = vmatprep.subr.bf16.mxu0 0
        %2394 = vmatpush1.bf16.msra.mxu0 %v2374
        %2395 = vmatprep.subr.bf16.mxu0 0
        %2396 = vmatpush2.bf16.msra.mxu0 0
        %2397 = vmatprep.subr.bf16.mxu0 0
        %2398 = vmatpush2.bf16.msra.mxu0 0
        %2399 = vmatprep.subr.bf16.mxu0 0
        %2400 = vmatpush2.bf16.msra.mxu0 0
        %2401 = vmatprep.subr.bf16.mxu0 0
        %2402 = vmatpush2.bf16.msra.mxu0 0
        %2403 = vmatprep.subr.bf16.mxu0 0
        %2404 = vmatpush2.bf16.msra.mxu0 0
        %2405 = vmatprep.subr.bf16.mxu0 0
        %2406 = vmatpush2.bf16.msra.mxu0 0
        %2407 = vmatprep.subr.bf16.mxu0 0
        %2408 = vmatpush2.bf16.msra.mxu0 0
        %2409 = vmatprep.subr.bf16.mxu0 0
        %2410 = vmatpush2.bf16.msra.mxu0 0
        %2411 = vmatprep.mubr.bf16.mxu0 0
        %2412 = vmatmul.mubr.bf16.gmra.mxu0 %v2377
        %v2413 = vpop.f32.mrf.mxu0
        %v2414 = vadd.f32 0.0, %v2413
        %v2415 = vpop.f32.mrf.mxu0
        %v2416 = vpop.f32.mrf.mxu0
        %v2417 = vpop.f32.mrf.mxu0
        %2418 = vdwg.mxu0
        %v2419 = vadd.f32 %v2203, %v2414
        %2420 = vrot.lane.b32.xlu0 %v1343, 48
        %v2421 = vpop.permute.xlu0 %2420
        %2422 = vrot.lane.b32.xlu0 %v1274, 48
        %v2423 = vpop.permute.xlu0 %2422
        %v2424 = vsel %vm1344, %v2421, 0
        %v2426 = vsel %vm1344, %v2423, 0
        %2428 = vmatprep.subr.mxu0 0.0
        %2429 = vmatpush1.xpose.msra.mxu0 0.0
        %2430 = vmatprep.subr.mxu0 0.0
        %2431 = vmatpush1.xpose.msra.mxu0 0.0
        %2432 = vmatprep.subr.mxu0 0.0
        %2433 = vmatpush1.xpose.msra.mxu0 0.0
        %2434 = vmatprep.subr.mxu0 0.0
        %2435 = vmatpush1.xpose.msra.mxu0 0.0
        %2436 = vmatprep.subr.mxu0 0.0
        %2437 = vmatpush1.xpose.msra.mxu0 0.0
        %2438 = vmatprep.subr.mxu0 0.0
        %2439 = vmatpush1.xpose.msra.mxu0 0.0
        %2440 = vmatprep.subr.mxu0 0.0
        %2441 = vmatpush1.xpose.msra.mxu0 0.0
        %2442 = vmatprep.subr.mxu0 0.0
        %2443 = vmatpush1.xpose.msra.mxu0 0.0
        %2444 = vmatprep.subr.mxu0 0.0
        %2445 = vmatpush1.xpose.msra.mxu0 0.0
        %2446 = vmatprep.subr.mxu0 0.0
        %2447 = vmatpush1.xpose.msra.mxu0 0.0
        %2448 = vmatprep.subr.mxu0 0.0
        %2449 = vmatpush1.xpose.msra.mxu0 0.0
        %2450 = vmatprep.subr.mxu0 0.0
        %2451 = vmatpush1.xpose.msra.mxu0 0.0
        %2452 = vmatprep.subr.mxu0 0.0
        %2453 = vmatpush1.xpose.msra.mxu0 0.0
        %2454 = vmatprep.subr.mxu0 0.0
        %2455 = vmatpush1.xpose.msra.mxu0 0.0
        %2456 = vmatprep.subr.mxu0 0.0
        %2457 = vmatpush1.xpose.msra.mxu0 0.0
        %2458 = vmatprep.subr.mxu0 0.0
        %2459 = vmatpush1.xpose.msra.mxu0 %v2426
        %2460 = vmatprep.subr.mxu0 0.0
        %2461 = vmatpush2.xpose.msra.mxu0 0.0
        %2462 = vmatprep.subr.mxu0 0.0
        %2463 = vmatpush2.xpose.msra.mxu0 0.0
        %2464 = vmatprep.subr.mxu0 0.0
        %2465 = vmatpush2.xpose.msra.mxu0 0.0
        %2466 = vmatprep.subr.mxu0 0.0
        %2467 = vmatpush2.xpose.msra.mxu0 0.0
        %2468 = vmatprep.subr.mxu0 0.0
        %2469 = vmatpush2.xpose.msra.mxu0 0.0
        %2470 = vmatprep.subr.mxu0 0.0
        %2471 = vmatpush2.xpose.msra.mxu0 0.0
        %2472 = vmatprep.subr.mxu0 0.0
        %2473 = vmatpush2.xpose.msra.mxu0 0.0
        %2474 = vmatprep.subr.mxu0 0.0
        %2475 = vmatpush2.xpose.msra.mxu0 0.0
        %2476 = vmatprep.subr.mxu0 0.0
        %2477 = vmatpush2.xpose.msra.mxu0 0.0
        %2478 = vmatprep.subr.mxu0 0.0
        %2479 = vmatpush2.xpose.msra.mxu0 0.0
        %2480 = vmatprep.subr.mxu0 0.0
        %2481 = vmatpush2.xpose.msra.mxu0 0.0
        %2482 = vmatprep.subr.mxu0 0.0
        %2483 = vmatpush2.xpose.msra.mxu0 0.0
        %2484 = vmatprep.subr.mxu0 0.0
        %2485 = vmatpush2.xpose.msra.mxu0 0.0
        %2486 = vmatprep.subr.mxu0 0.0
        %2487 = vmatpush2.xpose.msra.mxu0 0.0
        %2488 = vmatprep.subr.mxu0 0.0
        %2489 = vmatpush2.xpose.msra.mxu0 0.0
        %2490 = vmatprep.subr.mxu0 0.0
        %2491 = vmatpush2.xpose.msra.mxu0 0.0
        %2492 = vmatprep.mubr.f32.mxu0 0.0
        %2493 = vmatmul.mubr.f32.gmra.mxu0 %v2424
        %v2494 = vpop.f32.mrf.mxu0
        %v2495 = vadd.f32 %v1342, %v2494
        %v2496 = vpop.f32.mrf.mxu0
        %2497 = vdwg.mxu0
        %v2498 = vsel %vm1421, %v2495, -inf
        %2499 = vmax.xlane.f32.xlu0 %v2498
        %v2500 = vpop.xlane.xlu0 %2499
        %v2501 = vsub.f32 %v2495, %v2500
        %v2502 = vmul.f32 %v2501, 1.442695
        %v2503 = vpow.pop %v2502
        %v2504 = vsel %vm1421, %v2503, 0.0
        %2505 = vadd.xlane.f32.xlu0 %v2504
        %v2506 = vpop.xlane.xlu0 %2505
        %v2507 = vrcp.pop %v2506
        %v2508 = vmul.f32 %v2503, %v2507
        %2509 = vrot.lane.b32.xlu0 %v1315, 48
        %v2510 = vpop.permute.xlu0 %2509
        %v2513 = vsel %vm1421, %v2508, 0
        %2515 = vmatprep.subr.mxu0 0.0
        %2516 = vmatpush1.msra.mxu0 0.0
        %2517 = vmatprep.subr.mxu0 0.0
        %2518 = vmatpush1.msra.mxu0 0.0
        %2519 = vmatprep.subr.mxu0 0.0
        %2520 = vmatpush1.msra.mxu0 0.0
        %2521 = vmatprep.subr.mxu0 0.0
        %2522 = vmatpush1.msra.mxu0 0.0
        %2523 = vmatprep.subr.mxu0 0.0
        %2524 = vmatpush1.msra.mxu0 0.0
        %2525 = vmatprep.subr.mxu0 0.0
        %2526 = vmatpush1.msra.mxu0 0.0
        %2527 = vmatprep.subr.mxu0 0.0
        %2528 = vmatpush1.msra.mxu0 0.0
        %2529 = vmatprep.subr.mxu0 0.0
        %2530 = vmatpush1.msra.mxu0 0.0
        %2531 = vmatprep.subr.mxu0 0.0
        %2532 = vmatpush1.msra.mxu0 0.0
        %2533 = vmatprep.subr.mxu0 0.0
        %2534 = vmatpush1.msra.mxu0 0.0
        %2535 = vmatprep.subr.mxu0 0.0
        %2536 = vmatpush1.msra.mxu0 0.0
        %2537 = vmatprep.subr.mxu0 0.0
        %2538 = vmatpush1.msra.mxu0 0.0
        %2539 = vmatprep.subr.mxu0 0.0
        %2540 = vmatpush1.msra.mxu0 0.0
        %2541 = vmatprep.subr.mxu0 0.0
        %2542 = vmatpush1.msra.mxu0 0.0
        %2543 = vmatprep.subr.mxu0 0.0
        %2544 = vmatpush1.msra.mxu0 0.0
        %2545 = vmatprep.subr.mxu0 0.0
        %2546 = vmatpush1.msra.mxu0 %v2510
        %2547 = vmatprep.subr.mxu0 0.0
        %2548 = vmatpush2.msra.mxu0 0.0
        %2549 = vmatprep.subr.mxu0 0.0
        %2550 = vmatpush2.msra.mxu0 0.0
        %2551 = vmatprep.subr.mxu0 0.0
        %2552 = vmatpush2.msra.mxu0 0.0
        %2553 = vmatprep.subr.mxu0 0.0
        %2554 = vmatpush2.msra.mxu0 0.0
        %2555 = vmatprep.subr.mxu0 0.0
        %2556 = vmatpush2.msra.mxu0 0.0
        %2557 = vmatprep.subr.mxu0 0.0
        %2558 = vmatpush2.msra.mxu0 0.0
        %2559 = vmatprep.subr.mxu0 0.0
        %2560 = vmatpush2.msra.mxu0 0.0
        %2561 = vmatprep.subr.mxu0 0.0
        %2562 = vmatpush2.msra.mxu0 0.0
        %2563 = vmatprep.subr.mxu0 0.0
        %2564 = vmatpush2.msra.mxu0 0.0
        %2565 = vmatprep.subr.mxu0 0.0
        %2566 = vmatpush2.msra.mxu0 0.0
        %2567 = vmatprep.subr.mxu0 0.0
        %2568 = vmatpush2.msra.mxu0 0.0
        %2569 = vmatprep.subr.mxu0 0.0
        %2570 = vmatpush2.msra.mxu0 0.0
        %2571 = vmatprep.subr.mxu0 0.0
        %2572 = vmatpush2.msra.mxu0 0.0
        %2573 = vmatprep.subr.mxu0 0.0
        %2574 = vmatpush2.msra.mxu0 0.0
        %2575 = vmatprep.subr.mxu0 0.0
        %2576 = vmatpush2.msra.mxu0 0.0
        %2577 = vmatprep.subr.mxu0 0.0
        %2578 = vmatpush2.msra.mxu0 0.0
        %2579 = vmatprep.mubr.f32.mxu0 0.0
        %2580 = vmatmul.mubr.f32.gmra.mxu0 %v2513
        %v2581 = vpop.f32.mrf.mxu0
        %v2582 = vadd.f32 0.0, %v2581
        %v2583 = vpop.f32.mrf.mxu0
        %2584 = vdwg.mxu0
        %v2585 = vpack.c.bf16 %v2582, %v2582
        %v2588 = vunpack.c.l.b16 %v1331
        %v2589 = vunpack.c.l.b16 %v1332
        %v2590 = vpack.c.b16 %v2589, %v2588
        %v2593 = vsel %vm1344, %v2585, 0
        %2595 = vmatprep.subr.bf16.mxu0 0
        %2596 = vmatpush1.bf16.msra.mxu0 0
        %2597 = vmatprep.subr.bf16.mxu0 0
        %2598 = vmatpush1.bf16.msra.mxu0 0
        %2599 = vmatprep.subr.bf16.mxu0 0
        %2600 = vmatpush1.bf16.msra.mxu0 0
        %2601 = vmatprep.subr.bf16.mxu0 0
        %2602 = vmatpush1.bf16.msra.mxu0 0
        %2603 = vmatprep.subr.bf16.mxu0 0
        %2604 = vmatpush1.bf16.msra.mxu0 0
        %2605 = vmatprep.subr.bf16.mxu0 0
        %2606 = vmatpush1.bf16.msra.mxu0 0
        %2607 = vmatprep.subr.bf16.mxu0 0
        %2608 = vmatpush1.bf16.msra.mxu0 0
        %2609 = vmatprep.subr.bf16.mxu0 0
        %2610 = vmatpush1.bf16.msra.mxu0 %v2590
        %2611 = vmatprep.subr.bf16.mxu0 0
        %2612 = vmatpush2.bf16.msra.mxu0 0
        %2613 = vmatprep.subr.bf16.mxu0 0
        %2614 = vmatpush2.bf16.msra.mxu0 0
        %2615 = vmatprep.subr.bf16.mxu0 0
        %2616 = vmatpush2.bf16.msra.mxu0 0
        %2617 = vmatprep.subr.bf16.mxu0 0
        %2618 = vmatpush2.bf16.msra.mxu0 0
        %2619 = vmatprep.subr.bf16.mxu0 0
        %2620 = vmatpush2.bf16.msra.mxu0 0
        %2621 = vmatprep.subr.bf16.mxu0 0
        %2622 = vmatpush2.bf16.msra.mxu0 0
        %2623 = vmatprep.subr.bf16.mxu0 0
        %2624 = vmatpush2.bf16.msra.mxu0 0
        %2625 = vmatprep.subr.bf16.mxu0 0
        %2626 = vmatpush2.bf16.msra.mxu0 0
        %2627 = vmatprep.mubr.bf16.mxu0 0
        %2628 = vmatmul.mubr.bf16.gmra.mxu0 %v2593
        %v2629 = vpop.f32.mrf.mxu0
        %v2630 = vadd.f32 0.0, %v2629
        %v2631 = vpop.f32.mrf.mxu0
        %v2632 = vpop.f32.mrf.mxu0
        %v2633 = vpop.f32.mrf.mxu0
        %2634 = vdwg.mxu0
        %v2635 = vadd.f32 %v2419, %v2630
        %2636 = vrot.lane.b32.xlu0 %v1343, 32
        %v2637 = vpop.permute.xlu0 %2636
        %2638 = vrot.lane.b32.xlu0 %v1274, 32
        %v2639 = vpop.permute.xlu0 %2638
        %v2640 = vsel %vm1344, %v2637, 0
        %v2642 = vsel %vm1344, %v2639, 0
        %2644 = vmatprep.subr.mxu0 0.0
        %2645 = vmatpush1.xpose.msra.mxu0 0.0
        %2646 = vmatprep.subr.mxu0 0.0
        %2647 = vmatpush1.xpose.msra.mxu0 0.0
        %2648 = vmatprep.subr.mxu0 0.0
        %2649 = vmatpush1.xpose.msra.mxu0 0.0
        %2650 = vmatprep.subr.mxu0 0.0
        %2651 = vmatpush1.xpose.msra.mxu0 0.0
        %2652 = vmatprep.subr.mxu0 0.0
        %2653 = vmatpush1.xpose.msra.mxu0 0.0
        %2654 = vmatprep.subr.mxu0 0.0
        %2655 = vmatpush1.xpose.msra.mxu0 0.0
        %2656 = vmatprep.subr.mxu0 0.0
        %2657 = vmatpush1.xpose.msra.mxu0 0.0
        %2658 = vmatprep.subr.mxu0 0.0
        %2659 = vmatpush1.xpose.msra.mxu0 0.0
        %2660 = vmatprep.subr.mxu0 0.0
        %2661 = vmatpush1.xpose.msra.mxu0 0.0
        %2662 = vmatprep.subr.mxu0 0.0
        %2663 = vmatpush1.xpose.msra.mxu0 0.0
        %2664 = vmatprep.subr.mxu0 0.0
        %2665 = vmatpush1.xpose.msra.mxu0 0.0
        %2666 = vmatprep.subr.mxu0 0.0
        %2667 = vmatpush1.xpose.msra.mxu0 0.0
        %2668 = vmatprep.subr.mxu0 0.0
        %2669 = vmatpush1.xpose.msra.mxu0 0.0
        %2670 = vmatprep.subr.mxu0 0.0
        %2671 = vmatpush1.xpose.msra.mxu0 0.0
        %2672 = vmatprep.subr.mxu0 0.0
        %2673 = vmatpush1.xpose.msra.mxu0 0.0
        %2674 = vmatprep.subr.mxu0 0.0
        %2675 = vmatpush1.xpose.msra.mxu0 %v2642
        %2676 = vmatprep.subr.mxu0 0.0
        %2677 = vmatpush2.xpose.msra.mxu0 0.0
        %2678 = vmatprep.subr.mxu0 0.0
        %2679 = vmatpush2.xpose.msra.mxu0 0.0
        %2680 = vmatprep.subr.mxu0 0.0
        %2681 = vmatpush2.xpose.msra.mxu0 0.0
        %2682 = vmatprep.subr.mxu0 0.0
        %2683 = vmatpush2.xpose.msra.mxu0 0.0
        %2684 = vmatprep.subr.mxu0 0.0
        %2685 = vmatpush2.xpose.msra.mxu0 0.0
        %2686 = vmatprep.subr.mxu0 0.0
        %2687 = vmatpush2.xpose.msra.mxu0 0.0
        %2688 = vmatprep.subr.mxu0 0.0
        %2689 = vmatpush2.xpose.msra.mxu0 0.0
        %2690 = vmatprep.subr.mxu0 0.0
        %2691 = vmatpush2.xpose.msra.mxu0 0.0
        %2692 = vmatprep.subr.mxu0 0.0
        %2693 = vmatpush2.xpose.msra.mxu0 0.0
        %2694 = vmatprep.subr.mxu0 0.0
        %2695 = vmatpush2.xpose.msra.mxu0 0.0
        %2696 = vmatprep.subr.mxu0 0.0
        %2697 = vmatpush2.xpose.msra.mxu0 0.0
        %2698 = vmatprep.subr.mxu0 0.0
        %2699 = vmatpush2.xpose.msra.mxu0 0.0
        %2700 = vmatprep.subr.mxu0 0.0
        %2701 = vmatpush2.xpose.msra.mxu0 0.0
        %2702 = vmatprep.subr.mxu0 0.0
        %2703 = vmatpush2.xpose.msra.mxu0 0.0
        %2704 = vmatprep.subr.mxu0 0.0
        %2705 = vmatpush2.xpose.msra.mxu0 0.0
        %2706 = vmatprep.subr.mxu0 0.0
        %2707 = vmatpush2.xpose.msra.mxu0 0.0
        %2708 = vmatprep.mubr.f32.mxu0 0.0
        %2709 = vmatmul.mubr.f32.gmra.mxu0 %v2640
        %v2710 = vpop.f32.mrf.mxu0
        %v2711 = vadd.f32 %v1342, %v2710
        %v2712 = vpop.f32.mrf.mxu0
        %2713 = vdwg.mxu0
        %v2714 = vsel %vm1421, %v2711, -inf
        %2715 = vmax.xlane.f32.xlu0 %v2714
        %v2716 = vpop.xlane.xlu0 %2715
        %v2717 = vsub.f32 %v2711, %v2716
        %v2718 = vmul.f32 %v2717, 1.442695
        %v2719 = vpow.pop %v2718
        %v2720 = vsel %vm1421, %v2719, 0.0
        %2721 = vadd.xlane.f32.xlu0 %v2720
        %v2722 = vpop.xlane.xlu0 %2721
        %v2723 = vrcp.pop %v2722
        %v2724 = vmul.f32 %v2719, %v2723
        %2725 = vrot.lane.b32.xlu0 %v1315, 32
        %v2726 = vpop.permute.xlu0 %2725
        %v2729 = vsel %vm1421, %v2724, 0
        %2731 = vmatprep.subr.mxu0 0.0
        %2732 = vmatpush1.msra.mxu0 0.0
        %2733 = vmatprep.subr.mxu0 0.0
        %2734 = vmatpush1.msra.mxu0 0.0
        %2735 = vmatprep.subr.mxu0 0.0
        %2736 = vmatpush1.msra.mxu0 0.0
        %2737 = vmatprep.subr.mxu0 0.0
        %2738 = vmatpush1.msra.mxu0 0.0
        %2739 = vmatprep.subr.mxu0 0.0
        %2740 = vmatpush1.msra.mxu0 0.0
        %2741 = vmatprep.subr.mxu0 0.0
        %2742 = vmatpush1.msra.mxu0 0.0
        %2743 = vmatprep.subr.mxu0 0.0
        %2744 = vmatpush1.msra.mxu0 0.0
        %2745 = vmatprep.subr.mxu0 0.0
        %2746 = vmatpush1.msra.mxu0 0.0
        %2747 = vmatprep.subr.mxu0 0.0
        %2748 = vmatpush1.msra.mxu0 0.0
        %2749 = vmatprep.subr.mxu0 0.0
        %2750 = vmatpush1.msra.mxu0 0.0
        %2751 = vmatprep.subr.mxu0 0.0
        %2752 = vmatpush1.msra.mxu0 0.0
        %2753 = vmatprep.subr.mxu0 0.0
        %2754 = vmatpush1.msra.mxu0 0.0
        %2755 = vmatprep.subr.mxu0 0.0
        %2756 = vmatpush1.msra.mxu0 0.0
        %2757 = vmatprep.subr.mxu0 0.0
        %2758 = vmatpush1.msra.mxu0 0.0
        %2759 = vmatprep.subr.mxu0 0.0
        %2760 = vmatpush1.msra.mxu0 0.0
        %2761 = vmatprep.subr.mxu0 0.0
        %2762 = vmatpush1.msra.mxu0 %v2726
        %2763 = vmatprep.subr.mxu0 0.0
        %2764 = vmatpush2.msra.mxu0 0.0
        %2765 = vmatprep.subr.mxu0 0.0
        %2766 = vmatpush2.msra.mxu0 0.0
        %2767 = vmatprep.subr.mxu0 0.0
        %2768 = vmatpush2.msra.mxu0 0.0
        %2769 = vmatprep.subr.mxu0 0.0
        %2770 = vmatpush2.msra.mxu0 0.0
        %2771 = vmatprep.subr.mxu0 0.0
        %2772 = vmatpush2.msra.mxu0 0.0
        %2773 = vmatprep.subr.mxu0 0.0
        %2774 = vmatpush2.msra.mxu0 0.0
        %2775 = vmatprep.subr.mxu0 0.0
        %2776 = vmatpush2.msra.mxu0 0.0
        %2777 = vmatprep.subr.mxu0 0.0
        %2778 = vmatpush2.msra.mxu0 0.0
        %2779 = vmatprep.subr.mxu0 0.0
        %2780 = vmatpush2.msra.mxu0 0.0
        %2781 = vmatprep.subr.mxu0 0.0
        %2782 = vmatpush2.msra.mxu0 0.0
        %2783 = vmatprep.subr.mxu0 0.0
        %2784 = vmatpush2.msra.mxu0 0.0
        %2785 = vmatprep.subr.mxu0 0.0
        %2786 = vmatpush2.msra.mxu0 0.0
        %2787 = vmatprep.subr.mxu0 0.0
        %2788 = vmatpush2.msra.mxu0 0.0
        %2789 = vmatprep.subr.mxu0 0.0
        %2790 = vmatpush2.msra.mxu0 0.0
        %2791 = vmatprep.subr.mxu0 0.0
        %2792 = vmatpush2.msra.mxu0 0.0
        %2793 = vmatprep.subr.mxu0 0.0
        %2794 = vmatpush2.msra.mxu0 0.0
        %2795 = vmatprep.mubr.f32.mxu0 0.0
        %2796 = vmatmul.mubr.f32.gmra.mxu0 %v2729
        %v2797 = vpop.f32.mrf.mxu0
        %v2798 = vadd.f32 0.0, %v2797
        %v2799 = vpop.f32.mrf.mxu0
        %2800 = vdwg.mxu0
        %v2801 = vpack.c.bf16 %v2798, %v2798
        %v2804 = vunpack.c.l.b16 %v1333
        %v2805 = vunpack.c.l.b16 %v1334
        %v2806 = vpack.c.b16 %v2805, %v2804
        %v2809 = vsel %vm1344, %v2801, 0
        %2811 = vmatprep.subr.bf16.mxu0 0
        %2812 = vmatpush1.bf16.msra.mxu0 0
        %2813 = vmatprep.subr.bf16.mxu0 0
        %2814 = vmatpush1.bf16.msra.mxu0 0
        %2815 = vmatprep.subr.bf16.mxu0 0
        %2816 = vmatpush1.bf16.msra.mxu0 0
        %2817 = vmatprep.subr.bf16.mxu0 0
        %2818 = vmatpush1.bf16.msra.mxu0 0
        %2819 = vmatprep.subr.bf16.mxu0 0
        %2820 = vmatpush1.bf16.msra.mxu0 0
        %2821 = vmatprep.subr.bf16.mxu0 0
        %2822 = vmatpush1.bf16.msra.mxu0 0
        %2823 = vmatprep.subr.bf16.mxu0 0
        %2824 = vmatpush1.bf16.msra.mxu0 0
        %2825 = vmatprep.subr.bf16.mxu0 0
        %2826 = vmatpush1.bf16.msra.mxu0 %v2806
        %2827 = vmatprep.subr.bf16.mxu0 0
        %2828 = vmatpush2.bf16.msra.mxu0 0
        %2829 = vmatprep.subr.bf16.mxu0 0
        %2830 = vmatpush2.bf16.msra.mxu0 0
        %2831 = vmatprep.subr.bf16.mxu0 0
        %2832 = vmatpush2.bf16.msra.mxu0 0
        %2833 = vmatprep.subr.bf16.mxu0 0
        %2834 = vmatpush2.bf16.msra.mxu0 0
        %2835 = vmatprep.subr.bf16.mxu0 0
        %2836 = vmatpush2.bf16.msra.mxu0 0
        %2837 = vmatprep.subr.bf16.mxu0 0
        %2838 = vmatpush2.bf16.msra.mxu0 0
        %2839 = vmatprep.subr.bf16.mxu0 0
        %2840 = vmatpush2.bf16.msra.mxu0 0
        %2841 = vmatprep.subr.bf16.mxu0 0
        %2842 = vmatpush2.bf16.msra.mxu0 0
        %2843 = vmatprep.mubr.bf16.mxu0 0
        %2844 = vmatmul.mubr.bf16.gmra.mxu0 %v2809
        %v2845 = vpop.f32.mrf.mxu0
        %v2846 = vadd.f32 0.0, %v2845
        %v2847 = vpop.f32.mrf.mxu0
        %v2848 = vpop.f32.mrf.mxu0
        %v2849 = vpop.f32.mrf.mxu0
        %2850 = vdwg.mxu0
        %v2851 = vadd.f32 %v2635, %v2846
        %2852 = vrot.lane.b32.xlu0 %v1343, 16
        %v2853 = vpop.permute.xlu0 %2852
        %2854 = vrot.lane.b32.xlu0 %v1274, 16
        %v2855 = vpop.permute.xlu0 %2854
        %v2856 = vsel %vm1344, %v2853, 0
        %v2858 = vsel %vm1344, %v2855, 0
        %2860 = vmatprep.subr.mxu0 0.0
        %2861 = vmatpush1.xpose.msra.mxu0 0.0
        %2862 = vmatprep.subr.mxu0 0.0
        %2863 = vmatpush1.xpose.msra.mxu0 0.0
        %2864 = vmatprep.subr.mxu0 0.0
        %2865 = vmatpush1.xpose.msra.mxu0 0.0
        %2866 = vmatprep.subr.mxu0 0.0
        %2867 = vmatpush1.xpose.msra.mxu0 0.0
        %2868 = vmatprep.subr.mxu0 0.0
        %2869 = vmatpush1.xpose.msra.mxu0 0.0
        %2870 = vmatprep.subr.mxu0 0.0
        %2871 = vmatpush1.xpose.msra.mxu0 0.0
        %2872 = vmatprep.subr.mxu0 0.0
        %2873 = vmatpush1.xpose.msra.mxu0 0.0
        %2874 = vmatprep.subr.mxu0 0.0
        %2875 = vmatpush1.xpose.msra.mxu0 0.0
        %2876 = vmatprep.subr.mxu0 0.0
        %2877 = vmatpush1.xpose.msra.mxu0 0.0
        %2878 = vmatprep.subr.mxu0 0.0
        %2879 = vmatpush1.xpose.msra.mxu0 0.0
        %2880 = vmatprep.subr.mxu0 0.0
        %2881 = vmatpush1.xpose.msra.mxu0 0.0
        %2882 = vmatprep.subr.mxu0 0.0
        %2883 = vmatpush1.xpose.msra.mxu0 0.0
        %2884 = vmatprep.subr.mxu0 0.0
        %2885 = vmatpush1.xpose.msra.mxu0 0.0
        %2886 = vmatprep.subr.mxu0 0.0
        %2887 = vmatpush1.xpose.msra.mxu0 0.0
        %2888 = vmatprep.subr.mxu0 0.0
        %2889 = vmatpush1.xpose.msra.mxu0 0.0
        %2890 = vmatprep.subr.mxu0 0.0
        %2891 = vmatpush1.xpose.msra.mxu0 %v2858
        %2892 = vmatprep.subr.mxu0 0.0
        %2893 = vmatpush2.xpose.msra.mxu0 0.0
        %2894 = vmatprep.subr.mxu0 0.0
        %2895 = vmatpush2.xpose.msra.mxu0 0.0
        %2896 = vmatprep.subr.mxu0 0.0
        %2897 = vmatpush2.xpose.msra.mxu0 0.0
        %2898 = vmatprep.subr.mxu0 0.0
        %2899 = vmatpush2.xpose.msra.mxu0 0.0
        %2900 = vmatprep.subr.mxu0 0.0
        %2901 = vmatpush2.xpose.msra.mxu0 0.0
        %2902 = vmatprep.subr.mxu0 0.0
        %2903 = vmatpush2.xpose.msra.mxu0 0.0
        %2904 = vmatprep.subr.mxu0 0.0
        %2905 = vmatpush2.xpose.msra.mxu0 0.0
        %2906 = vmatprep.subr.mxu0 0.0
        %2907 = vmatpush2.xpose.msra.mxu0 0.0
        %2908 = vmatprep.subr.mxu0 0.0
        %2909 = vmatpush2.xpose.msra.mxu0 0.0
        %2910 = vmatprep.subr.mxu0 0.0
        %2911 = vmatpush2.xpose.msra.mxu0 0.0
        %2912 = vmatprep.subr.mxu0 0.0
        %2913 = vmatpush2.xpose.msra.mxu0 0.0
        %2914 = vmatprep.subr.mxu0 0.0
        %2915 = vmatpush2.xpose.msra.mxu0 0.0
        %2916 = vmatprep.subr.mxu0 0.0
        %2917 = vmatpush2.xpose.msra.mxu0 0.0
        %2918 = vmatprep.subr.mxu0 0.0
        %2919 = vmatpush2.xpose.msra.mxu0 0.0
        %2920 = vmatprep.subr.mxu0 0.0
        %2921 = vmatpush2.xpose.msra.mxu0 0.0
        %2922 = vmatprep.subr.mxu0 0.0
        %2923 = vmatpush2.xpose.msra.mxu0 0.0
        %2924 = vmatprep.mubr.f32.mxu0 0.0
        %2925 = vmatmul.mubr.f32.gmra.mxu0 %v2856
        %v2926 = vpop.f32.mrf.mxu0
        %v2927 = vadd.f32 %v1342, %v2926
        %v2928 = vpop.f32.mrf.mxu0
        %2929 = vdwg.mxu0
        %v2930 = vsel %vm1421, %v2927, -inf
        %2931 = vmax.xlane.f32.xlu0 %v2930
        %v2932 = vpop.xlane.xlu0 %2931
        %v2933 = vsub.f32 %v2927, %v2932
        %v2934 = vmul.f32 %v2933, 1.442695
        %v2935 = vpow.pop %v2934
        %v2936 = vsel %vm1421, %v2935, 0.0
        %2937 = vadd.xlane.f32.xlu0 %v2936
        %v2938 = vpop.xlane.xlu0 %2937
        %v2939 = vrcp.pop %v2938
        %v2940 = vmul.f32 %v2935, %v2939
        %2941 = vrot.lane.b32.xlu0 %v1315, 16
        %v2942 = vpop.permute.xlu0 %2941
        %v2945 = vsel %vm1421, %v2940, 0
        %2947 = vmatprep.subr.mxu0 0.0
        %2948 = vmatpush1.msra.mxu0 0.0
        %2949 = vmatprep.subr.mxu0 0.0
        %2950 = vmatpush1.msra.mxu0 0.0
        %2951 = vmatprep.subr.mxu0 0.0
        %2952 = vmatpush1.msra.mxu0 0.0
        %2953 = vmatprep.subr.mxu0 0.0
        %2954 = vmatpush1.msra.mxu0 0.0
        %2955 = vmatprep.subr.mxu0 0.0
        %2956 = vmatpush1.msra.mxu0 0.0
        %2957 = vmatprep.subr.mxu0 0.0
        %2958 = vmatpush1.msra.mxu0 0.0
        %2959 = vmatprep.subr.mxu0 0.0
        %2960 = vmatpush1.msra.mxu0 0.0
        %2961 = vmatprep.subr.mxu0 0.0
        %2962 = vmatpush1.msra.mxu0 0.0
        %2963 = vmatprep.subr.mxu0 0.0
        %2964 = vmatpush1.msra.mxu0 0.0
        %2965 = vmatprep.subr.mxu0 0.0
        %2966 = vmatpush1.msra.mxu0 0.0
        %2967 = vmatprep.subr.mxu0 0.0
        %2968 = vmatpush1.msra.mxu0 0.0
        %2969 = vmatprep.subr.mxu0 0.0
        %2970 = vmatpush1.msra.mxu0 0.0
        %2971 = vmatprep.subr.mxu0 0.0
        %2972 = vmatpush1.msra.mxu0 0.0
        %2973 = vmatprep.subr.mxu0 0.0
        %2974 = vmatpush1.msra.mxu0 0.0
        %2975 = vmatprep.subr.mxu0 0.0
        %2976 = vmatpush1.msra.mxu0 0.0
        %2977 = vmatprep.subr.mxu0 0.0
        %2978 = vmatpush1.msra.mxu0 %v2942
        %2979 = vmatprep.subr.mxu0 0.0
        %2980 = vmatpush2.msra.mxu0 0.0
        %2981 = vmatprep.subr.mxu0 0.0
        %2982 = vmatpush2.msra.mxu0 0.0
        %2983 = vmatprep.subr.mxu0 0.0
        %2984 = vmatpush2.msra.mxu0 0.0
        %2985 = vmatprep.subr.mxu0 0.0
        %2986 = vmatpush2.msra.mxu0 0.0
        %2987 = vmatprep.subr.mxu0 0.0
        %2988 = vmatpush2.msra.mxu0 0.0
        %2989 = vmatprep.subr.mxu0 0.0
        %2990 = vmatpush2.msra.mxu0 0.0
        %2991 = vmatprep.subr.mxu0 0.0
        %2992 = vmatpush2.msra.mxu0 0.0
        %2993 = vmatprep.subr.mxu0 0.0
        %2994 = vmatpush2.msra.mxu0 0.0
        %2995 = vmatprep.subr.mxu0 0.0
        %2996 = vmatpush2.msra.mxu0 0.0
        %2997 = vmatprep.subr.mxu0 0.0
        %2998 = vmatpush2.msra.mxu0 0.0
        %2999 = vmatprep.subr.mxu0 0.0
        %3000 = vmatpush2.msra.mxu0 0.0
        %3001 = vmatprep.subr.mxu0 0.0
        %3002 = vmatpush2.msra.mxu0 0.0
        %3003 = vmatprep.subr.mxu0 0.0
        %3004 = vmatpush2.msra.mxu0 0.0
        %3005 = vmatprep.subr.mxu0 0.0
        %3006 = vmatpush2.msra.mxu0 0.0
        %3007 = vmatprep.subr.mxu0 0.0
        %3008 = vmatpush2.msra.mxu0 0.0
        %3009 = vmatprep.subr.mxu0 0.0
        %3010 = vmatpush2.msra.mxu0 0.0
        %3011 = vmatprep.mubr.f32.mxu0 0.0
        %3012 = vmatmul.mubr.f32.gmra.mxu0 %v2945
        %v3013 = vpop.f32.mrf.mxu0
        %v3014 = vadd.f32 0.0, %v3013
        %v3015 = vpop.f32.mrf.mxu0
        %3016 = vdwg.mxu0
        %v3017 = vpack.c.bf16 %v3014, %v3014
        %v3020 = vunpack.c.l.b16 %v1335
        %v3021 = vunpack.c.l.b16 %v1336
        %v3022 = vpack.c.b16 %v3021, %v3020
        %v3025 = vsel %vm1344, %v3017, 0
        %3027 = vmatprep.subr.bf16.mxu0 0
        %3028 = vmatpush1.bf16.msra.mxu0 0
        %3029 = vmatprep.subr.bf16.mxu0 0
        %3030 = vmatpush1.bf16.msra.mxu0 0
        %3031 = vmatprep.subr.bf16.mxu0 0
        %3032 = vmatpush1.bf16.msra.mxu0 0
        %3033 = vmatprep.subr.bf16.mxu0 0
        %3034 = vmatpush1.bf16.msra.mxu0 0
        %3035 = vmatprep.subr.bf16.mxu0 0
        %3036 = vmatpush1.bf16.msra.mxu0 0
        %3037 = vmatprep.subr.bf16.mxu0 0
        %3038 = vmatpush1.bf16.msra.mxu0 0
        %3039 = vmatprep.subr.bf16.mxu0 0
        %3040 = vmatpush1.bf16.msra.mxu0 0
        %3041 = vmatprep.subr.bf16.mxu0 0
        %3042 = vmatpush1.bf16.msra.mxu0 %v3022
        %3043 = vmatprep.subr.bf16.mxu0 0
        %3044 = vmatpush2.bf16.msra.mxu0 0
        %3045 = vmatprep.subr.bf16.mxu0 0
        %3046 = vmatpush2.bf16.msra.mxu0 0
        %3047 = vmatprep.subr.bf16.mxu0 0
        %3048 = vmatpush2.bf16.msra.mxu0 0
        %3049 = vmatprep.subr.bf16.mxu0 0
        %3050 = vmatpush2.bf16.msra.mxu0 0
        %3051 = vmatprep.subr.bf16.mxu0 0
        %3052 = vmatpush2.bf16.msra.mxu0 0
        %3053 = vmatprep.subr.bf16.mxu0 0
        %3054 = vmatpush2.bf16.msra.mxu0 0
        %3055 = vmatprep.subr.bf16.mxu0 0
        %3056 = vmatpush2.bf16.msra.mxu0 0
        %3057 = vmatprep.subr.bf16.mxu0 0
        %3058 = vmatpush2.bf16.msra.mxu0 0
        %3059 = vmatprep.mubr.bf16.mxu0 0
        %3060 = vmatmul.mubr.bf16.gmra.mxu0 %v3025
        %v3061 = vpop.f32.mrf.mxu0
        %v3062 = vadd.f32 0.0, %v3061
        %v3063 = vpop.f32.mrf.mxu0
        %v3064 = vpop.f32.mrf.mxu0
        %v3065 = vpop.f32.mrf.mxu0
        %3066 = vdwg.mxu0
        %v3067 = vadd.f32 %v2851, %v3062
        %3068 = vst [vmem:[#allocation3] sm:$0xff] %v3067
        %v3069 = vld [vmem:[%s2 + $0x1] sm:$0x1]
        %v3070 = vlaneseq
        %v3071 = vshrl.u32 %v3070, 7
        %v3072 = vsub.s32 0, %v3071
        %v3073 = vrot.slane %v3069, %v3072
        %v3074 = vadd.f32 %v1058, %v3073
        %v3075 = vmul.f32 %v1276, 0.25
        %v3077 = vsel %vm1344, %v3075, 0
        %v3080 = vsel %vm1344, %v1278, 0
        %3082 = vmatprep.subr.mxu0 0.0
        %3083 = vmatpush1.xpose.msra.mxu0 0.0
        %3084 = vmatprep.subr.mxu0 0.0
        %3085 = vmatpush1.xpose.msra.mxu0 0.0
        %3086 = vmatprep.subr.mxu0 0.0
        %3087 = vmatpush1.xpose.msra.mxu0 0.0
        %3088 = vmatprep.subr.mxu0 0.0
        %3089 = vmatpush1.xpose.msra.mxu0 0.0
        %3090 = vmatprep.subr.mxu0 0.0
        %3091 = vmatpush1.xpose.msra.mxu0 0.0
        %3092 = vmatprep.subr.mxu0 0.0
        %3093 = vmatpush1.xpose.msra.mxu0 0.0
        %3094 = vmatprep.subr.mxu0 0.0
        %3095 = vmatpush1.xpose.msra.mxu0 0.0
        %3096 = vmatprep.subr.mxu0 0.0
        %3097 = vmatpush1.xpose.msra.mxu0 0.0
        %3098 = vmatprep.subr.mxu0 0.0
        %3099 = vmatpush1.xpose.msra.mxu0 0.0
        %3100 = vmatprep.subr.mxu0 0.0
        %3101 = vmatpush1.xpose.msra.mxu0 0.0
        %3102 = vmatprep.subr.mxu0 0.0
        %3103 = vmatpush1.xpose.msra.mxu0 0.0
        %3104 = vmatprep.subr.mxu0 0.0
        %3105 = vmatpush1.xpose.msra.mxu0 0.0
        %3106 = vmatprep.subr.mxu0 0.0
        %3107 = vmatpush1.xpose.msra.mxu0 0.0
        %3108 = vmatprep.subr.mxu0 0.0
        %3109 = vmatpush1.xpose.msra.mxu0 0.0
        %3110 = vmatprep.subr.mxu0 0.0
        %3111 = vmatpush1.xpose.msra.mxu0 0.0
        %3112 = vmatprep.subr.mxu0 0.0
        %3113 = vmatpush1.xpose.msra.mxu0 %v3080
        %3114 = vmatprep.subr.mxu0 0.0
        %3115 = vmatpush2.xpose.msra.mxu0 0.0
        %3116 = vmatprep.subr.mxu0 0.0
        %3117 = vmatpush2.xpose.msra.mxu0 0.0
        %3118 = vmatprep.subr.mxu0 0.0
        %3119 = vmatpush2.xpose.msra.mxu0 0.0
        %3120 = vmatprep.subr.mxu0 0.0
        %3121 = vmatpush2.xpose.msra.mxu0 0.0
        %3122 = vmatprep.subr.mxu0 0.0
        %3123 = vmatpush2.xpose.msra.mxu0 0.0
        %3124 = vmatprep.subr.mxu0 0.0
        %3125 = vmatpush2.xpose.msra.mxu0 0.0
        %3126 = vmatprep.subr.mxu0 0.0
        %3127 = vmatpush2.xpose.msra.mxu0 0.0
        %3128 = vmatprep.subr.mxu0 0.0
        %3129 = vmatpush2.xpose.msra.mxu0 0.0
        %3130 = vmatprep.subr.mxu0 0.0
        %3131 = vmatpush2.xpose.msra.mxu0 0.0
        %3132 = vmatprep.subr.mxu0 0.0
        %3133 = vmatpush2.xpose.msra.mxu0 0.0
        %3134 = vmatprep.subr.mxu0 0.0
        %3135 = vmatpush2.xpose.msra.mxu0 0.0
        %3136 = vmatprep.subr.mxu0 0.0
        %3137 = vmatpush2.xpose.msra.mxu0 0.0
        %3138 = vmatprep.subr.mxu0 0.0
        %3139 = vmatpush2.xpose.msra.mxu0 0.0
        %3140 = vmatprep.subr.mxu0 0.0
        %3141 = vmatpush2.xpose.msra.mxu0 0.0
        %3142 = vmatprep.subr.mxu0 0.0
        %3143 = vmatpush2.xpose.msra.mxu0 0.0
        %3144 = vmatprep.subr.mxu0 0.0
        %3145 = vmatpush2.xpose.msra.mxu0 0.0
        %3146 = vmatprep.mubr.f32.mxu0 0.0
        %3147 = vmatmul.mubr.f32.gmra.mxu0 %v3077
        %v3148 = vpop.f32.mrf.mxu0
        %v3149 = vadd.f32 %v3074, %v3148
        %v3150 = vpop.f32.mrf.mxu0
        %3151 = vdwg.mxu0
        %v3152 = vsel %vm1421, %v3149, -inf
        %3153 = vmax.xlane.f32.xlu0 %v3152
        %v3154 = vpop.xlane.xlu0 %3153
        %v3155 = vsub.f32 %v3149, %v3154
        %v3156 = vmul.f32 %v3155, 1.442695
        %v3157 = vpow.pop %v3156
        %v3158 = vsel %vm1421, %v3157, 0.0
        %3159 = vadd.xlane.f32.xlu0 %v3158
        %v3160 = vpop.xlane.xlu0 %3159
        %v3161 = vrcp.pop %v3160
        %v3162 = vmul.f32 %v3157, %v3161
        %v3164 = vsel %vm1421, %v3162, 0
        %3166 = vmatprep.subr.mxu0 0.0
        %3167 = vmatpush1.msra.mxu0 0.0
        %3168 = vmatprep.subr.mxu0 0.0
        %3169 = vmatpush1.msra.mxu0 0.0
        %3170 = vmatprep.subr.mxu0 0.0
        %3171 = vmatpush1.msra.mxu0 0.0
        %3172 = vmatprep.subr.mxu0 0.0
        %3173 = vmatpush1.msra.mxu0 0.0
        %3174 = vmatprep.subr.mxu0 0.0
        %3175 = vmatpush1.msra.mxu0 0.0
        %3176 = vmatprep.subr.mxu0 0.0
        %3177 = vmatpush1.msra.mxu0 0.0
        %3178 = vmatprep.subr.mxu0 0.0
        %3179 = vmatpush1.msra.mxu0 0.0
        %3180 = vmatprep.subr.mxu0 0.0
        %3181 = vmatpush1.msra.mxu0 0.0
        %3182 = vmatprep.subr.mxu0 0.0
        %3183 = vmatpush1.msra.mxu0 0.0
        %3184 = vmatprep.subr.mxu0 0.0
        %3185 = vmatpush1.msra.mxu0 0.0
        %3186 = vmatprep.subr.mxu0 0.0
        %3187 = vmatpush1.msra.mxu0 0.0
        %3188 = vmatprep.subr.mxu0 0.0
        %3189 = vmatpush1.msra.mxu0 0.0
        %3190 = vmatprep.subr.mxu0 0.0
        %3191 = vmatpush1.msra.mxu0 0.0
        %3192 = vmatprep.subr.mxu0 0.0
        %3193 = vmatpush1.msra.mxu0 0.0
        %3194 = vmatprep.subr.mxu0 0.0
        %3195 = vmatpush1.msra.mxu0 0.0
        %3196 = vmatprep.subr.mxu0 0.0
        %3197 = vmatpush1.msra.mxu0 %v1318
        %3198 = vmatprep.subr.mxu0 0.0
        %3199 = vmatpush2.msra.mxu0 0.0
        %3200 = vmatprep.subr.mxu0 0.0
        %3201 = vmatpush2.msra.mxu0 0.0
        %3202 = vmatprep.subr.mxu0 0.0
        %3203 = vmatpush2.msra.mxu0 0.0
        %3204 = vmatprep.subr.mxu0 0.0
        %3205 = vmatpush2.msra.mxu0 0.0
        %3206 = vmatprep.subr.mxu0 0.0
        %3207 = vmatpush2.msra.mxu0 0.0
        %3208 = vmatprep.subr.mxu0 0.0
        %3209 = vmatpush2.msra.mxu0 0.0
        %3210 = vmatprep.subr.mxu0 0.0
        %3211 = vmatpush2.msra.mxu0 0.0
        %3212 = vmatprep.subr.mxu0 0.0
        %3213 = vmatpush2.msra.mxu0 0.0
        %3214 = vmatprep.subr.mxu0 0.0
        %3215 = vmatpush2.msra.mxu0 0.0
        %3216 = vmatprep.subr.mxu0 0.0
        %3217 = vmatpush2.msra.mxu0 0.0
        %3218 = vmatprep.subr.mxu0 0.0
        %3219 = vmatpush2.msra.mxu0 0.0
        %3220 = vmatprep.subr.mxu0 0.0
        %3221 = vmatpush2.msra.mxu0 0.0
        %3222 = vmatprep.subr.mxu0 0.0
        %3223 = vmatpush2.msra.mxu0 0.0
        %3224 = vmatprep.subr.mxu0 0.0
        %3225 = vmatpush2.msra.mxu0 0.0
        %3226 = vmatprep.subr.mxu0 0.0
        %3227 = vmatpush2.msra.mxu0 0.0
        %3228 = vmatprep.subr.mxu0 0.0
        %3229 = vmatpush2.msra.mxu0 0.0
        %3230 = vmatprep.mubr.f32.mxu0 0.0
        %3231 = vmatmul.mubr.f32.gmra.mxu0 %v3164
        %v3232 = vpop.f32.mrf.mxu0
        %v3233 = vadd.f32 0.0, %v3232
        %v3234 = vpop.f32.mrf.mxu0
        %3235 = vdwg.mxu0
        %v3236 = vpack.c.bf16 %v3233, %v3233
        %3237 = vrot.lane.b32.xlu0 %v3075, 112
        %v3238 = vpop.permute.xlu0 %3237
        %3239 = vrot.lane.b32.xlu0 %v1278, 112
        %v3240 = vpop.permute.xlu0 %3239
        %v3241 = vsel %vm1344, %v3238, 0
        %v3243 = vsel %vm1344, %v3240, 0
        %3245 = vmatprep.subr.mxu0 0.0
        %3246 = vmatpush1.xpose.msra.mxu0 0.0
        %3247 = vmatprep.subr.mxu0 0.0
        %3248 = vmatpush1.xpose.msra.mxu0 0.0
        %3249 = vmatprep.subr.mxu0 0.0
        %3250 = vmatpush1.xpose.msra.mxu0 0.0
        %3251 = vmatprep.subr.mxu0 0.0
        %3252 = vmatpush1.xpose.msra.mxu0 0.0
        %3253 = vmatprep.subr.mxu0 0.0
        %3254 = vmatpush1.xpose.msra.mxu0 0.0
        %3255 = vmatprep.subr.mxu0 0.0
        %3256 = vmatpush1.xpose.msra.mxu0 0.0
        %3257 = vmatprep.subr.mxu0 0.0
        %3258 = vmatpush1.xpose.msra.mxu0 0.0
        %3259 = vmatprep.subr.mxu0 0.0
        %3260 = vmatpush1.xpose.msra.mxu0 0.0
        %3261 = vmatprep.subr.mxu0 0.0
        %3262 = vmatpush1.xpose.msra.mxu0 0.0
        %3263 = vmatprep.subr.mxu0 0.0
        %3264 = vmatpush1.xpose.msra.mxu0 0.0
        %3265 = vmatprep.subr.mxu0 0.0
        %3266 = vmatpush1.xpose.msra.mxu0 0.0
        %3267 = vmatprep.subr.mxu0 0.0
        %3268 = vmatpush1.xpose.msra.mxu0 0.0
        %3269 = vmatprep.subr.mxu0 0.0
        %3270 = vmatpush1.xpose.msra.mxu0 0.0
        %3271 = vmatprep.subr.mxu0 0.0
        %3272 = vmatpush1.xpose.msra.mxu0 0.0
        %3273 = vmatprep.subr.mxu0 0.0
        %3274 = vmatpush1.xpose.msra.mxu0 0.0
        %3275 = vmatprep.subr.mxu0 0.0
        %3276 = vmatpush1.xpose.msra.mxu0 %v3243
        %3277 = vmatprep.subr.mxu0 0.0
        %3278 = vmatpush2.xpose.msra.mxu0 0.0
        %3279 = vmatprep.subr.mxu0 0.0
        %3280 = vmatpush2.xpose.msra.mxu0 0.0
        %3281 = vmatprep.subr.mxu0 0.0
        %3282 = vmatpush2.xpose.msra.mxu0 0.0
        %3283 = vmatprep.subr.mxu0 0.0
        %3284 = vmatpush2.xpose.msra.mxu0 0.0
        %3285 = vmatprep.subr.mxu0 0.0
        %3286 = vmatpush2.xpose.msra.mxu0 0.0
        %3287 = vmatprep.subr.mxu0 0.0
        %3288 = vmatpush2.xpose.msra.mxu0 0.0
        %3289 = vmatprep.subr.mxu0 0.0
        %3290 = vmatpush2.xpose.msra.mxu0 0.0
        %3291 = vmatprep.subr.mxu0 0.0
        %3292 = vmatpush2.xpose.msra.mxu0 0.0
        %3293 = vmatprep.subr.mxu0 0.0
        %3294 = vmatpush2.xpose.msra.mxu0 0.0
        %3295 = vmatprep.subr.mxu0 0.0
        %3296 = vmatpush2.xpose.msra.mxu0 0.0
        %3297 = vmatprep.subr.mxu0 0.0
        %3298 = vmatpush2.xpose.msra.mxu0 0.0
        %3299 = vmatprep.subr.mxu0 0.0
        %3300 = vmatpush2.xpose.msra.mxu0 0.0
        %3301 = vmatprep.subr.mxu0 0.0
        %3302 = vmatpush2.xpose.msra.mxu0 0.0
        %3303 = vmatprep.subr.mxu0 0.0
        %3304 = vmatpush2.xpose.msra.mxu0 0.0
        %3305 = vmatprep.subr.mxu0 0.0
        %3306 = vmatpush2.xpose.msra.mxu0 0.0
        %3307 = vmatprep.subr.mxu0 0.0
        %3308 = vmatpush2.xpose.msra.mxu0 0.0
        %3309 = vmatprep.mubr.f32.mxu0 0.0
        %3310 = vmatmul.mubr.f32.gmra.mxu0 %v3241
        %v3311 = vpop.f32.mrf.mxu0
        %v3312 = vadd.f32 %v3074, %v3311
        %v3313 = vpop.f32.mrf.mxu0
        %3314 = vdwg.mxu0
        %v3315 = vsel %vm1421, %v3312, -inf
        %3316 = vmax.xlane.f32.xlu0 %v3315
        %v3317 = vpop.xlane.xlu0 %3316
        %v3318 = vsub.f32 %v3312, %v3317
        %v3319 = vmul.f32 %v3318, 1.442695
        %v3320 = vpow.pop %v3319
        %v3321 = vsel %vm1421, %v3320, 0.0
        %3322 = vadd.xlane.f32.xlu0 %v3321
        %v3323 = vpop.xlane.xlu0 %3322
        %v3324 = vrcp.pop %v3323
        %v3325 = vmul.f32 %v3320, %v3324
        %3327 = vrot.lane.b32.xlu0 %v1318, 112
        %v3328 = vpop.permute.xlu0 %3327
        %v3331 = vsel %vm1421, %v3325, 0
        %3333 = vmatprep.subr.mxu0 0.0
        %3334 = vmatpush1.msra.mxu0 0.0
        %3335 = vmatprep.subr.mxu0 0.0
        %3336 = vmatpush1.msra.mxu0 0.0
        %3337 = vmatprep.subr.mxu0 0.0
        %3338 = vmatpush1.msra.mxu0 0.0
        %3339 = vmatprep.subr.mxu0 0.0
        %3340 = vmatpush1.msra.mxu0 0.0
        %3341 = vmatprep.subr.mxu0 0.0
        %3342 = vmatpush1.msra.mxu0 0.0
        %3343 = vmatprep.subr.mxu0 0.0
        %3344 = vmatpush1.msra.mxu0 0.0
        %3345 = vmatprep.subr.mxu0 0.0
        %3346 = vmatpush1.msra.mxu0 0.0
        %3347 = vmatprep.subr.mxu0 0.0
        %3348 = vmatpush1.msra.mxu0 0.0
        %3349 = vmatprep.subr.mxu0 0.0
        %3350 = vmatpush1.msra.mxu0 0.0
        %3351 = vmatprep.subr.mxu0 0.0
        %3352 = vmatpush1.msra.mxu0 0.0
        %3353 = vmatprep.subr.mxu0 0.0
        %3354 = vmatpush1.msra.mxu0 0.0
        %3355 = vmatprep.subr.mxu0 0.0
        %3356 = vmatpush1.msra.mxu0 0.0
        %3357 = vmatprep.subr.mxu0 0.0
        %3358 = vmatpush1.msra.mxu0 0.0
        %3359 = vmatprep.subr.mxu0 0.0
        %3360 = vmatpush1.msra.mxu0 0.0
        %3361 = vmatprep.subr.mxu0 0.0
        %3362 = vmatpush1.msra.mxu0 0.0
        %3363 = vmatprep.subr.mxu0 0.0
        %3364 = vmatpush1.msra.mxu0 %v3328
        %3365 = vmatprep.subr.mxu0 0.0
        %3366 = vmatpush2.msra.mxu0 0.0
        %3367 = vmatprep.subr.mxu0 0.0
        %3368 = vmatpush2.msra.mxu0 0.0
        %3369 = vmatprep.subr.mxu0 0.0
        %3370 = vmatpush2.msra.mxu0 0.0
        %3371 = vmatprep.subr.mxu0 0.0
        %3372 = vmatpush2.msra.mxu0 0.0
        %3373 = vmatprep.subr.mxu0 0.0
        %3374 = vmatpush2.msra.mxu0 0.0
        %3375 = vmatprep.subr.mxu0 0.0
        %3376 = vmatpush2.msra.mxu0 0.0
        %3377 = vmatprep.subr.mxu0 0.0
        %3378 = vmatpush2.msra.mxu0 0.0
        %3379 = vmatprep.subr.mxu0 0.0
        %3380 = vmatpush2.msra.mxu0 0.0
        %3381 = vmatprep.subr.mxu0 0.0
        %3382 = vmatpush2.msra.mxu0 0.0
        %3383 = vmatprep.subr.mxu0 0.0
        %3384 = vmatpush2.msra.mxu0 0.0
        %3385 = vmatprep.subr.mxu0 0.0
        %3386 = vmatpush2.msra.mxu0 0.0
        %3387 = vmatprep.subr.mxu0 0.0
        %3388 = vmatpush2.msra.mxu0 0.0
        %3389 = vmatprep.subr.mxu0 0.0
        %3390 = vmatpush2.msra.mxu0 0.0
        %3391 = vmatprep.subr.mxu0 0.0
        %3392 = vmatpush2.msra.mxu0 0.0
        %3393 = vmatprep.subr.mxu0 0.0
        %3394 = vmatpush2.msra.mxu0 0.0
        %3395 = vmatprep.subr.mxu0 0.0
        %3396 = vmatpush2.msra.mxu0 0.0
        %3397 = vmatprep.mubr.f32.mxu0 0.0
        %3398 = vmatmul.mubr.f32.gmra.mxu0 %v3331
        %v3399 = vpop.f32.mrf.mxu0
        %v3400 = vadd.f32 0.0, %v3399
        %v3401 = vpop.f32.mrf.mxu0
        %3402 = vdwg.mxu0
        %v3403 = vpack.c.bf16 %v3400, %v3400
        %v3405 = vsel %vm1344, %v3403, 0
        %3407 = vmatprep.subr.bf16.mxu0 0
        %3408 = vmatpush1.bf16.msra.mxu0 0
        %3409 = vmatprep.subr.bf16.mxu0 0
        %3410 = vmatpush1.bf16.msra.mxu0 0
        %3411 = vmatprep.subr.bf16.mxu0 0
        %3412 = vmatpush1.bf16.msra.mxu0 0
        %3413 = vmatprep.subr.bf16.mxu0 0
        %3414 = vmatpush1.bf16.msra.mxu0 0
        %3415 = vmatprep.subr.bf16.mxu0 0
        %3416 = vmatpush1.bf16.msra.mxu0 0
        %3417 = vmatprep.subr.bf16.mxu0 0
        %3418 = vmatpush1.bf16.msra.mxu0 0
        %3419 = vmatprep.subr.bf16.mxu0 0
        %3420 = vmatpush1.bf16.msra.mxu0 0
        %3421 = vmatprep.subr.bf16.mxu0 0
        %3422 = vmatpush1.bf16.msra.mxu0 %v1678
        %3423 = vmatprep.subr.bf16.mxu0 0
        %3424 = vmatpush2.bf16.msra.mxu0 0
        %3425 = vmatprep.subr.bf16.mxu0 0
        %3426 = vmatpush2.bf16.msra.mxu0 0
        %3427 = vmatprep.subr.bf16.mxu0 0
        %3428 = vmatpush2.bf16.msra.mxu0 0
        %3429 = vmatprep.subr.bf16.mxu0 0
        %3430 = vmatpush2.bf16.msra.mxu0 0
        %3431 = vmatprep.subr.bf16.mxu0 0
        %3432 = vmatpush2.bf16.msra.mxu0 0
        %3433 = vmatprep.subr.bf16.mxu0 0
        %3434 = vmatpush2.bf16.msra.mxu0 0
        %3435 = vmatprep.subr.bf16.mxu0 0
        %3436 = vmatpush2.bf16.msra.mxu0 0
        %3437 = vmatprep.subr.bf16.mxu0 0
        %3438 = vmatpush2.bf16.msra.mxu0 0
        %3439 = vmatprep.mubr.bf16.mxu0 0
        %3440 = vmatmul.mubr.bf16.gmra.mxu0 %v3405
        %v3441 = vpop.f32.mrf.mxu0
        %v3442 = vadd.f32 0.0, %v3441
        %v3443 = vpop.f32.mrf.mxu0
        %v3444 = vpop.f32.mrf.mxu0
        %v3445 = vpop.f32.mrf.mxu0
        %3446 = vdwg.mxu0
        %v3448 = vsel %vm1344, %v3236, 0
        %3450 = vmatprep.subr.bf16.mxu0 0
        %3451 = vmatpush1.bf16.msra.mxu0 0
        %3452 = vmatprep.subr.bf16.mxu0 0
        %3453 = vmatpush1.bf16.msra.mxu0 0
        %3454 = vmatprep.subr.bf16.mxu0 0
        %3455 = vmatpush1.bf16.msra.mxu0 0
        %3456 = vmatprep.subr.bf16.mxu0 0
        %3457 = vmatpush1.bf16.msra.mxu0 0
        %3458 = vmatprep.subr.bf16.mxu0 0
        %3459 = vmatpush1.bf16.msra.mxu0 0
        %3460 = vmatprep.subr.bf16.mxu0 0
        %3461 = vmatpush1.bf16.msra.mxu0 0
        %3462 = vmatprep.subr.bf16.mxu0 0
        %3463 = vmatpush1.bf16.msra.mxu0 0
        %3464 = vmatprep.subr.bf16.mxu0 0
        %3465 = vmatpush1.bf16.msra.mxu0 %v1727
        %3466 = vmatprep.subr.bf16.mxu0 0
        %3467 = vmatpush2.bf16.msra.mxu0 0
        %3468 = vmatprep.subr.bf16.mxu0 0
        %3469 = vmatpush2.bf16.msra.mxu0 0
        %3470 = vmatprep.subr.bf16.mxu0 0
        %3471 = vmatpush2.bf16.msra.mxu0 0
        %3472 = vmatprep.subr.bf16.mxu0 0
        %3473 = vmatpush2.bf16.msra.mxu0 0
        %3474 = vmatprep.subr.bf16.mxu0 0
        %3475 = vmatpush2.bf16.msra.mxu0 0
        %3476 = vmatprep.subr.bf16.mxu0 0
        %3477 = vmatpush2.bf16.msra.mxu0 0
        %3478 = vmatprep.subr.bf16.mxu0 0
        %3479 = vmatpush2.bf16.msra.mxu0 0
        %3480 = vmatprep.subr.bf16.mxu0 0
        %3481 = vmatpush2.bf16.msra.mxu0 0
        %3482 = vmatprep.mubr.bf16.mxu0 0
        %3483 = vmatmul.mubr.bf16.gmra.mxu0 %v3448
        %v3484 = vpop.f32.mrf.mxu0
        %v3485 = vadd.f32 %v3442, %v3484
        %v3486 = vpop.f32.mrf.mxu0
        %v3487 = vpop.f32.mrf.mxu0
        %v3488 = vpop.f32.mrf.mxu0
        %3489 = vdwg.mxu0
        %3490 = vrot.lane.b32.xlu0 %v3075, 96
        %v3491 = vpop.permute.xlu0 %3490
        %3492 = vrot.lane.b32.xlu0 %v1278, 96
        %v3493 = vpop.permute.xlu0 %3492
        %v3494 = vsel %vm1344, %v3491, 0
        %v3496 = vsel %vm1344, %v3493, 0
        %3498 = vmatprep.subr.mxu0 0.0
        %3499 = vmatpush1.xpose.msra.mxu0 0.0
        %3500 = vmatprep.subr.mxu0 0.0
        %3501 = vmatpush1.xpose.msra.mxu0 0.0
        %3502 = vmatprep.subr.mxu0 0.0
        %3503 = vmatpush1.xpose.msra.mxu0 0.0
        %3504 = vmatprep.subr.mxu0 0.0
        %3505 = vmatpush1.xpose.msra.mxu0 0.0
        %3506 = vmatprep.subr.mxu0 0.0
        %3507 = vmatpush1.xpose.msra.mxu0 0.0
        %3508 = vmatprep.subr.mxu0 0.0
        %3509 = vmatpush1.xpose.msra.mxu0 0.0
        %3510 = vmatprep.subr.mxu0 0.0
        %3511 = vmatpush1.xpose.msra.mxu0 0.0
        %3512 = vmatprep.subr.mxu0 0.0
        %3513 = vmatpush1.xpose.msra.mxu0 0.0
        %3514 = vmatprep.subr.mxu0 0.0
        %3515 = vmatpush1.xpose.msra.mxu0 0.0
        %3516 = vmatprep.subr.mxu0 0.0
        %3517 = vmatpush1.xpose.msra.mxu0 0.0
        %3518 = vmatprep.subr.mxu0 0.0
        %3519 = vmatpush1.xpose.msra.mxu0 0.0
        %3520 = vmatprep.subr.mxu0 0.0
        %3521 = vmatpush1.xpose.msra.mxu0 0.0
        %3522 = vmatprep.subr.mxu0 0.0
        %3523 = vmatpush1.xpose.msra.mxu0 0.0
        %3524 = vmatprep.subr.mxu0 0.0
        %3525 = vmatpush1.xpose.msra.mxu0 0.0
        %3526 = vmatprep.subr.mxu0 0.0
        %3527 = vmatpush1.xpose.msra.mxu0 0.0
        %3528 = vmatprep.subr.mxu0 0.0
        %3529 = vmatpush1.xpose.msra.mxu0 %v3496
        %3530 = vmatprep.subr.mxu0 0.0
        %3531 = vmatpush2.xpose.msra.mxu0 0.0
        %3532 = vmatprep.subr.mxu0 0.0
        %3533 = vmatpush2.xpose.msra.mxu0 0.0
        %3534 = vmatprep.subr.mxu0 0.0
        %3535 = vmatpush2.xpose.msra.mxu0 0.0
        %3536 = vmatprep.subr.mxu0 0.0
        %3537 = vmatpush2.xpose.msra.mxu0 0.0
        %3538 = vmatprep.subr.mxu0 0.0
        %3539 = vmatpush2.xpose.msra.mxu0 0.0
        %3540 = vmatprep.subr.mxu0 0.0
        %3541 = vmatpush2.xpose.msra.mxu0 0.0
        %3542 = vmatprep.subr.mxu0 0.0
        %3543 = vmatpush2.xpose.msra.mxu0 0.0
        %3544 = vmatprep.subr.mxu0 0.0
        %3545 = vmatpush2.xpose.msra.mxu0 0.0
        %3546 = vmatprep.subr.mxu0 0.0
        %3547 = vmatpush2.xpose.msra.mxu0 0.0
        %3548 = vmatprep.subr.mxu0 0.0
        %3549 = vmatpush2.xpose.msra.mxu0 0.0
        %3550 = vmatprep.subr.mxu0 0.0
        %3551 = vmatpush2.xpose.msra.mxu0 0.0
        %3552 = vmatprep.subr.mxu0 0.0
        %3553 = vmatpush2.xpose.msra.mxu0 0.0
        %3554 = vmatprep.subr.mxu0 0.0
        %3555 = vmatpush2.xpose.msra.mxu0 0.0
        %3556 = vmatprep.subr.mxu0 0.0
        %3557 = vmatpush2.xpose.msra.mxu0 0.0
        %3558 = vmatprep.subr.mxu0 0.0
        %3559 = vmatpush2.xpose.msra.mxu0 0.0
        %3560 = vmatprep.subr.mxu0 0.0
        %3561 = vmatpush2.xpose.msra.mxu0 0.0
        %3562 = vmatprep.mubr.f32.mxu0 0.0
        %3563 = vmatmul.mubr.f32.gmra.mxu0 %v3494
        %v3564 = vpop.f32.mrf.mxu0
        %v3565 = vadd.f32 %v3074, %v3564
        %v3566 = vpop.f32.mrf.mxu0
        %3567 = vdwg.mxu0
        %v3568 = vsel %vm1421, %v3565, -inf
        %3569 = vmax.xlane.f32.xlu0 %v3568
        %v3570 = vpop.xlane.xlu0 %3569
        %v3571 = vsub.f32 %v3565, %v3570
        %v3572 = vmul.f32 %v3571, 1.442695
        %v3573 = vpow.pop %v3572
        %v3574 = vsel %vm1421, %v3573, 0.0
        %3575 = vadd.xlane.f32.xlu0 %v3574
        %v3576 = vpop.xlane.xlu0 %3575
        %v3577 = vrcp.pop %v3576
        %v3578 = vmul.f32 %v3573, %v3577
        %3579 = vrot.lane.b32.xlu0 %v1318, 96
        %v3580 = vpop.permute.xlu0 %3579
        %v3583 = vsel %vm1421, %v3578, 0
        %3585 = vmatprep.subr.mxu0 0.0
        %3586 = vmatpush1.msra.mxu0 0.0
        %3587 = vmatprep.subr.mxu0 0.0
        %3588 = vmatpush1.msra.mxu0 0.0
        %3589 = vmatprep.subr.mxu0 0.0
        %3590 = vmatpush1.msra.mxu0 0.0
        %3591 = vmatprep.subr.mxu0 0.0
        %3592 = vmatpush1.msra.mxu0 0.0
        %3593 = vmatprep.subr.mxu0 0.0
        %3594 = vmatpush1.msra.mxu0 0.0
        %3595 = vmatprep.subr.mxu0 0.0
        %3596 = vmatpush1.msra.mxu0 0.0
        %3597 = vmatprep.subr.mxu0 0.0
        %3598 = vmatpush1.msra.mxu0 0.0
        %3599 = vmatprep.subr.mxu0 0.0
        %3600 = vmatpush1.msra.mxu0 0.0
        %3601 = vmatprep.subr.mxu0 0.0
        %3602 = vmatpush1.msra.mxu0 0.0
        %3603 = vmatprep.subr.mxu0 0.0
        %3604 = vmatpush1.msra.mxu0 0.0
        %3605 = vmatprep.subr.mxu0 0.0
        %3606 = vmatpush1.msra.mxu0 0.0
        %3607 = vmatprep.subr.mxu0 0.0
        %3608 = vmatpush1.msra.mxu0 0.0
        %3609 = vmatprep.subr.mxu0 0.0
        %3610 = vmatpush1.msra.mxu0 0.0
        %3611 = vmatprep.subr.mxu0 0.0
        %3612 = vmatpush1.msra.mxu0 0.0
        %3613 = vmatprep.subr.mxu0 0.0
        %3614 = vmatpush1.msra.mxu0 0.0
        %3615 = vmatprep.subr.mxu0 0.0
        %3616 = vmatpush1.msra.mxu0 %v3580
        %3617 = vmatprep.subr.mxu0 0.0
        %3618 = vmatpush2.msra.mxu0 0.0
        %3619 = vmatprep.subr.mxu0 0.0
        %3620 = vmatpush2.msra.mxu0 0.0
        %3621 = vmatprep.subr.mxu0 0.0
        %3622 = vmatpush2.msra.mxu0 0.0
        %3623 = vmatprep.subr.mxu0 0.0
        %3624 = vmatpush2.msra.mxu0 0.0
        %3625 = vmatprep.subr.mxu0 0.0
        %3626 = vmatpush2.msra.mxu0 0.0
        %3627 = vmatprep.subr.mxu0 0.0
        %3628 = vmatpush2.msra.mxu0 0.0
        %3629 = vmatprep.subr.mxu0 0.0
        %3630 = vmatpush2.msra.mxu0 0.0
        %3631 = vmatprep.subr.mxu0 0.0
        %3632 = vmatpush2.msra.mxu0 0.0
        %3633 = vmatprep.subr.mxu0 0.0
        %3634 = vmatpush2.msra.mxu0 0.0
        %3635 = vmatprep.subr.mxu0 0.0
        %3636 = vmatpush2.msra.mxu0 0.0
        %3637 = vmatprep.subr.mxu0 0.0
        %3638 = vmatpush2.msra.mxu0 0.0
        %3639 = vmatprep.subr.mxu0 0.0
        %3640 = vmatpush2.msra.mxu0 0.0
        %3641 = vmatprep.subr.mxu0 0.0
        %3642 = vmatpush2.msra.mxu0 0.0
        %3643 = vmatprep.subr.mxu0 0.0
        %3644 = vmatpush2.msra.mxu0 0.0
        %3645 = vmatprep.subr.mxu0 0.0
        %3646 = vmatpush2.msra.mxu0 0.0
        %3647 = vmatprep.subr.mxu0 0.0
        %3648 = vmatpush2.msra.mxu0 0.0
        %3649 = vmatprep.mubr.f32.mxu0 0.0
        %3650 = vmatmul.mubr.f32.gmra.mxu0 %v3583
        %v3651 = vpop.f32.mrf.mxu0
        %v3652 = vadd.f32 0.0, %v3651
        %v3653 = vpop.f32.mrf.mxu0
        %3654 = vdwg.mxu0
        %v3655 = vpack.c.bf16 %v3652, %v3652
        %v3657 = vsel %vm1344, %v3655, 0
        %3659 = vmatprep.subr.bf16.mxu0 0
        %3660 = vmatpush1.bf16.msra.mxu0 0
        %3661 = vmatprep.subr.bf16.mxu0 0
        %3662 = vmatpush1.bf16.msra.mxu0 0
        %3663 = vmatprep.subr.bf16.mxu0 0
        %3664 = vmatpush1.bf16.msra.mxu0 0
        %3665 = vmatprep.subr.bf16.mxu0 0
        %3666 = vmatpush1.bf16.msra.mxu0 0
        %3667 = vmatprep.subr.bf16.mxu0 0
        %3668 = vmatpush1.bf16.msra.mxu0 0
        %3669 = vmatprep.subr.bf16.mxu0 0
        %3670 = vmatpush1.bf16.msra.mxu0 0
        %3671 = vmatprep.subr.bf16.mxu0 0
        %3672 = vmatpush1.bf16.msra.mxu0 0
        %3673 = vmatprep.subr.bf16.mxu0 0
        %3674 = vmatpush1.bf16.msra.mxu0 %v1942
        %3675 = vmatprep.subr.bf16.mxu0 0
        %3676 = vmatpush2.bf16.msra.mxu0 0
        %3677 = vmatprep.subr.bf16.mxu0 0
        %3678 = vmatpush2.bf16.msra.mxu0 0
        %3679 = vmatprep.subr.bf16.mxu0 0
        %3680 = vmatpush2.bf16.msra.mxu0 0
        %3681 = vmatprep.subr.bf16.mxu0 0
        %3682 = vmatpush2.bf16.msra.mxu0 0
        %3683 = vmatprep.subr.bf16.mxu0 0
        %3684 = vmatpush2.bf16.msra.mxu0 0
        %3685 = vmatprep.subr.bf16.mxu0 0
        %3686 = vmatpush2.bf16.msra.mxu0 0
        %3687 = vmatprep.subr.bf16.mxu0 0
        %3688 = vmatpush2.bf16.msra.mxu0 0
        %3689 = vmatprep.subr.bf16.mxu0 0
        %3690 = vmatpush2.bf16.msra.mxu0 0
        %3691 = vmatprep.mubr.bf16.mxu0 0
        %3692 = vmatmul.mubr.bf16.gmra.mxu0 %v3657
        %v3693 = vpop.f32.mrf.mxu0
        %v3694 = vadd.f32 0.0, %v3693
        %v3695 = vpop.f32.mrf.mxu0
        %v3696 = vpop.f32.mrf.mxu0
        %v3697 = vpop.f32.mrf.mxu0
        %3698 = vdwg.mxu0
        %v3699 = vadd.f32 %v3485, %v3694
        %3700 = vrot.lane.b32.xlu0 %v3075, 80
        %v3701 = vpop.permute.xlu0 %3700
        %3702 = vrot.lane.b32.xlu0 %v1278, 80
        %v3703 = vpop.permute.xlu0 %3702
        %v3704 = vsel %vm1344, %v3701, 0
        %v3706 = vsel %vm1344, %v3703, 0
        %3708 = vmatprep.subr.mxu0 0.0
        %3709 = vmatpush1.xpose.msra.mxu0 0.0
        %3710 = vmatprep.subr.mxu0 0.0
        %3711 = vmatpush1.xpose.msra.mxu0 0.0
        %3712 = vmatprep.subr.mxu0 0.0
        %3713 = vmatpush1.xpose.msra.mxu0 0.0
        %3714 = vmatprep.subr.mxu0 0.0
        %3715 = vmatpush1.xpose.msra.mxu0 0.0
        %3716 = vmatprep.subr.mxu0 0.0
        %3717 = vmatpush1.xpose.msra.mxu0 0.0
        %3718 = vmatprep.subr.mxu0 0.0
        %3719 = vmatpush1.xpose.msra.mxu0 0.0
        %3720 = vmatprep.subr.mxu0 0.0
        %3721 = vmatpush1.xpose.msra.mxu0 0.0
        %3722 = vmatprep.subr.mxu0 0.0
        %3723 = vmatpush1.xpose.msra.mxu0 0.0
        %3724 = vmatprep.subr.mxu0 0.0
        %3725 = vmatpush1.xpose.msra.mxu0 0.0
        %3726 = vmatprep.subr.mxu0 0.0
        %3727 = vmatpush1.xpose.msra.mxu0 0.0
        %3728 = vmatprep.subr.mxu0 0.0
        %3729 = vmatpush1.xpose.msra.mxu0 0.0
        %3730 = vmatprep.subr.mxu0 0.0
        %3731 = vmatpush1.xpose.msra.mxu0 0.0
        %3732 = vmatprep.subr.mxu0 0.0
        %3733 = vmatpush1.xpose.msra.mxu0 0.0
        %3734 = vmatprep.subr.mxu0 0.0
        %3735 = vmatpush1.xpose.msra.mxu0 0.0
        %3736 = vmatprep.subr.mxu0 0.0
        %3737 = vmatpush1.xpose.msra.mxu0 0.0
        %3738 = vmatprep.subr.mxu0 0.0
        %3739 = vmatpush1.xpose.msra.mxu0 %v3706
        %3740 = vmatprep.subr.mxu0 0.0
        %3741 = vmatpush2.xpose.msra.mxu0 0.0
        %3742 = vmatprep.subr.mxu0 0.0
        %3743 = vmatpush2.xpose.msra.mxu0 0.0
        %3744 = vmatprep.subr.mxu0 0.0
        %3745 = vmatpush2.xpose.msra.mxu0 0.0
        %3746 = vmatprep.subr.mxu0 0.0
        %3747 = vmatpush2.xpose.msra.mxu0 0.0
        %3748 = vmatprep.subr.mxu0 0.0
        %3749 = vmatpush2.xpose.msra.mxu0 0.0
        %3750 = vmatprep.subr.mxu0 0.0
        %3751 = vmatpush2.xpose.msra.mxu0 0.0
        %3752 = vmatprep.subr.mxu0 0.0
        %3753 = vmatpush2.xpose.msra.mxu0 0.0
        %3754 = vmatprep.subr.mxu0 0.0
        %3755 = vmatpush2.xpose.msra.mxu0 0.0
        %3756 = vmatprep.subr.mxu0 0.0
        %3757 = vmatpush2.xpose.msra.mxu0 0.0
        %3758 = vmatprep.subr.mxu0 0.0
        %3759 = vmatpush2.xpose.msra.mxu0 0.0
        %3760 = vmatprep.subr.mxu0 0.0
        %3761 = vmatpush2.xpose.msra.mxu0 0.0
        %3762 = vmatprep.subr.mxu0 0.0
        %3763 = vmatpush2.xpose.msra.mxu0 0.0
        %3764 = vmatprep.subr.mxu0 0.0
        %3765 = vmatpush2.xpose.msra.mxu0 0.0
        %3766 = vmatprep.subr.mxu0 0.0
        %3767 = vmatpush2.xpose.msra.mxu0 0.0
        %3768 = vmatprep.subr.mxu0 0.0
        %3769 = vmatpush2.xpose.msra.mxu0 0.0
        %3770 = vmatprep.subr.mxu0 0.0
        %3771 = vmatpush2.xpose.msra.mxu0 0.0
        %3772 = vmatprep.mubr.f32.mxu0 0.0
        %3773 = vmatmul.mubr.f32.gmra.mxu0 %v3704
        %v3774 = vpop.f32.mrf.mxu0
        %v3775 = vadd.f32 %v3074, %v3774
        %v3776 = vpop.f32.mrf.mxu0
        %3777 = vdwg.mxu0
        %v3778 = vsel %vm1421, %v3775, -inf
        %3779 = vmax.xlane.f32.xlu0 %v3778
        %v3780 = vpop.xlane.xlu0 %3779
        %v3781 = vsub.f32 %v3775, %v3780
        %v3782 = vmul.f32 %v3781, 1.442695
        %v3783 = vpow.pop %v3782
        %v3784 = vsel %vm1421, %v3783, 0.0
        %3785 = vadd.xlane.f32.xlu0 %v3784
        %v3786 = vpop.xlane.xlu0 %3785
        %v3787 = vrcp.pop %v3786
        %v3788 = vmul.f32 %v3783, %v3787
        %3789 = vrot.lane.b32.xlu0 %v1318, 80
        %v3790 = vpop.permute.xlu0 %3789
        %v3793 = vsel %vm1421, %v3788, 0
        %3795 = vmatprep.subr.mxu0 0.0
        %3796 = vmatpush1.msra.mxu0 0.0
        %3797 = vmatprep.subr.mxu0 0.0
        %3798 = vmatpush1.msra.mxu0 0.0
        %3799 = vmatprep.subr.mxu0 0.0
        %3800 = vmatpush1.msra.mxu0 0.0
        %3801 = vmatprep.subr.mxu0 0.0
        %3802 = vmatpush1.msra.mxu0 0.0
        %3803 = vmatprep.subr.mxu0 0.0
        %3804 = vmatpush1.msra.mxu0 0.0
        %3805 = vmatprep.subr.mxu0 0.0
        %3806 = vmatpush1.msra.mxu0 0.0
        %3807 = vmatprep.subr.mxu0 0.0
        %3808 = vmatpush1.msra.mxu0 0.0
        %3809 = vmatprep.subr.mxu0 0.0
        %3810 = vmatpush1.msra.mxu0 0.0
        %3811 = vmatprep.subr.mxu0 0.0
        %3812 = vmatpush1.msra.mxu0 0.0
        %3813 = vmatprep.subr.mxu0 0.0
        %3814 = vmatpush1.msra.mxu0 0.0
        %3815 = vmatprep.subr.mxu0 0.0
        %3816 = vmatpush1.msra.mxu0 0.0
        %3817 = vmatprep.subr.mxu0 0.0
        %3818 = vmatpush1.msra.mxu0 0.0
        %3819 = vmatprep.subr.mxu0 0.0
        %3820 = vmatpush1.msra.mxu0 0.0
        %3821 = vmatprep.subr.mxu0 0.0
        %3822 = vmatpush1.msra.mxu0 0.0
        %3823 = vmatprep.subr.mxu0 0.0
        %3824 = vmatpush1.msra.mxu0 0.0
        %3825 = vmatprep.subr.mxu0 0.0
        %3826 = vmatpush1.msra.mxu0 %v3790
        %3827 = vmatprep.subr.mxu0 0.0
        %3828 = vmatpush2.msra.mxu0 0.0
        %3829 = vmatprep.subr.mxu0 0.0
        %3830 = vmatpush2.msra.mxu0 0.0
        %3831 = vmatprep.subr.mxu0 0.0
        %3832 = vmatpush2.msra.mxu0 0.0
        %3833 = vmatprep.subr.mxu0 0.0
        %3834 = vmatpush2.msra.mxu0 0.0
        %3835 = vmatprep.subr.mxu0 0.0
        %3836 = vmatpush2.msra.mxu0 0.0
        %3837 = vmatprep.subr.mxu0 0.0
        %3838 = vmatpush2.msra.mxu0 0.0
        %3839 = vmatprep.subr.mxu0 0.0
        %3840 = vmatpush2.msra.mxu0 0.0
        %3841 = vmatprep.subr.mxu0 0.0
        %3842 = vmatpush2.msra.mxu0 0.0
        %3843 = vmatprep.subr.mxu0 0.0
        %3844 = vmatpush2.msra.mxu0 0.0
        %3845 = vmatprep.subr.mxu0 0.0
        %3846 = vmatpush2.msra.mxu0 0.0
        %3847 = vmatprep.subr.mxu0 0.0
        %3848 = vmatpush2.msra.mxu0 0.0
        %3849 = vmatprep.subr.mxu0 0.0
        %3850 = vmatpush2.msra.mxu0 0.0
        %3851 = vmatprep.subr.mxu0 0.0
        %3852 = vmatpush2.msra.mxu0 0.0
        %3853 = vmatprep.subr.mxu0 0.0
        %3854 = vmatpush2.msra.mxu0 0.0
        %3855 = vmatprep.subr.mxu0 0.0
        %3856 = vmatpush2.msra.mxu0 0.0
        %3857 = vmatprep.subr.mxu0 0.0
        %3858 = vmatpush2.msra.mxu0 0.0
        %3859 = vmatprep.mubr.f32.mxu0 0.0
        %3860 = vmatmul.mubr.f32.gmra.mxu0 %v3793
        %v3861 = vpop.f32.mrf.mxu0
        %v3862 = vadd.f32 0.0, %v3861
        %v3863 = vpop.f32.mrf.mxu0
        %3864 = vdwg.mxu0
        %v3865 = vpack.c.bf16 %v3862, %v3862
        %v3867 = vsel %vm1344, %v3865, 0
        %3869 = vmatprep.subr.bf16.mxu0 0
        %3870 = vmatpush1.bf16.msra.mxu0 0
        %3871 = vmatprep.subr.bf16.mxu0 0
        %3872 = vmatpush1.bf16.msra.mxu0 0
        %3873 = vmatprep.subr.bf16.mxu0 0
        %3874 = vmatpush1.bf16.msra.mxu0 0
        %3875 = vmatprep.subr.bf16.mxu0 0
        %3876 = vmatpush1.bf16.msra.mxu0 0
        %3877 = vmatprep.subr.bf16.mxu0 0
        %3878 = vmatpush1.bf16.msra.mxu0 0
        %3879 = vmatprep.subr.bf16.mxu0 0
        %3880 = vmatpush1.bf16.msra.mxu0 0
        %3881 = vmatprep.subr.bf16.mxu0 0
        %3882 = vmatpush1.bf16.msra.mxu0 0
        %3883 = vmatprep.subr.bf16.mxu0 0
        %3884 = vmatpush1.bf16.msra.mxu0 %v2158
        %3885 = vmatprep.subr.bf16.mxu0 0
        %3886 = vmatpush2.bf16.msra.mxu0 0
        %3887 = vmatprep.subr.bf16.mxu0 0
        %3888 = vmatpush2.bf16.msra.mxu0 0
        %3889 = vmatprep.subr.bf16.mxu0 0
        %3890 = vmatpush2.bf16.msra.mxu0 0
        %3891 = vmatprep.subr.bf16.mxu0 0
        %3892 = vmatpush2.bf16.msra.mxu0 0
        %3893 = vmatprep.subr.bf16.mxu0 0
        %3894 = vmatpush2.bf16.msra.mxu0 0
        %3895 = vmatprep.subr.bf16.mxu0 0
        %3896 = vmatpush2.bf16.msra.mxu0 0
        %3897 = vmatprep.subr.bf16.mxu0 0
        %3898 = vmatpush2.bf16.msra.mxu0 0
        %3899 = vmatprep.subr.bf16.mxu0 0
        %3900 = vmatpush2.bf16.msra.mxu0 0
        %3901 = vmatprep.mubr.bf16.mxu0 0
        %3902 = vmatmul.mubr.bf16.gmra.mxu0 %v3867
        %v3903 = vpop.f32.mrf.mxu0
        %v3904 = vadd.f32 0.0, %v3903
        %v3905 = vpop.f32.mrf.mxu0
        %v3906 = vpop.f32.mrf.mxu0
        %v3907 = vpop.f32.mrf.mxu0
        %3908 = vdwg.mxu0
        %v3909 = vadd.f32 %v3699, %v3904
        %3910 = vrot.lane.b32.xlu0 %v3075, 64
        %v3911 = vpop.permute.xlu0 %3910
        %3912 = vrot.lane.b32.xlu0 %v1278, 64
        %v3913 = vpop.permute.xlu0 %3912
        %v3914 = vsel %vm1344, %v3911, 0
        %v3916 = vsel %vm1344, %v3913, 0
        %3918 = vmatprep.subr.mxu0 0.0
        %3919 = vmatpush1.xpose.msra.mxu0 0.0
        %3920 = vmatprep.subr.mxu0 0.0
        %3921 = vmatpush1.xpose.msra.mxu0 0.0
        %3922 = vmatprep.subr.mxu0 0.0
        %3923 = vmatpush1.xpose.msra.mxu0 0.0
        %3924 = vmatprep.subr.mxu0 0.0
        %3925 = vmatpush1.xpose.msra.mxu0 0.0
        %3926 = vmatprep.subr.mxu0 0.0
        %3927 = vmatpush1.xpose.msra.mxu0 0.0
        %3928 = vmatprep.subr.mxu0 0.0
        %3929 = vmatpush1.xpose.msra.mxu0 0.0
        %3930 = vmatprep.subr.mxu0 0.0
        %3931 = vmatpush1.xpose.msra.mxu0 0.0
        %3932 = vmatprep.subr.mxu0 0.0
        %3933 = vmatpush1.xpose.msra.mxu0 0.0
        %3934 = vmatprep.subr.mxu0 0.0
        %3935 = vmatpush1.xpose.msra.mxu0 0.0
        %3936 = vmatprep.subr.mxu0 0.0
        %3937 = vmatpush1.xpose.msra.mxu0 0.0
        %3938 = vmatprep.subr.mxu0 0.0
        %3939 = vmatpush1.xpose.msra.mxu0 0.0
        %3940 = vmatprep.subr.mxu0 0.0
        %3941 = vmatpush1.xpose.msra.mxu0 0.0
        %3942 = vmatprep.subr.mxu0 0.0
        %3943 = vmatpush1.xpose.msra.mxu0 0.0
        %3944 = vmatprep.subr.mxu0 0.0
        %3945 = vmatpush1.xpose.msra.mxu0 0.0
        %3946 = vmatprep.subr.mxu0 0.0
        %3947 = vmatpush1.xpose.msra.mxu0 0.0
        %3948 = vmatprep.subr.mxu0 0.0
        %3949 = vmatpush1.xpose.msra.mxu0 %v3916
        %3950 = vmatprep.subr.mxu0 0.0
        %3951 = vmatpush2.xpose.msra.mxu0 0.0
        %3952 = vmatprep.subr.mxu0 0.0
        %3953 = vmatpush2.xpose.msra.mxu0 0.0
        %3954 = vmatprep.subr.mxu0 0.0
        %3955 = vmatpush2.xpose.msra.mxu0 0.0
        %3956 = vmatprep.subr.mxu0 0.0
        %3957 = vmatpush2.xpose.msra.mxu0 0.0
        %3958 = vmatprep.subr.mxu0 0.0
        %3959 = vmatpush2.xpose.msra.mxu0 0.0
        %3960 = vmatprep.subr.mxu0 0.0
        %3961 = vmatpush2.xpose.msra.mxu0 0.0
        %3962 = vmatprep.subr.mxu0 0.0
        %3963 = vmatpush2.xpose.msra.mxu0 0.0
        %3964 = vmatprep.subr.mxu0 0.0
        %3965 = vmatpush2.xpose.msra.mxu0 0.0
        %3966 = vmatprep.subr.mxu0 0.0
        %3967 = vmatpush2.xpose.msra.mxu0 0.0
        %3968 = vmatprep.subr.mxu0 0.0
        %3969 = vmatpush2.xpose.msra.mxu0 0.0
        %3970 = vmatprep.subr.mxu0 0.0
        %3971 = vmatpush2.xpose.msra.mxu0 0.0
        %3972 = vmatprep.subr.mxu0 0.0
        %3973 = vmatpush2.xpose.msra.mxu0 0.0
        %3974 = vmatprep.subr.mxu0 0.0
        %3975 = vmatpush2.xpose.msra.mxu0 0.0
        %3976 = vmatprep.subr.mxu0 0.0
        %3977 = vmatpush2.xpose.msra.mxu0 0.0
        %3978 = vmatprep.subr.mxu0 0.0
        %3979 = vmatpush2.xpose.msra.mxu0 0.0
        %3980 = vmatprep.subr.mxu0 0.0
        %3981 = vmatpush2.xpose.msra.mxu0 0.0
        %3982 = vmatprep.mubr.f32.mxu0 0.0
        %3983 = vmatmul.mubr.f32.gmra.mxu0 %v3914
        %v3984 = vpop.f32.mrf.mxu0
        %v3985 = vadd.f32 %v3074, %v3984
        %v3986 = vpop.f32.mrf.mxu0
        %3987 = vdwg.mxu0
        %v3988 = vsel %vm1421, %v3985, -inf
        %3989 = vmax.xlane.f32.xlu0 %v3988
        %v3990 = vpop.xlane.xlu0 %3989
        %v3991 = vsub.f32 %v3985, %v3990
        %v3992 = vmul.f32 %v3991, 1.442695
        %v3993 = vpow.pop %v3992
        %v3994 = vsel %vm1421, %v3993, 0.0
        %3995 = vadd.xlane.f32.xlu0 %v3994
        %v3996 = vpop.xlane.xlu0 %3995
        %v3997 = vrcp.pop %v3996
        %v3998 = vmul.f32 %v3993, %v3997
        %3999 = vrot.lane.b32.xlu0 %v1318, 64
        %v4000 = vpop.permute.xlu0 %3999
        %v4003 = vsel %vm1421, %v3998, 0
        %4005 = vmatprep.subr.mxu0 0.0
        %4006 = vmatpush1.msra.mxu0 0.0
        %4007 = vmatprep.subr.mxu0 0.0
        %4008 = vmatpush1.msra.mxu0 0.0
        %4009 = vmatprep.subr.mxu0 0.0
        %4010 = vmatpush1.msra.mxu0 0.0
        %4011 = vmatprep.subr.mxu0 0.0
        %4012 = vmatpush1.msra.mxu0 0.0
        %4013 = vmatprep.subr.mxu0 0.0
        %4014 = vmatpush1.msra.mxu0 0.0
        %4015 = vmatprep.subr.mxu0 0.0
        %4016 = vmatpush1.msra.mxu0 0.0
        %4017 = vmatprep.subr.mxu0 0.0
        %4018 = vmatpush1.msra.mxu0 0.0
        %4019 = vmatprep.subr.mxu0 0.0
        %4020 = vmatpush1.msra.mxu0 0.0
        %4021 = vmatprep.subr.mxu0 0.0
        %4022 = vmatpush1.msra.mxu0 0.0
        %4023 = vmatprep.subr.mxu0 0.0
        %4024 = vmatpush1.msra.mxu0 0.0
        %4025 = vmatprep.subr.mxu0 0.0
        %4026 = vmatpush1.msra.mxu0 0.0
        %4027 = vmatprep.subr.mxu0 0.0
        %4028 = vmatpush1.msra.mxu0 0.0
        %4029 = vmatprep.subr.mxu0 0.0
        %4030 = vmatpush1.msra.mxu0 0.0
        %4031 = vmatprep.subr.mxu0 0.0
        %4032 = vmatpush1.msra.mxu0 0.0
        %4033 = vmatprep.subr.mxu0 0.0
        %4034 = vmatpush1.msra.mxu0 0.0
        %4035 = vmatprep.subr.mxu0 0.0
        %4036 = vmatpush1.msra.mxu0 %v4000
        %4037 = vmatprep.subr.mxu0 0.0
        %4038 = vmatpush2.msra.mxu0 0.0
        %4039 = vmatprep.subr.mxu0 0.0
        %4040 = vmatpush2.msra.mxu0 0.0
        %4041 = vmatprep.subr.mxu0 0.0
        %4042 = vmatpush2.msra.mxu0 0.0
        %4043 = vmatprep.subr.mxu0 0.0
        %4044 = vmatpush2.msra.mxu0 0.0
        %4045 = vmatprep.subr.mxu0 0.0
        %4046 = vmatpush2.msra.mxu0 0.0
        %4047 = vmatprep.subr.mxu0 0.0
        %4048 = vmatpush2.msra.mxu0 0.0
        %4049 = vmatprep.subr.mxu0 0.0
        %4050 = vmatpush2.msra.mxu0 0.0
        %4051 = vmatprep.subr.mxu0 0.0
        %4052 = vmatpush2.msra.mxu0 0.0
        %4053 = vmatprep.subr.mxu0 0.0
        %4054 = vmatpush2.msra.mxu0 0.0
        %4055 = vmatprep.subr.mxu0 0.0
        %4056 = vmatpush2.msra.mxu0 0.0
        %4057 = vmatprep.subr.mxu0 0.0
        %4058 = vmatpush2.msra.mxu0 0.0
        %4059 = vmatprep.subr.mxu0 0.0
        %4060 = vmatpush2.msra.mxu0 0.0
        %4061 = vmatprep.subr.mxu0 0.0
        %4062 = vmatpush2.msra.mxu0 0.0
        %4063 = vmatprep.subr.mxu0 0.0
        %4064 = vmatpush2.msra.mxu0 0.0
        %4065 = vmatprep.subr.mxu0 0.0
        %4066 = vmatpush2.msra.mxu0 0.0
        %4067 = vmatprep.subr.mxu0 0.0
        %4068 = vmatpush2.msra.mxu0 0.0
        %4069 = vmatprep.mubr.f32.mxu0 0.0
        %4070 = vmatmul.mubr.f32.gmra.mxu0 %v4003
        %v4071 = vpop.f32.mrf.mxu0
        %v4072 = vadd.f32 0.0, %v4071
        %v4073 = vpop.f32.mrf.mxu0
        %4074 = vdwg.mxu0
        %v4075 = vpack.c.bf16 %v4072, %v4072
        %v4077 = vsel %vm1344, %v4075, 0
        %4079 = vmatprep.subr.bf16.mxu0 0
        %4080 = vmatpush1.bf16.msra.mxu0 0
        %4081 = vmatprep.subr.bf16.mxu0 0
        %4082 = vmatpush1.bf16.msra.mxu0 0
        %4083 = vmatprep.subr.bf16.mxu0 0
        %4084 = vmatpush1.bf16.msra.mxu0 0
        %4085 = vmatprep.subr.bf16.mxu0 0
        %4086 = vmatpush1.bf16.msra.mxu0 0
        %4087 = vmatprep.subr.bf16.mxu0 0
        %4088 = vmatpush1.bf16.msra.mxu0 0
        %4089 = vmatprep.subr.bf16.mxu0 0
        %4090 = vmatpush1.bf16.msra.mxu0 0
        %4091 = vmatprep.subr.bf16.mxu0 0
        %4092 = vmatpush1.bf16.msra.mxu0 0
        %4093 = vmatprep.subr.bf16.mxu0 0
        %4094 = vmatpush1.bf16.msra.mxu0 %v2374
        %4095 = vmatprep.subr.bf16.mxu0 0
        %4096 = vmatpush2.bf16.msra.mxu0 0
        %4097 = vmatprep.subr.bf16.mxu0 0
        %4098 = vmatpush2.bf16.msra.mxu0 0
        %4099 = vmatprep.subr.bf16.mxu0 0
        %4100 = vmatpush2.bf16.msra.mxu0 0
        %4101 = vmatprep.subr.bf16.mxu0 0
        %4102 = vmatpush2.bf16.msra.mxu0 0
        %4103 = vmatprep.subr.bf16.mxu0 0
        %4104 = vmatpush2.bf16.msra.mxu0 0
        %4105 = vmatprep.subr.bf16.mxu0 0
        %4106 = vmatpush2.bf16.msra.mxu0 0
        %4107 = vmatprep.subr.bf16.mxu0 0
        %4108 = vmatpush2.bf16.msra.mxu0 0
        %4109 = vmatprep.subr.bf16.mxu0 0
        %4110 = vmatpush2.bf16.msra.mxu0 0
        %4111 = vmatprep.mubr.bf16.mxu0 0
        %4112 = vmatmul.mubr.bf16.gmra.mxu0 %v4077
        %v4113 = vpop.f32.mrf.mxu0
        %v4114 = vadd.f32 0.0, %v4113
        %v4115 = vpop.f32.mrf.mxu0
        %v4116 = vpop.f32.mrf.mxu0
        %v4117 = vpop.f32.mrf.mxu0
        %4118 = vdwg.mxu0
        %v4119 = vadd.f32 %v3909, %v4114
        %4120 = vrot.lane.b32.xlu0 %v3075, 48
        %v4121 = vpop.permute.xlu0 %4120
        %4122 = vrot.lane.b32.xlu0 %v1278, 48
        %v4123 = vpop.permute.xlu0 %4122
        %v4124 = vsel %vm1344, %v4121, 0
        %v4126 = vsel %vm1344, %v4123, 0
        %4128 = vmatprep.subr.mxu0 0.0
        %4129 = vmatpush1.xpose.msra.mxu0 0.0
        %4130 = vmatprep.subr.mxu0 0.0
        %4131 = vmatpush1.xpose.msra.mxu0 0.0
        %4132 = vmatprep.subr.mxu0 0.0
        %4133 = vmatpush1.xpose.msra.mxu0 0.0
        %4134 = vmatprep.subr.mxu0 0.0
        %4135 = vmatpush1.xpose.msra.mxu0 0.0
        %4136 = vmatprep.subr.mxu0 0.0
        %4137 = vmatpush1.xpose.msra.mxu0 0.0
        %4138 = vmatprep.subr.mxu0 0.0
        %4139 = vmatpush1.xpose.msra.mxu0 0.0
        %4140 = vmatprep.subr.mxu0 0.0
        %4141 = vmatpush1.xpose.msra.mxu0 0.0
        %4142 = vmatprep.subr.mxu0 0.0
        %4143 = vmatpush1.xpose.msra.mxu0 0.0
        %4144 = vmatprep.subr.mxu0 0.0
        %4145 = vmatpush1.xpose.msra.mxu0 0.0
        %4146 = vmatprep.subr.mxu0 0.0
        %4147 = vmatpush1.xpose.msra.mxu0 0.0
        %4148 = vmatprep.subr.mxu0 0.0
        %4149 = vmatpush1.xpose.msra.mxu0 0.0
        %4150 = vmatprep.subr.mxu0 0.0
        %4151 = vmatpush1.xpose.msra.mxu0 0.0
        %4152 = vmatprep.subr.mxu0 0.0
        %4153 = vmatpush1.xpose.msra.mxu0 0.0
        %4154 = vmatprep.subr.mxu0 0.0
        %4155 = vmatpush1.xpose.msra.mxu0 0.0
        %4156 = vmatprep.subr.mxu0 0.0
        %4157 = vmatpush1.xpose.msra.mxu0 0.0
        %4158 = vmatprep.subr.mxu0 0.0
        %4159 = vmatpush1.xpose.msra.mxu0 %v4126
        %4160 = vmatprep.subr.mxu0 0.0
        %4161 = vmatpush2.xpose.msra.mxu0 0.0
        %4162 = vmatprep.subr.mxu0 0.0
        %4163 = vmatpush2.xpose.msra.mxu0 0.0
        %4164 = vmatprep.subr.mxu0 0.0
        %4165 = vmatpush2.xpose.msra.mxu0 0.0
        %4166 = vmatprep.subr.mxu0 0.0
        %4167 = vmatpush2.xpose.msra.mxu0 0.0
        %4168 = vmatprep.subr.mxu0 0.0
        %4169 = vmatpush2.xpose.msra.mxu0 0.0
        %4170 = vmatprep.subr.mxu0 0.0
        %4171 = vmatpush2.xpose.msra.mxu0 0.0
        %4172 = vmatprep.subr.mxu0 0.0
        %4173 = vmatpush2.xpose.msra.mxu0 0.0
        %4174 = vmatprep.subr.mxu0 0.0
        %4175 = vmatpush2.xpose.msra.mxu0 0.0
        %4176 = vmatprep.subr.mxu0 0.0
        %4177 = vmatpush2.xpose.msra.mxu0 0.0
        %4178 = vmatprep.subr.mxu0 0.0
        %4179 = vmatpush2.xpose.msra.mxu0 0.0
        %4180 = vmatprep.subr.mxu0 0.0
        %4181 = vmatpush2.xpose.msra.mxu0 0.0
        %4182 = vmatprep.subr.mxu0 0.0
        %4183 = vmatpush2.xpose.msra.mxu0 0.0
        %4184 = vmatprep.subr.mxu0 0.0
        %4185 = vmatpush2.xpose.msra.mxu0 0.0
        %4186 = vmatprep.subr.mxu0 0.0
        %4187 = vmatpush2.xpose.msra.mxu0 0.0
        %4188 = vmatprep.subr.mxu0 0.0
        %4189 = vmatpush2.xpose.msra.mxu0 0.0
        %4190 = vmatprep.subr.mxu0 0.0
        %4191 = vmatpush2.xpose.msra.mxu0 0.0
        %4192 = vmatprep.mubr.f32.mxu0 0.0
        %4193 = vmatmul.mubr.f32.gmra.mxu0 %v4124
        %v4194 = vpop.f32.mrf.mxu0
        %v4195 = vadd.f32 %v3074, %v4194
        %v4196 = vpop.f32.mrf.mxu0
        %4197 = vdwg.mxu0
        %v4198 = vsel %vm1421, %v4195, -inf
        %4199 = vmax.xlane.f32.xlu0 %v4198
        %v4200 = vpop.xlane.xlu0 %4199
        %v4201 = vsub.f32 %v4195, %v4200
        %v4202 = vmul.f32 %v4201, 1.442695
        %v4203 = vpow.pop %v4202
        %v4204 = vsel %vm1421, %v4203, 0.0
        %4205 = vadd.xlane.f32.xlu0 %v4204
        %v4206 = vpop.xlane.xlu0 %4205
        %v4207 = vrcp.pop %v4206
        %v4208 = vmul.f32 %v4203, %v4207
        %4209 = vrot.lane.b32.xlu0 %v1318, 48
        %v4210 = vpop.permute.xlu0 %4209
        %v4213 = vsel %vm1421, %v4208, 0
        %4215 = vmatprep.subr.mxu0 0.0
        %4216 = vmatpush1.msra.mxu0 0.0
        %4217 = vmatprep.subr.mxu0 0.0
        %4218 = vmatpush1.msra.mxu0 0.0
        %4219 = vmatprep.subr.mxu0 0.0
        %4220 = vmatpush1.msra.mxu0 0.0
        %4221 = vmatprep.subr.mxu0 0.0
        %4222 = vmatpush1.msra.mxu0 0.0
        %4223 = vmatprep.subr.mxu0 0.0
        %4224 = vmatpush1.msra.mxu0 0.0
        %4225 = vmatprep.subr.mxu0 0.0
        %4226 = vmatpush1.msra.mxu0 0.0
        %4227 = vmatprep.subr.mxu0 0.0
        %4228 = vmatpush1.msra.mxu0 0.0
        %4229 = vmatprep.subr.mxu0 0.0
        %4230 = vmatpush1.msra.mxu0 0.0
        %4231 = vmatprep.subr.mxu0 0.0
        %4232 = vmatpush1.msra.mxu0 0.0
        %4233 = vmatprep.subr.mxu0 0.0
        %4234 = vmatpush1.msra.mxu0 0.0
        %4235 = vmatprep.subr.mxu0 0.0
        %4236 = vmatpush1.msra.mxu0 0.0
        %4237 = vmatprep.subr.mxu0 0.0
        %4238 = vmatpush1.msra.mxu0 0.0
        %4239 = vmatprep.subr.mxu0 0.0
        %4240 = vmatpush1.msra.mxu0 0.0
        %4241 = vmatprep.subr.mxu0 0.0
        %4242 = vmatpush1.msra.mxu0 0.0
        %4243 = vmatprep.subr.mxu0 0.0
        %4244 = vmatpush1.msra.mxu0 0.0
        %4245 = vmatprep.subr.mxu0 0.0
        %4246 = vmatpush1.msra.mxu0 %v4210
        %4247 = vmatprep.subr.mxu0 0.0
        %4248 = vmatpush2.msra.mxu0 0.0
        %4249 = vmatprep.subr.mxu0 0.0
        %4250 = vmatpush2.msra.mxu0 0.0
        %4251 = vmatprep.subr.mxu0 0.0
        %4252 = vmatpush2.msra.mxu0 0.0
        %4253 = vmatprep.subr.mxu0 0.0
        %4254 = vmatpush2.msra.mxu0 0.0
        %4255 = vmatprep.subr.mxu0 0.0
        %4256 = vmatpush2.msra.mxu0 0.0
        %4257 = vmatprep.subr.mxu0 0.0
        %4258 = vmatpush2.msra.mxu0 0.0
        %4259 = vmatprep.subr.mxu0 0.0
        %4260 = vmatpush2.msra.mxu0 0.0
        %4261 = vmatprep.subr.mxu0 0.0
        %4262 = vmatpush2.msra.mxu0 0.0
        %4263 = vmatprep.subr.mxu0 0.0
        %4264 = vmatpush2.msra.mxu0 0.0
        %4265 = vmatprep.subr.mxu0 0.0
        %4266 = vmatpush2.msra.mxu0 0.0
        %4267 = vmatprep.subr.mxu0 0.0
        %4268 = vmatpush2.msra.mxu0 0.0
        %4269 = vmatprep.subr.mxu0 0.0
        %4270 = vmatpush2.msra.mxu0 0.0
        %4271 = vmatprep.subr.mxu0 0.0
        %4272 = vmatpush2.msra.mxu0 0.0
        %4273 = vmatprep.subr.mxu0 0.0
        %4274 = vmatpush2.msra.mxu0 0.0
        %4275 = vmatprep.subr.mxu0 0.0
        %4276 = vmatpush2.msra.mxu0 0.0
        %4277 = vmatprep.subr.mxu0 0.0
        %4278 = vmatpush2.msra.mxu0 0.0
        %4279 = vmatprep.mubr.f32.mxu0 0.0
        %4280 = vmatmul.mubr.f32.gmra.mxu0 %v4213
        %v4281 = vpop.f32.mrf.mxu0
        %v4282 = vadd.f32 0.0, %v4281
        %v4283 = vpop.f32.mrf.mxu0
        %4284 = vdwg.mxu0
        %v4285 = vpack.c.bf16 %v4282, %v4282
        %v4287 = vsel %vm1344, %v4285, 0
        %4289 = vmatprep.subr.bf16.mxu0 0
        %4290 = vmatpush1.bf16.msra.mxu0 0
        %4291 = vmatprep.subr.bf16.mxu0 0
        %4292 = vmatpush1.bf16.msra.mxu0 0
        %4293 = vmatprep.subr.bf16.mxu0 0
        %4294 = vmatpush1.bf16.msra.mxu0 0
        %4295 = vmatprep.subr.bf16.mxu0 0
        %4296 = vmatpush1.bf16.msra.mxu0 0
        %4297 = vmatprep.subr.bf16.mxu0 0
        %4298 = vmatpush1.bf16.msra.mxu0 0
        %4299 = vmatprep.subr.bf16.mxu0 0
        %4300 = vmatpush1.bf16.msra.mxu0 0
        %4301 = vmatprep.subr.bf16.mxu0 0
        %4302 = vmatpush1.bf16.msra.mxu0 0
        %4303 = vmatprep.subr.bf16.mxu0 0
        %4304 = vmatpush1.bf16.msra.mxu0 %v2590
        %4305 = vmatprep.subr.bf16.mxu0 0
        %4306 = vmatpush2.bf16.msra.mxu0 0
        %4307 = vmatprep.subr.bf16.mxu0 0
        %4308 = vmatpush2.bf16.msra.mxu0 0
        %4309 = vmatprep.subr.bf16.mxu0 0
        %4310 = vmatpush2.bf16.msra.mxu0 0
        %4311 = vmatprep.subr.bf16.mxu0 0
        %4312 = vmatpush2.bf16.msra.mxu0 0
        %4313 = vmatprep.subr.bf16.mxu0 0
        %4314 = vmatpush2.bf16.msra.mxu0 0
        %4315 = vmatprep.subr.bf16.mxu0 0
        %4316 = vmatpush2.bf16.msra.mxu0 0
        %4317 = vmatprep.subr.bf16.mxu0 0
        %4318 = vmatpush2.bf16.msra.mxu0 0
        %4319 = vmatprep.subr.bf16.mxu0 0
        %4320 = vmatpush2.bf16.msra.mxu0 0
        %4321 = vmatprep.mubr.bf16.mxu0 0
        %4322 = vmatmul.mubr.bf16.gmra.mxu0 %v4287
        %v4323 = vpop.f32.mrf.mxu0
        %v4324 = vadd.f32 0.0, %v4323
        %v4325 = vpop.f32.mrf.mxu0
        %v4326 = vpop.f32.mrf.mxu0
        %v4327 = vpop.f32.mrf.mxu0
        %4328 = vdwg.mxu0
        %v4329 = vadd.f32 %v4119, %v4324
        %4330 = vrot.lane.b32.xlu0 %v3075, 32
        %v4331 = vpop.permute.xlu0 %4330
        %4332 = vrot.lane.b32.xlu0 %v1278, 32
        %v4333 = vpop.permute.xlu0 %4332
        %v4334 = vsel %vm1344, %v4331, 0
        %v4336 = vsel %vm1344, %v4333, 0
        %4338 = vmatprep.subr.mxu0 0.0
        %4339 = vmatpush1.xpose.msra.mxu0 0.0
        %4340 = vmatprep.subr.mxu0 0.0
        %4341 = vmatpush1.xpose.msra.mxu0 0.0
        %4342 = vmatprep.subr.mxu0 0.0
        %4343 = vmatpush1.xpose.msra.mxu0 0.0
        %4344 = vmatprep.subr.mxu0 0.0
        %4345 = vmatpush1.xpose.msra.mxu0 0.0
        %4346 = vmatprep.subr.mxu0 0.0
        %4347 = vmatpush1.xpose.msra.mxu0 0.0
        %4348 = vmatprep.subr.mxu0 0.0
        %4349 = vmatpush1.xpose.msra.mxu0 0.0
        %4350 = vmatprep.subr.mxu0 0.0
        %4351 = vmatpush1.xpose.msra.mxu0 0.0
        %4352 = vmatprep.subr.mxu0 0.0
        %4353 = vmatpush1.xpose.msra.mxu0 0.0
        %4354 = vmatprep.subr.mxu0 0.0
        %4355 = vmatpush1.xpose.msra.mxu0 0.0
        %4356 = vmatprep.subr.mxu0 0.0
        %4357 = vmatpush1.xpose.msra.mxu0 0.0
        %4358 = vmatprep.subr.mxu0 0.0
        %4359 = vmatpush1.xpose.msra.mxu0 0.0
        %4360 = vmatprep.subr.mxu0 0.0
        %4361 = vmatpush1.xpose.msra.mxu0 0.0
        %4362 = vmatprep.subr.mxu0 0.0
        %4363 = vmatpush1.xpose.msra.mxu0 0.0
        %4364 = vmatprep.subr.mxu0 0.0
        %4365 = vmatpush1.xpose.msra.mxu0 0.0
        %4366 = vmatprep.subr.mxu0 0.0
        %4367 = vmatpush1.xpose.msra.mxu0 0.0
        %4368 = vmatprep.subr.mxu0 0.0
        %4369 = vmatpush1.xpose.msra.mxu0 %v4336
        %4370 = vmatprep.subr.mxu0 0.0
        %4371 = vmatpush2.xpose.msra.mxu0 0.0
        %4372 = vmatprep.subr.mxu0 0.0
        %4373 = vmatpush2.xpose.msra.mxu0 0.0
        %4374 = vmatprep.subr.mxu0 0.0
        %4375 = vmatpush2.xpose.msra.mxu0 0.0
        %4376 = vmatprep.subr.mxu0 0.0
        %4377 = vmatpush2.xpose.msra.mxu0 0.0
        %4378 = vmatprep.subr.mxu0 0.0
        %4379 = vmatpush2.xpose.msra.mxu0 0.0
        %4380 = vmatprep.subr.mxu0 0.0
        %4381 = vmatpush2.xpose.msra.mxu0 0.0
        %4382 = vmatprep.subr.mxu0 0.0
        %4383 = vmatpush2.xpose.msra.mxu0 0.0
        %4384 = vmatprep.subr.mxu0 0.0
        %4385 = vmatpush2.xpose.msra.mxu0 0.0
        %4386 = vmatprep.subr.mxu0 0.0
        %4387 = vmatpush2.xpose.msra.mxu0 0.0
        %4388 = vmatprep.subr.mxu0 0.0
        %4389 = vmatpush2.xpose.msra.mxu0 0.0
        %4390 = vmatprep.subr.mxu0 0.0
        %4391 = vmatpush2.xpose.msra.mxu0 0.0
        %4392 = vmatprep.subr.mxu0 0.0
        %4393 = vmatpush2.xpose.msra.mxu0 0.0
        %4394 = vmatprep.subr.mxu0 0.0
        %4395 = vmatpush2.xpose.msra.mxu0 0.0
        %4396 = vmatprep.subr.mxu0 0.0
        %4397 = vmatpush2.xpose.msra.mxu0 0.0
        %4398 = vmatprep.subr.mxu0 0.0
        %4399 = vmatpush2.xpose.msra.mxu0 0.0
        %4400 = vmatprep.subr.mxu0 0.0
        %4401 = vmatpush2.xpose.msra.mxu0 0.0
        %4402 = vmatprep.mubr.f32.mxu0 0.0
        %4403 = vmatmul.mubr.f32.gmra.mxu0 %v4334
        %v4404 = vpop.f32.mrf.mxu0
        %v4405 = vadd.f32 %v3074, %v4404
        %v4406 = vpop.f32.mrf.mxu0
        %4407 = vdwg.mxu0
        %v4408 = vsel %vm1421, %v4405, -inf
        %4409 = vmax.xlane.f32.xlu0 %v4408
        %v4410 = vpop.xlane.xlu0 %4409
        %v4411 = vsub.f32 %v4405, %v4410
        %v4412 = vmul.f32 %v4411, 1.442695
        %v4413 = vpow.pop %v4412
        %v4414 = vsel %vm1421, %v4413, 0.0
        %4415 = vadd.xlane.f32.xlu0 %v4414
        %v4416 = vpop.xlane.xlu0 %4415
        %v4417 = vrcp.pop %v4416
        %v4418 = vmul.f32 %v4413, %v4417
        %4419 = vrot.lane.b32.xlu0 %v1318, 32
        %v4420 = vpop.permute.xlu0 %4419
        %v4423 = vsel %vm1421, %v4418, 0
        %4425 = vmatprep.subr.mxu0 0.0
        %4426 = vmatpush1.msra.mxu0 0.0
        %4427 = vmatprep.subr.mxu0 0.0
        %4428 = vmatpush1.msra.mxu0 0.0
        %4429 = vmatprep.subr.mxu0 0.0
        %4430 = vmatpush1.msra.mxu0 0.0
        %4431 = vmatprep.subr.mxu0 0.0
        %4432 = vmatpush1.msra.mxu0 0.0
        %4433 = vmatprep.subr.mxu0 0.0
        %4434 = vmatpush1.msra.mxu0 0.0
        %4435 = vmatprep.subr.mxu0 0.0
        %4436 = vmatpush1.msra.mxu0 0.0
        %4437 = vmatprep.subr.mxu0 0.0
        %4438 = vmatpush1.msra.mxu0 0.0
        %4439 = vmatprep.subr.mxu0 0.0
        %4440 = vmatpush1.msra.mxu0 0.0
        %4441 = vmatprep.subr.mxu0 0.0
        %4442 = vmatpush1.msra.mxu0 0.0
        %4443 = vmatprep.subr.mxu0 0.0
        %4444 = vmatpush1.msra.mxu0 0.0
        %4445 = vmatprep.subr.mxu0 0.0
        %4446 = vmatpush1.msra.mxu0 0.0
        %4447 = vmatprep.subr.mxu0 0.0
        %4448 = vmatpush1.msra.mxu0 0.0
        %4449 = vmatprep.subr.mxu0 0.0
        %4450 = vmatpush1.msra.mxu0 0.0
        %4451 = vmatprep.subr.mxu0 0.0
        %4452 = vmatpush1.msra.mxu0 0.0
        %4453 = vmatprep.subr.mxu0 0.0
        %4454 = vmatpush1.msra.mxu0 0.0
        %4455 = vmatprep.subr.mxu0 0.0
        %4456 = vmatpush1.msra.mxu0 %v4420
        %4457 = vmatprep.subr.mxu0 0.0
        %4458 = vmatpush2.msra.mxu0 0.0
        %4459 = vmatprep.subr.mxu0 0.0
        %4460 = vmatpush2.msra.mxu0 0.0
        %4461 = vmatprep.subr.mxu0 0.0
        %4462 = vmatpush2.msra.mxu0 0.0
        %4463 = vmatprep.subr.mxu0 0.0
        %4464 = vmatpush2.msra.mxu0 0.0
        %4465 = vmatprep.subr.mxu0 0.0
        %4466 = vmatpush2.msra.mxu0 0.0
        %4467 = vmatprep.subr.mxu0 0.0
        %4468 = vmatpush2.msra.mxu0 0.0
        %4469 = vmatprep.subr.mxu0 0.0
        %4470 = vmatpush2.msra.mxu0 0.0
        %4471 = vmatprep.subr.mxu0 0.0
        %4472 = vmatpush2.msra.mxu0 0.0
        %4473 = vmatprep.subr.mxu0 0.0
        %4474 = vmatpush2.msra.mxu0 0.0
        %4475 = vmatprep.subr.mxu0 0.0
        %4476 = vmatpush2.msra.mxu0 0.0
        %4477 = vmatprep.subr.mxu0 0.0
        %4478 = vmatpush2.msra.mxu0 0.0
        %4479 = vmatprep.subr.mxu0 0.0
        %4480 = vmatpush2.msra.mxu0 0.0
        %4481 = vmatprep.subr.mxu0 0.0
        %4482 = vmatpush2.msra.mxu0 0.0
        %4483 = vmatprep.subr.mxu0 0.0
        %4484 = vmatpush2.msra.mxu0 0.0
        %4485 = vmatprep.subr.mxu0 0.0
        %4486 = vmatpush2.msra.mxu0 0.0
        %4487 = vmatprep.subr.mxu0 0.0
        %4488 = vmatpush2.msra.mxu0 0.0
        %4489 = vmatprep.mubr.f32.mxu0 0.0
        %4490 = vmatmul.mubr.f32.gmra.mxu0 %v4423
        %v4491 = vpop.f32.mrf.mxu0
        %v4492 = vadd.f32 0.0, %v4491
        %v4493 = vpop.f32.mrf.mxu0
        %4494 = vdwg.mxu0
        %v4495 = vpack.c.bf16 %v4492, %v4492
        %v4497 = vsel %vm1344, %v4495, 0
        %4499 = vmatprep.subr.bf16.mxu0 0
        %4500 = vmatpush1.bf16.msra.mxu0 0
        %4501 = vmatprep.subr.bf16.mxu0 0
        %4502 = vmatpush1.bf16.msra.mxu0 0
        %4503 = vmatprep.subr.bf16.mxu0 0
        %4504 = vmatpush1.bf16.msra.mxu0 0
        %4505 = vmatprep.subr.bf16.mxu0 0
        %4506 = vmatpush1.bf16.msra.mxu0 0
        %4507 = vmatprep.subr.bf16.mxu0 0
        %4508 = vmatpush1.bf16.msra.mxu0 0
        %4509 = vmatprep.subr.bf16.mxu0 0
        %4510 = vmatpush1.bf16.msra.mxu0 0
        %4511 = vmatprep.subr.bf16.mxu0 0
        %4512 = vmatpush1.bf16.msra.mxu0 0
        %4513 = vmatprep.subr.bf16.mxu0 0
        %4514 = vmatpush1.bf16.msra.mxu0 %v2806
        %4515 = vmatprep.subr.bf16.mxu0 0
        %4516 = vmatpush2.bf16.msra.mxu0 0
        %4517 = vmatprep.subr.bf16.mxu0 0
        %4518 = vmatpush2.bf16.msra.mxu0 0
        %4519 = vmatprep.subr.bf16.mxu0 0
        %4520 = vmatpush2.bf16.msra.mxu0 0
        %4521 = vmatprep.subr.bf16.mxu0 0
        %4522 = vmatpush2.bf16.msra.mxu0 0
        %4523 = vmatprep.subr.bf16.mxu0 0
        %4524 = vmatpush2.bf16.msra.mxu0 0
        %4525 = vmatprep.subr.bf16.mxu0 0
        %4526 = vmatpush2.bf16.msra.mxu0 0
        %4527 = vmatprep.subr.bf16.mxu0 0
        %4528 = vmatpush2.bf16.msra.mxu0 0
        %4529 = vmatprep.subr.bf16.mxu0 0
        %4530 = vmatpush2.bf16.msra.mxu0 0
        %4531 = vmatprep.mubr.bf16.mxu0 0
        %4532 = vmatmul.mubr.bf16.gmra.mxu0 %v4497
        %v4533 = vpop.f32.mrf.mxu0
        %v4534 = vadd.f32 0.0, %v4533
        %v4535 = vpop.f32.mrf.mxu0
        %v4536 = vpop.f32.mrf.mxu0
        %v4537 = vpop.f32.mrf.mxu0
        %4538 = vdwg.mxu0
        %v4539 = vadd.f32 %v4329, %v4534
        %4540 = vrot.lane.b32.xlu0 %v3075, 16
        %v4541 = vpop.permute.xlu0 %4540
        %4542 = vrot.lane.b32.xlu0 %v1278, 16
        %v4543 = vpop.permute.xlu0 %4542
        %v4544 = vsel %vm1344, %v4541, 0
        %v4546 = vsel %vm1344, %v4543, 0
        %4548 = vmatprep.subr.mxu0 0.0
        %4549 = vmatpush1.xpose.msra.mxu0 0.0
        %4550 = vmatprep.subr.mxu0 0.0
        %4551 = vmatpush1.xpose.msra.mxu0 0.0
        %4552 = vmatprep.subr.mxu0 0.0
        %4553 = vmatpush1.xpose.msra.mxu0 0.0
        %4554 = vmatprep.subr.mxu0 0.0
        %4555 = vmatpush1.xpose.msra.mxu0 0.0
        %4556 = vmatprep.subr.mxu0 0.0
        %4557 = vmatpush1.xpose.msra.mxu0 0.0
        %4558 = vmatprep.subr.mxu0 0.0
        %4559 = vmatpush1.xpose.msra.mxu0 0.0
        %4560 = vmatprep.subr.mxu0 0.0
        %4561 = vmatpush1.xpose.msra.mxu0 0.0
        %4562 = vmatprep.subr.mxu0 0.0
        %4563 = vmatpush1.xpose.msra.mxu0 0.0
        %4564 = vmatprep.subr.mxu0 0.0
        %4565 = vmatpush1.xpose.msra.mxu0 0.0
        %4566 = vmatprep.subr.mxu0 0.0
        %4567 = vmatpush1.xpose.msra.mxu0 0.0
        %4568 = vmatprep.subr.mxu0 0.0
        %4569 = vmatpush1.xpose.msra.mxu0 0.0
        %4570 = vmatprep.subr.mxu0 0.0
        %4571 = vmatpush1.xpose.msra.mxu0 0.0
        %4572 = vmatprep.subr.mxu0 0.0
        %4573 = vmatpush1.xpose.msra.mxu0 0.0
        %4574 = vmatprep.subr.mxu0 0.0
        %4575 = vmatpush1.xpose.msra.mxu0 0.0
        %4576 = vmatprep.subr.mxu0 0.0
        %4577 = vmatpush1.xpose.msra.mxu0 0.0
        %4578 = vmatprep.subr.mxu0 0.0
        %4579 = vmatpush1.xpose.msra.mxu0 %v4546
        %4580 = vmatprep.subr.mxu0 0.0
        %4581 = vmatpush2.xpose.msra.mxu0 0.0
        %4582 = vmatprep.subr.mxu0 0.0
        %4583 = vmatpush2.xpose.msra.mxu0 0.0
        %4584 = vmatprep.subr.mxu0 0.0
        %4585 = vmatpush2.xpose.msra.mxu0 0.0
        %4586 = vmatprep.subr.mxu0 0.0
        %4587 = vmatpush2.xpose.msra.mxu0 0.0
        %4588 = vmatprep.subr.mxu0 0.0
        %4589 = vmatpush2.xpose.msra.mxu0 0.0
        %4590 = vmatprep.subr.mxu0 0.0
        %4591 = vmatpush2.xpose.msra.mxu0 0.0
        %4592 = vmatprep.subr.mxu0 0.0
        %4593 = vmatpush2.xpose.msra.mxu0 0.0
        %4594 = vmatprep.subr.mxu0 0.0
        %4595 = vmatpush2.xpose.msra.mxu0 0.0
        %4596 = vmatprep.subr.mxu0 0.0
        %4597 = vmatpush2.xpose.msra.mxu0 0.0
        %4598 = vmatprep.subr.mxu0 0.0
        %4599 = vmatpush2.xpose.msra.mxu0 0.0
        %4600 = vmatprep.subr.mxu0 0.0
        %4601 = vmatpush2.xpose.msra.mxu0 0.0
        %4602 = vmatprep.subr.mxu0 0.0
        %4603 = vmatpush2.xpose.msra.mxu0 0.0
        %4604 = vmatprep.subr.mxu0 0.0
        %4605 = vmatpush2.xpose.msra.mxu0 0.0
        %4606 = vmatprep.subr.mxu0 0.0
        %4607 = vmatpush2.xpose.msra.mxu0 0.0
        %4608 = vmatprep.subr.mxu0 0.0
        %4609 = vmatpush2.xpose.msra.mxu0 0.0
        %4610 = vmatprep.subr.mxu0 0.0
        %4611 = vmatpush2.xpose.msra.mxu0 0.0
        %4612 = vmatprep.mubr.f32.mxu0 0.0
        %4613 = vmatmul.mubr.f32.gmra.mxu0 %v4544
        %v4614 = vpop.f32.mrf.mxu0
        %v4615 = vadd.f32 %v3074, %v4614
        %v4616 = vpop.f32.mrf.mxu0
        %4617 = vdwg.mxu0
        %v4618 = vsel %vm1421, %v4615, -inf
        %4619 = vmax.xlane.f32.xlu0 %v4618
        %v4620 = vpop.xlane.xlu0 %4619
        %v4621 = vsub.f32 %v4615, %v4620
        %v4622 = vmul.f32 %v4621, 1.442695
        %v4623 = vpow.pop %v4622
        %v4624 = vsel %vm1421, %v4623, 0.0
        %4625 = vadd.xlane.f32.xlu0 %v4624
        %v4626 = vpop.xlane.xlu0 %4625
        %v4627 = vrcp.pop %v4626
        %v4628 = vmul.f32 %v4623, %v4627
        %4629 = vrot.lane.b32.xlu0 %v1318, 16
        %v4630 = vpop.permute.xlu0 %4629
        %v4633 = vsel %vm1421, %v4628, 0
        %4635 = vmatprep.subr.mxu0 0.0
        %4636 = vmatpush1.msra.mxu0 0.0
        %4637 = vmatprep.subr.mxu0 0.0
        %4638 = vmatpush1.msra.mxu0 0.0
        %4639 = vmatprep.subr.mxu0 0.0
        %4640 = vmatpush1.msra.mxu0 0.0
        %4641 = vmatprep.subr.mxu0 0.0
        %4642 = vmatpush1.msra.mxu0 0.0
        %4643 = vmatprep.subr.mxu0 0.0
        %4644 = vmatpush1.msra.mxu0 0.0
        %4645 = vmatprep.subr.mxu0 0.0
        %4646 = vmatpush1.msra.mxu0 0.0
        %4647 = vmatprep.subr.mxu0 0.0
        %4648 = vmatpush1.msra.mxu0 0.0
        %4649 = vmatprep.subr.mxu0 0.0
        %4650 = vmatpush1.msra.mxu0 0.0
        %4651 = vmatprep.subr.mxu0 0.0
        %4652 = vmatpush1.msra.mxu0 0.0
        %4653 = vmatprep.subr.mxu0 0.0
        %4654 = vmatpush1.msra.mxu0 0.0
        %4655 = vmatprep.subr.mxu0 0.0
        %4656 = vmatpush1.msra.mxu0 0.0
        %4657 = vmatprep.subr.mxu0 0.0
        %4658 = vmatpush1.msra.mxu0 0.0
        %4659 = vmatprep.subr.mxu0 0.0
        %4660 = vmatpush1.msra.mxu0 0.0
        %4661 = vmatprep.subr.mxu0 0.0
        %4662 = vmatpush1.msra.mxu0 0.0
        %4663 = vmatprep.subr.mxu0 0.0
        %4664 = vmatpush1.msra.mxu0 0.0
        %4665 = vmatprep.subr.mxu0 0.0
        %4666 = vmatpush1.msra.mxu0 %v4630
        %4667 = vmatprep.subr.mxu0 0.0
        %4668 = vmatpush2.msra.mxu0 0.0
        %4669 = vmatprep.subr.mxu0 0.0
        %4670 = vmatpush2.msra.mxu0 0.0
        %4671 = vmatprep.subr.mxu0 0.0
        %4672 = vmatpush2.msra.mxu0 0.0
        %4673 = vmatprep.subr.mxu0 0.0
        %4674 = vmatpush2.msra.mxu0 0.0
        %4675 = vmatprep.subr.mxu0 0.0
        %4676 = vmatpush2.msra.mxu0 0.0
        %4677 = vmatprep.subr.mxu0 0.0
        %4678 = vmatpush2.msra.mxu0 0.0
        %4679 = vmatprep.subr.mxu0 0.0
        %4680 = vmatpush2.msra.mxu0 0.0
        %4681 = vmatprep.subr.mxu0 0.0
        %4682 = vmatpush2.msra.mxu0 0.0
        %4683 = vmatprep.subr.mxu0 0.0
        %4684 = vmatpush2.msra.mxu0 0.0
        %4685 = vmatprep.subr.mxu0 0.0
        %4686 = vmatpush2.msra.mxu0 0.0
        %4687 = vmatprep.subr.mxu0 0.0
        %4688 = vmatpush2.msra.mxu0 0.0
        %4689 = vmatprep.subr.mxu0 0.0
        %4690 = vmatpush2.msra.mxu0 0.0
        %4691 = vmatprep.subr.mxu0 0.0
        %4692 = vmatpush2.msra.mxu0 0.0
        %4693 = vmatprep.subr.mxu0 0.0
        %4694 = vmatpush2.msra.mxu0 0.0
        %4695 = vmatprep.subr.mxu0 0.0
        %4696 = vmatpush2.msra.mxu0 0.0
        %4697 = vmatprep.subr.mxu0 0.0
        %4698 = vmatpush2.msra.mxu0 0.0
        %4699 = vmatprep.mubr.f32.mxu0 0.0
        %4700 = vmatmul.mubr.f32.gmra.mxu0 %v4633
        %v4701 = vpop.f32.mrf.mxu0
        %v4702 = vadd.f32 0.0, %v4701
        %v4703 = vpop.f32.mrf.mxu0
        %4704 = vdwg.mxu0
        %v4705 = vpack.c.bf16 %v4702, %v4702
        %v4707 = vsel %vm1344, %v4705, 0
        %4709 = vmatprep.subr.bf16.mxu0 0
        %4710 = vmatpush1.bf16.msra.mxu0 0
        %4711 = vmatprep.subr.bf16.mxu0 0
        %4712 = vmatpush1.bf16.msra.mxu0 0
        %4713 = vmatprep.subr.bf16.mxu0 0
        %4714 = vmatpush1.bf16.msra.mxu0 0
        %4715 = vmatprep.subr.bf16.mxu0 0
        %4716 = vmatpush1.bf16.msra.mxu0 0
        %4717 = vmatprep.subr.bf16.mxu0 0
        %4718 = vmatpush1.bf16.msra.mxu0 0
        %4719 = vmatprep.subr.bf16.mxu0 0
        %4720 = vmatpush1.bf16.msra.mxu0 0
        %4721 = vmatprep.subr.bf16.mxu0 0
        %4722 = vmatpush1.bf16.msra.mxu0 0
        %4723 = vmatprep.subr.bf16.mxu0 0
        %4724 = vmatpush1.bf16.msra.mxu0 %v3022
        %4725 = vmatprep.subr.bf16.mxu0 0
        %4726 = vmatpush2.bf16.msra.mxu0 0
        %4727 = vmatprep.subr.bf16.mxu0 0
        %4728 = vmatpush2.bf16.msra.mxu0 0
        %4729 = vmatprep.subr.bf16.mxu0 0
        %4730 = vmatpush2.bf16.msra.mxu0 0
        %4731 = vmatprep.subr.bf16.mxu0 0
        %4732 = vmatpush2.bf16.msra.mxu0 0
        %4733 = vmatprep.subr.bf16.mxu0 0
        %4734 = vmatpush2.bf16.msra.mxu0 0
        %4735 = vmatprep.subr.bf16.mxu0 0
        %4736 = vmatpush2.bf16.msra.mxu0 0
        %4737 = vmatprep.subr.bf16.mxu0 0
        %4738 = vmatpush2.bf16.msra.mxu0 0
        %4739 = vmatprep.subr.bf16.mxu0 0
        %4740 = vmatpush2.bf16.msra.mxu0 0
        %4741 = vmatprep.mubr.bf16.mxu0 0
        %4742 = vmatmul.mubr.bf16.gmra.mxu0 %v4707
        %v4743 = vpop.f32.mrf.mxu0
        %v4744 = vadd.f32 0.0, %v4743
        %v4745 = vpop.f32.mrf.mxu0
        %v4746 = vpop.f32.mrf.mxu0
        %v4747 = vpop.f32.mrf.mxu0
        %4748 = vdwg.mxu0
        %v4749 = vadd.f32 %v4539, %v4744
        %4750 = vst [vmem:[#allocation3 + $0x8] sm:$0xff] %v4749
        %v4751 = vld [vmem:[#allocation3] sm:$0xff]
        %v4752 = vld [vmem:[#allocation3 + $0x8] sm:$0xff]
        %v4753 = vld [vmem:[%s871] sm:$0x1]
        %v4755 = vlaneseq
        %v4756 = vshrl.u32 %v4755, 7
        %v4757 = vsub.s32 0, %v4756
        %v4758 = vrot.slane %v4753, %v4757
        %v4760 = vadd.f32 %v4751, %v4758
        %v4761 = vadd.f32 %v4752, %v4758
        %v4762 = vadd.f32 %v1056, %v4760
        %v4763 = vadd.f32 %v1057, %v4761
        %v4764 = vld [vmem:[%s879] sm:$0x1]
        %v4765 = vld [vmem:[%s887] sm:$0x1]
        %4766 = vadd.xlane.f32.xlu0 %v4762
        %v4767 = vpop.xlane.xlu0 %4766
        %4768 = vadd.xlane.f32.xlu0 %v4763
        %v4769 = vpop.xlane.xlu0 %4768
        %v4770 = vrcp.pop 128.0
        %v4771 = vmul.f32 %v4767, %v4770
        %v4772 = vmul.f32 %v4769, %v4770
        %v4773 = vsub.f32 %v4762, %v4771
        %v4774 = vsub.f32 %v4763, %v4772
        %v4775 = vmul.f32 %v4773, %v4773
        %v4776 = vmul.f32 %v4774, %v4774
        %4777 = vadd.xlane.f32.xlu0 %v4775
        %v4778 = vpop.xlane.xlu0 %4777
        %4779 = vadd.xlane.f32.xlu0 %v4776
        %v4780 = vpop.xlane.xlu0 %4779
        %v4781 = vmul.f32 %v4778, %v4770
        %v4782 = vmul.f32 %v4780, %v4770
        %v4783 = vadd.f32 %v4781, 1e-05
        %v4784 = vadd.f32 %v4782, 1e-05
        %v4785 = vrsqrt.pop %v4783
        %v4786 = vrsqrt.pop %v4784
        %v4787 = vmul.f32 %v4773, %v4785
        %v4788 = vmul.f32 %v4774, %v4786
        %v4790 = vlaneseq
        %v4791 = vshrl.u32 %v4790, 7
        %v4792 = vsub.s32 0, %v4791
        %v4793 = vrot.slane %v4764, %v4792
        %v4795 = vmul.f32 %v4787, %v4793
        %v4796 = vmul.f32 %v4788, %v4793
        %v4798 = vlaneseq
        %v4799 = vshrl.u32 %v4798, 7
        %v4800 = vsub.s32 0, %v4799
        %v4801 = vrot.slane %v4765, %v4800
        %v4803 = vadd.f32 %v4795, %v4801
        %v4804 = vadd.f32 %v4796, %v4801
        %v4805 = vpack.c.bf16 %v4804, %v4803
        %v4806 = vld [vmem:[%s896] sm:$0xff]
        %v4807 = vld [vmem:[%s896 + $0x8] sm:$0xff]
        %v4808 = vld [vmem:[%s896 + $0x10] sm:$0xff]
        %v4809 = vld [vmem:[%s896 + $0x18] sm:$0xff]
        %v4810 = vld [vmem:[%s896 + $0x20] sm:$0xff]
        %v4811 = vld [vmem:[%s896 + $0x28] sm:$0xff]
        %v4812 = vld [vmem:[%s896 + $0x30] sm:$0xff]
        %v4813 = vld [vmem:[%s896 + $0x38] sm:$0xff]
        %v4814 = vld [vmem:[%s896 + $0x40] sm:$0xff]
        %v4815 = vld [vmem:[%s896 + $0x48] sm:$0xff]
        %v4816 = vld [vmem:[%s896 + $0x50] sm:$0xff]
        %v4817 = vld [vmem:[%s896 + $0x58] sm:$0xff]
        %v4818 = vld [vmem:[%s896 + $0x60] sm:$0xff]
        %v4819 = vld [vmem:[%s896 + $0x68] sm:$0xff]
        %v4820 = vld [vmem:[%s896 + $0x70] sm:$0xff]
        %v4821 = vld [vmem:[%s896 + $0x78] sm:$0xff]
        %v4822 = vld [vmem:[%s896 + $0x80] sm:$0xff]
        %v4823 = vld [vmem:[%s896 + $0x88] sm:$0xff]
        %v4824 = vld [vmem:[%s896 + $0x90] sm:$0xff]
        %v4825 = vld [vmem:[%s896 + $0x98] sm:$0xff]
        %v4826 = vld [vmem:[%s896 + $0xa0] sm:$0xff]
        %v4827 = vld [vmem:[%s896 + $0xa8] sm:$0xff]
        %v4828 = vld [vmem:[%s896 + $0xb0] sm:$0xff]
        %v4829 = vld [vmem:[%s896 + $0xb8] sm:$0xff]
        %v4830 = vld [vmem:[%s896 + $0xc0] sm:$0xff]
        %v4831 = vld [vmem:[%s896 + $0xc8] sm:$0xff]
        %v4832 = vld [vmem:[%s896 + $0xd0] sm:$0xff]
        %v4833 = vld [vmem:[%s896 + $0xd8] sm:$0xff]
        %v4834 = vld [vmem:[%s896 + $0xe0] sm:$0xff]
        %v4835 = vld [vmem:[%s896 + $0xe8] sm:$0xff]
        %v4836 = vld [vmem:[%s896 + $0xf0] sm:$0xff]
        %v4837 = vld [vmem:[%s896 + $0xf8] sm:$0xff]
        %v4838 = vld [vmem:[%s896 + $0x100] sm:$0xff]
        %v4839 = vld [vmem:[%s896 + $0x108] sm:$0xff]
        %v4840 = vld [vmem:[%s896 + $0x110] sm:$0xff]
        %v4841 = vld [vmem:[%s896 + $0x118] sm:$0xff]
        %v4842 = vld [vmem:[%s896 + $0x120] sm:$0xff]
        %v4843 = vld [vmem:[%s896 + $0x128] sm:$0xff]
        %v4844 = vld [vmem:[%s896 + $0x130] sm:$0xff]
        %v4845 = vld [vmem:[%s896 + $0x138] sm:$0xff]
        %v4846 = vld [vmem:[%s896 + $0x140] sm:$0xff]
        %v4847 = vld [vmem:[%s896 + $0x148] sm:$0xff]
        %v4848 = vld [vmem:[%s896 + $0x150] sm:$0xff]
        %v4849 = vld [vmem:[%s896 + $0x158] sm:$0xff]
        %v4850 = vld [vmem:[%s896 + $0x160] sm:$0xff]
        %v4851 = vld [vmem:[%s896 + $0x168] sm:$0xff]
        %v4852 = vld [vmem:[%s896 + $0x170] sm:$0xff]
        %v4853 = vld [vmem:[%s896 + $0x178] sm:$0xff]
        %v4854 = vld [vmem:[%s896 + $0x180] sm:$0xff]
        %v4855 = vld [vmem:[%s896 + $0x188] sm:$0xff]
        %v4856 = vld [vmem:[%s896 + $0x190] sm:$0xff]
        %v4857 = vld [vmem:[%s896 + $0x198] sm:$0xff]
        %v4858 = vld [vmem:[%s896 + $0x1a0] sm:$0xff]
        %v4859 = vld [vmem:[%s896 + $0x1a8] sm:$0xff]
        %v4860 = vld [vmem:[%s896 + $0x1b0] sm:$0xff]
        %v4861 = vld [vmem:[%s896 + $0x1b8] sm:$0xff]
        %v4862 = vld [vmem:[%s896 + $0x1c0] sm:$0xff]
        %v4863 = vld [vmem:[%s896 + $0x1c8] sm:$0xff]
        %v4864 = vld [vmem:[%s896 + $0x1d0] sm:$0xff]
        %v4865 = vld [vmem:[%s896 + $0x1d8] sm:$0xff]
        %v4866 = vld [vmem:[%s896 + $0x1e0] sm:$0xff]
        %v4867 = vld [vmem:[%s896 + $0x1e8] sm:$0xff]
        %v4868 = vld [vmem:[%s896 + $0x1f0] sm:$0xff]
        %v4869 = vld [vmem:[%s896 + $0x1f8] sm:$0xff]
        %v4870 = vld [vmem:[%s896 + $0x200] sm:$0xff]
        %v4871 = vld [vmem:[%s896 + $0x208] sm:$0xff]
        %v4872 = vld [vmem:[%s896 + $0x210] sm:$0xff]
        %v4873 = vld [vmem:[%s896 + $0x218] sm:$0xff]
        %v4874 = vld [vmem:[%s896 + $0x220] sm:$0xff]
        %v4875 = vld [vmem:[%s896 + $0x228] sm:$0xff]
        %v4876 = vld [vmem:[%s896 + $0x230] sm:$0xff]
        %v4877 = vld [vmem:[%s896 + $0x238] sm:$0xff]
        %v4878 = vld [vmem:[%s896 + $0x240] sm:$0xff]
        %v4879 = vld [vmem:[%s896 + $0x248] sm:$0xff]
        %v4880 = vld [vmem:[%s896 + $0x250] sm:$0xff]
        %v4881 = vld [vmem:[%s896 + $0x258] sm:$0xff]
        %v4882 = vld [vmem:[%s896 + $0x260] sm:$0xff]
        %v4883 = vld [vmem:[%s896 + $0x268] sm:$0xff]
        %v4884 = vld [vmem:[%s896 + $0x270] sm:$0xff]
        %v4885 = vld [vmem:[%s896 + $0x278] sm:$0xff]
        %v4886 = vld [vmem:[%s896 + $0x280] sm:$0xff]
        %v4887 = vld [vmem:[%s896 + $0x288] sm:$0xff]
        %v4888 = vld [vmem:[%s896 + $0x290] sm:$0xff]
        %v4889 = vld [vmem:[%s896 + $0x298] sm:$0xff]
        %v4890 = vld [vmem:[%s896 + $0x2a0] sm:$0xff]
        %v4891 = vld [vmem:[%s896 + $0x2a8] sm:$0xff]
        %v4892 = vld [vmem:[%s896 + $0x2b0] sm:$0xff]
        %v4893 = vld [vmem:[%s896 + $0x2b8] sm:$0xff]
        %v4894 = vld [vmem:[%s896 + $0x2c0] sm:$0xff]
        %v4895 = vld [vmem:[%s896 + $0x2c8] sm:$0xff]
        %v4896 = vld [vmem:[%s896 + $0x2d0] sm:$0xff]
        %v4897 = vld [vmem:[%s896 + $0x2d8] sm:$0xff]
        %v4898 = vld [vmem:[%s896 + $0x2e0] sm:$0xff]
        %v4899 = vld [vmem:[%s896 + $0x2e8] sm:$0xff]
        %v4900 = vld [vmem:[%s896 + $0x2f0] sm:$0xff]
        %v4901 = vld [vmem:[%s896 + $0x2f8] sm:$0xff]
        %v4902 = vld [vmem:[%s896 + $0x300] sm:$0xff]
        %v4903 = vld [vmem:[%s896 + $0x308] sm:$0xff]
        %v4904 = vld [vmem:[%s896 + $0x310] sm:$0xff]
        %v4905 = vld [vmem:[%s896 + $0x318] sm:$0xff]
        %v4906 = vld [vmem:[%s896 + $0x320] sm:$0xff]
        %v4907 = vld [vmem:[%s896 + $0x328] sm:$0xff]
        %v4908 = vld [vmem:[%s896 + $0x330] sm:$0xff]
        %v4909 = vld [vmem:[%s896 + $0x338] sm:$0xff]
        %v4910 = vld [vmem:[%s896 + $0x340] sm:$0xff]
        %v4911 = vld [vmem:[%s896 + $0x348] sm:$0xff]
        %v4912 = vld [vmem:[%s896 + $0x350] sm:$0xff]
        %v4913 = vld [vmem:[%s896 + $0x358] sm:$0xff]
        %v4914 = vld [vmem:[%s896 + $0x360] sm:$0xff]
        %v4915 = vld [vmem:[%s896 + $0x368] sm:$0xff]
        %v4916 = vld [vmem:[%s896 + $0x370] sm:$0xff]
        %v4917 = vld [vmem:[%s896 + $0x378] sm:$0xff]
        %v4918 = vld [vmem:[%s896 + $0x380] sm:$0xff]
        %v4919 = vld [vmem:[%s896 + $0x388] sm:$0xff]
        %v4920 = vld [vmem:[%s896 + $0x390] sm:$0xff]
        %v4921 = vld [vmem:[%s896 + $0x398] sm:$0xff]
        %v4922 = vld [vmem:[%s896 + $0x3a0] sm:$0xff]
        %v4923 = vld [vmem:[%s896 + $0x3a8] sm:$0xff]
        %v4924 = vld [vmem:[%s896 + $0x3b0] sm:$0xff]
        %v4925 = vld [vmem:[%s896 + $0x3b8] sm:$0xff]
        %v4926 = vld [vmem:[%s896 + $0x3c0] sm:$0xff]
        %v4927 = vld [vmem:[%s896 + $0x3c8] sm:$0xff]
        %v4928 = vld [vmem:[%s896 + $0x3d0] sm:$0xff]
        %v4929 = vld [vmem:[%s896 + $0x3d8] sm:$0xff]
        %v4930 = vld [vmem:[%s896 + $0x3e0] sm:$0xff]
        %v4931 = vld [vmem:[%s896 + $0x3e8] sm:$0xff]
        %v4932 = vld [vmem:[%s896 + $0x3f0] sm:$0xff]
        %v4933 = vld [vmem:[%s896 + $0x3f8] sm:$0xff]
        %v4934 = vld [vmem:[%s905] sm:$0xff]
        %v4935 = vld [vmem:[%s905 + $0x8] sm:$0xff]
        %v4938 = vlaneseq
        %v4939 = vshrl.u32 %v4938, 7
        %v4940 = vsub.s32 0, %v4939
        %v4941 = vrot.slane %v4934, %v4940
        %v4942 = vlaneseq
        %v4943 = vshrl.u32 %v4942, 7
        %v4944 = vsub.s32 1, %v4943
        %v4945 = vrot.slane %v4934, %v4944
        %v4946 = vlaneseq
        %v4947 = vshrl.u32 %v4946, 7
        %v4948 = vsub.s32 2, %v4947
        %v4949 = vrot.slane %v4934, %v4948
        %v4950 = vlaneseq
        %v4951 = vshrl.u32 %v4950, 7
        %v4952 = vsub.s32 3, %v4951
        %v4953 = vrot.slane %v4934, %v4952
        %v4954 = vlaneseq
        %v4955 = vshrl.u32 %v4954, 7
        %v4956 = vsub.s32 4, %v4955
        %v4957 = vrot.slane %v4934, %v4956
        %v4958 = vlaneseq
        %v4959 = vshrl.u32 %v4958, 7
        %v4960 = vsub.s32 5, %v4959
        %v4961 = vrot.slane %v4934, %v4960
        %v4962 = vlaneseq
        %v4963 = vshrl.u32 %v4962, 7
        %v4964 = vsub.s32 6, %v4963
        %v4965 = vrot.slane %v4934, %v4964
        %v4966 = vlaneseq
        %v4967 = vshrl.u32 %v4966, 7
        %v4968 = vsub.s32 7, %v4967
        %v4969 = vrot.slane %v4934, %v4968
        %v4970 = vlaneseq
        %v4971 = vshrl.u32 %v4970, 7
        %v4972 = vsub.s32 0, %v4971
        %v4973 = vrot.slane %v4935, %v4972
        %v4974 = vlaneseq
        %v4975 = vshrl.u32 %v4974, 7
        %v4976 = vsub.s32 1, %v4975
        %v4977 = vrot.slane %v4935, %v4976
        %v4978 = vlaneseq
        %v4979 = vshrl.u32 %v4978, 7
        %v4980 = vsub.s32 2, %v4979
        %v4981 = vrot.slane %v4935, %v4980
        %v4982 = vlaneseq
        %v4983 = vshrl.u32 %v4982, 7
        %v4984 = vsub.s32 3, %v4983
        %v4985 = vrot.slane %v4935, %v4984
        %v4986 = vlaneseq
        %v4987 = vshrl.u32 %v4986, 7
        %v4988 = vsub.s32 4, %v4987
        %v4989 = vrot.slane %v4935, %v4988
        %v4990 = vlaneseq
        %v4991 = vshrl.u32 %v4990, 7
        %v4992 = vsub.s32 5, %v4991
        %v4993 = vrot.slane %v4935, %v4992
        %v4994 = vlaneseq
        %v4995 = vshrl.u32 %v4994, 7
        %v4996 = vsub.s32 6, %v4995
        %v4997 = vrot.slane %v4935, %v4996
        %v4998 = vlaneseq
        %v4999 = vshrl.u32 %v4998, 7
        %v5000 = vsub.s32 7, %v4999
        %v5001 = vrot.slane %v4935, %v5000
        %v5146 = vunpack.c.l.b16 %v4806
        %v5147 = vunpack.c.h.b16 %v4806
        %v5148 = vunpack.c.l.b16 %v4807
        %v5149 = vunpack.c.h.b16 %v4807
        %v5150 = vunpack.c.l.b16 %v4808
        %v5151 = vunpack.c.h.b16 %v4808
        %v5152 = vunpack.c.l.b16 %v4809
        %v5153 = vunpack.c.h.b16 %v4809
        %v5154 = vunpack.c.l.b16 %v4810
        %v5155 = vunpack.c.h.b16 %v4810
        %v5156 = vunpack.c.l.b16 %v4811
        %v5157 = vunpack.c.h.b16 %v4811
        %v5158 = vunpack.c.l.b16 %v4812
        %v5159 = vunpack.c.h.b16 %v4812
        %v5160 = vunpack.c.l.b16 %v4813
        %v5161 = vunpack.c.h.b16 %v4813
        %v5162 = vunpack.c.l.b16 %v4814
        %v5163 = vunpack.c.h.b16 %v4814
        %v5164 = vunpack.c.l.b16 %v4815
        %v5165 = vunpack.c.h.b16 %v4815
        %v5166 = vunpack.c.l.b16 %v4816
        %v5167 = vunpack.c.h.b16 %v4816
        %v5168 = vunpack.c.l.b16 %v4817
        %v5169 = vunpack.c.h.b16 %v4817
        %v5170 = vunpack.c.l.b16 %v4818
        %v5171 = vunpack.c.h.b16 %v4818
        %v5172 = vunpack.c.l.b16 %v4819
        %v5173 = vunpack.c.h.b16 %v4819
        %v5174 = vunpack.c.l.b16 %v4820
        %v5175 = vunpack.c.h.b16 %v4820
        %v5176 = vunpack.c.l.b16 %v4821
        %v5177 = vunpack.c.h.b16 %v4821
        %v5178 = vunpack.c.l.b16 %v4822
        %v5179 = vunpack.c.h.b16 %v4822
        %v5180 = vunpack.c.l.b16 %v4823
        %v5181 = vunpack.c.h.b16 %v4823
        %v5182 = vunpack.c.l.b16 %v4824
        %v5183 = vunpack.c.h.b16 %v4824
        %v5184 = vunpack.c.l.b16 %v4825
        %v5185 = vunpack.c.h.b16 %v4825
        %v5186 = vunpack.c.l.b16 %v4826
        %v5187 = vunpack.c.h.b16 %v4826
        %v5188 = vunpack.c.l.b16 %v4827
        %v5189 = vunpack.c.h.b16 %v4827
        %v5190 = vunpack.c.l.b16 %v4828
        %v5191 = vunpack.c.h.b16 %v4828
        %v5192 = vunpack.c.l.b16 %v4829
        %v5193 = vunpack.c.h.b16 %v4829
        %v5194 = vunpack.c.l.b16 %v4830
        %v5195 = vunpack.c.h.b16 %v4830
        %v5196 = vunpack.c.l.b16 %v4831
        %v5197 = vunpack.c.h.b16 %v4831
        %v5198 = vunpack.c.l.b16 %v4832
        %v5199 = vunpack.c.h.b16 %v4832
        %v5200 = vunpack.c.l.b16 %v4833
        %v5201 = vunpack.c.h.b16 %v4833
        %v5202 = vunpack.c.l.b16 %v4834
        %v5203 = vunpack.c.h.b16 %v4834
        %v5204 = vunpack.c.l.b16 %v4835
        %v5205 = vunpack.c.h.b16 %v4835
        %v5206 = vunpack.c.l.b16 %v4836
        %v5207 = vunpack.c.h.b16 %v4836
        %v5208 = vunpack.c.l.b16 %v4837
        %v5209 = vunpack.c.h.b16 %v4837
        %v5210 = vunpack.c.l.b16 %v4838
        %v5211 = vunpack.c.h.b16 %v4838
        %v5212 = vunpack.c.l.b16 %v4839
        %v5213 = vunpack.c.h.b16 %v4839
        %v5214 = vunpack.c.l.b16 %v4840
        %v5215 = vunpack.c.h.b16 %v4840
        %v5216 = vunpack.c.l.b16 %v4841
        %v5217 = vunpack.c.h.b16 %v4841
        %v5218 = vunpack.c.l.b16 %v4842
        %v5219 = vunpack.c.h.b16 %v4842
        %v5220 = vunpack.c.l.b16 %v4843
        %v5221 = vunpack.c.h.b16 %v4843
        %v5222 = vunpack.c.l.b16 %v4844
        %v5223 = vunpack.c.h.b16 %v4844
        %v5224 = vunpack.c.l.b16 %v4845
        %v5225 = vunpack.c.h.b16 %v4845
        %v5226 = vunpack.c.l.b16 %v4846
        %v5227 = vunpack.c.h.b16 %v4846
        %v5228 = vunpack.c.l.b16 %v4847
        %v5229 = vunpack.c.h.b16 %v4847
        %v5230 = vunpack.c.l.b16 %v4848
        %v5231 = vunpack.c.h.b16 %v4848
        %v5232 = vunpack.c.l.b16 %v4849
        %v5233 = vunpack.c.h.b16 %v4849
        %v5234 = vunpack.c.l.b16 %v4850
        %v5235 = vunpack.c.h.b16 %v4850
        %v5236 = vunpack.c.l.b16 %v4851
        %v5237 = vunpack.c.h.b16 %v4851
        %v5238 = vunpack.c.l.b16 %v4852
        %v5239 = vunpack.c.h.b16 %v4852
        %v5240 = vunpack.c.l.b16 %v4853
        %v5241 = vunpack.c.h.b16 %v4853
        %v5242 = vunpack.c.l.b16 %v4854
        %v5243 = vunpack.c.h.b16 %v4854
        %v5244 = vunpack.c.l.b16 %v4855
        %v5245 = vunpack.c.h.b16 %v4855
        %v5246 = vunpack.c.l.b16 %v4856
        %v5247 = vunpack.c.h.b16 %v4856
        %v5248 = vunpack.c.l.b16 %v4857
        %v5249 = vunpack.c.h.b16 %v4857
        %v5250 = vunpack.c.l.b16 %v4858
        %v5251 = vunpack.c.h.b16 %v4858
        %v5252 = vunpack.c.l.b16 %v4859
        %v5253 = vunpack.c.h.b16 %v4859
        %v5254 = vunpack.c.l.b16 %v4860
        %v5255 = vunpack.c.h.b16 %v4860
        %v5256 = vunpack.c.l.b16 %v4861
        %v5257 = vunpack.c.h.b16 %v4861
        %v5258 = vunpack.c.l.b16 %v4862
        %v5259 = vunpack.c.h.b16 %v4862
        %v5260 = vunpack.c.l.b16 %v4863
        %v5261 = vunpack.c.h.b16 %v4863
        %v5262 = vunpack.c.l.b16 %v4864
        %v5263 = vunpack.c.h.b16 %v4864
        %v5264 = vunpack.c.l.b16 %v4865
        %v5265 = vunpack.c.h.b16 %v4865
        %v5266 = vunpack.c.l.b16 %v4866
        %v5267 = vunpack.c.h.b16 %v4866
        %v5268 = vunpack.c.l.b16 %v4867
        %v5269 = vunpack.c.h.b16 %v4867
        %v5270 = vunpack.c.l.b16 %v4868
        %v5271 = vunpack.c.h.b16 %v4868
        %v5272 = vunpack.c.l.b16 %v4869
        %v5273 = vunpack.c.h.b16 %v4869
        %v5274 = vunpack.c.l.b16 %v4870
        %v5275 = vunpack.c.h.b16 %v4870
        %v5276 = vunpack.c.l.b16 %v4871
        %v5277 = vunpack.c.h.b16 %v4871
        %v5278 = vunpack.c.l.b16 %v4872
        %v5279 = vunpack.c.h.b16 %v4872
        %v5280 = vunpack.c.l.b16 %v4873
        %v5281 = vunpack.c.h.b16 %v4873
        %v5282 = vunpack.c.l.b16 %v4874
        %v5283 = vunpack.c.h.b16 %v4874
        %v5284 = vunpack.c.l.b16 %v4875
        %v5285 = vunpack.c.h.b16 %v4875
        %v5286 = vunpack.c.l.b16 %v4876
        %v5287 = vunpack.c.h.b16 %v4876
        %v5288 = vunpack.c.l.b16 %v4877
        %v5289 = vunpack.c.h.b16 %v4877
        %v5290 = vunpack.c.l.b16 %v4878
        %v5291 = vunpack.c.h.b16 %v4878
        %v5292 = vunpack.c.l.b16 %v4879
        %v5293 = vunpack.c.h.b16 %v4879
        %v5294 = vunpack.c.l.b16 %v4880
        %v5295 = vunpack.c.h.b16 %v4880
        %v5296 = vunpack.c.l.b16 %v4881
        %v5297 = vunpack.c.h.b16 %v4881
        %v5298 = vunpack.c.l.b16 %v4882
        %v5299 = vunpack.c.h.b16 %v4882
        %v5300 = vunpack.c.l.b16 %v4883
        %v5301 = vunpack.c.h.b16 %v4883
        %v5302 = vunpack.c.l.b16 %v4884
        %v5303 = vunpack.c.h.b16 %v4884
        %v5304 = vunpack.c.l.b16 %v4885
        %v5305 = vunpack.c.h.b16 %v4885
        %v5306 = vunpack.c.l.b16 %v4886
        %v5307 = vunpack.c.h.b16 %v4886
        %v5308 = vunpack.c.l.b16 %v4887
        %v5309 = vunpack.c.h.b16 %v4887
        %v5310 = vunpack.c.l.b16 %v4888
        %v5311 = vunpack.c.h.b16 %v4888
        %v5312 = vunpack.c.l.b16 %v4889
        %v5313 = vunpack.c.h.b16 %v4889
        %v5314 = vunpack.c.l.b16 %v4890
        %v5315 = vunpack.c.h.b16 %v4890
        %v5316 = vunpack.c.l.b16 %v4891
        %v5317 = vunpack.c.h.b16 %v4891
        %v5318 = vunpack.c.l.b16 %v4892
        %v5319 = vunpack.c.h.b16 %v4892
        %v5320 = vunpack.c.l.b16 %v4893
        %v5321 = vunpack.c.h.b16 %v4893
        %v5322 = vunpack.c.l.b16 %v4894
        %v5323 = vunpack.c.h.b16 %v4894
        %v5324 = vunpack.c.l.b16 %v4895
        %v5325 = vunpack.c.h.b16 %v4895
        %v5326 = vunpack.c.l.b16 %v4896
        %v5327 = vunpack.c.h.b16 %v4896
        %v5328 = vunpack.c.l.b16 %v4897
        %v5329 = vunpack.c.h.b16 %v4897
        %v5330 = vunpack.c.l.b16 %v4898
        %v5331 = vunpack.c.h.b16 %v4898
        %v5332 = vunpack.c.l.b16 %v4899
        %v5333 = vunpack.c.h.b16 %v4899
        %v5334 = vunpack.c.l.b16 %v4900
        %v5335 = vunpack.c.h.b16 %v4900
        %v5336 = vunpack.c.l.b16 %v4901
        %v5337 = vunpack.c.h.b16 %v4901
        %v5338 = vunpack.c.l.b16 %v4902
        %v5339 = vunpack.c.h.b16 %v4902
        %v5340 = vunpack.c.l.b16 %v4903
        %v5341 = vunpack.c.h.b16 %v4903
        %v5342 = vunpack.c.l.b16 %v4904
        %v5343 = vunpack.c.h.b16 %v4904
        %v5344 = vunpack.c.l.b16 %v4905
        %v5345 = vunpack.c.h.b16 %v4905
        %v5346 = vunpack.c.l.b16 %v4906
        %v5347 = vunpack.c.h.b16 %v4906
        %v5348 = vunpack.c.l.b16 %v4907
        %v5349 = vunpack.c.h.b16 %v4907
        %v5350 = vunpack.c.l.b16 %v4908
        %v5351 = vunpack.c.h.b16 %v4908
        %v5352 = vunpack.c.l.b16 %v4909
        %v5353 = vunpack.c.h.b16 %v4909
        %v5354 = vunpack.c.l.b16 %v4910
        %v5355 = vunpack.c.h.b16 %v4910
        %v5356 = vunpack.c.l.b16 %v4911
        %v5357 = vunpack.c.h.b16 %v4911
        %v5358 = vunpack.c.l.b16 %v4912
        %v5359 = vunpack.c.h.b16 %v4912
        %v5360 = vunpack.c.l.b16 %v4913
        %v5361 = vunpack.c.h.b16 %v4913
        %v5362 = vunpack.c.l.b16 %v4914
        %v5363 = vunpack.c.h.b16 %v4914
        %v5364 = vunpack.c.l.b16 %v4915
        %v5365 = vunpack.c.h.b16 %v4915
        %v5366 = vunpack.c.l.b16 %v4916
        %v5367 = vunpack.c.h.b16 %v4916
        %v5368 = vunpack.c.l.b16 %v4917
        %v5369 = vunpack.c.h.b16 %v4917
        %v5370 = vunpack.c.l.b16 %v4918
        %v5371 = vunpack.c.h.b16 %v4918
        %v5372 = vunpack.c.l.b16 %v4919
        %v5373 = vunpack.c.h.b16 %v4919
        %v5374 = vunpack.c.l.b16 %v4920
        %v5375 = vunpack.c.h.b16 %v4920
        %v5376 = vunpack.c.l.b16 %v4921
        %v5377 = vunpack.c.h.b16 %v4921
        %v5378 = vunpack.c.l.b16 %v4922
        %v5379 = vunpack.c.h.b16 %v4922
        %v5380 = vunpack.c.l.b16 %v4923
        %v5381 = vunpack.c.h.b16 %v4923
        %v5382 = vunpack.c.l.b16 %v4924
        %v5383 = vunpack.c.h.b16 %v4924
        %v5384 = vunpack.c.l.b16 %v4925
        %v5385 = vunpack.c.h.b16 %v4925
        %v5386 = vunpack.c.l.b16 %v4926
        %v5387 = vunpack.c.h.b16 %v4926
        %v5388 = vunpack.c.l.b16 %v4927
        %v5389 = vunpack.c.h.b16 %v4927
        %v5390 = vunpack.c.l.b16 %v4928
        %v5391 = vunpack.c.h.b16 %v4928
        %v5392 = vunpack.c.l.b16 %v4929
        %v5393 = vunpack.c.h.b16 %v4929
        %v5394 = vunpack.c.l.b16 %v4930
        %v5395 = vunpack.c.h.b16 %v4930
        %v5396 = vunpack.c.l.b16 %v4931
        %v5397 = vunpack.c.h.b16 %v4931
        %v5398 = vunpack.c.l.b16 %v4932
        %v5399 = vunpack.c.h.b16 %v4932
        %v5400 = vunpack.c.l.b16 %v4933
        %v5401 = vunpack.c.h.b16 %v4933
        %v5402 = vpack.c.b16 %v5162, %v5146
        %v5403 = vpack.c.b16 %v5163, %v5147
        %v5404 = vpack.c.b16 %v5164, %v5148
        %v5405 = vpack.c.b16 %v5165, %v5149
        %v5406 = vpack.c.b16 %v5166, %v5150
        %v5407 = vpack.c.b16 %v5167, %v5151
        %v5408 = vpack.c.b16 %v5168, %v5152
        %v5409 = vpack.c.b16 %v5169, %v5153
        %v5410 = vpack.c.b16 %v5170, %v5154
        %v5411 = vpack.c.b16 %v5171, %v5155
        %v5412 = vpack.c.b16 %v5172, %v5156
        %v5413 = vpack.c.b16 %v5173, %v5157
        %v5414 = vpack.c.b16 %v5174, %v5158
        %v5415 = vpack.c.b16 %v5175, %v5159
        %v5416 = vpack.c.b16 %v5176, %v5160
        %v5417 = vpack.c.b16 %v5177, %v5161
        %v5418 = vpack.c.b16 %v5194, %v5178
        %v5419 = vpack.c.b16 %v5195, %v5179
        %v5420 = vpack.c.b16 %v5196, %v5180
        %v5421 = vpack.c.b16 %v5197, %v5181
        %v5422 = vpack.c.b16 %v5198, %v5182
        %v5423 = vpack.c.b16 %v5199, %v5183
        %v5424 = vpack.c.b16 %v5200, %v5184
        %v5425 = vpack.c.b16 %v5201, %v5185
        %v5426 = vpack.c.b16 %v5202, %v5186
        %v5427 = vpack.c.b16 %v5203, %v5187
        %v5428 = vpack.c.b16 %v5204, %v5188
        %v5429 = vpack.c.b16 %v5205, %v5189
        %v5430 = vpack.c.b16 %v5206, %v5190
        %v5431 = vpack.c.b16 %v5207, %v5191
        %v5432 = vpack.c.b16 %v5208, %v5192
        %v5433 = vpack.c.b16 %v5209, %v5193
        %v5434 = vpack.c.b16 %v5226, %v5210
        %v5435 = vpack.c.b16 %v5227, %v5211
        %v5436 = vpack.c.b16 %v5228, %v5212
        %v5437 = vpack.c.b16 %v5229, %v5213
        %v5438 = vpack.c.b16 %v5230, %v5214
        %v5439 = vpack.c.b16 %v5231, %v5215
        %v5440 = vpack.c.b16 %v5232, %v5216
        %v5441 = vpack.c.b16 %v5233, %v5217
        %v5442 = vpack.c.b16 %v5234, %v5218
        %v5443 = vpack.c.b16 %v5235, %v5219
        %v5444 = vpack.c.b16 %v5236, %v5220
        %v5445 = vpack.c.b16 %v5237, %v5221
        %v5446 = vpack.c.b16 %v5238, %v5222
        %v5447 = vpack.c.b16 %v5239, %v5223
        %v5448 = vpack.c.b16 %v5240, %v5224
        %v5449 = vpack.c.b16 %v5241, %v5225
        %v5450 = vpack.c.b16 %v5258, %v5242
        %v5451 = vpack.c.b16 %v5259, %v5243
        %v5452 = vpack.c.b16 %v5260, %v5244
        %v5453 = vpack.c.b16 %v5261, %v5245
        %v5454 = vpack.c.b16 %v5262, %v5246
        %v5455 = vpack.c.b16 %v5263, %v5247
        %v5456 = vpack.c.b16 %v5264, %v5248
        %v5457 = vpack.c.b16 %v5265, %v5249
        %v5458 = vpack.c.b16 %v5266, %v5250
        %v5459 = vpack.c.b16 %v5267, %v5251
        %v5460 = vpack.c.b16 %v5268, %v5252
        %v5461 = vpack.c.b16 %v5269, %v5253
        %v5462 = vpack.c.b16 %v5270, %v5254
        %v5463 = vpack.c.b16 %v5271, %v5255
        %v5464 = vpack.c.b16 %v5272, %v5256
        %v5465 = vpack.c.b16 %v5273, %v5257
        %v5466 = vpack.c.b16 %v5290, %v5274
        %v5467 = vpack.c.b16 %v5291, %v5275
        %v5468 = vpack.c.b16 %v5292, %v5276
        %v5469 = vpack.c.b16 %v5293, %v5277
        %v5470 = vpack.c.b16 %v5294, %v5278
        %v5471 = vpack.c.b16 %v5295, %v5279
        %v5472 = vpack.c.b16 %v5296, %v5280
        %v5473 = vpack.c.b16 %v5297, %v5281
        %v5474 = vpack.c.b16 %v5298, %v5282
        %v5475 = vpack.c.b16 %v5299, %v5283
        %v5476 = vpack.c.b16 %v5300, %v5284
        %v5477 = vpack.c.b16 %v5301, %v5285
        %v5478 = vpack.c.b16 %v5302, %v5286
        %v5479 = vpack.c.b16 %v5303, %v5287
        %v5480 = vpack.c.b16 %v5304, %v5288
        %v5481 = vpack.c.b16 %v5305, %v5289
        %v5482 = vpack.c.b16 %v5322, %v5306
        %v5483 = vpack.c.b16 %v5323, %v5307
        %v5484 = vpack.c.b16 %v5324, %v5308
        %v5485 = vpack.c.b16 %v5325, %v5309
        %v5486 = vpack.c.b16 %v5326, %v5310
        %v5487 = vpack.c.b16 %v5327, %v5311
        %v5488 = vpack.c.b16 %v5328, %v5312
        %v5489 = vpack.c.b16 %v5329, %v5313
        %v5490 = vpack.c.b16 %v5330, %v5314
        %v5491 = vpack.c.b16 %v5331, %v5315
        %v5492 = vpack.c.b16 %v5332, %v5316
        %v5493 = vpack.c.b16 %v5333, %v5317
        %v5494 = vpack.c.b16 %v5334, %v5318
        %v5495 = vpack.c.b16 %v5335, %v5319
        %v5496 = vpack.c.b16 %v5336, %v5320
        %v5497 = vpack.c.b16 %v5337, %v5321
        %v5498 = vpack.c.b16 %v5354, %v5338
        %v5499 = vpack.c.b16 %v5355, %v5339
        %v5500 = vpack.c.b16 %v5356, %v5340
        %v5501 = vpack.c.b16 %v5357, %v5341
        %v5502 = vpack.c.b16 %v5358, %v5342
        %v5503 = vpack.c.b16 %v5359, %v5343
        %v5504 = vpack.c.b16 %v5360, %v5344
        %v5505 = vpack.c.b16 %v5361, %v5345
        %v5506 = vpack.c.b16 %v5362, %v5346
        %v5507 = vpack.c.b16 %v5363, %v5347
        %v5508 = vpack.c.b16 %v5364, %v5348
        %v5509 = vpack.c.b16 %v5365, %v5349
        %v5510 = vpack.c.b16 %v5366, %v5350
        %v5511 = vpack.c.b16 %v5367, %v5351
        %v5512 = vpack.c.b16 %v5368, %v5352
        %v5513 = vpack.c.b16 %v5369, %v5353
        %v5514 = vpack.c.b16 %v5386, %v5370
        %v5515 = vpack.c.b16 %v5387, %v5371
        %v5516 = vpack.c.b16 %v5388, %v5372
        %v5517 = vpack.c.b16 %v5389, %v5373
        %v5518 = vpack.c.b16 %v5390, %v5374
        %v5519 = vpack.c.b16 %v5391, %v5375
        %v5520 = vpack.c.b16 %v5392, %v5376
        %v5521 = vpack.c.b16 %v5393, %v5377
        %v5522 = vpack.c.b16 %v5394, %v5378
        %v5523 = vpack.c.b16 %v5395, %v5379
        %v5524 = vpack.c.b16 %v5396, %v5380
        %v5525 = vpack.c.b16 %v5397, %v5381
        %v5526 = vpack.c.b16 %v5398, %v5382
        %v5527 = vpack.c.b16 %v5399, %v5383
        %v5528 = vpack.c.b16 %v5400, %v5384
        %v5529 = vpack.c.b16 %v5401, %v5385
        %5658 = vmatprep.subr.bf16.mxu0 %v5515
        %5659 = vmatpush1.bf16.msra.mxu0 %v5514
        %5660 = vmatprep.subr.bf16.mxu0 %v5499
        %5661 = vmatpush1.bf16.msra.mxu0 %v5498
        %5662 = vmatprep.subr.bf16.mxu0 %v5483
        %5663 = vmatpush1.bf16.msra.mxu0 %v5482
        %5664 = vmatprep.subr.bf16.mxu0 %v5467
        %5665 = vmatpush1.bf16.msra.mxu0 %v5466
        %5666 = vmatprep.subr.bf16.mxu0 %v5451
        %5667 = vmatpush1.bf16.msra.mxu0 %v5450
        %5668 = vmatprep.subr.bf16.mxu0 %v5435
        %5669 = vmatpush1.bf16.msra.mxu0 %v5434
        %5670 = vmatprep.subr.bf16.mxu0 %v5419
        %5671 = vmatpush1.bf16.msra.mxu0 %v5418
        %5672 = vmatprep.subr.bf16.mxu0 %v5403
        %5673 = vmatpush1.bf16.msra.mxu0 %v5402
        %5674 = vmatprep.subr.bf16.mxu0 0
        %5675 = vmatpush2.bf16.msra.mxu0 0
        %5676 = vmatprep.subr.bf16.mxu0 0
        %5677 = vmatpush2.bf16.msra.mxu0 0
        %5678 = vmatprep.subr.bf16.mxu0 0
        %5679 = vmatpush2.bf16.msra.mxu0 0
        %5680 = vmatprep.subr.bf16.mxu0 0
        %5681 = vmatpush2.bf16.msra.mxu0 0
        %5682 = vmatprep.subr.bf16.mxu0 0
        %5683 = vmatpush2.bf16.msra.mxu0 0
        %5684 = vmatprep.subr.bf16.mxu0 0
        %5685 = vmatpush2.bf16.msra.mxu0 0
        %5686 = vmatprep.subr.bf16.mxu0 0
        %5687 = vmatpush2.bf16.msra.mxu0 0
        %5688 = vmatprep.subr.bf16.mxu0 0
        %5689 = vmatpush2.bf16.msra.mxu0 0
        %5690 = vmatprep.mubr.bf16.mxu0 0
        %5691 = vmatmul.mubr.bf16.gmra.mxu0 %v4805
        %v5692 = vpop.f32.mrf.mxu0
        %v5693 = vadd.f32 %v4941, %v5692
        %v5694 = vpop.f32.mrf.mxu0
        %v5695 = vadd.f32 %v4945, %v5694
        %v5696 = vpop.f32.mrf.mxu0
        %v5697 = vadd.f32 %v4941, %v5696
        %v5698 = vpop.f32.mrf.mxu0
        %v5699 = vadd.f32 %v4945, %v5698
        %5700 = vdwg.mxu0
        %5701 = vmatprep.subr.bf16.mxu0 %v5517
        %5702 = vmatpush1.bf16.msra.mxu0 %v5516
        %5703 = vmatprep.subr.bf16.mxu0 %v5501
        %5704 = vmatpush1.bf16.msra.mxu0 %v5500
        %5705 = vmatprep.subr.bf16.mxu0 %v5485
        %5706 = vmatpush1.bf16.msra.mxu0 %v5484
        %5707 = vmatprep.subr.bf16.mxu0 %v5469
        %5708 = vmatpush1.bf16.msra.mxu0 %v5468
        %5709 = vmatprep.subr.bf16.mxu0 %v5453
        %5710 = vmatpush1.bf16.msra.mxu0 %v5452
        %5711 = vmatprep.subr.bf16.mxu0 %v5437
        %5712 = vmatpush1.bf16.msra.mxu0 %v5436
        %5713 = vmatprep.subr.bf16.mxu0 %v5421
        %5714 = vmatpush1.bf16.msra.mxu0 %v5420
        %5715 = vmatprep.subr.bf16.mxu0 %v5405
        %5716 = vmatpush1.bf16.msra.mxu0 %v5404
        %5717 = vmatprep.subr.bf16.mxu0 0
        %5718 = vmatpush2.bf16.msra.mxu0 0
        %5719 = vmatprep.subr.bf16.mxu0 0
        %5720 = vmatpush2.bf16.msra.mxu0 0
        %5721 = vmatprep.subr.bf16.mxu0 0
        %5722 = vmatpush2.bf16.msra.mxu0 0
        %5723 = vmatprep.subr.bf16.mxu0 0
        %5724 = vmatpush2.bf16.msra.mxu0 0
        %5725 = vmatprep.subr.bf16.mxu0 0
        %5726 = vmatpush2.bf16.msra.mxu0 0
        %5727 = vmatprep.subr.bf16.mxu0 0
        %5728 = vmatpush2.bf16.msra.mxu0 0
        %5729 = vmatprep.subr.bf16.mxu0 0
        %5730 = vmatpush2.bf16.msra.mxu0 0
        %5731 = vmatprep.subr.bf16.mxu0 0
        %5732 = vmatpush2.bf16.msra.mxu0 0
        %5733 = vmatprep.mubr.bf16.mxu0 0
        %5734 = vmatmul.mubr.bf16.gmra.mxu0 %v4805
        %v5735 = vpop.f32.mrf.mxu0
        %v5736 = vadd.f32 %v4949, %v5735
        %v5737 = vpop.f32.mrf.mxu0
        %v5738 = vadd.f32 %v4953, %v5737
        %v5739 = vpop.f32.mrf.mxu0
        %v5740 = vadd.f32 %v4949, %v5739
        %v5741 = vpop.f32.mrf.mxu0
        %v5742 = vadd.f32 %v4953, %v5741
        %5743 = vdwg.mxu0
        %5744 = vmatprep.subr.bf16.mxu0 %v5519
        %5745 = vmatpush1.bf16.msra.mxu0 %v5518
        %5746 = vmatprep.subr.bf16.mxu0 %v5503
        %5747 = vmatpush1.bf16.msra.mxu0 %v5502
        %5748 = vmatprep.subr.bf16.mxu0 %v5487
        %5749 = vmatpush1.bf16.msra.mxu0 %v5486
        %5750 = vmatprep.subr.bf16.mxu0 %v5471
        %5751 = vmatpush1.bf16.msra.mxu0 %v5470
        %5752 = vmatprep.subr.bf16.mxu0 %v5455
        %5753 = vmatpush1.bf16.msra.mxu0 %v5454
        %5754 = vmatprep.subr.bf16.mxu0 %v5439
        %5755 = vmatpush1.bf16.msra.mxu0 %v5438
        %5756 = vmatprep.subr.bf16.mxu0 %v5423
        %5757 = vmatpush1.bf16.msra.mxu0 %v5422
        %5758 = vmatprep.subr.bf16.mxu0 %v5407
        %5759 = vmatpush1.bf16.msra.mxu0 %v5406
        %5760 = vmatprep.subr.bf16.mxu0 0
        %5761 = vmatpush2.bf16.msra.mxu0 0
        %5762 = vmatprep.subr.bf16.mxu0 0
        %5763 = vmatpush2.bf16.msra.mxu0 0
        %5764 = vmatprep.subr.bf16.mxu0 0
        %5765 = vmatpush2.bf16.msra.mxu0 0
        %5766 = vmatprep.subr.bf16.mxu0 0
        %5767 = vmatpush2.bf16.msra.mxu0 0
        %5768 = vmatprep.subr.bf16.mxu0 0
        %5769 = vmatpush2.bf16.msra.mxu0 0
        %5770 = vmatprep.subr.bf16.mxu0 0
        %5771 = vmatpush2.bf16.msra.mxu0 0
        %5772 = vmatprep.subr.bf16.mxu0 0
        %5773 = vmatpush2.bf16.msra.mxu0 0
        %5774 = vmatprep.subr.bf16.mxu0 0
        %5775 = vmatpush2.bf16.msra.mxu0 0
        %5776 = vmatprep.mubr.bf16.mxu0 0
        %5777 = vmatmul.mubr.bf16.gmra.mxu0 %v4805
        %v5778 = vpop.f32.mrf.mxu0
        %v5779 = vadd.f32 %v4957, %v5778
        %v5780 = vpop.f32.mrf.mxu0
        %v5781 = vadd.f32 %v4961, %v5780
        %v5782 = vpop.f32.mrf.mxu0
        %v5783 = vadd.f32 %v4957, %v5782
        %v5784 = vpop.f32.mrf.mxu0
        %v5785 = vadd.f32 %v4961, %v5784
        %5786 = vdwg.mxu0
        %5787 = vmatprep.subr.bf16.mxu0 %v5521
        %5788 = vmatpush1.bf16.msra.mxu0 %v5520
        %5789 = vmatprep.subr.bf16.mxu0 %v5505
        %5790 = vmatpush1.bf16.msra.mxu0 %v5504
        %5791 = vmatprep.subr.bf16.mxu0 %v5489
        %5792 = vmatpush1.bf16.msra.mxu0 %v5488
        %5793 = vmatprep.subr.bf16.mxu0 %v5473
        %5794 = vmatpush1.bf16.msra.mxu0 %v5472
        %5795 = vmatprep.subr.bf16.mxu0 %v5457
        %5796 = vmatpush1.bf16.msra.mxu0 %v5456
        %5797 = vmatprep.subr.bf16.mxu0 %v5441
        %5798 = vmatpush1.bf16.msra.mxu0 %v5440
        %5799 = vmatprep.subr.bf16.mxu0 %v5425
        %5800 = vmatpush1.bf16.msra.mxu0 %v5424
        %5801 = vmatprep.subr.bf16.mxu0 %v5409
        %5802 = vmatpush1.bf16.msra.mxu0 %v5408
        %5803 = vmatprep.subr.bf16.mxu0 0
        %5804 = vmatpush2.bf16.msra.mxu0 0
        %5805 = vmatprep.subr.bf16.mxu0 0
        %5806 = vmatpush2.bf16.msra.mxu0 0
        %5807 = vmatprep.subr.bf16.mxu0 0
        %5808 = vmatpush2.bf16.msra.mxu0 0
        %5809 = vmatprep.subr.bf16.mxu0 0
        %5810 = vmatpush2.bf16.msra.mxu0 0
        %5811 = vmatprep.subr.bf16.mxu0 0
        %5812 = vmatpush2.bf16.msra.mxu0 0
        %5813 = vmatprep.subr.bf16.mxu0 0
        %5814 = vmatpush2.bf16.msra.mxu0 0
        %5815 = vmatprep.subr.bf16.mxu0 0
        %5816 = vmatpush2.bf16.msra.mxu0 0
        %5817 = vmatprep.subr.bf16.mxu0 0
        %5818 = vmatpush2.bf16.msra.mxu0 0
        %5819 = vmatprep.mubr.bf16.mxu0 0
        %5820 = vmatmul.mubr.bf16.gmra.mxu0 %v4805
        %v5821 = vpop.f32.mrf.mxu0
        %v5822 = vadd.f32 %v4965, %v5821
        %v5823 = vpop.f32.mrf.mxu0
        %v5824 = vadd.f32 %v4969, %v5823
        %v5825 = vpop.f32.mrf.mxu0
        %v5826 = vadd.f32 %v4965, %v5825
        %v5827 = vpop.f32.mrf.mxu0
        %v5828 = vadd.f32 %v4969, %v5827
        %5829 = vdwg.mxu0
        %5830 = vmatprep.subr.bf16.mxu0 %v5523
        %5831 = vmatpush1.bf16.msra.mxu0 %v5522
        %5832 = vmatprep.subr.bf16.mxu0 %v5507
        %5833 = vmatpush1.bf16.msra.mxu0 %v5506
        %5834 = vmatprep.subr.bf16.mxu0 %v5491
        %5835 = vmatpush1.bf16.msra.mxu0 %v5490
        %5836 = vmatprep.subr.bf16.mxu0 %v5475
        %5837 = vmatpush1.bf16.msra.mxu0 %v5474
        %5838 = vmatprep.subr.bf16.mxu0 %v5459
        %5839 = vmatpush1.bf16.msra.mxu0 %v5458
        %5840 = vmatprep.subr.bf16.mxu0 %v5443
        %5841 = vmatpush1.bf16.msra.mxu0 %v5442
        %5842 = vmatprep.subr.bf16.mxu0 %v5427
        %5843 = vmatpush1.bf16.msra.mxu0 %v5426
        %5844 = vmatprep.subr.bf16.mxu0 %v5411
        %5845 = vmatpush1.bf16.msra.mxu0 %v5410
        %5846 = vmatprep.subr.bf16.mxu0 0
        %5847 = vmatpush2.bf16.msra.mxu0 0
        %5848 = vmatprep.subr.bf16.mxu0 0
        %5849 = vmatpush2.bf16.msra.mxu0 0
        %5850 = vmatprep.subr.bf16.mxu0 0
        %5851 = vmatpush2.bf16.msra.mxu0 0
        %5852 = vmatprep.subr.bf16.mxu0 0
        %5853 = vmatpush2.bf16.msra.mxu0 0
        %5854 = vmatprep.subr.bf16.mxu0 0
        %5855 = vmatpush2.bf16.msra.mxu0 0
        %5856 = vmatprep.subr.bf16.mxu0 0
        %5857 = vmatpush2.bf16.msra.mxu0 0
        %5858 = vmatprep.subr.bf16.mxu0 0
        %5859 = vmatpush2.bf16.msra.mxu0 0
        %5860 = vmatprep.subr.bf16.mxu0 0
        %5861 = vmatpush2.bf16.msra.mxu0 0
        %5862 = vmatprep.mubr.bf16.mxu0 0
        %5863 = vmatmul.mubr.bf16.gmra.mxu0 %v4805
        %v5864 = vpop.f32.mrf.mxu0
        %v5865 = vadd.f32 %v4973, %v5864
        %v5866 = vpop.f32.mrf.mxu0
        %v5867 = vadd.f32 %v4977, %v5866
        %v5868 = vpop.f32.mrf.mxu0
        %v5869 = vadd.f32 %v4973, %v5868
        %v5870 = vpop.f32.mrf.mxu0
        %v5871 = vadd.f32 %v4977, %v5870
        %5872 = vdwg.mxu0
        %5873 = vmatprep.subr.bf16.mxu0 %v5525
        %5874 = vmatpush1.bf16.msra.mxu0 %v5524
        %5875 = vmatprep.subr.bf16.mxu0 %v5509
        %5876 = vmatpush1.bf16.msra.mxu0 %v5508
        %5877 = vmatprep.subr.bf16.mxu0 %v5493
        %5878 = vmatpush1.bf16.msra.mxu0 %v5492
        %5879 = vmatprep.subr.bf16.mxu0 %v5477
        %5880 = vmatpush1.bf16.msra.mxu0 %v5476
        %5881 = vmatprep.subr.bf16.mxu0 %v5461
        %5882 = vmatpush1.bf16.msra.mxu0 %v5460
        %5883 = vmatprep.subr.bf16.mxu0 %v5445
        %5884 = vmatpush1.bf16.msra.mxu0 %v5444
        %5885 = vmatprep.subr.bf16.mxu0 %v5429
        %5886 = vmatpush1.bf16.msra.mxu0 %v5428
        %5887 = vmatprep.subr.bf16.mxu0 %v5413
        %5888 = vmatpush1.bf16.msra.mxu0 %v5412
        %5889 = vmatprep.subr.bf16.mxu0 0
        %5890 = vmatpush2.bf16.msra.mxu0 0
        %5891 = vmatprep.subr.bf16.mxu0 0
        %5892 = vmatpush2.bf16.msra.mxu0 0
        %5893 = vmatprep.subr.bf16.mxu0 0
        %5894 = vmatpush2.bf16.msra.mxu0 0
        %5895 = vmatprep.subr.bf16.mxu0 0
        %5896 = vmatpush2.bf16.msra.mxu0 0
        %5897 = vmatprep.subr.bf16.mxu0 0
        %5898 = vmatpush2.bf16.msra.mxu0 0
        %5899 = vmatprep.subr.bf16.mxu0 0
        %5900 = vmatpush2.bf16.msra.mxu0 0
        %5901 = vmatprep.subr.bf16.mxu0 0
        %5902 = vmatpush2.bf16.msra.mxu0 0
        %5903 = vmatprep.subr.bf16.mxu0 0
        %5904 = vmatpush2.bf16.msra.mxu0 0
        %5905 = vmatprep.mubr.bf16.mxu0 0
        %5906 = vmatmul.mubr.bf16.gmra.mxu0 %v4805
        %v5907 = vpop.f32.mrf.mxu0
        %v5908 = vadd.f32 %v4981, %v5907
        %v5909 = vpop.f32.mrf.mxu0
        %v5910 = vadd.f32 %v4985, %v5909
        %v5911 = vpop.f32.mrf.mxu0
        %v5912 = vadd.f32 %v4981, %v5911
        %v5913 = vpop.f32.mrf.mxu0
        %v5914 = vadd.f32 %v4985, %v5913
        %5915 = vdwg.mxu0
        %5916 = vmatprep.subr.bf16.mxu0 %v5527
        %5917 = vmatpush1.bf16.msra.mxu0 %v5526
        %5918 = vmatprep.subr.bf16.mxu0 %v5511
        %5919 = vmatpush1.bf16.msra.mxu0 %v5510
        %5920 = vmatprep.subr.bf16.mxu0 %v5495
        %5921 = vmatpush1.bf16.msra.mxu0 %v5494
        %5922 = vmatprep.subr.bf16.mxu0 %v5479
        %5923 = vmatpush1.bf16.msra.mxu0 %v5478
        %5924 = vmatprep.subr.bf16.mxu0 %v5463
        %5925 = vmatpush1.bf16.msra.mxu0 %v5462
        %5926 = vmatprep.subr.bf16.mxu0 %v5447
        %5927 = vmatpush1.bf16.msra.mxu0 %v5446
        %5928 = vmatprep.subr.bf16.mxu0 %v5431
        %5929 = vmatpush1.bf16.msra.mxu0 %v5430
        %5930 = vmatprep.subr.bf16.mxu0 %v5415
        %5931 = vmatpush1.bf16.msra.mxu0 %v5414
        %5932 = vmatprep.subr.bf16.mxu0 0
        %5933 = vmatpush2.bf16.msra.mxu0 0
        %5934 = vmatprep.subr.bf16.mxu0 0
        %5935 = vmatpush2.bf16.msra.mxu0 0
        %5936 = vmatprep.subr.bf16.mxu0 0
        %5937 = vmatpush2.bf16.msra.mxu0 0
        %5938 = vmatprep.subr.bf16.mxu0 0
        %5939 = vmatpush2.bf16.msra.mxu0 0
        %5940 = vmatprep.subr.bf16.mxu0 0
        %5941 = vmatpush2.bf16.msra.mxu0 0
        %5942 = vmatprep.subr.bf16.mxu0 0
        %5943 = vmatpush2.bf16.msra.mxu0 0
        %5944 = vmatprep.subr.bf16.mxu0 0
        %5945 = vmatpush2.bf16.msra.mxu0 0
        %5946 = vmatprep.subr.bf16.mxu0 0
        %5947 = vmatpush2.bf16.msra.mxu0 0
        %5948 = vmatprep.mubr.bf16.mxu0 0
        %5949 = vmatmul.mubr.bf16.gmra.mxu0 %v4805
        %v5950 = vpop.f32.mrf.mxu0
        %v5951 = vadd.f32 %v4989, %v5950
        %v5952 = vpop.f32.mrf.mxu0
        %v5953 = vadd.f32 %v4993, %v5952
        %v5954 = vpop.f32.mrf.mxu0
        %v5955 = vadd.f32 %v4989, %v5954
        %v5956 = vpop.f32.mrf.mxu0
        %v5957 = vadd.f32 %v4993, %v5956
        %5958 = vdwg.mxu0
        %5959 = vmatprep.subr.bf16.mxu0 %v5529
        %5960 = vmatpush1.bf16.msra.mxu0 %v5528
        %5961 = vmatprep.subr.bf16.mxu0 %v5513
        %5962 = vmatpush1.bf16.msra.mxu0 %v5512
        %5963 = vmatprep.subr.bf16.mxu0 %v5497
        %5964 = vmatpush1.bf16.msra.mxu0 %v5496
        %5965 = vmatprep.subr.bf16.mxu0 %v5481
        %5966 = vmatpush1.bf16.msra.mxu0 %v5480
        %5967 = vmatprep.subr.bf16.mxu0 %v5465
        %5968 = vmatpush1.bf16.msra.mxu0 %v5464
        %5969 = vmatprep.subr.bf16.mxu0 %v5449
        %5970 = vmatpush1.bf16.msra.mxu0 %v5448
        %5971 = vmatprep.subr.bf16.mxu0 %v5433
        %5972 = vmatpush1.bf16.msra.mxu0 %v5432
        %5973 = vmatprep.subr.bf16.mxu0 %v5417
        %5974 = vmatpush1.bf16.msra.mxu0 %v5416
        %5975 = vmatprep.subr.bf16.mxu0 0
        %5976 = vmatpush2.bf16.msra.mxu0 0
        %5977 = vmatprep.subr.bf16.mxu0 0
        %5978 = vmatpush2.bf16.msra.mxu0 0
        %5979 = vmatprep.subr.bf16.mxu0 0
        %5980 = vmatpush2.bf16.msra.mxu0 0
        %5981 = vmatprep.subr.bf16.mxu0 0
        %5982 = vmatpush2.bf16.msra.mxu0 0
        %5983 = vmatprep.subr.bf16.mxu0 0
        %5984 = vmatpush2.bf16.msra.mxu0 0
        %5985 = vmatprep.subr.bf16.mxu0 0
        %5986 = vmatpush2.bf16.msra.mxu0 0
        %5987 = vmatprep.subr.bf16.mxu0 0
        %5988 = vmatpush2.bf16.msra.mxu0 0
        %5989 = vmatprep.subr.bf16.mxu0 0
        %5990 = vmatpush2.bf16.msra.mxu0 0
        %5991 = vmatprep.mubr.bf16.mxu0 0
        %5992 = vmatmul.mubr.bf16.gmra.mxu0 %v4805
        %v5993 = vpop.f32.mrf.mxu0
        %v5994 = vadd.f32 %v4997, %v5993
        %v5995 = vpop.f32.mrf.mxu0
        %v5996 = vadd.f32 %v5001, %v5995
        %v5997 = vpop.f32.mrf.mxu0
        %v5998 = vadd.f32 %v4997, %v5997
        %v5999 = vpop.f32.mrf.mxu0
        %v6000 = vadd.f32 %v5001, %v5999
        %6001 = vdwg.mxu0
        %v6002 = vmax.f32 %v5693, 0.0
        %v6003 = vmax.f32 %v5695, 0.0
        %v6004 = vmax.f32 %v5736, 0.0
        %v6005 = vmax.f32 %v5738, 0.0
        %v6006 = vmax.f32 %v5779, 0.0
        %v6007 = vmax.f32 %v5781, 0.0
        %v6008 = vmax.f32 %v5822, 0.0
        %v6009 = vmax.f32 %v5824, 0.0
        %v6010 = vmax.f32 %v5865, 0.0
        %v6011 = vmax.f32 %v5867, 0.0
        %v6012 = vmax.f32 %v5908, 0.0
        %v6013 = vmax.f32 %v5910, 0.0
        %v6014 = vmax.f32 %v5951, 0.0
        %v6015 = vmax.f32 %v5953, 0.0
        %v6016 = vmax.f32 %v5994, 0.0
        %v6017 = vmax.f32 %v5996, 0.0
        %v6018 = vmax.f32 %v5697, 0.0
        %v6019 = vmax.f32 %v5699, 0.0
        %v6020 = vmax.f32 %v5740, 0.0
        %v6021 = vmax.f32 %v5742, 0.0
        %v6022 = vmax.f32 %v5783, 0.0
        %v6023 = vmax.f32 %v5785, 0.0
        %v6024 = vmax.f32 %v5826, 0.0
        %v6025 = vmax.f32 %v5828, 0.0
        %v6026 = vmax.f32 %v5869, 0.0
        %v6027 = vmax.f32 %v5871, 0.0
        %v6028 = vmax.f32 %v5912, 0.0
        %v6029 = vmax.f32 %v5914, 0.0
        %v6030 = vmax.f32 %v5955, 0.0
        %v6031 = vmax.f32 %v5957, 0.0
        %v6032 = vmax.f32 %v5998, 0.0
        %v6033 = vmax.f32 %v6000, 0.0
        %v6034 = vpack.c.bf16 %v6018, %v6002
        %v6035 = vpack.c.bf16 %v6019, %v6003
        %v6036 = vpack.c.bf16 %v6020, %v6004
        %v6037 = vpack.c.bf16 %v6021, %v6005
        %v6038 = vpack.c.bf16 %v6022, %v6006
        %v6039 = vpack.c.bf16 %v6023, %v6007
        %v6040 = vpack.c.bf16 %v6024, %v6008
        %v6041 = vpack.c.bf16 %v6025, %v6009
        %v6042 = vpack.c.bf16 %v6026, %v6010
        %v6043 = vpack.c.bf16 %v6027, %v6011
        %v6044 = vpack.c.bf16 %v6028, %v6012
        %v6045 = vpack.c.bf16 %v6029, %v6013
        %v6046 = vpack.c.bf16 %v6030, %v6014
        %v6047 = vpack.c.bf16 %v6031, %v6015
        %v6048 = vpack.c.bf16 %v6032, %v6016
        %v6049 = vpack.c.bf16 %v6033, %v6017
        %v6050 = vld [vmem:[%s914] sm:$0xf]
        %v6051 = vld [vmem:[%s914 + $0x4] sm:$0xf]
        %v6052 = vld [vmem:[%s914 + $0x8] sm:$0xf]
        %v6053 = vld [vmem:[%s914 + $0xc] sm:$0xf]
        %v6054 = vld [vmem:[%s914 + $0x10] sm:$0xf]
        %v6055 = vld [vmem:[%s914 + $0x14] sm:$0xf]
        %v6056 = vld [vmem:[%s914 + $0x18] sm:$0xf]
        %v6057 = vld [vmem:[%s914 + $0x1c] sm:$0xf]
        %v6058 = vld [vmem:[%s914 + $0x20] sm:$0xf]
        %v6059 = vld [vmem:[%s914 + $0x24] sm:$0xf]
        %v6060 = vld [vmem:[%s914 + $0x28] sm:$0xf]
        %v6061 = vld [vmem:[%s914 + $0x2c] sm:$0xf]
        %v6062 = vld [vmem:[%s914 + $0x30] sm:$0xf]
        %v6063 = vld [vmem:[%s914 + $0x34] sm:$0xf]
        %v6064 = vld [vmem:[%s914 + $0x38] sm:$0xf]
        %v6065 = vld [vmem:[%s914 + $0x3c] sm:$0xf]
        %v6066 = vld [vmem:[%s914 + $0x40] sm:$0xf]
        %v6067 = vld [vmem:[%s914 + $0x44] sm:$0xf]
        %v6068 = vld [vmem:[%s914 + $0x48] sm:$0xf]
        %v6069 = vld [vmem:[%s914 + $0x4c] sm:$0xf]
        %v6070 = vld [vmem:[%s914 + $0x50] sm:$0xf]
        %v6071 = vld [vmem:[%s914 + $0x54] sm:$0xf]
        %v6072 = vld [vmem:[%s914 + $0x58] sm:$0xf]
        %v6073 = vld [vmem:[%s914 + $0x5c] sm:$0xf]
        %v6074 = vld [vmem:[%s914 + $0x60] sm:$0xf]
        %v6075 = vld [vmem:[%s914 + $0x64] sm:$0xf]
        %v6076 = vld [vmem:[%s914 + $0x68] sm:$0xf]
        %v6077 = vld [vmem:[%s914 + $0x6c] sm:$0xf]
        %v6078 = vld [vmem:[%s914 + $0x70] sm:$0xf]
        %v6079 = vld [vmem:[%s914 + $0x74] sm:$0xf]
        %v6080 = vld [vmem:[%s914 + $0x78] sm:$0xf]
        %v6081 = vld [vmem:[%s914 + $0x7c] sm:$0xf]
        %v6082 = vld [vmem:[%s914 + $0x80] sm:$0xf]
        %v6083 = vld [vmem:[%s914 + $0x84] sm:$0xf]
        %v6084 = vld [vmem:[%s914 + $0x88] sm:$0xf]
        %v6085 = vld [vmem:[%s914 + $0x8c] sm:$0xf]
        %v6086 = vld [vmem:[%s914 + $0x90] sm:$0xf]
        %v6087 = vld [vmem:[%s914 + $0x94] sm:$0xf]
        %v6088 = vld [vmem:[%s914 + $0x98] sm:$0xf]
        %v6089 = vld [vmem:[%s914 + $0x9c] sm:$0xf]
        %v6090 = vld [vmem:[%s914 + $0xa0] sm:$0xf]
        %v6091 = vld [vmem:[%s914 + $0xa4] sm:$0xf]
        %v6092 = vld [vmem:[%s914 + $0xa8] sm:$0xf]
        %v6093 = vld [vmem:[%s914 + $0xac] sm:$0xf]
        %v6094 = vld [vmem:[%s914 + $0xb0] sm:$0xf]
        %v6095 = vld [vmem:[%s914 + $0xb4] sm:$0xf]
        %v6096 = vld [vmem:[%s914 + $0xb8] sm:$0xf]
        %v6097 = vld [vmem:[%s914 + $0xbc] sm:$0xf]
        %v6098 = vld [vmem:[%s914 + $0xc0] sm:$0xf]
        %v6099 = vld [vmem:[%s914 + $0xc4] sm:$0xf]
        %v6100 = vld [vmem:[%s914 + $0xc8] sm:$0xf]
        %v6101 = vld [vmem:[%s914 + $0xcc] sm:$0xf]
        %v6102 = vld [vmem:[%s914 + $0xd0] sm:$0xf]
        %v6103 = vld [vmem:[%s914 + $0xd4] sm:$0xf]
        %v6104 = vld [vmem:[%s914 + $0xd8] sm:$0xf]
        %v6105 = vld [vmem:[%s914 + $0xdc] sm:$0xf]
        %v6106 = vld [vmem:[%s914 + $0xe0] sm:$0xf]
        %v6107 = vld [vmem:[%s914 + $0xe4] sm:$0xf]
        %v6108 = vld [vmem:[%s914 + $0xe8] sm:$0xf]
        %v6109 = vld [vmem:[%s914 + $0xec] sm:$0xf]
        %v6110 = vld [vmem:[%s914 + $0xf0] sm:$0xf]
        %v6111 = vld [vmem:[%s914 + $0xf4] sm:$0xf]
        %v6112 = vld [vmem:[%s914 + $0xf8] sm:$0xf]
        %v6113 = vld [vmem:[%s914 + $0xfc] sm:$0xf]
        %v6114 = vld [vmem:[%s914 + $0x100] sm:$0xf]
        %v6115 = vld [vmem:[%s914 + $0x104] sm:$0xf]
        %v6116 = vld [vmem:[%s914 + $0x108] sm:$0xf]
        %v6117 = vld [vmem:[%s914 + $0x10c] sm:$0xf]
        %v6118 = vld [vmem:[%s914 + $0x110] sm:$0xf]
        %v6119 = vld [vmem:[%s914 + $0x114] sm:$0xf]
        %v6120 = vld [vmem:[%s914 + $0x118] sm:$0xf]
        %v6121 = vld [vmem:[%s914 + $0x11c] sm:$0xf]
        %v6122 = vld [vmem:[%s914 + $0x120] sm:$0xf]
        %v6123 = vld [vmem:[%s914 + $0x124] sm:$0xf]
        %v6124 = vld [vmem:[%s914 + $0x128] sm:$0xf]
        %v6125 = vld [vmem:[%s914 + $0x12c] sm:$0xf]
        %v6126 = vld [vmem:[%s914 + $0x130] sm:$0xf]
        %v6127 = vld [vmem:[%s914 + $0x134] sm:$0xf]
        %v6128 = vld [vmem:[%s914 + $0x138] sm:$0xf]
        %v6129 = vld [vmem:[%s914 + $0x13c] sm:$0xf]
        %v6130 = vld [vmem:[%s914 + $0x140] sm:$0xf]
        %v6131 = vld [vmem:[%s914 + $0x144] sm:$0xf]
        %v6132 = vld [vmem:[%s914 + $0x148] sm:$0xf]
        %v6133 = vld [vmem:[%s914 + $0x14c] sm:$0xf]
        %v6134 = vld [vmem:[%s914 + $0x150] sm:$0xf]
        %v6135 = vld [vmem:[%s914 + $0x154] sm:$0xf]
        %v6136 = vld [vmem:[%s914 + $0x158] sm:$0xf]
        %v6137 = vld [vmem:[%s914 + $0x15c] sm:$0xf]
        %v6138 = vld [vmem:[%s914 + $0x160] sm:$0xf]
        %v6139 = vld [vmem:[%s914 + $0x164] sm:$0xf]
        %v6140 = vld [vmem:[%s914 + $0x168] sm:$0xf]
        %v6141 = vld [vmem:[%s914 + $0x16c] sm:$0xf]
        %v6142 = vld [vmem:[%s914 + $0x170] sm:$0xf]
        %v6143 = vld [vmem:[%s914 + $0x174] sm:$0xf]
        %v6144 = vld [vmem:[%s914 + $0x178] sm:$0xf]
        %v6145 = vld [vmem:[%s914 + $0x17c] sm:$0xf]
        %v6146 = vld [vmem:[%s914 + $0x180] sm:$0xf]
        %v6147 = vld [vmem:[%s914 + $0x184] sm:$0xf]
        %v6148 = vld [vmem:[%s914 + $0x188] sm:$0xf]
        %v6149 = vld [vmem:[%s914 + $0x18c] sm:$0xf]
        %v6150 = vld [vmem:[%s914 + $0x190] sm:$0xf]
        %v6151 = vld [vmem:[%s914 + $0x194] sm:$0xf]
        %v6152 = vld [vmem:[%s914 + $0x198] sm:$0xf]
        %v6153 = vld [vmem:[%s914 + $0x19c] sm:$0xf]
        %v6154 = vld [vmem:[%s914 + $0x1a0] sm:$0xf]
        %v6155 = vld [vmem:[%s914 + $0x1a4] sm:$0xf]
        %v6156 = vld [vmem:[%s914 + $0x1a8] sm:$0xf]
        %v6157 = vld [vmem:[%s914 + $0x1ac] sm:$0xf]
        %v6158 = vld [vmem:[%s914 + $0x1b0] sm:$0xf]
        %v6159 = vld [vmem:[%s914 + $0x1b4] sm:$0xf]
        %v6160 = vld [vmem:[%s914 + $0x1b8] sm:$0xf]
        %v6161 = vld [vmem:[%s914 + $0x1bc] sm:$0xf]
        %v6162 = vld [vmem:[%s914 + $0x1c0] sm:$0xf]
        %v6163 = vld [vmem:[%s914 + $0x1c4] sm:$0xf]
        %v6164 = vld [vmem:[%s914 + $0x1c8] sm:$0xf]
        %v6165 = vld [vmem:[%s914 + $0x1cc] sm:$0xf]
        %v6166 = vld [vmem:[%s914 + $0x1d0] sm:$0xf]
        %v6167 = vld [vmem:[%s914 + $0x1d4] sm:$0xf]
        %v6168 = vld [vmem:[%s914 + $0x1d8] sm:$0xf]
        %v6169 = vld [vmem:[%s914 + $0x1dc] sm:$0xf]
        %v6170 = vld [vmem:[%s914 + $0x1e0] sm:$0xf]
        %v6171 = vld [vmem:[%s914 + $0x1e4] sm:$0xf]
        %v6172 = vld [vmem:[%s914 + $0x1e8] sm:$0xf]
        %v6173 = vld [vmem:[%s914 + $0x1ec] sm:$0xf]
        %v6174 = vld [vmem:[%s914 + $0x1f0] sm:$0xf]
        %v6175 = vld [vmem:[%s914 + $0x1f4] sm:$0xf]
        %v6176 = vld [vmem:[%s914 + $0x1f8] sm:$0xf]
        %v6177 = vld [vmem:[%s914 + $0x1fc] sm:$0xf]
        %v6178 = vld [vmem:[%s914 + $0x200] sm:$0xf]
        %v6179 = vld [vmem:[%s914 + $0x204] sm:$0xf]
        %v6180 = vld [vmem:[%s914 + $0x208] sm:$0xf]
        %v6181 = vld [vmem:[%s914 + $0x20c] sm:$0xf]
        %v6182 = vld [vmem:[%s914 + $0x210] sm:$0xf]
        %v6183 = vld [vmem:[%s914 + $0x214] sm:$0xf]
        %v6184 = vld [vmem:[%s914 + $0x218] sm:$0xf]
        %v6185 = vld [vmem:[%s914 + $0x21c] sm:$0xf]
        %v6186 = vld [vmem:[%s914 + $0x220] sm:$0xf]
        %v6187 = vld [vmem:[%s914 + $0x224] sm:$0xf]
        %v6188 = vld [vmem:[%s914 + $0x228] sm:$0xf]
        %v6189 = vld [vmem:[%s914 + $0x22c] sm:$0xf]
        %v6190 = vld [vmem:[%s914 + $0x230] sm:$0xf]
        %v6191 = vld [vmem:[%s914 + $0x234] sm:$0xf]
        %v6192 = vld [vmem:[%s914 + $0x238] sm:$0xf]
        %v6193 = vld [vmem:[%s914 + $0x23c] sm:$0xf]
        %v6194 = vld [vmem:[%s914 + $0x240] sm:$0xf]
        %v6195 = vld [vmem:[%s914 + $0x244] sm:$0xf]
        %v6196 = vld [vmem:[%s914 + $0x248] sm:$0xf]
        %v6197 = vld [vmem:[%s914 + $0x24c] sm:$0xf]
        %v6198 = vld [vmem:[%s914 + $0x250] sm:$0xf]
        %v6199 = vld [vmem:[%s914 + $0x254] sm:$0xf]
        %v6200 = vld [vmem:[%s914 + $0x258] sm:$0xf]
        %v6201 = vld [vmem:[%s914 + $0x25c] sm:$0xf]
        %v6202 = vld [vmem:[%s914 + $0x260] sm:$0xf]
        %v6203 = vld [vmem:[%s914 + $0x264] sm:$0xf]
        %v6204 = vld [vmem:[%s914 + $0x268] sm:$0xf]
        %v6205 = vld [vmem:[%s914 + $0x26c] sm:$0xf]
        %v6206 = vld [vmem:[%s914 + $0x270] sm:$0xf]
        %v6207 = vld [vmem:[%s914 + $0x274] sm:$0xf]
        %v6208 = vld [vmem:[%s914 + $0x278] sm:$0xf]
        %v6209 = vld [vmem:[%s914 + $0x27c] sm:$0xf]
        %v6210 = vld [vmem:[%s914 + $0x280] sm:$0xf]
        %v6211 = vld [vmem:[%s914 + $0x284] sm:$0xf]
        %v6212 = vld [vmem:[%s914 + $0x288] sm:$0xf]
        %v6213 = vld [vmem:[%s914 + $0x28c] sm:$0xf]
        %v6214 = vld [vmem:[%s914 + $0x290] sm:$0xf]
        %v6215 = vld [vmem:[%s914 + $0x294] sm:$0xf]
        %v6216 = vld [vmem:[%s914 + $0x298] sm:$0xf]
        %v6217 = vld [vmem:[%s914 + $0x29c] sm:$0xf]
        %v6218 = vld [vmem:[%s914 + $0x2a0] sm:$0xf]
        %v6219 = vld [vmem:[%s914 + $0x2a4] sm:$0xf]
        %v6220 = vld [vmem:[%s914 + $0x2a8] sm:$0xf]
        %v6221 = vld [vmem:[%s914 + $0x2ac] sm:$0xf]
        %v6222 = vld [vmem:[%s914 + $0x2b0] sm:$0xf]
        %v6223 = vld [vmem:[%s914 + $0x2b4] sm:$0xf]
        %v6224 = vld [vmem:[%s914 + $0x2b8] sm:$0xf]
        %v6225 = vld [vmem:[%s914 + $0x2bc] sm:$0xf]
        %v6226 = vld [vmem:[%s914 + $0x2c0] sm:$0xf]
        %v6227 = vld [vmem:[%s914 + $0x2c4] sm:$0xf]
        %v6228 = vld [vmem:[%s914 + $0x2c8] sm:$0xf]
        %v6229 = vld [vmem:[%s914 + $0x2cc] sm:$0xf]
        %v6230 = vld [vmem:[%s914 + $0x2d0] sm:$0xf]
        %v6231 = vld [vmem:[%s914 + $0x2d4] sm:$0xf]
        %v6232 = vld [vmem:[%s914 + $0x2d8] sm:$0xf]
        %v6233 = vld [vmem:[%s914 + $0x2dc] sm:$0xf]
        %v6234 = vld [vmem:[%s914 + $0x2e0] sm:$0xf]
        %v6235 = vld [vmem:[%s914 + $0x2e4] sm:$0xf]
        %v6236 = vld [vmem:[%s914 + $0x2e8] sm:$0xf]
        %v6237 = vld [vmem:[%s914 + $0x2ec] sm:$0xf]
        %v6238 = vld [vmem:[%s914 + $0x2f0] sm:$0xf]
        %v6239 = vld [vmem:[%s914 + $0x2f4] sm:$0xf]
        %v6240 = vld [vmem:[%s914 + $0x2f8] sm:$0xf]
        %v6241 = vld [vmem:[%s914 + $0x2fc] sm:$0xf]
        %v6242 = vld [vmem:[%s914 + $0x300] sm:$0xf]
        %v6243 = vld [vmem:[%s914 + $0x304] sm:$0xf]
        %v6244 = vld [vmem:[%s914 + $0x308] sm:$0xf]
        %v6245 = vld [vmem:[%s914 + $0x30c] sm:$0xf]
        %v6246 = vld [vmem:[%s914 + $0x310] sm:$0xf]
        %v6247 = vld [vmem:[%s914 + $0x314] sm:$0xf]
        %v6248 = vld [vmem:[%s914 + $0x318] sm:$0xf]
        %v6249 = vld [vmem:[%s914 + $0x31c] sm:$0xf]
        %v6250 = vld [vmem:[%s914 + $0x320] sm:$0xf]
        %v6251 = vld [vmem:[%s914 + $0x324] sm:$0xf]
        %v6252 = vld [vmem:[%s914 + $0x328] sm:$0xf]
        %v6253 = vld [vmem:[%s914 + $0x32c] sm:$0xf]
        %v6254 = vld [vmem:[%s914 + $0x330] sm:$0xf]
        %v6255 = vld [vmem:[%s914 + $0x334] sm:$0xf]
        %v6256 = vld [vmem:[%s914 + $0x338] sm:$0xf]
        %v6257 = vld [vmem:[%s914 + $0x33c] sm:$0xf]
        %v6258 = vld [vmem:[%s914 + $0x340] sm:$0xf]
        %v6259 = vld [vmem:[%s914 + $0x344] sm:$0xf]
        %v6260 = vld [vmem:[%s914 + $0x348] sm:$0xf]
        %v6261 = vld [vmem:[%s914 + $0x34c] sm:$0xf]
        %v6262 = vld [vmem:[%s914 + $0x350] sm:$0xf]
        %v6263 = vld [vmem:[%s914 + $0x354] sm:$0xf]
        %v6264 = vld [vmem:[%s914 + $0x358] sm:$0xf]
        %v6265 = vld [vmem:[%s914 + $0x35c] sm:$0xf]
        %v6266 = vld [vmem:[%s914 + $0x360] sm:$0xf]
        %v6267 = vld [vmem:[%s914 + $0x364] sm:$0xf]
        %v6268 = vld [vmem:[%s914 + $0x368] sm:$0xf]
        %v6269 = vld [vmem:[%s914 + $0x36c] sm:$0xf]
        %v6270 = vld [vmem:[%s914 + $0x370] sm:$0xf]
        %v6271 = vld [vmem:[%s914 + $0x374] sm:$0xf]
        %v6272 = vld [vmem:[%s914 + $0x378] sm:$0xf]
        %v6273 = vld [vmem:[%s914 + $0x37c] sm:$0xf]
        %v6274 = vld [vmem:[%s914 + $0x380] sm:$0xf]
        %v6275 = vld [vmem:[%s914 + $0x384] sm:$0xf]
        %v6276 = vld [vmem:[%s914 + $0x388] sm:$0xf]
        %v6277 = vld [vmem:[%s914 + $0x38c] sm:$0xf]
        %v6278 = vld [vmem:[%s914 + $0x390] sm:$0xf]
        %v6279 = vld [vmem:[%s914 + $0x394] sm:$0xf]
        %v6280 = vld [vmem:[%s914 + $0x398] sm:$0xf]
        %v6281 = vld [vmem:[%s914 + $0x39c] sm:$0xf]
        %v6282 = vld [vmem:[%s914 + $0x3a0] sm:$0xf]
        %v6283 = vld [vmem:[%s914 + $0x3a4] sm:$0xf]
        %v6284 = vld [vmem:[%s914 + $0x3a8] sm:$0xf]
        %v6285 = vld [vmem:[%s914 + $0x3ac] sm:$0xf]
        %v6286 = vld [vmem:[%s914 + $0x3b0] sm:$0xf]
        %v6287 = vld [vmem:[%s914 + $0x3b4] sm:$0xf]
        %v6288 = vld [vmem:[%s914 + $0x3b8] sm:$0xf]
        %v6289 = vld [vmem:[%s914 + $0x3bc] sm:$0xf]
        %v6290 = vld [vmem:[%s914 + $0x3c0] sm:$0xf]
        %v6291 = vld [vmem:[%s914 + $0x3c4] sm:$0xf]
        %v6292 = vld [vmem:[%s914 + $0x3c8] sm:$0xf]
        %v6293 = vld [vmem:[%s914 + $0x3cc] sm:$0xf]
        %v6294 = vld [vmem:[%s914 + $0x3d0] sm:$0xf]
        %v6295 = vld [vmem:[%s914 + $0x3d4] sm:$0xf]
        %v6296 = vld [vmem:[%s914 + $0x3d8] sm:$0xf]
        %v6297 = vld [vmem:[%s914 + $0x3dc] sm:$0xf]
        %v6298 = vld [vmem:[%s914 + $0x3e0] sm:$0xf]
        %v6299 = vld [vmem:[%s914 + $0x3e4] sm:$0xf]
        %v6300 = vld [vmem:[%s914 + $0x3e8] sm:$0xf]
        %v6301 = vld [vmem:[%s914 + $0x3ec] sm:$0xf]
        %v6302 = vld [vmem:[%s914 + $0x3f0] sm:$0xf]
        %v6303 = vld [vmem:[%s914 + $0x3f4] sm:$0xf]
        %v6304 = vld [vmem:[%s914 + $0x3f8] sm:$0xf]
        %v6305 = vld [vmem:[%s914 + $0x3fc] sm:$0xf]
        %v6306 = vld [vmem:[%s922] sm:$0x1]
        %v6308 = vlaneseq
        %v6309 = vshrl.u32 %v6308, 7
        %v6310 = vsub.s32 0, %v6309
        %v6311 = vrot.slane %v6306, %v6310
        %v6569 = vunpack.c.l.b16 %v6050
        %v6570 = vunpack.c.l.b16 %v6051
        %v6571 = vunpack.c.l.b16 %v6052
        %v6572 = vunpack.c.l.b16 %v6053
        %v6573 = vunpack.c.l.b16 %v6054
        %v6574 = vunpack.c.l.b16 %v6055
        %v6575 = vunpack.c.l.b16 %v6056
        %v6576 = vunpack.c.l.b16 %v6057
        %v6577 = vunpack.c.l.b16 %v6058
        %v6578 = vunpack.c.l.b16 %v6059
        %v6579 = vunpack.c.l.b16 %v6060
        %v6580 = vunpack.c.l.b16 %v6061
        %v6581 = vunpack.c.l.b16 %v6062
        %v6582 = vunpack.c.l.b16 %v6063
        %v6583 = vunpack.c.l.b16 %v6064
        %v6584 = vunpack.c.l.b16 %v6065
        %v6585 = vunpack.c.l.b16 %v6066
        %v6586 = vunpack.c.l.b16 %v6067
        %v6587 = vunpack.c.l.b16 %v6068
        %v6588 = vunpack.c.l.b16 %v6069
        %v6589 = vunpack.c.l.b16 %v6070
        %v6590 = vunpack.c.l.b16 %v6071
        %v6591 = vunpack.c.l.b16 %v6072
        %v6592 = vunpack.c.l.b16 %v6073
        %v6593 = vunpack.c.l.b16 %v6074
        %v6594 = vunpack.c.l.b16 %v6075
        %v6595 = vunpack.c.l.b16 %v6076
        %v6596 = vunpack.c.l.b16 %v6077
        %v6597 = vunpack.c.l.b16 %v6078
        %v6598 = vunpack.c.l.b16 %v6079
        %v6599 = vunpack.c.l.b16 %v6080
        %v6600 = vunpack.c.l.b16 %v6081
        %v6601 = vunpack.c.l.b16 %v6082
        %v6602 = vunpack.c.l.b16 %v6083
        %v6603 = vunpack.c.l.b16 %v6084
        %v6604 = vunpack.c.l.b16 %v6085
        %v6605 = vunpack.c.l.b16 %v6086
        %v6606 = vunpack.c.l.b16 %v6087
        %v6607 = vunpack.c.l.b16 %v6088
        %v6608 = vunpack.c.l.b16 %v6089
        %v6609 = vunpack.c.l.b16 %v6090
        %v6610 = vunpack.c.l.b16 %v6091
        %v6611 = vunpack.c.l.b16 %v6092
        %v6612 = vunpack.c.l.b16 %v6093
        %v6613 = vunpack.c.l.b16 %v6094
        %v6614 = vunpack.c.l.b16 %v6095
        %v6615 = vunpack.c.l.b16 %v6096
        %v6616 = vunpack.c.l.b16 %v6097
        %v6617 = vunpack.c.l.b16 %v6098
        %v6618 = vunpack.c.l.b16 %v6099
        %v6619 = vunpack.c.l.b16 %v6100
        %v6620 = vunpack.c.l.b16 %v6101
        %v6621 = vunpack.c.l.b16 %v6102
        %v6622 = vunpack.c.l.b16 %v6103
        %v6623 = vunpack.c.l.b16 %v6104
        %v6624 = vunpack.c.l.b16 %v6105
        %v6625 = vunpack.c.l.b16 %v6106
        %v6626 = vunpack.c.l.b16 %v6107
        %v6627 = vunpack.c.l.b16 %v6108
        %v6628 = vunpack.c.l.b16 %v6109
        %v6629 = vunpack.c.l.b16 %v6110
        %v6630 = vunpack.c.l.b16 %v6111
        %v6631 = vunpack.c.l.b16 %v6112
        %v6632 = vunpack.c.l.b16 %v6113
        %v6633 = vunpack.c.l.b16 %v6114
        %v6634 = vunpack.c.l.b16 %v6115
        %v6635 = vunpack.c.l.b16 %v6116
        %v6636 = vunpack.c.l.b16 %v6117
        %v6637 = vunpack.c.l.b16 %v6118
        %v6638 = vunpack.c.l.b16 %v6119
        %v6639 = vunpack.c.l.b16 %v6120
        %v6640 = vunpack.c.l.b16 %v6121
        %v6641 = vunpack.c.l.b16 %v6122
        %v6642 = vunpack.c.l.b16 %v6123
        %v6643 = vunpack.c.l.b16 %v6124
        %v6644 = vunpack.c.l.b16 %v6125
        %v6645 = vunpack.c.l.b16 %v6126
        %v6646 = vunpack.c.l.b16 %v6127
        %v6647 = vunpack.c.l.b16 %v6128
        %v6648 = vunpack.c.l.b16 %v6129
        %v6649 = vunpack.c.l.b16 %v6130
        %v6650 = vunpack.c.l.b16 %v6131
        %v6651 = vunpack.c.l.b16 %v6132
        %v6652 = vunpack.c.l.b16 %v6133
        %v6653 = vunpack.c.l.b16 %v6134
        %v6654 = vunpack.c.l.b16 %v6135
        %v6655 = vunpack.c.l.b16 %v6136
        %v6656 = vunpack.c.l.b16 %v6137
        %v6657 = vunpack.c.l.b16 %v6138
        %v6658 = vunpack.c.l.b16 %v6139
        %v6659 = vunpack.c.l.b16 %v6140
        %v6660 = vunpack.c.l.b16 %v6141
        %v6661 = vunpack.c.l.b16 %v6142
        %v6662 = vunpack.c.l.b16 %v6143
        %v6663 = vunpack.c.l.b16 %v6144
        %v6664 = vunpack.c.l.b16 %v6145
        %v6665 = vunpack.c.l.b16 %v6146
        %v6666 = vunpack.c.l.b16 %v6147
        %v6667 = vunpack.c.l.b16 %v6148
        %v6668 = vunpack.c.l.b16 %v6149
        %v6669 = vunpack.c.l.b16 %v6150
        %v6670 = vunpack.c.l.b16 %v6151
        %v6671 = vunpack.c.l.b16 %v6152
        %v6672 = vunpack.c.l.b16 %v6153
        %v6673 = vunpack.c.l.b16 %v6154
        %v6674 = vunpack.c.l.b16 %v6155
        %v6675 = vunpack.c.l.b16 %v6156
        %v6676 = vunpack.c.l.b16 %v6157
        %v6677 = vunpack.c.l.b16 %v6158
        %v6678 = vunpack.c.l.b16 %v6159
        %v6679 = vunpack.c.l.b16 %v6160
        %v6680 = vunpack.c.l.b16 %v6161
        %v6681 = vunpack.c.l.b16 %v6162
        %v6682 = vunpack.c.l.b16 %v6163
        %v6683 = vunpack.c.l.b16 %v6164
        %v6684 = vunpack.c.l.b16 %v6165
        %v6685 = vunpack.c.l.b16 %v6166
        %v6686 = vunpack.c.l.b16 %v6167
        %v6687 = vunpack.c.l.b16 %v6168
        %v6688 = vunpack.c.l.b16 %v6169
        %v6689 = vunpack.c.l.b16 %v6170
        %v6690 = vunpack.c.l.b16 %v6171
        %v6691 = vunpack.c.l.b16 %v6172
        %v6692 = vunpack.c.l.b16 %v6173
        %v6693 = vunpack.c.l.b16 %v6174
        %v6694 = vunpack.c.l.b16 %v6175
        %v6695 = vunpack.c.l.b16 %v6176
        %v6696 = vunpack.c.l.b16 %v6177
        %v6697 = vunpack.c.l.b16 %v6178
        %v6698 = vunpack.c.l.b16 %v6179
        %v6699 = vunpack.c.l.b16 %v6180
        %v6700 = vunpack.c.l.b16 %v6181
        %v6701 = vunpack.c.l.b16 %v6182
        %v6702 = vunpack.c.l.b16 %v6183
        %v6703 = vunpack.c.l.b16 %v6184
        %v6704 = vunpack.c.l.b16 %v6185
        %v6705 = vunpack.c.l.b16 %v6186
        %v6706 = vunpack.c.l.b16 %v6187
        %v6707 = vunpack.c.l.b16 %v6188
        %v6708 = vunpack.c.l.b16 %v6189
        %v6709 = vunpack.c.l.b16 %v6190
        %v6710 = vunpack.c.l.b16 %v6191
        %v6711 = vunpack.c.l.b16 %v6192
        %v6712 = vunpack.c.l.b16 %v6193
        %v6713 = vunpack.c.l.b16 %v6194
        %v6714 = vunpack.c.l.b16 %v6195
        %v6715 = vunpack.c.l.b16 %v6196
        %v6716 = vunpack.c.l.b16 %v6197
        %v6717 = vunpack.c.l.b16 %v6198
        %v6718 = vunpack.c.l.b16 %v6199
        %v6719 = vunpack.c.l.b16 %v6200
        %v6720 = vunpack.c.l.b16 %v6201
        %v6721 = vunpack.c.l.b16 %v6202
        %v6722 = vunpack.c.l.b16 %v6203
        %v6723 = vunpack.c.l.b16 %v6204
        %v6724 = vunpack.c.l.b16 %v6205
        %v6725 = vunpack.c.l.b16 %v6206
        %v6726 = vunpack.c.l.b16 %v6207
        %v6727 = vunpack.c.l.b16 %v6208
        %v6728 = vunpack.c.l.b16 %v6209
        %v6729 = vunpack.c.l.b16 %v6210
        %v6730 = vunpack.c.l.b16 %v6211
        %v6731 = vunpack.c.l.b16 %v6212
        %v6732 = vunpack.c.l.b16 %v6213
        %v6733 = vunpack.c.l.b16 %v6214
        %v6734 = vunpack.c.l.b16 %v6215
        %v6735 = vunpack.c.l.b16 %v6216
        %v6736 = vunpack.c.l.b16 %v6217
        %v6737 = vunpack.c.l.b16 %v6218
        %v6738 = vunpack.c.l.b16 %v6219
        %v6739 = vunpack.c.l.b16 %v6220
        %v6740 = vunpack.c.l.b16 %v6221
        %v6741 = vunpack.c.l.b16 %v6222
        %v6742 = vunpack.c.l.b16 %v6223
        %v6743 = vunpack.c.l.b16 %v6224
        %v6744 = vunpack.c.l.b16 %v6225
        %v6745 = vunpack.c.l.b16 %v6226
        %v6746 = vunpack.c.l.b16 %v6227
        %v6747 = vunpack.c.l.b16 %v6228
        %v6748 = vunpack.c.l.b16 %v6229
        %v6749 = vunpack.c.l.b16 %v6230
        %v6750 = vunpack.c.l.b16 %v6231
        %v6751 = vunpack.c.l.b16 %v6232
        %v6752 = vunpack.c.l.b16 %v6233
        %v6753 = vunpack.c.l.b16 %v6234
        %v6754 = vunpack.c.l.b16 %v6235
        %v6755 = vunpack.c.l.b16 %v6236
        %v6756 = vunpack.c.l.b16 %v6237
        %v6757 = vunpack.c.l.b16 %v6238
        %v6758 = vunpack.c.l.b16 %v6239
        %v6759 = vunpack.c.l.b16 %v6240
        %v6760 = vunpack.c.l.b16 %v6241
        %v6761 = vunpack.c.l.b16 %v6242
        %v6762 = vunpack.c.l.b16 %v6243
        %v6763 = vunpack.c.l.b16 %v6244
        %v6764 = vunpack.c.l.b16 %v6245
        %v6765 = vunpack.c.l.b16 %v6246
        %v6766 = vunpack.c.l.b16 %v6247
        %v6767 = vunpack.c.l.b16 %v6248
        %v6768 = vunpack.c.l.b16 %v6249
        %v6769 = vunpack.c.l.b16 %v6250
        %v6770 = vunpack.c.l.b16 %v6251
        %v6771 = vunpack.c.l.b16 %v6252
        %v6772 = vunpack.c.l.b16 %v6253
        %v6773 = vunpack.c.l.b16 %v6254
        %v6774 = vunpack.c.l.b16 %v6255
        %v6775 = vunpack.c.l.b16 %v6256
        %v6776 = vunpack.c.l.b16 %v6257
        %v6777 = vunpack.c.l.b16 %v6258
        %v6778 = vunpack.c.l.b16 %v6259
        %v6779 = vunpack.c.l.b16 %v6260
        %v6780 = vunpack.c.l.b16 %v6261
        %v6781 = vunpack.c.l.b16 %v6262
        %v6782 = vunpack.c.l.b16 %v6263
        %v6783 = vunpack.c.l.b16 %v6264
        %v6784 = vunpack.c.l.b16 %v6265
        %v6785 = vunpack.c.l.b16 %v6266
        %v6786 = vunpack.c.l.b16 %v6267
        %v6787 = vunpack.c.l.b16 %v6268
        %v6788 = vunpack.c.l.b16 %v6269
        %v6789 = vunpack.c.l.b16 %v6270
        %v6790 = vunpack.c.l.b16 %v6271
        %v6791 = vunpack.c.l.b16 %v6272
        %v6792 = vunpack.c.l.b16 %v6273
        %v6793 = vunpack.c.l.b16 %v6274
        %v6794 = vunpack.c.l.b16 %v6275
        %v6795 = vunpack.c.l.b16 %v6276
        %v6796 = vunpack.c.l.b16 %v6277
        %v6797 = vunpack.c.l.b16 %v6278
        %v6798 = vunpack.c.l.b16 %v6279
        %v6799 = vunpack.c.l.b16 %v6280
        %v6800 = vunpack.c.l.b16 %v6281
        %v6801 = vunpack.c.l.b16 %v6282
        %v6802 = vunpack.c.l.b16 %v6283
        %v6803 = vunpack.c.l.b16 %v6284
        %v6804 = vunpack.c.l.b16 %v6285
        %v6805 = vunpack.c.l.b16 %v6286
        %v6806 = vunpack.c.l.b16 %v6287
        %v6807 = vunpack.c.l.b16 %v6288
        %v6808 = vunpack.c.l.b16 %v6289
        %v6809 = vunpack.c.l.b16 %v6290
        %v6810 = vunpack.c.l.b16 %v6291
        %v6811 = vunpack.c.l.b16 %v6292
        %v6812 = vunpack.c.l.b16 %v6293
        %v6813 = vunpack.c.l.b16 %v6294
        %v6814 = vunpack.c.l.b16 %v6295
        %v6815 = vunpack.c.l.b16 %v6296
        %v6816 = vunpack.c.l.b16 %v6297
        %v6817 = vunpack.c.l.b16 %v6298
        %v6818 = vunpack.c.l.b16 %v6299
        %v6819 = vunpack.c.l.b16 %v6300
        %v6820 = vunpack.c.l.b16 %v6301
        %v6821 = vunpack.c.l.b16 %v6302
        %v6822 = vunpack.c.l.b16 %v6303
        %v6823 = vunpack.c.l.b16 %v6304
        %v6824 = vunpack.c.l.b16 %v6305
        %v6825 = vpack.c.b16 %v6570, %v6569
        %v6826 = vpack.c.b16 %v6572, %v6571
        %v6827 = vpack.c.b16 %v6574, %v6573
        %v6828 = vpack.c.b16 %v6576, %v6575
        %v6829 = vpack.c.b16 %v6578, %v6577
        %v6830 = vpack.c.b16 %v6580, %v6579
        %v6831 = vpack.c.b16 %v6582, %v6581
        %v6832 = vpack.c.b16 %v6584, %v6583
        %v6833 = vpack.c.b16 %v6586, %v6585
        %v6834 = vpack.c.b16 %v6588, %v6587
        %v6835 = vpack.c.b16 %v6590, %v6589
        %v6836 = vpack.c.b16 %v6592, %v6591
        %v6837 = vpack.c.b16 %v6594, %v6593
        %v6838 = vpack.c.b16 %v6596, %v6595
        %v6839 = vpack.c.b16 %v6598, %v6597
        %v6840 = vpack.c.b16 %v6600, %v6599
        %v6841 = vpack.c.b16 %v6602, %v6601
        %v6842 = vpack.c.b16 %v6604, %v6603
        %v6843 = vpack.c.b16 %v6606, %v6605
        %v6844 = vpack.c.b16 %v6608, %v6607
        %v6845 = vpack.c.b16 %v6610, %v6609
        %v6846 = vpack.c.b16 %v6612, %v6611
        %v6847 = vpack.c.b16 %v6614, %v6613
        %v6848 = vpack.c.b16 %v6616, %v6615
        %v6849 = vpack.c.b16 %v6618, %v6617
        %v6850 = vpack.c.b16 %v6620, %v6619
        %v6851 = vpack.c.b16 %v6622, %v6621
        %v6852 = vpack.c.b16 %v6624, %v6623
        %v6853 = vpack.c.b16 %v6626, %v6625
        %v6854 = vpack.c.b16 %v6628, %v6627
        %v6855 = vpack.c.b16 %v6630, %v6629
        %v6856 = vpack.c.b16 %v6632, %v6631
        %v6857 = vpack.c.b16 %v6634, %v6633
        %v6858 = vpack.c.b16 %v6636, %v6635
        %v6859 = vpack.c.b16 %v6638, %v6637
        %v6860 = vpack.c.b16 %v6640, %v6639
        %v6861 = vpack.c.b16 %v6642, %v6641
        %v6862 = vpack.c.b16 %v6644, %v6643
        %v6863 = vpack.c.b16 %v6646, %v6645
        %v6864 = vpack.c.b16 %v6648, %v6647
        %v6865 = vpack.c.b16 %v6650, %v6649
        %v6866 = vpack.c.b16 %v6652, %v6651
        %v6867 = vpack.c.b16 %v6654, %v6653
        %v6868 = vpack.c.b16 %v6656, %v6655
        %v6869 = vpack.c.b16 %v6658, %v6657
        %v6870 = vpack.c.b16 %v6660, %v6659
        %v6871 = vpack.c.b16 %v6662, %v6661
        %v6872 = vpack.c.b16 %v6664, %v6663
        %v6873 = vpack.c.b16 %v6666, %v6665
        %v6874 = vpack.c.b16 %v6668, %v6667
        %v6875 = vpack.c.b16 %v6670, %v6669
        %v6876 = vpack.c.b16 %v6672, %v6671
        %v6877 = vpack.c.b16 %v6674, %v6673
        %v6878 = vpack.c.b16 %v6676, %v6675
        %v6879 = vpack.c.b16 %v6678, %v6677
        %v6880 = vpack.c.b16 %v6680, %v6679
        %v6881 = vpack.c.b16 %v6682, %v6681
        %v6882 = vpack.c.b16 %v6684, %v6683
        %v6883 = vpack.c.b16 %v6686, %v6685
        %v6884 = vpack.c.b16 %v6688, %v6687
        %v6885 = vpack.c.b16 %v6690, %v6689
        %v6886 = vpack.c.b16 %v6692, %v6691
        %v6887 = vpack.c.b16 %v6694, %v6693
        %v6888 = vpack.c.b16 %v6696, %v6695
        %v6889 = vpack.c.b16 %v6698, %v6697
        %v6890 = vpack.c.b16 %v6700, %v6699
        %v6891 = vpack.c.b16 %v6702, %v6701
        %v6892 = vpack.c.b16 %v6704, %v6703
        %v6893 = vpack.c.b16 %v6706, %v6705
        %v6894 = vpack.c.b16 %v6708, %v6707
        %v6895 = vpack.c.b16 %v6710, %v6709
        %v6896 = vpack.c.b16 %v6712, %v6711
        %v6897 = vpack.c.b16 %v6714, %v6713
        %v6898 = vpack.c.b16 %v6716, %v6715
        %v6899 = vpack.c.b16 %v6718, %v6717
        %v6900 = vpack.c.b16 %v6720, %v6719
        %v6901 = vpack.c.b16 %v6722, %v6721
        %v6902 = vpack.c.b16 %v6724, %v6723
        %v6903 = vpack.c.b16 %v6726, %v6725
        %v6904 = vpack.c.b16 %v6728, %v6727
        %v6905 = vpack.c.b16 %v6730, %v6729
        %v6906 = vpack.c.b16 %v6732, %v6731
        %v6907 = vpack.c.b16 %v6734, %v6733
        %v6908 = vpack.c.b16 %v6736, %v6735
        %v6909 = vpack.c.b16 %v6738, %v6737
        %v6910 = vpack.c.b16 %v6740, %v6739
        %v6911 = vpack.c.b16 %v6742, %v6741
        %v6912 = vpack.c.b16 %v6744, %v6743
        %v6913 = vpack.c.b16 %v6746, %v6745
        %v6914 = vpack.c.b16 %v6748, %v6747
        %v6915 = vpack.c.b16 %v6750, %v6749
        %v6916 = vpack.c.b16 %v6752, %v6751
        %v6917 = vpack.c.b16 %v6754, %v6753
        %v6918 = vpack.c.b16 %v6756, %v6755
        %v6919 = vpack.c.b16 %v6758, %v6757
        %v6920 = vpack.c.b16 %v6760, %v6759
        %v6921 = vpack.c.b16 %v6762, %v6761
        %v6922 = vpack.c.b16 %v6764, %v6763
        %v6923 = vpack.c.b16 %v6766, %v6765
        %v6924 = vpack.c.b16 %v6768, %v6767
        %v6925 = vpack.c.b16 %v6770, %v6769
        %v6926 = vpack.c.b16 %v6772, %v6771
        %v6927 = vpack.c.b16 %v6774, %v6773
        %v6928 = vpack.c.b16 %v6776, %v6775
        %v6929 = vpack.c.b16 %v6778, %v6777
        %v6930 = vpack.c.b16 %v6780, %v6779
        %v6931 = vpack.c.b16 %v6782, %v6781
        %v6932 = vpack.c.b16 %v6784, %v6783
        %v6933 = vpack.c.b16 %v6786, %v6785
        %v6934 = vpack.c.b16 %v6788, %v6787
        %v6935 = vpack.c.b16 %v6790, %v6789
        %v6936 = vpack.c.b16 %v6792, %v6791
        %v6937 = vpack.c.b16 %v6794, %v6793
        %v6938 = vpack.c.b16 %v6796, %v6795
        %v6939 = vpack.c.b16 %v6798, %v6797
        %v6940 = vpack.c.b16 %v6800, %v6799
        %v6941 = vpack.c.b16 %v6802, %v6801
        %v6942 = vpack.c.b16 %v6804, %v6803
        %v6943 = vpack.c.b16 %v6806, %v6805
        %v6944 = vpack.c.b16 %v6808, %v6807
        %v6945 = vpack.c.b16 %v6810, %v6809
        %v6946 = vpack.c.b16 %v6812, %v6811
        %v6947 = vpack.c.b16 %v6814, %v6813
        %v6948 = vpack.c.b16 %v6816, %v6815
        %v6949 = vpack.c.b16 %v6818, %v6817
        %v6950 = vpack.c.b16 %v6820, %v6819
        %v6951 = vpack.c.b16 %v6822, %v6821
        %v6952 = vpack.c.b16 %v6824, %v6823
        %7081 = vmatprep.subr.bf16.mxu0 0
        %7082 = vmatpush1.bf16.msra.mxu0 %v6832
        %7083 = vmatprep.subr.bf16.mxu0 0
        %7084 = vmatpush1.bf16.msra.mxu0 %v6831
        %7085 = vmatprep.subr.bf16.mxu0 0
        %7086 = vmatpush1.bf16.msra.mxu0 %v6830
        %7087 = vmatprep.subr.bf16.mxu0 0
        %7088 = vmatpush1.bf16.msra.mxu0 %v6829
        %7089 = vmatprep.subr.bf16.mxu0 0
        %7090 = vmatpush1.bf16.msra.mxu0 %v6828
        %7091 = vmatprep.subr.bf16.mxu0 0
        %7092 = vmatpush1.bf16.msra.mxu0 %v6827
        %7093 = vmatprep.subr.bf16.mxu0 0
        %7094 = vmatpush1.bf16.msra.mxu0 %v6826
        %7095 = vmatprep.subr.bf16.mxu0 0
        %7096 = vmatpush1.bf16.msra.mxu0 %v6825
        %7097 = vmatprep.subr.bf16.mxu0 0
        %7098 = vmatpush2.bf16.msra.mxu0 %v6840
        %7099 = vmatprep.subr.bf16.mxu0 0
        %7100 = vmatpush2.bf16.msra.mxu0 %v6839
        %7101 = vmatprep.subr.bf16.mxu0 0
        %7102 = vmatpush2.bf16.msra.mxu0 %v6838
        %7103 = vmatprep.subr.bf16.mxu0 0
        %7104 = vmatpush2.bf16.msra.mxu0 %v6837
        %7105 = vmatprep.subr.bf16.mxu0 0
        %7106 = vmatpush2.bf16.msra.mxu0 %v6836
        %7107 = vmatprep.subr.bf16.mxu0 0
        %7108 = vmatpush2.bf16.msra.mxu0 %v6835
        %7109 = vmatprep.subr.bf16.mxu0 0
        %7110 = vmatpush2.bf16.msra.mxu0 %v6834
        %7111 = vmatprep.subr.bf16.mxu0 0
        %7112 = vmatpush2.bf16.msra.mxu0 %v6833
        %7113 = vmatprep.mubr.bf16.mxu0 %v6035
        %7114 = vmatmul.mubr.bf16.gmra.mxu0 %v6034
        %v7115 = vpop.f32.mrf.mxu0
        %v7116 = vadd.f32 %v6311, %v7115
        %v7117 = vpop.f32.mrf.mxu0
        %v7118 = vpop.f32.mrf.mxu0
        %v7119 = vadd.f32 %v6311, %v7118
        %v7120 = vpop.f32.mrf.mxu0
        %7121 = vdwg.mxu0
        %7122 = vmatprep.subr.bf16.mxu0 0
        %7123 = vmatpush1.bf16.msra.mxu0 %v6848
        %7124 = vmatprep.subr.bf16.mxu0 0
        %7125 = vmatpush1.bf16.msra.mxu0 %v6847
        %7126 = vmatprep.subr.bf16.mxu0 0
        %7127 = vmatpush1.bf16.msra.mxu0 %v6846
        %7128 = vmatprep.subr.bf16.mxu0 0
        %7129 = vmatpush1.bf16.msra.mxu0 %v6845
        %7130 = vmatprep.subr.bf16.mxu0 0
        %7131 = vmatpush1.bf16.msra.mxu0 %v6844
        %7132 = vmatprep.subr.bf16.mxu0 0
        %7133 = vmatpush1.bf16.msra.mxu0 %v6843
        %7134 = vmatprep.subr.bf16.mxu0 0
        %7135 = vmatpush1.bf16.msra.mxu0 %v6842
        %7136 = vmatprep.subr.bf16.mxu0 0
        %7137 = vmatpush1.bf16.msra.mxu0 %v6841
        %7138 = vmatprep.subr.bf16.mxu0 0
        %7139 = vmatpush2.bf16.msra.mxu0 %v6856
        %7140 = vmatprep.subr.bf16.mxu0 0
        %7141 = vmatpush2.bf16.msra.mxu0 %v6855
        %7142 = vmatprep.subr.bf16.mxu0 0
        %7143 = vmatpush2.bf16.msra.mxu0 %v6854
        %7144 = vmatprep.subr.bf16.mxu0 0
        %7145 = vmatpush2.bf16.msra.mxu0 %v6853
        %7146 = vmatprep.subr.bf16.mxu0 0
        %7147 = vmatpush2.bf16.msra.mxu0 %v6852
        %7148 = vmatprep.subr.bf16.mxu0 0
        %7149 = vmatpush2.bf16.msra.mxu0 %v6851
        %7150 = vmatprep.subr.bf16.mxu0 0
        %7151 = vmatpush2.bf16.msra.mxu0 %v6850
        %7152 = vmatprep.subr.bf16.mxu0 0
        %7153 = vmatpush2.bf16.msra.mxu0 %v6849
        %7154 = vmatprep.mubr.bf16.mxu0 %v6037
        %7155 = vmatmul.mubr.bf16.gmra.mxu0 %v6036
        %v7156 = vpop.f32.mrf.mxu0
        %v7157 = vadd.f32 %v7116, %v7156
        %v7158 = vpop.f32.mrf.mxu0
        %v7159 = vpop.f32.mrf.mxu0
        %v7160 = vadd.f32 %v7119, %v7159
        %v7161 = vpop.f32.mrf.mxu0
        %7162 = vdwg.mxu0
        %7163 = vmatprep.subr.bf16.mxu0 0
        %7164 = vmatpush1.bf16.msra.mxu0 %v6864
        %7165 = vmatprep.subr.bf16.mxu0 0
        %7166 = vmatpush1.bf16.msra.mxu0 %v6863
        %7167 = vmatprep.subr.bf16.mxu0 0
        %7168 = vmatpush1.bf16.msra.mxu0 %v6862
        %7169 = vmatprep.subr.bf16.mxu0 0
        %7170 = vmatpush1.bf16.msra.mxu0 %v6861
        %7171 = vmatprep.subr.bf16.mxu0 0
        %7172 = vmatpush1.bf16.msra.mxu0 %v6860
        %7173 = vmatprep.subr.bf16.mxu0 0
        %7174 = vmatpush1.bf16.msra.mxu0 %v6859
        %7175 = vmatprep.subr.bf16.mxu0 0
        %7176 = vmatpush1.bf16.msra.mxu0 %v6858
        %7177 = vmatprep.subr.bf16.mxu0 0
        %7178 = vmatpush1.bf16.msra.mxu0 %v6857
        %7179 = vmatprep.subr.bf16.mxu0 0
        %7180 = vmatpush2.bf16.msra.mxu0 %v6872
        %7181 = vmatprep.subr.bf16.mxu0 0
        %7182 = vmatpush2.bf16.msra.mxu0 %v6871
        %7183 = vmatprep.subr.bf16.mxu0 0
        %7184 = vmatpush2.bf16.msra.mxu0 %v6870
        %7185 = vmatprep.subr.bf16.mxu0 0
        %7186 = vmatpush2.bf16.msra.mxu0 %v6869
        %7187 = vmatprep.subr.bf16.mxu0 0
        %7188 = vmatpush2.bf16.msra.mxu0 %v6868
        %7189 = vmatprep.subr.bf16.mxu0 0
        %7190 = vmatpush2.bf16.msra.mxu0 %v6867
        %7191 = vmatprep.subr.bf16.mxu0 0
        %7192 = vmatpush2.bf16.msra.mxu0 %v6866
        %7193 = vmatprep.subr.bf16.mxu0 0
        %7194 = vmatpush2.bf16.msra.mxu0 %v6865
        %7195 = vmatprep.mubr.bf16.mxu0 %v6039
        %7196 = vmatmul.mubr.bf16.gmra.mxu0 %v6038
        %v7197 = vpop.f32.mrf.mxu0
        %v7198 = vadd.f32 %v7157, %v7197
        %v7199 = vpop.f32.mrf.mxu0
        %v7200 = vpop.f32.mrf.mxu0
        %v7201 = vadd.f32 %v7160, %v7200
        %v7202 = vpop.f32.mrf.mxu0
        %7203 = vdwg.mxu0
        %7204 = vmatprep.subr.bf16.mxu0 0
        %7205 = vmatpush1.bf16.msra.mxu0 %v6880
        %7206 = vmatprep.subr.bf16.mxu0 0
        %7207 = vmatpush1.bf16.msra.mxu0 %v6879
        %7208 = vmatprep.subr.bf16.mxu0 0
        %7209 = vmatpush1.bf16.msra.mxu0 %v6878
        %7210 = vmatprep.subr.bf16.mxu0 0
        %7211 = vmatpush1.bf16.msra.mxu0 %v6877
        %7212 = vmatprep.subr.bf16.mxu0 0
        %7213 = vmatpush1.bf16.msra.mxu0 %v6876
        %7214 = vmatprep.subr.bf16.mxu0 0
        %7215 = vmatpush1.bf16.msra.mxu0 %v6875
        %7216 = vmatprep.subr.bf16.mxu0 0
        %7217 = vmatpush1.bf16.msra.mxu0 %v6874
        %7218 = vmatprep.subr.bf16.mxu0 0
        %7219 = vmatpush1.bf16.msra.mxu0 %v6873
        %7220 = vmatprep.subr.bf16.mxu0 0
        %7221 = vmatpush2.bf16.msra.mxu0 %v6888
        %7222 = vmatprep.subr.bf16.mxu0 0
        %7223 = vmatpush2.bf16.msra.mxu0 %v6887
        %7224 = vmatprep.subr.bf16.mxu0 0
        %7225 = vmatpush2.bf16.msra.mxu0 %v6886
        %7226 = vmatprep.subr.bf16.mxu0 0
        %7227 = vmatpush2.bf16.msra.mxu0 %v6885
        %7228 = vmatprep.subr.bf16.mxu0 0
        %7229 = vmatpush2.bf16.msra.mxu0 %v6884
        %7230 = vmatprep.subr.bf16.mxu0 0
        %7231 = vmatpush2.bf16.msra.mxu0 %v6883
        %7232 = vmatprep.subr.bf16.mxu0 0
        %7233 = vmatpush2.bf16.msra.mxu0 %v6882
        %7234 = vmatprep.subr.bf16.mxu0 0
        %7235 = vmatpush2.bf16.msra.mxu0 %v6881
        %7236 = vmatprep.mubr.bf16.mxu0 %v6041
        %7237 = vmatmul.mubr.bf16.gmra.mxu0 %v6040
        %v7238 = vpop.f32.mrf.mxu0
        %v7239 = vadd.f32 %v7198, %v7238
        %v7240 = vpop.f32.mrf.mxu0
        %v7241 = vpop.f32.mrf.mxu0
        %v7242 = vadd.f32 %v7201, %v7241
        %v7243 = vpop.f32.mrf.mxu0
        %7244 = vdwg.mxu0
        %7245 = vmatprep.subr.bf16.mxu0 0
        %7246 = vmatpush1.bf16.msra.mxu0 %v6896
        %7247 = vmatprep.subr.bf16.mxu0 0
        %7248 = vmatpush1.bf16.msra.mxu0 %v6895
        %7249 = vmatprep.subr.bf16.mxu0 0
        %7250 = vmatpush1.bf16.msra.mxu0 %v6894
        %7251 = vmatprep.subr.bf16.mxu0 0
        %7252 = vmatpush1.bf16.msra.mxu0 %v6893
        %7253 = vmatprep.subr.bf16.mxu0 0
        %7254 = vmatpush1.bf16.msra.mxu0 %v6892
        %7255 = vmatprep.subr.bf16.mxu0 0
        %7256 = vmatpush1.bf16.msra.mxu0 %v6891
        %7257 = vmatprep.subr.bf16.mxu0 0
        %7258 = vmatpush1.bf16.msra.mxu0 %v6890
        %7259 = vmatprep.subr.bf16.mxu0 0
        %7260 = vmatpush1.bf16.msra.mxu0 %v6889
        %7261 = vmatprep.subr.bf16.mxu0 0
        %7262 = vmatpush2.bf16.msra.mxu0 %v6904
        %7263 = vmatprep.subr.bf16.mxu0 0
        %7264 = vmatpush2.bf16.msra.mxu0 %v6903
        %7265 = vmatprep.subr.bf16.mxu0 0
        %7266 = vmatpush2.bf16.msra.mxu0 %v6902
        %7267 = vmatprep.subr.bf16.mxu0 0
        %7268 = vmatpush2.bf16.msra.mxu0 %v6901
        %7269 = vmatprep.subr.bf16.mxu0 0
        %7270 = vmatpush2.bf16.msra.mxu0 %v6900
        %7271 = vmatprep.subr.bf16.mxu0 0
        %7272 = vmatpush2.bf16.msra.mxu0 %v6899
        %7273 = vmatprep.subr.bf16.mxu0 0
        %7274 = vmatpush2.bf16.msra.mxu0 %v6898
        %7275 = vmatprep.subr.bf16.mxu0 0
        %7276 = vmatpush2.bf16.msra.mxu0 %v6897
        %7277 = vmatprep.mubr.bf16.mxu0 %v6043
        %7278 = vmatmul.mubr.bf16.gmra.mxu0 %v6042
        %v7279 = vpop.f32.mrf.mxu0
        %v7280 = vadd.f32 %v7239, %v7279
        %v7281 = vpop.f32.mrf.mxu0
        %v7282 = vpop.f32.mrf.mxu0
        %v7283 = vadd.f32 %v7242, %v7282
        %v7284 = vpop.f32.mrf.mxu0
        %7285 = vdwg.mxu0
        %7286 = vmatprep.subr.bf16.mxu0 0
        %7287 = vmatpush1.bf16.msra.mxu0 %v6912
        %7288 = vmatprep.subr.bf16.mxu0 0
        %7289 = vmatpush1.bf16.msra.mxu0 %v6911
        %7290 = vmatprep.subr.bf16.mxu0 0
        %7291 = vmatpush1.bf16.msra.mxu0 %v6910
        %7292 = vmatprep.subr.bf16.mxu0 0
        %7293 = vmatpush1.bf16.msra.mxu0 %v6909
        %7294 = vmatprep.subr.bf16.mxu0 0
        %7295 = vmatpush1.bf16.msra.mxu0 %v6908
        %7296 = vmatprep.subr.bf16.mxu0 0
        %7297 = vmatpush1.bf16.msra.mxu0 %v6907
        %7298 = vmatprep.subr.bf16.mxu0 0
        %7299 = vmatpush1.bf16.msra.mxu0 %v6906
        %7300 = vmatprep.subr.bf16.mxu0 0
        %7301 = vmatpush1.bf16.msra.mxu0 %v6905
        %7302 = vmatprep.subr.bf16.mxu0 0
        %7303 = vmatpush2.bf16.msra.mxu0 %v6920
        %7304 = vmatprep.subr.bf16.mxu0 0
        %7305 = vmatpush2.bf16.msra.mxu0 %v6919
        %7306 = vmatprep.subr.bf16.mxu0 0
        %7307 = vmatpush2.bf16.msra.mxu0 %v6918
        %7308 = vmatprep.subr.bf16.mxu0 0
        %7309 = vmatpush2.bf16.msra.mxu0 %v6917
        %7310 = vmatprep.subr.bf16.mxu0 0
        %7311 = vmatpush2.bf16.msra.mxu0 %v6916
        %7312 = vmatprep.subr.bf16.mxu0 0
        %7313 = vmatpush2.bf16.msra.mxu0 %v6915
        %7314 = vmatprep.subr.bf16.mxu0 0
        %7315 = vmatpush2.bf16.msra.mxu0 %v6914
        %7316 = vmatprep.subr.bf16.mxu0 0
        %7317 = vmatpush2.bf16.msra.mxu0 %v6913
        %7318 = vmatprep.mubr.bf16.mxu0 %v6045
        %7319 = vmatmul.mubr.bf16.gmra.mxu0 %v6044
        %v7320 = vpop.f32.mrf.mxu0
        %v7321 = vadd.f32 %v7280, %v7320
        %v7322 = vpop.f32.mrf.mxu0
        %v7323 = vpop.f32.mrf.mxu0
        %v7324 = vadd.f32 %v7283, %v7323
        %v7325 = vpop.f32.mrf.mxu0
        %7326 = vdwg.mxu0
        %7327 = vmatprep.subr.bf16.mxu0 0
        %7328 = vmatpush1.bf16.msra.mxu0 %v6928
        %7329 = vmatprep.subr.bf16.mxu0 0
        %7330 = vmatpush1.bf16.msra.mxu0 %v6927
        %7331 = vmatprep.subr.bf16.mxu0 0
        %7332 = vmatpush1.bf16.msra.mxu0 %v6926
        %7333 = vmatprep.subr.bf16.mxu0 0
        %7334 = vmatpush1.bf16.msra.mxu0 %v6925
        %7335 = vmatprep.subr.bf16.mxu0 0
        %7336 = vmatpush1.bf16.msra.mxu0 %v6924
        %7337 = vmatprep.subr.bf16.mxu0 0
        %7338 = vmatpush1.bf16.msra.mxu0 %v6923
        %7339 = vmatprep.subr.bf16.mxu0 0
        %7340 = vmatpush1.bf16.msra.mxu0 %v6922
        %7341 = vmatprep.subr.bf16.mxu0 0
        %7342 = vmatpush1.bf16.msra.mxu0 %v6921
        %7343 = vmatprep.subr.bf16.mxu0 0
        %7344 = vmatpush2.bf16.msra.mxu0 %v6936
        %7345 = vmatprep.subr.bf16.mxu0 0
        %7346 = vmatpush2.bf16.msra.mxu0 %v6935
        %7347 = vmatprep.subr.bf16.mxu0 0
        %7348 = vmatpush2.bf16.msra.mxu0 %v6934
        %7349 = vmatprep.subr.bf16.mxu0 0
        %7350 = vmatpush2.bf16.msra.mxu0 %v6933
        %7351 = vmatprep.subr.bf16.mxu0 0
        %7352 = vmatpush2.bf16.msra.mxu0 %v6932
        %7353 = vmatprep.subr.bf16.mxu0 0
        %7354 = vmatpush2.bf16.msra.mxu0 %v6931
        %7355 = vmatprep.subr.bf16.mxu0 0
        %7356 = vmatpush2.bf16.msra.mxu0 %v6930
        %7357 = vmatprep.subr.bf16.mxu0 0
        %7358 = vmatpush2.bf16.msra.mxu0 %v6929
        %7359 = vmatprep.mubr.bf16.mxu0 %v6047
        %7360 = vmatmul.mubr.bf16.gmra.mxu0 %v6046
        %v7361 = vpop.f32.mrf.mxu0
        %v7362 = vadd.f32 %v7321, %v7361
        %v7363 = vpop.f32.mrf.mxu0
        %v7364 = vpop.f32.mrf.mxu0
        %v7365 = vadd.f32 %v7324, %v7364
        %v7366 = vpop.f32.mrf.mxu0
        %7367 = vdwg.mxu0
        %7368 = vmatprep.subr.bf16.mxu0 0
        %7369 = vmatpush1.bf16.msra.mxu0 %v6944
        %7370 = vmatprep.subr.bf16.mxu0 0
        %7371 = vmatpush1.bf16.msra.mxu0 %v6943
        %7372 = vmatprep.subr.bf16.mxu0 0
        %7373 = vmatpush1.bf16.msra.mxu0 %v6942
        %7374 = vmatprep.subr.bf16.mxu0 0
        %7375 = vmatpush1.bf16.msra.mxu0 %v6941
        %7376 = vmatprep.subr.bf16.mxu0 0
        %7377 = vmatpush1.bf16.msra.mxu0 %v6940
        %7378 = vmatprep.subr.bf16.mxu0 0
        %7379 = vmatpush1.bf16.msra.mxu0 %v6939
        %7380 = vmatprep.subr.bf16.mxu0 0
        %7381 = vmatpush1.bf16.msra.mxu0 %v6938
        %7382 = vmatprep.subr.bf16.mxu0 0
        %7383 = vmatpush1.bf16.msra.mxu0 %v6937
        %7384 = vmatprep.subr.bf16.mxu0 0
        %7385 = vmatpush2.bf16.msra.mxu0 %v6952
        %7386 = vmatprep.subr.bf16.mxu0 0
        %7387 = vmatpush2.bf16.msra.mxu0 %v6951
        %7388 = vmatprep.subr.bf16.mxu0 0
        %7389 = vmatpush2.bf16.msra.mxu0 %v6950
        %7390 = vmatprep.subr.bf16.mxu0 0
        %7391 = vmatpush2.bf16.msra.mxu0 %v6949
        %7392 = vmatprep.subr.bf16.mxu0 0
        %7393 = vmatpush2.bf16.msra.mxu0 %v6948
        %7394 = vmatprep.subr.bf16.mxu0 0
        %7395 = vmatpush2.bf16.msra.mxu0 %v6947
        %7396 = vmatprep.subr.bf16.mxu0 0
        %7397 = vmatpush2.bf16.msra.mxu0 %v6946
        %7398 = vmatprep.subr.bf16.mxu0 0
        %7399 = vmatpush2.bf16.msra.mxu0 %v6945
        %7400 = vmatprep.mubr.bf16.mxu0 %v6049
        %7401 = vmatmul.mubr.bf16.gmra.mxu0 %v6048
        %v7402 = vpop.f32.mrf.mxu0
        %v7403 = vadd.f32 %v7362, %v7402
        %v7404 = vpop.f32.mrf.mxu0
        %v7405 = vpop.f32.mrf.mxu0
        %v7406 = vadd.f32 %v7365, %v7405
        %v7407 = vpop.f32.mrf.mxu0
        %7408 = vdwg.mxu0
        %v7409 = vadd.f32 %v4803, %v7403
        %v7410 = vadd.f32 %v4804, %v7406
        %v7411 = vld [vmem:[%s930] sm:$0x1]
        %v7412 = vld [vmem:[%s938] sm:$0x1]
        %7413 = vadd.xlane.f32.xlu0 %v7409
        %v7414 = vpop.xlane.xlu0 %7413
        %7415 = vadd.xlane.f32.xlu0 %v7410
        %v7416 = vpop.xlane.xlu0 %7415
        %v7417 = vmul.f32 %v7414, %v4770
        %v7418 = vmul.f32 %v7416, %v4770
        %v7419 = vsub.f32 %v7409, %v7417
        %v7420 = vsub.f32 %v7410, %v7418
        %v7421 = vmul.f32 %v7419, %v7419
        %v7422 = vmul.f32 %v7420, %v7420
        %7423 = vadd.xlane.f32.xlu0 %v7421
        %v7424 = vpop.xlane.xlu0 %7423
        %7425 = vadd.xlane.f32.xlu0 %v7422
        %v7426 = vpop.xlane.xlu0 %7425
        %v7427 = vmul.f32 %v7424, %v4770
        %v7428 = vmul.f32 %v7426, %v4770
        %v7429 = vadd.f32 %v7427, 1e-05
        %v7430 = vadd.f32 %v7428, 1e-05
        %v7431 = vrsqrt.pop %v7429
        %v7432 = vrsqrt.pop %v7430
        %v7433 = vmul.f32 %v7419, %v7431
        %v7434 = vmul.f32 %v7420, %v7432
        %v7436 = vlaneseq
        %v7437 = vshrl.u32 %v7436, 7
        %v7438 = vsub.s32 0, %v7437
        %v7439 = vrot.slane %v7411, %v7438
        %v7441 = vmul.f32 %v7433, %v7439
        %v7442 = vmul.f32 %v7434, %v7439
        %v7444 = vlaneseq
        %v7445 = vshrl.u32 %v7444, 7
        %v7446 = vsub.s32 0, %v7445
        %v7447 = vrot.slane %v7412, %v7446
        %v7449 = vadd.f32 %v7441, %v7447
        %v7450 = vadd.f32 %v7442, %v7447
        %7451 = vst [vmem:[#allocation2] sm:$0xff] %v7449
        %7452 = vst [vmem:[#allocation2 + $0x8] sm:$0xff] %v7450
        %p7453 = scmp.eq.s32.totalorder %s58, 5
        // Predicated region
        $region157: #{score_function_model_forward.1} parent=95 // pred_check
          %p7454 = pneg %p7453
        $region158: #{score_function_model_forward.1} parent=95 // pred_check_branch
          %7456 = sbr.rel (%p7454) target = $region160
        $region159: #{score_function_model_forward.1} parent=95 // pred_region
          %v7457 = vld [vmem:[%s3] sm:$0x3]
          %v7459 = vsel %vm1344, %v7457, 0
          %7461 = vmatprep.subr.mxu0 0.0
          %7462 = vmatpush1.msra.mxu0 0.0
          %7463 = vmatprep.subr.mxu0 0.0
          %7464 = vmatpush1.msra.mxu0 0.0
          %7465 = vmatprep.subr.mxu0 0.0
          %7466 = vmatpush1.msra.mxu0 0.0
          %7467 = vmatprep.subr.mxu0 0.0
          %7468 = vmatpush1.msra.mxu0 0.0
          %7469 = vmatprep.subr.mxu0 0.0
          %7470 = vmatpush1.msra.mxu0 0.0
          %7471 = vmatprep.subr.mxu0 0.0
          %7472 = vmatpush1.msra.mxu0 0.0
          %7473 = vmatprep.subr.mxu0 0.0
          %7474 = vmatpush1.msra.mxu0 0.0
          %7475 = vmatprep.subr.mxu0 0.0
          %7476 = vmatpush1.msra.mxu0 0.0
          %7477 = vmatprep.subr.mxu0 0.0
          %7478 = vmatpush1.msra.mxu0 0.0
          %7479 = vmatprep.subr.mxu0 0.0
          %7480 = vmatpush1.msra.mxu0 0.0
          %7481 = vmatprep.subr.mxu0 0.0
          %7482 = vmatpush1.msra.mxu0 0.0
          %7483 = vmatprep.subr.mxu0 0.0
          %7484 = vmatpush1.msra.mxu0 0.0
          %7485 = vmatprep.subr.mxu0 0.0
          %7486 = vmatpush1.msra.mxu0 0.0
          %7487 = vmatprep.subr.mxu0 0.0
          %7488 = vmatpush1.msra.mxu0 0.0
          %7489 = vmatprep.subr.mxu0 0.0
          %7490 = vmatpush1.msra.mxu0 %v7450
          %7491 = vmatprep.subr.mxu0 0.0
          %7492 = vmatpush1.msra.mxu0 %v7449
          %7493 = vmatprep.subr.mxu0 0.0
          %7494 = vmatpush2.msra.mxu0 0.0
          %7495 = vmatprep.subr.mxu0 0.0
          %7496 = vmatpush2.msra.mxu0 0.0
          %7497 = vmatprep.subr.mxu0 0.0
          %7498 = vmatpush2.msra.mxu0 0.0
          %7499 = vmatprep.subr.mxu0 0.0
          %7500 = vmatpush2.msra.mxu0 0.0
          %7501 = vmatprep.subr.mxu0 0.0
          %7502 = vmatpush2.msra.mxu0 0.0
          %7503 = vmatprep.subr.mxu0 0.0
          %7504 = vmatpush2.msra.mxu0 0.0
          %7505 = vmatprep.subr.mxu0 0.0
          %7506 = vmatpush2.msra.mxu0 0.0
          %7507 = vmatprep.subr.mxu0 0.0
          %7508 = vmatpush2.msra.mxu0 0.0
          %7509 = vmatprep.subr.mxu0 0.0
          %7510 = vmatpush2.msra.mxu0 0.0
          %7511 = vmatprep.subr.mxu0 0.0
          %7512 = vmatpush2.msra.mxu0 0.0
          %7513 = vmatprep.subr.mxu0 0.0
          %7514 = vmatpush2.msra.mxu0 0.0
          %7515 = vmatprep.subr.mxu0 0.0
          %7516 = vmatpush2.msra.mxu0 0.0
          %7517 = vmatprep.subr.mxu0 0.0
          %7518 = vmatpush2.msra.mxu0 0.0
          %7519 = vmatprep.subr.mxu0 0.0
          %7520 = vmatpush2.msra.mxu0 0.0
          %7521 = vmatprep.subr.mxu0 0.0
          %7522 = vmatpush2.msra.mxu0 0.0
          %7523 = vmatprep.subr.mxu0 0.0
          %7524 = vmatpush2.msra.mxu0 0.0
          %7525 = vmatprep.mubr.f32.mxu0 0.0
          %7526 = vmatmul.mubr.f32.gmra.mxu0 %v7459
          %v7527 = vpop.f32.mrf.mxu0
          %v7528 = vadd.f32 0.0, %v7527
          %v7529 = vpop.f32.mrf.mxu0
          %7530 = vdwg.mxu0
          %v7531 = vld [vmem:[#allocation25] sm:$0x1]
          %v7532 = vld [vmem:[#allocation4] sm:$0x1]
          %7534 = vset.pattern.permute.xlu0 0
          %7535 = vperm.xlu0 %7534, %v7532
          %v7536 = vpop.permute.xlu0 %7535
          %v7538 = vlaneseq
          %v7539 = vshrl.u32 %v7538, 7
          %v7540 = vsub.s32 0, %v7539
          %v7541 = vrot.slane %v7536, %v7540
          %7542 = vmatprep.subr.mxu0 0.0
          %7543 = vmatpush1.xpose.msra.mxu0 0.0
          %7544 = vmatprep.subr.mxu0 0.0
          %7545 = vmatpush1.xpose.msra.mxu0 0.0
          %7546 = vmatprep.subr.mxu0 0.0
          %7547 = vmatpush1.xpose.msra.mxu0 0.0
          %7548 = vmatprep.subr.mxu0 0.0
          %7549 = vmatpush1.xpose.msra.mxu0 0.0
          %7550 = vmatprep.subr.mxu0 0.0
          %7551 = vmatpush1.xpose.msra.mxu0 0.0
          %7552 = vmatprep.subr.mxu0 0.0
          %7553 = vmatpush1.xpose.msra.mxu0 0.0
          %7554 = vmatprep.subr.mxu0 0.0
          %7555 = vmatpush1.xpose.msra.mxu0 0.0
          %7556 = vmatprep.subr.mxu0 0.0
          %7557 = vmatpush1.xpose.msra.mxu0 0.0
          %7558 = vmatprep.subr.mxu0 0.0
          %7559 = vmatpush1.xpose.msra.mxu0 0.0
          %7560 = vmatprep.subr.mxu0 0.0
          %7561 = vmatpush1.xpose.msra.mxu0 0.0
          %7562 = vmatprep.subr.mxu0 0.0
          %7563 = vmatpush1.xpose.msra.mxu0 0.0
          %7564 = vmatprep.subr.mxu0 0.0
          %7565 = vmatpush1.xpose.msra.mxu0 0.0
          %7566 = vmatprep.subr.mxu0 0.0
          %7567 = vmatpush1.xpose.msra.mxu0 0.0
          %7568 = vmatprep.subr.mxu0 0.0
          %7569 = vmatpush1.xpose.msra.mxu0 0.0
          %7570 = vmatprep.subr.mxu0 0.0
          %7571 = vmatpush1.xpose.msra.mxu0 0.0
          %7572 = vmatprep.subr.mxu0 0.0
          %7573 = vmatpush1.xpose.msra.mxu0 %v7528
          %7574 = vmatprep.subr.mxu0 0.0
          %7575 = vmatpush2.xpose.msra.mxu0 0.0
          %7576 = vmatprep.subr.mxu0 0.0
          %7577 = vmatpush2.xpose.msra.mxu0 0.0
          %7578 = vmatprep.subr.mxu0 0.0
          %7579 = vmatpush2.xpose.msra.mxu0 0.0
          %7580 = vmatprep.subr.mxu0 0.0
          %7581 = vmatpush2.xpose.msra.mxu0 0.0
          %7582 = vmatprep.subr.mxu0 0.0
          %7583 = vmatpush2.xpose.msra.mxu0 0.0
          %7584 = vmatprep.subr.mxu0 0.0
          %7585 = vmatpush2.xpose.msra.mxu0 0.0
          %7586 = vmatprep.subr.mxu0 0.0
          %7587 = vmatpush2.xpose.msra.mxu0 0.0
          %7588 = vmatprep.subr.mxu0 0.0
          %7589 = vmatpush2.xpose.msra.mxu0 0.0
          %7590 = vmatprep.subr.mxu0 0.0
          %7591 = vmatpush2.xpose.msra.mxu0 0.0
          %7592 = vmatprep.subr.mxu0 0.0
          %7593 = vmatpush2.xpose.msra.mxu0 0.0
          %7594 = vmatprep.subr.mxu0 0.0
          %7595 = vmatpush2.xpose.msra.mxu0 0.0
          %7596 = vmatprep.subr.mxu0 0.0
          %7597 = vmatpush2.xpose.msra.mxu0 0.0
          %7598 = vmatprep.subr.mxu0 0.0
          %7599 = vmatpush2.xpose.msra.mxu0 0.0
          %7600 = vmatprep.subr.mxu0 0.0
          %7601 = vmatpush2.xpose.msra.mxu0 0.0
          %7602 = vmatprep.subr.mxu0 0.0
          %7603 = vmatpush2.xpose.msra.mxu0 0.0
          %7604 = vmatprep.subr.mxu0 0.0
          %7605 = vmatpush2.xpose.msra.mxu0 0.0
          %7606 = vmatprep.mubr.f32.mxu0 0.0
          %7607 = vmatmul.mubr.f32.gmra.mxu0 %v7531
          %v7608 = vpop.f32.mrf.mxu0
          %v7609 = vadd.f32 %v7541, %v7608
          %v7610 = vpop.f32.mrf.mxu0
          %7611 = vdwg.mxu0
          %v7612 = vsub.f32 0.0, %v7609
          %v7613 = vmul.f32 %v7612, 1.442695
          %v7614 = vpow.pop %v7613
          %v7615 = vadd.f32 %v7614, 1.0
          %v7616 = vrcp.pop %v7615
          %v7617 = vmul.f32 1.0, %v7616
          %vm7618 = vcmask 8192
          %7619 = vst.msk [vmem:[#allocation28] sm:$0x1] %vm7618, %v7617
          %v7620 = vld [vmem:[#allocation26] sm:$0x1]
          %v7621 = vmul.f32 %v7609, %v7620
          %v7622 = vsub.f32 0.0, %v7621
          %v7623 = vmax.f32 %v7622, 0.0
          %v7624 = vand.u32 2147483647, %v7621
          %v7625 = vsub.f32 0.0, %v7624
          %v7626 = vmul.f32 %v7625, 1.442695
          %v7627 = vpow.pop %v7626
          %v7628 = vadd.f32 %v7627, 1.0
          %v7629 = vlog2.pop %v7628
          %v7630 = vmul.f32 %v7629, 0.6931472
          %v7631 = vadd.f32 %v7623, %v7630
          %v7632 = vsel %vm7618, %v7631, 0.0
          %7633 = vadd.xlane.f32.xlu0 %v7632
          %v7634 = vpop.xlane.xlu0 %7633
          %vm7635 = vcmask 0
          %7636 = vst.msk [vmem:[#allocation29] sm:$0x1] %vm7635, %v7634
        $region160: #{score_function_model_forward.1} parent=95 // pred_fallthru
          _
        // Predicated region
        $region161: #{score_function_model_forward.1} parent=95 // pred_check
          %p7637 = pneg %p530
        $region162: #{score_function_model_forward.1} parent=95 // pred_check_branch
          %7639 = sbr.rel (%p7637) target = $region164
        $region163: #{score_function_model_forward.1} parent=95 // pred_region
          %s7641 = ssub.s32 16, 16
          %7642 = vsyncadd [#allocation7], %s7641
          %s7644 = sshll.u32 [#allocation28], 4
          %s7645 = int_to_ptr.vmem [resolvable:$true] %s7644
          %7647 = dma.vmem_to_hbm [thread:$0]  %s7645, 16, %s19, [#allocation7]
        $region164: #{score_function_model_forward.1} parent=95 // pred_fallthru
          _
        // Predicated region
        $region165: #{score_function_model_forward.1} parent=95 // pred_check
          %p7648 = pneg %p551
        $region166: #{score_function_model_forward.1} parent=95 // pred_check_branch
          %7650 = sbr.rel (%p7648) target = $region168
        $region167: #{score_function_model_forward.1} parent=95 // pred_region
          %s7652 = ssub.s32 16, 16
          %7653 = vsyncadd [#allocation30], %s7652
          %s7655 = sshll.u32 [#allocation29], 4
          %s7656 = int_to_ptr.vmem [resolvable:$true] %s7655
          %7658 = dma.vmem_to_hbm [thread:$0]  %s7656, 16, %s20, [#allocation30]
        $region168: #{score_function_model_forward.1} parent=95 // pred_fallthru
          _
        // Predicated region
        $region169: #{score_function_model_forward.1} parent=95 // pred_check
          %p7659 = pneg %p530
        $region170: #{score_function_model_forward.1} parent=95 // pred_check_branch
          %7661 = sbr.rel (%p7659) target = $region172
        $region171: #{score_function_model_forward.1} parent=95 // pred_region
          %7662 = dma.done [#allocation7], 16
        $region172: #{score_function_model_forward.1} parent=95 // pred_fallthru
          _
        // Predicated region
        $region173: #{score_function_model_forward.1} parent=95 // pred_check
          %p7663 = pneg %p551
        $region174: #{score_function_model_forward.1} parent=95 // pred_check_branch
          %7665 = sbr.rel (%p7663) target = $region176
        $region175: #{score_function_model_forward.1} parent=95 // pred_region
          %7666 = dma.done [#allocation30], 16
        $region176: #{score_function_model_forward.1} parent=95 // pred_fallthru
          _
      $region96: #{score_function_model_forward.1} parent=5 // pred_fallthru
        _
      %p7667 = scmp.le.s32.totalorder 2, %s53
      // Predicated region
      $region177: #{score_function_model_forward.1} parent=5 // pred_check
        %p7668 = pneg %p7667
      $region178: #{score_function_model_forward.1} parent=5 // pred_check_branch
        %7670 = sbr.rel (%p7668) target = $region180
      $region179: #{score_function_model_forward.1} parent=5 // pred_region
        %s7671 = ssub.s32 %s53, 2
      $region180: #{score_function_model_forward.1} parent=5 // pred_fallthru
        _
    $region6: #{score_function_model_forward.1} parent=1 // loop_footer
      %s57 = sadd.s32 1, %s53
    $region7: #{score_function_model_forward.1} parent=1 // loop_footer_branch
      %52 = sbr.rel target = $region3
    $region8: #{score_function_model_forward.1} parent=1 // loop_exit
      _
    %7672 = vsyncpa [#allocation6], 1
    %s7673 = scalar_lea.sflag [#allocation6], 1
    %7674 = vsyncpa %s7673, 1
    %7675 = vsyncpa [#allocation9], 1
    %s7676 = scalar_lea.sflag [#allocation9], 1
    %7677 = vsyncpa %s7676, 1
    %7678 = vsyncpa [#allocation12], 1
    %s7679 = scalar_lea.sflag [#allocation12], 1
    %7680 = vsyncpa %s7679, 1
    %7681 = vsyncpa [#allocation15], 1
    %s7682 = scalar_lea.sflag [#allocation15], 1
    %7683 = vsyncpa %s7682, 1
    %7684 = vsyncpa [#allocation18], 1
    %s7685 = scalar_lea.sflag [#allocation18], 1
    %7686 = vsyncpa %s7685, 1
    %7687 = vsyncpa [#allocation21], 1
    %s7688 = scalar_lea.sflag [#allocation21], 1
    %7689 = vsyncpa %s7688, 1
    %7690 = vsyncpa [#allocation24], 1
    %s7691 = scalar_lea.sflag [#allocation24], 1
    %7692 = vsyncpa %s7691, 1
    %7693 = vsyncpa [#allocation27], 1
    %7694 = vsyncpa [#allocation7], 1
    %s7695 = scalar_lea.sflag [#allocation7], 1
    %7696 = vsyncpa %s7695, 1
    %7697 = vsyncpa [#allocation30], 1

</llo_original>
